<compile_context>
chip_gen: v6e
topology: v6e:2x2x1
jax: 0.10.0
libtpu: 0.0.40
codegen_flags: <defaults>
</compile_context>

<pallas_src>
import jax
import jax.numpy as jnp
from jax.experimental import pallas as pl
from jax.experimental.pallas import tpu as pltpu


def _leaky_relu(x, negative_slope=0.2):
    return jnp.where(x > 0, x, negative_slope * x)


def _round_up(n, m):
    return ((n + m - 1) // m) * m


def discriminator_kernel(x_ref,
                         w1_ref, b1_ref,
                         w2_ref, b2_ref,
                         w3_ref, b3_ref,
                         w4_ref, b4_ref,
                         o_ref):
    # Lane-major layout: batch along lanes, features along sublanes.
    xb = x_ref[...].astype(jnp.bfloat16)                        # (1, TB) bf16

    # Layer 1: Linear(1, 1024) == outer product -> VPU broadcast multiply.
    h = w1_ref[...] * xb + b1_ref[...]                          # (1024,1)*(1,TB) -> (1024, TB) bf16
    h = _leaky_relu(h)

    # Layer 2: Linear(1024, 512) on the MXU (bf16 inputs, f32 accumulation).
    h = jnp.dot(w2_ref[...], h, preferred_element_type=jnp.float32)   # (512, TB) f32
    h = _leaky_relu(h.astype(jnp.bfloat16) + b2_ref[...])             # bf16 elementwise

    # Layer 3: Linear(512, 256) on the MXU.
    h = jnp.dot(w3_ref[...], h, preferred_element_type=jnp.float32)   # (256, TB) f32
    h = _leaky_relu(h + b3_ref[...])                                  # f32

    # Layer 4: Linear(256, 1) == VPU multiply + sublane reduction (no MXU).
    logits = jnp.sum(h * w4_ref[...], axis=0, keepdims=True) + b4_ref[...]   # (1, TB) f32

    # Sigmoid (EUP exp) on the packed lane-dense row; single unmasked store.
    o_ref[...] = jax.nn.sigmoid(logits).astype(o_ref.dtype)


def discriminator_forward(x, params, *, block_b=512):
    """x: [B, 1] float32.  params: dict of PyTorch-oriented weights/biases.

    The batch is mapped to the lane axis: x is presented as a (1, B_pad) row
    and the kernel output is a (1, B_pad) row, tiled in lane-dense (1, TB)
    blocks along a "parallel" batch grid.
    """
    B = x.shape[0]
    assert x.shape == (B, 1), x.shape

    if B <= 128:
        # Single tile; block == full array so no (8,128) constraint applies.
        TB = _round_up(B, 8)
    else:
        # Lane-major tiles must be multiples of 128; make sure the grid has
        # at least 2 steps so both v7x TensorCores get work.
        TB = min(_round_up(max(block_b, 128), 128), _round_up(pl.cdiv(B, 2), 128))
    B_pad = _round_up(B, TB)
    grid = (B_pad // TB,)

    x_row = jnp.pad(x, ((0, B_pad - B), (0, 0))).reshape(1, B_pad)

    args = (x_row,
            params["w1"], params["b1"],
            params["w2"], params["b2"],
            params["w3"], params["b3"],
            params["w4"], params["b4"])

    def batch_map(i):
        return (0, i)

    def const_map(i):
        return (0, 0)                      # weights resident across the grid

    in_specs = [pl.BlockSpec((1, TB), batch_map)]
    in_specs += [pl.BlockSpec(a.shape, const_map) for a in args[1:]]

    param_bytes = sum(int(a.size) * a.dtype.itemsize for a in args[1:])
    cost = pl.CostEstimate(
        flops=2 * B_pad * (1 * 1024 + 1024 * 512 + 512 * 256 + 256 * 1),
        transcendentals=B_pad,
        bytes_accessed=param_bytes + 8 * B_pad,   # weights + x in + out
    )

    out = pl.pallas_call(
        discriminator_kernel,
        out_shape=jax.ShapeDtypeStruct((1, B_pad), jnp.float32),
        grid=grid,
        in_specs=in_specs,
        out_specs=pl.BlockSpec((1, TB), batch_map),
        compiler_params=pltpu.CompilerParams(
            dimension_semantics=("parallel",),
            vmem_limit_bytes=32 << 20,
        ),
        cost_estimate=cost,
    )(*args)
    return out[0, :B].reshape(B, 1)


def init_params(key):
    """Deterministic init matching PyTorch nn.Linear default:
    U(-1/sqrt(fan_in), 1/sqrt(fan_in)) for both weight and bias.
    Weights are stored PyTorch-style as (fan_out, fan_in); biases as
    (fan_out, 1) columns so they broadcast over the lane-major batch.
    w1/w2/w3 and b1/b2 are bf16 (MXU inputs / bf16 elementwise path);
    w4 is kept as a (256, 1) f32 column for the VPU layer-4 path; b3/b4 f32."""
    dims = [(1, 1024), (1024, 512), (512, 256), (256, 1)]
    params = {}
    keys = jax.random.split(key, 2 * len(dims))
    for i, (fan_in, fan_out) in enumerate(dims):
        bound = 1.0 / float(fan_in) ** 0.5
        w = jax.random.uniform(keys[2 * i], (fan_out, fan_in),
                               minval=-bound, maxval=bound, dtype=jnp.float32)
        b = jax.random.uniform(keys[2 * i + 1], (fan_out, 1),
                               minval=-bound, maxval=bound, dtype=jnp.float32)
        if i == 3:                          # layer-4 weight as a (256, 1) column
            w = w.reshape(fan_in, 1)
        if i in (0, 1, 2):                  # bf16 weights for VPU/MXU bf16 paths
            w = w.astype(jnp.bfloat16)
        if i in (0, 1):                     # biases added in bf16
            b = b.astype(jnp.bfloat16)
        params[f"w{i + 1}"] = w
        params[f"b{i + 1}"] = b
    return params


def reference_forward(x, params):
    """Pure-JAX reference mirroring the kernel's lane-major layout and
    bf16-matmul / bf16-elementwise numerics."""
    xb = x.reshape(1, -1).astype(jnp.bfloat16)                        # (1, B)
    h = params["w1"] * xb + params["b1"]                              # (1024, B) bf16
    h = jnp.where(h > 0, h, 0.2 * h)
    h = jnp.dot(params["w2"], h, preferred_element_type=jnp.float32)  # (512, B) f32
    h = h.astype(jnp.bfloat16) + params["b2"]
    h = jnp.where(h > 0, h, 0.2 * h)
    h = jnp.dot(params["w3"], h, preferred_element_type=jnp.float32) + params["b3"]
    h = jnp.where(h > 0, h, 0.2 * h)                                  # (256, B) f32
    logits = jnp.sum(h * params["w4"], axis=0, keepdims=True) + params["b4"]
    return jax.nn.sigmoid(logits).reshape(-1, 1)


if __name__ == "__main__":
    key = jax.random.PRNGKey(0)
    pkey, xkey = jax.random.split(key)
    params = init_params(pkey)

    # Small single-tile case (block == full array).
    B = 8
    x = jax.random.normal(xkey, (B, 1), dtype=jnp.float32)
    out = jax.block_until_ready(discriminator_forward(x, params))
    ref = reference_forward(x, params)
    assert out.shape == (B, 1), out.shape
    assert jnp.allclose(out, ref, atol=1e-2, rtol=1e-2), (out, ref)

    # Multi-tile case: exercises batch padding and the 2-step lane-major grid.
    B2 = 300
    x2 = jax.random.normal(jax.random.PRNGKey(1), (B2, 1), dtype=jnp.float32)
    out2 = jax.block_until_ready(discriminator_forward(x2, params))
    ref2 = reference_forward(x2, params)
    assert out2.shape == (B2, 1), out2.shape
    assert jnp.allclose(out2, ref2, atol=1e-2, rtol=1e-2), \
        float(jnp.max(jnp.abs(out2 - ref2)))

    print("KERNEL_OK")
</pallas_src>

<mosaic_0001>
module attributes {stable_mosaic.version = 11 : i64} {
  func.func @discriminator_kernel(%arg0: i32, %arg1: memref<1x8xf32, #tpu.memory_space<vmem>>, %arg2: memref<1024x1xbf16, #tpu.memory_space<vmem>>, %arg3: memref<1024x1xbf16, #tpu.memory_space<vmem>>, %arg4: memref<512x1024xbf16, #tpu.memory_space<vmem>>, %arg5: memref<512x1xbf16, #tpu.memory_space<vmem>>, %arg6: memref<256x512xbf16, #tpu.memory_space<vmem>>, %arg7: memref<256x1xf32, #tpu.memory_space<vmem>>, %arg8: memref<256x1xf32, #tpu.memory_space<vmem>>, %arg9: memref<1x1xf32, #tpu.memory_space<vmem>>, %arg10: memref<1x8xf32, #tpu.memory_space<vmem>>) attributes {dimension_semantics = [#tpu.dimension_semantics<parallel>], iteration_bounds = array<i64: 1>, scalar_prefetch = 0 : i64, scratch_operands = 0 : i64, tpu.core_type = #tpu.core_type<tc>, window_params = [{transform_indices = @transform_0, window_bounds = array<i64: 1, 8>}, {pipeline_mode = #tpu.pipeline_mode<synchronous>, transform_indices = @transform_1, window_bounds = array<i64: 1024, 1>}, {pipeline_mode = #tpu.pipeline_mode<synchronous>, transform_indices = @transform_2, window_bounds = array<i64: 1024, 1>}, {pipeline_mode = #tpu.pipeline_mode<synchronous>, transform_indices = @transform_3, window_bounds = array<i64: 512, 1024>}, {pipeline_mode = #tpu.pipeline_mode<synchronous>, transform_indices = @transform_4, window_bounds = array<i64: 512, 1>}, {pipeline_mode = #tpu.pipeline_mode<synchronous>, transform_indices = @transform_5, window_bounds = array<i64: 256, 512>}, {pipeline_mode = #tpu.pipeline_mode<synchronous>, transform_indices = @transform_6, window_bounds = array<i64: 256, 1>}, {pipeline_mode = #tpu.pipeline_mode<synchronous>, transform_indices = @transform_7, window_bounds = array<i64: 256, 1>}, {pipeline_mode = #tpu.pipeline_mode<synchronous>, transform_indices = @transform_8, window_bounds = array<i64: 1, 1>}, {transform_indices = @transform_9, window_bounds = array<i64: 1, 8>}]} {
    %c0 = arith.constant 0 : index
    %c0_0 = arith.constant 0 : index
    %0 = vector.load %arg1[%c0, %c0_0] : memref<1x8xf32, #tpu.memory_space<vmem>>, vector<1x8xf32>
    %1 = arith.truncf %0 : vector<1x8xf32> to vector<1x8xbf16>
    %c0_1 = arith.constant 0 : index
    %c0_2 = arith.constant 0 : index
    %2 = vector.load %arg2[%c0_1, %c0_2] : memref<1024x1xbf16, #tpu.memory_space<vmem>>, vector<1024x1xbf16>
    %3 = vector.broadcast %2 : vector<1024x1xbf16> to vector<1024x8xbf16>
    %4 = vector.broadcast %1 : vector<1x8xbf16> to vector<1024x8xbf16>
    %5 = arith.mulf %3, %4 : vector<1024x8xbf16>
    %c0_3 = arith.constant 0 : index
    %c0_4 = arith.constant 0 : index
    %6 = vector.load %arg3[%c0_3, %c0_4] : memref<1024x1xbf16, #tpu.memory_space<vmem>>, vector<1024x1xbf16>
    %7 = vector.broadcast %6 : vector<1024x1xbf16> to vector<1024x8xbf16>
    %8 = arith.addf %5, %7 : vector<1024x8xbf16>
    %cst = arith.constant 0.000000e+00 : bf16
    %9 = vector.broadcast %cst : bf16 to vector<1024x8xbf16>
    %10 = arith.cmpf ogt, %8, %9 : vector<1024x8xbf16>
    %cst_5 = arith.constant 2.001950e-01 : bf16
    %11 = vector.broadcast %cst_5 : bf16 to vector<1024x8xbf16>
    %12 = arith.mulf %11, %8 : vector<1024x8xbf16>
    %13 = arith.select %10, %8, %12 : vector<1024x8xi1>, vector<1024x8xbf16>
    %c0_6 = arith.constant 0 : index
    %c0_7 = arith.constant 0 : index
    %14 = vector.load %arg4[%c0_6, %c0_7] : memref<512x1024xbf16, #tpu.memory_space<vmem>>, vector<512x1024xbf16>
    %cst_8 = arith.constant dense<0.000000e+00> : vector<512x8xf32>
    %15 = tpu.matmul %14, %13, %cst_8 {dimension_numbers = #tpu.dot_dimension_numbers<[1], [0], [0], [1], [0, 0, 1, 1], [], []>} : vector<512x1024xbf16>, vector<1024x8xbf16>, vector<512x8xf32> -> vector<512x8xf32>
    %16 = arith.truncf %15 : vector<512x8xf32> to vector<512x8xbf16>
    %c0_9 = arith.constant 0 : index
    %c0_10 = arith.constant 0 : index
    %17 = vector.load %arg5[%c0_9, %c0_10] : memref<512x1xbf16, #tpu.memory_space<vmem>>, vector<512x1xbf16>
    %18 = vector.broadcast %17 : vector<512x1xbf16> to vector<512x8xbf16>
    %19 = arith.addf %16, %18 : vector<512x8xbf16>
    %cst_11 = arith.constant 0.000000e+00 : bf16
    %20 = vector.broadcast %cst_11 : bf16 to vector<512x8xbf16>
    %21 = arith.cmpf ogt, %19, %20 : vector<512x8xbf16>
    %cst_12 = arith.constant 2.001950e-01 : bf16
    %22 = vector.broadcast %cst_12 : bf16 to vector<512x8xbf16>
    %23 = arith.mulf %22, %19 : vector<512x8xbf16>
    %24 = arith.select %21, %19, %23 : vector<512x8xi1>, vector<512x8xbf16>
    %c0_13 = arith.constant 0 : index
    %c0_14 = arith.constant 0 : index
    %25 = vector.load %arg6[%c0_13, %c0_14] : memref<256x512xbf16, #tpu.memory_space<vmem>>, vector<256x512xbf16>
    %cst_15 = arith.constant dense<0.000000e+00> : vector<256x8xf32>
    %26 = tpu.matmul %25, %24, %cst_15 {dimension_numbers = #tpu.dot_dimension_numbers<[1], [0], [0], [1], [0, 0, 1, 1], [], []>} : vector<256x512xbf16>, vector<512x8xbf16>, vector<256x8xf32> -> vector<256x8xf32>
    %c0_16 = arith.constant 0 : index
    %c0_17 = arith.constant 0 : index
    %27 = vector.load %arg7[%c0_16, %c0_17] : memref<256x1xf32, #tpu.memory_space<vmem>>, vector<256x1xf32>
    %28 = vector.broadcast %27 : vector<256x1xf32> to vector<256x8xf32>
    %29 = arith.addf %26, %28 : vector<256x8xf32>
    %cst_18 = arith.constant 0.000000e+00 : f32
    %30 = vector.broadcast %cst_18 : f32 to vector<256x8xf32>
    %31 = arith.cmpf ogt, %29, %30 : vector<256x8xf32>
    %cst_19 = arith.constant 2.000000e-01 : f32
    %32 = vector.broadcast %cst_19 : f32 to vector<256x8xf32>
    %33 = arith.mulf %32, %29 : vector<256x8xf32>
    %34 = arith.select %31, %29, %33 : vector<256x8xi1>, vector<256x8xf32>
    %c0_20 = arith.constant 0 : index
    %c0_21 = arith.constant 0 : index
    %35 = vector.load %arg8[%c0_20, %c0_21] : memref<256x1xf32, #tpu.memory_space<vmem>>, vector<256x1xf32>
    %36 = vector.broadcast %35 : vector<256x1xf32> to vector<256x8xf32>
    %37 = arith.mulf %34, %36 : vector<256x8xf32>
    %cst_22 = arith.constant dense<0.000000e+00> : vector<8xf32>
    %38 = vector.multi_reduction <add>, %37, %cst_22 [0] : vector<256x8xf32> to vector<8xf32>
    %39 = vector.shape_cast %38 : vector<8xf32> to vector<1x8xf32>
    %c0_23 = arith.constant 0 : index
    %c0_24 = arith.constant 0 : index
    %40 = vector.load %arg9[%c0_23, %c0_24] : memref<1x1xf32, #tpu.memory_space<vmem>>, vector<1x1xf32>
    %41 = vector.broadcast %40 : vector<1x1xf32> to vector<1x8xf32>
    %42 = arith.addf %39, %41 : vector<1x8xf32>
    %43 = arith.negf %42 : vector<1x8xf32>
    %44 = math.exp %43 : vector<1x8xf32>
    %cst_25 = arith.constant 1.000000e+00 : f32
    %45 = vector.broadcast %cst_25 : f32 to vector<1x8xf32>
    %46 = arith.addf %45, %44 : vector<1x8xf32>
    %47 = arith.divf %45, %46 : vector<1x8xf32>
    %c0_26 = arith.constant 0 : index
    %c0_27 = arith.constant 0 : index
    %48 = vector.load %arg10[%c0_26, %c0_27] : memref<1x8xf32, #tpu.memory_space<vmem>>, vector<1x8xf32>
    tpu.vector_store %arg10[%c0_26, %c0_27], %47 {strides = array<i32>} : memref<1x8xf32, #tpu.memory_space<vmem>>, vector<1x8xf32>,
    return
  }
  func.func @transform_0(%arg0: i32) -> (i32, i32) {
    %c0_i32 = arith.constant 0 : i32
    %c0_i32_0 = arith.constant 0 : i32
    return %c0_i32, %arg0 : i32, i32
  }
  func.func @transform_1(%arg0: i32) -> (i32, i32) {
    %c0_i32 = arith.constant 0 : i32
    %c0_i32_0 = arith.constant 0 : i32
    %c0_i32_1 = arith.constant 0 : i32
    return %c0_i32, %c0_i32_0 : i32, i32
  }
  func.func @transform_2(%arg0: i32) -> (i32, i32) {
    %c0_i32 = arith.constant 0 : i32
    %c0_i32_0 = arith.constant 0 : i32
    %c0_i32_1 = arith.constant 0 : i32
    return %c0_i32, %c0_i32_0 : i32, i32
  }
  func.func @transform_3(%arg0: i32) -> (i32, i32) {
    %c0_i32 = arith.constant 0 : i32
    %c0_i32_0 = arith.constant 0 : i32
    %c0_i32_1 = arith.constant 0 : i32
    return %c0_i32, %c0_i32_0 : i32, i32
  }
  func.func @transform_4(%arg0: i32) -> (i32, i32) {
    %c0_i32 = arith.constant 0 : i32
    %c0_i32_0 = arith.constant 0 : i32
    %c0_i32_1 = arith.constant 0 : i32
    return %c0_i32, %c0_i32_0 : i32, i32
  }
  func.func @transform_5(%arg0: i32) -> (i32, i32) {
    %c0_i32 = arith.constant 0 : i32
    %c0_i32_0 = arith.constant 0 : i32
    %c0_i32_1 = arith.constant 0 : i32
    return %c0_i32, %c0_i32_0 : i32, i32
  }
  func.func @transform_6(%arg0: i32) -> (i32, i32) {
    %c0_i32 = arith.constant 0 : i32
    %c0_i32_0 = arith.constant 0 : i32
    %c0_i32_1 = arith.constant 0 : i32
    return %c0_i32, %c0_i32_0 : i32, i32
  }
  func.func @transform_7(%arg0: i32) -> (i32, i32) {
    %c0_i32 = arith.constant 0 : i32
    %c0_i32_0 = arith.constant 0 : i32
    %c0_i32_1 = arith.constant 0 : i32
    return %c0_i32, %c0_i32_0 : i32, i32
  }
  func.func @transform_8(%arg0: i32) -> (i32, i32) {
    %c0_i32 = arith.constant 0 : i32
    %c0_i32_0 = arith.constant 0 : i32
    %c0_i32_1 = arith.constant 0 : i32
    return %c0_i32, %c0_i32_0 : i32, i32
  }
  func.func @transform_9(%arg0: i32) -> (i32, i32) {
    %c0_i32 = arith.constant 0 : i32
    %c0_i32_0 = arith.constant 0 : i32
    return %c0_i32, %arg0 : i32, i32
  }
}

</mosaic_0001>

<llo_original>
// kernel: tpu_custom_call.1
$region0: #{tpu_custom_call.1}
  #allocation0 [shape = 'u32[]', space=smem, size = 0x4, offset = 0x4, fixed_abs, tag = 'smem constant byte address 0x4 - core index']
  #allocation1 [shape = 'u32[144,128]{1,0:T(1,128)}', space=vmem, size = 0x12000, scoped, tag = 'internal scratch']
  #allocation2 [shape = 'f32[1,1]{1,0:T(1,128)S(1)}', space=vmem, size = 0x200, scoped, tag = 'scoped memory for tpu_custom_call.1']
  %s0 = inlined_call_operand.vmem [shape: f32[1,8], index: 0, kind: input, shape index: {}]
  %s1 = inlined_call_operand.vmem [shape: bf16[1024,1], index: 1, kind: input, shape index: {}]
  %s2 = inlined_call_operand.vmem [shape: bf16[1024,1], index: 2, kind: input, shape index: {}]
  %s3 = inlined_call_operand.hbm [shape: bf16[512,1024], index: 3, kind: input, shape index: {}]
  %s4 = inlined_call_operand.vmem [shape: bf16[512,1], index: 4, kind: input, shape index: {}]
  %s5 = inlined_call_operand.vmem [shape: bf16[256,512], index: 5, kind: input, shape index: {}]
  %s6 = inlined_call_operand.vmem [shape: f32[256,1], index: 6, kind: input, shape index: {}]
  %s7 = inlined_call_operand.vmem [shape: f32[256,1], index: 7, kind: input, shape index: {}]
  %s8 = inlined_call_operand.<no memory space> [shape: f32[1,1], index: 8, kind: input, shape index: {}]
  %s9 = inlined_call_operand.hbm [shape: f32[1,8], index: 9, kind: output, shape index: {}]
  %s10 = sld [smem:[#allocation0]]
  $region50: #{tpu_custom_call.1} parent=0
    _
  %s12 = ssub.s32 1, %s10
  %s13 = scalar_select 0, %s12, %s10
  %v14 = vstv %s8
  %15 = vst [vmem:[#allocation2] sm:$0x1] %v14
  $region1: #{tpu_custom_call.1} parent=0
    #allocation3 [shape = 'u8[1048576]{0}', space=vmem, size = 0x100000, scoped, tag = 'input window, operand 3, single buffered']
    #allocation4 [shape = 's32[1]{0}', space=sflag, size = 0x4, scoped, tag = 'scoped memory for tpu_custom_call.1']
    #allocation5 [shape = 's32[1]{0}', space=sflag, size = 0x4, scoped, tag = 'scoped memory for tpu_custom_call.1']
    #allocation6 [shape = 'u8[512]{0}', space=vmem, size = 0x400, scoped, tag = 'output window, operand 0, single buffered']
    %16 = vsyncpa [#allocation4], 0
    %17 = vsyncpa [#allocation5], 0
    // Predicated region
    $region2: #{tpu_custom_call.1} parent=1 // pred_check
      _
    $region3: #{tpu_custom_call.1} parent=1 // pred_check_branch
      %19 = sbr.rel (0) target = $region5
    $region4: #{tpu_custom_call.1} parent=1 // pred_region
      _
    $region5: #{tpu_custom_call.1} parent=1 // pred_fallthru
      _
    // Predicated region
    $region6: #{tpu_custom_call.1} parent=1 // pred_check
      _
    $region7: #{tpu_custom_call.1} parent=1 // pred_check_branch
      %21 = sbr.rel (0) target = $region9
    $region8: #{tpu_custom_call.1} parent=1 // pred_region
      _
    $region9: #{tpu_custom_call.1} parent=1 // pred_fallthru
      _
    // Predicated region
    $region10: #{tpu_custom_call.1} parent=1 // pred_check
      _
    $region11: #{tpu_custom_call.1} parent=1 // pred_check_branch
      %23 = sbr.rel (0) target = $region13
    $region12: #{tpu_custom_call.1} parent=1 // pred_region
      _
    $region13: #{tpu_custom_call.1} parent=1 // pred_fallthru
      _
    // Predicated region
    $region14: #{tpu_custom_call.1} parent=1 // pred_check
      _
    $region15: #{tpu_custom_call.1} parent=1 // pred_check_branch
      %25 = sbr.rel (0) target = $region17
    $region16: #{tpu_custom_call.1} parent=1 // pred_region
      %s27 = ssub.s32 32768, 32768
      %28 = vsyncadd [#allocation4], %s27
      %s29 = sshll.u32 [#allocation3], 4
      %s30 = int_to_ptr.vmem [resolvable:$true] %s29
      %35 = dma.hbm_to_vmem [thread:$0]  %s3, 32768, %s30, [#allocation4], 512, 512, 32
    $region17: #{tpu_custom_call.1} parent=1 // pred_fallthru
      _
    // Predicated region
    $region18: #{tpu_custom_call.1} parent=1 // pred_check
      _
    $region19: #{tpu_custom_call.1} parent=1 // pred_check_branch
      %37 = sbr.rel (0) target = $region21
    $region20: #{tpu_custom_call.1} parent=1 // pred_region
      _
    $region21: #{tpu_custom_call.1} parent=1 // pred_fallthru
      _
    // Predicated region
    $region22: #{tpu_custom_call.1} parent=1 // pred_check
      _
    $region23: #{tpu_custom_call.1} parent=1 // pred_check_branch
      %39 = sbr.rel (0) target = $region25
    $region24: #{tpu_custom_call.1} parent=1 // pred_region
      _
    $region25: #{tpu_custom_call.1} parent=1 // pred_fallthru
      _
    // Predicated region
    $region26: #{tpu_custom_call.1} parent=1 // pred_check
      _
    $region27: #{tpu_custom_call.1} parent=1 // pred_check_branch
      %41 = sbr.rel (0) target = $region29
    $region28: #{tpu_custom_call.1} parent=1 // pred_region
      _
    $region29: #{tpu_custom_call.1} parent=1 // pred_fallthru
      _
    // Predicated region
    $region30: #{tpu_custom_call.1} parent=1 // pred_check
      _
    $region31: #{tpu_custom_call.1} parent=1 // pred_check_branch
      %43 = sbr.rel (0) target = $region33
    $region32: #{tpu_custom_call.1} parent=1 // pred_region
      _
    $region33: #{tpu_custom_call.1} parent=1 // pred_fallthru
      _
    // Predicated region
    $region34: #{tpu_custom_call.1} parent=1 // pred_check
      _
    $region35: #{tpu_custom_call.1} parent=1 // pred_check_branch
      %45 = sbr.rel (0) target = $region37
    $region36: #{tpu_custom_call.1} parent=1 // pred_region
      _
    $region37: #{tpu_custom_call.1} parent=1 // pred_fallthru
      _
    // Predicated region
    $region38: #{tpu_custom_call.1} parent=1 // pred_check
      _
    $region39: #{tpu_custom_call.1} parent=1 // pred_check_branch
      %47 = sbr.rel (0) target = $region41
    $region40: #{tpu_custom_call.1} parent=1 // pred_region
      %48 = dma.done [#allocation4], 32768
    $region41: #{tpu_custom_call.1} parent=1 // pred_fallthru
      _
    %v51 = vld [vmem:[%s0] sm:$0x1]
    %v52 = vpack.c.bf16 %v51, %v51
    %v53 = vld [vmem:[%s1] sm:$0xf]
    %v54 = vld [vmem:[%s1 + $0x4] sm:$0xf]
    %v55 = vld [vmem:[%s1 + $0x8] sm:$0xf]
    %v56 = vld [vmem:[%s1 + $0xc] sm:$0xf]
    %v57 = vld [vmem:[%s1 + $0x10] sm:$0xf]
    %v58 = vld [vmem:[%s1 + $0x14] sm:$0xf]
    %v59 = vld [vmem:[%s1 + $0x18] sm:$0xf]
    %v60 = vld [vmem:[%s1 + $0x1c] sm:$0xf]
    %v61 = vld [vmem:[%s1 + $0x20] sm:$0xf]
    %v62 = vld [vmem:[%s1 + $0x24] sm:$0xf]
    %v63 = vld [vmem:[%s1 + $0x28] sm:$0xf]
    %v64 = vld [vmem:[%s1 + $0x2c] sm:$0xf]
    %v65 = vld [vmem:[%s1 + $0x30] sm:$0xf]
    %v66 = vld [vmem:[%s1 + $0x34] sm:$0xf]
    %v67 = vld [vmem:[%s1 + $0x38] sm:$0xf]
    %v68 = vld [vmem:[%s1 + $0x3c] sm:$0xf]
    %v69 = vld [vmem:[%s1 + $0x40] sm:$0xf]
    %v70 = vld [vmem:[%s1 + $0x44] sm:$0xf]
    %v71 = vld [vmem:[%s1 + $0x48] sm:$0xf]
    %v72 = vld [vmem:[%s1 + $0x4c] sm:$0xf]
    %v73 = vld [vmem:[%s1 + $0x50] sm:$0xf]
    %v74 = vld [vmem:[%s1 + $0x54] sm:$0xf]
    %v75 = vld [vmem:[%s1 + $0x58] sm:$0xf]
    %v76 = vld [vmem:[%s1 + $0x5c] sm:$0xf]
    %v77 = vld [vmem:[%s1 + $0x60] sm:$0xf]
    %v78 = vld [vmem:[%s1 + $0x64] sm:$0xf]
    %v79 = vld [vmem:[%s1 + $0x68] sm:$0xf]
    %v80 = vld [vmem:[%s1 + $0x6c] sm:$0xf]
    %v81 = vld [vmem:[%s1 + $0x70] sm:$0xf]
    %v82 = vld [vmem:[%s1 + $0x74] sm:$0xf]
    %v83 = vld [vmem:[%s1 + $0x78] sm:$0xf]
    %v84 = vld [vmem:[%s1 + $0x7c] sm:$0xf]
    %v85 = vld [vmem:[%s1 + $0x80] sm:$0xf]
    %v86 = vld [vmem:[%s1 + $0x84] sm:$0xf]
    %v87 = vld [vmem:[%s1 + $0x88] sm:$0xf]
    %v88 = vld [vmem:[%s1 + $0x8c] sm:$0xf]
    %v89 = vld [vmem:[%s1 + $0x90] sm:$0xf]
    %v90 = vld [vmem:[%s1 + $0x94] sm:$0xf]
    %v91 = vld [vmem:[%s1 + $0x98] sm:$0xf]
    %v92 = vld [vmem:[%s1 + $0x9c] sm:$0xf]
    %v93 = vld [vmem:[%s1 + $0xa0] sm:$0xf]
    %v94 = vld [vmem:[%s1 + $0xa4] sm:$0xf]
    %v95 = vld [vmem:[%s1 + $0xa8] sm:$0xf]
    %v96 = vld [vmem:[%s1 + $0xac] sm:$0xf]
    %v97 = vld [vmem:[%s1 + $0xb0] sm:$0xf]
    %v98 = vld [vmem:[%s1 + $0xb4] sm:$0xf]
    %v99 = vld [vmem:[%s1 + $0xb8] sm:$0xf]
    %v100 = vld [vmem:[%s1 + $0xbc] sm:$0xf]
    %v101 = vld [vmem:[%s1 + $0xc0] sm:$0xf]
    %v102 = vld [vmem:[%s1 + $0xc4] sm:$0xf]
    %v103 = vld [vmem:[%s1 + $0xc8] sm:$0xf]
    %v104 = vld [vmem:[%s1 + $0xcc] sm:$0xf]
    %v105 = vld [vmem:[%s1 + $0xd0] sm:$0xf]
    %v106 = vld [vmem:[%s1 + $0xd4] sm:$0xf]
    %v107 = vld [vmem:[%s1 + $0xd8] sm:$0xf]
    %v108 = vld [vmem:[%s1 + $0xdc] sm:$0xf]
    %v109 = vld [vmem:[%s1 + $0xe0] sm:$0xf]
    %v110 = vld [vmem:[%s1 + $0xe4] sm:$0xf]
    %v111 = vld [vmem:[%s1 + $0xe8] sm:$0xf]
    %v112 = vld [vmem:[%s1 + $0xec] sm:$0xf]
    %v113 = vld [vmem:[%s1 + $0xf0] sm:$0xf]
    %v114 = vld [vmem:[%s1 + $0xf4] sm:$0xf]
    %v115 = vld [vmem:[%s1 + $0xf8] sm:$0xf]
    %v116 = vld [vmem:[%s1 + $0xfc] sm:$0xf]
    %v117 = vld [vmem:[%s1 + $0x100] sm:$0xf]
    %v118 = vld [vmem:[%s1 + $0x104] sm:$0xf]
    %v119 = vld [vmem:[%s1 + $0x108] sm:$0xf]
    %v120 = vld [vmem:[%s1 + $0x10c] sm:$0xf]
    %v121 = vld [vmem:[%s1 + $0x110] sm:$0xf]
    %v122 = vld [vmem:[%s1 + $0x114] sm:$0xf]
    %v123 = vld [vmem:[%s1 + $0x118] sm:$0xf]
    %v124 = vld [vmem:[%s1 + $0x11c] sm:$0xf]
    %v125 = vld [vmem:[%s1 + $0x120] sm:$0xf]
    %v126 = vld [vmem:[%s1 + $0x124] sm:$0xf]
    %v127 = vld [vmem:[%s1 + $0x128] sm:$0xf]
    %v128 = vld [vmem:[%s1 + $0x12c] sm:$0xf]
    %v129 = vld [vmem:[%s1 + $0x130] sm:$0xf]
    %v130 = vld [vmem:[%s1 + $0x134] sm:$0xf]
    %v131 = vld [vmem:[%s1 + $0x138] sm:$0xf]
    %v132 = vld [vmem:[%s1 + $0x13c] sm:$0xf]
    %v133 = vld [vmem:[%s1 + $0x140] sm:$0xf]
    %v134 = vld [vmem:[%s1 + $0x144] sm:$0xf]
    %v135 = vld [vmem:[%s1 + $0x148] sm:$0xf]
    %v136 = vld [vmem:[%s1 + $0x14c] sm:$0xf]
    %v137 = vld [vmem:[%s1 + $0x150] sm:$0xf]
    %v138 = vld [vmem:[%s1 + $0x154] sm:$0xf]
    %v139 = vld [vmem:[%s1 + $0x158] sm:$0xf]
    %v140 = vld [vmem:[%s1 + $0x15c] sm:$0xf]
    %v141 = vld [vmem:[%s1 + $0x160] sm:$0xf]
    %v142 = vld [vmem:[%s1 + $0x164] sm:$0xf]
    %v143 = vld [vmem:[%s1 + $0x168] sm:$0xf]
    %v144 = vld [vmem:[%s1 + $0x16c] sm:$0xf]
    %v145 = vld [vmem:[%s1 + $0x170] sm:$0xf]
    %v146 = vld [vmem:[%s1 + $0x174] sm:$0xf]
    %v147 = vld [vmem:[%s1 + $0x178] sm:$0xf]
    %v148 = vld [vmem:[%s1 + $0x17c] sm:$0xf]
    %v149 = vld [vmem:[%s1 + $0x180] sm:$0xf]
    %v150 = vld [vmem:[%s1 + $0x184] sm:$0xf]
    %v151 = vld [vmem:[%s1 + $0x188] sm:$0xf]
    %v152 = vld [vmem:[%s1 + $0x18c] sm:$0xf]
    %v153 = vld [vmem:[%s1 + $0x190] sm:$0xf]
    %v154 = vld [vmem:[%s1 + $0x194] sm:$0xf]
    %v155 = vld [vmem:[%s1 + $0x198] sm:$0xf]
    %v156 = vld [vmem:[%s1 + $0x19c] sm:$0xf]
    %v157 = vld [vmem:[%s1 + $0x1a0] sm:$0xf]
    %v158 = vld [vmem:[%s1 + $0x1a4] sm:$0xf]
    %v159 = vld [vmem:[%s1 + $0x1a8] sm:$0xf]
    %v160 = vld [vmem:[%s1 + $0x1ac] sm:$0xf]
    %v161 = vld [vmem:[%s1 + $0x1b0] sm:$0xf]
    %v162 = vld [vmem:[%s1 + $0x1b4] sm:$0xf]
    %v163 = vld [vmem:[%s1 + $0x1b8] sm:$0xf]
    %v164 = vld [vmem:[%s1 + $0x1bc] sm:$0xf]
    %v165 = vld [vmem:[%s1 + $0x1c0] sm:$0xf]
    %v166 = vld [vmem:[%s1 + $0x1c4] sm:$0xf]
    %v167 = vld [vmem:[%s1 + $0x1c8] sm:$0xf]
    %v168 = vld [vmem:[%s1 + $0x1cc] sm:$0xf]
    %v169 = vld [vmem:[%s1 + $0x1d0] sm:$0xf]
    %v170 = vld [vmem:[%s1 + $0x1d4] sm:$0xf]
    %v171 = vld [vmem:[%s1 + $0x1d8] sm:$0xf]
    %v172 = vld [vmem:[%s1 + $0x1dc] sm:$0xf]
    %v173 = vld [vmem:[%s1 + $0x1e0] sm:$0xf]
    %v174 = vld [vmem:[%s1 + $0x1e4] sm:$0xf]
    %v175 = vld [vmem:[%s1 + $0x1e8] sm:$0xf]
    %v176 = vld [vmem:[%s1 + $0x1ec] sm:$0xf]
    %v177 = vld [vmem:[%s1 + $0x1f0] sm:$0xf]
    %v178 = vld [vmem:[%s1 + $0x1f4] sm:$0xf]
    %v179 = vld [vmem:[%s1 + $0x1f8] sm:$0xf]
    %v180 = vld [vmem:[%s1 + $0x1fc] sm:$0xf]
    %182 = vset.pattern.permute.xlu0 0
    %183 = vperm.xlu0 %182, %v53
    %v184 = vpop.permute.xlu0 %183
    %v187 = vunpack.c.l.s4 839922192
    %v188 = vunpack.c.0.s8 %v187
    %v189 = vlaneseq
    %v190 = vshrl.u32 %v189, 7
    %v191 = vsub.s32 %v188, %v190
    %v192 = vrot.slane %v184, %v191
    %194 = vset.pattern.permute.xlu0 0
    %195 = vperm.xlu0 %194, %v54
    %v196 = vpop.permute.xlu0 %195
    %v199 = vunpack.c.l.s4 839922192
    %v200 = vunpack.c.0.s8 %v199
    %v201 = vlaneseq
    %v202 = vshrl.u32 %v201, 7
    %v203 = vsub.s32 %v200, %v202
    %v204 = vrot.slane %v196, %v203
    %206 = vset.pattern.permute.xlu0 0
    %207 = vperm.xlu0 %206, %v55
    %v208 = vpop.permute.xlu0 %207
    %v211 = vunpack.c.l.s4 839922192
    %v212 = vunpack.c.0.s8 %v211
    %v213 = vlaneseq
    %v214 = vshrl.u32 %v213, 7
    %v215 = vsub.s32 %v212, %v214
    %v216 = vrot.slane %v208, %v215
    %218 = vset.pattern.permute.xlu0 0
    %219 = vperm.xlu0 %218, %v56
    %v220 = vpop.permute.xlu0 %219
    %v223 = vunpack.c.l.s4 839922192
    %v224 = vunpack.c.0.s8 %v223
    %v225 = vlaneseq
    %v226 = vshrl.u32 %v225, 7
    %v227 = vsub.s32 %v224, %v226
    %v228 = vrot.slane %v220, %v227
    %230 = vset.pattern.permute.xlu0 0
    %231 = vperm.xlu0 %230, %v57
    %v232 = vpop.permute.xlu0 %231
    %v235 = vunpack.c.l.s4 839922192
    %v236 = vunpack.c.0.s8 %v235
    %v237 = vlaneseq
    %v238 = vshrl.u32 %v237, 7
    %v239 = vsub.s32 %v236, %v238
    %v240 = vrot.slane %v232, %v239
    %242 = vset.pattern.permute.xlu0 0
    %243 = vperm.xlu0 %242, %v58
    %v244 = vpop.permute.xlu0 %243
    %v247 = vunpack.c.l.s4 839922192
    %v248 = vunpack.c.0.s8 %v247
    %v249 = vlaneseq
    %v250 = vshrl.u32 %v249, 7
    %v251 = vsub.s32 %v248, %v250
    %v252 = vrot.slane %v244, %v251
    %254 = vset.pattern.permute.xlu0 0
    %255 = vperm.xlu0 %254, %v59
    %v256 = vpop.permute.xlu0 %255
    %v259 = vunpack.c.l.s4 839922192
    %v260 = vunpack.c.0.s8 %v259
    %v261 = vlaneseq
    %v262 = vshrl.u32 %v261, 7
    %v263 = vsub.s32 %v260, %v262
    %v264 = vrot.slane %v256, %v263
    %266 = vset.pattern.permute.xlu0 0
    %267 = vperm.xlu0 %266, %v60
    %v268 = vpop.permute.xlu0 %267
    %v271 = vunpack.c.l.s4 839922192
    %v272 = vunpack.c.0.s8 %v271
    %v273 = vlaneseq
    %v274 = vshrl.u32 %v273, 7
    %v275 = vsub.s32 %v272, %v274
    %v276 = vrot.slane %v268, %v275
    %278 = vset.pattern.permute.xlu0 0
    %279 = vperm.xlu0 %278, %v61
    %v280 = vpop.permute.xlu0 %279
    %v283 = vunpack.c.l.s4 839922192
    %v284 = vunpack.c.0.s8 %v283
    %v285 = vlaneseq
    %v286 = vshrl.u32 %v285, 7
    %v287 = vsub.s32 %v284, %v286
    %v288 = vrot.slane %v280, %v287
    %290 = vset.pattern.permute.xlu0 0
    %291 = vperm.xlu0 %290, %v62
    %v292 = vpop.permute.xlu0 %291
    %v295 = vunpack.c.l.s4 839922192
    %v296 = vunpack.c.0.s8 %v295
    %v297 = vlaneseq
    %v298 = vshrl.u32 %v297, 7
    %v299 = vsub.s32 %v296, %v298
    %v300 = vrot.slane %v292, %v299
    %302 = vset.pattern.permute.xlu0 0
    %303 = vperm.xlu0 %302, %v63
    %v304 = vpop.permute.xlu0 %303
    %v307 = vunpack.c.l.s4 839922192
    %v308 = vunpack.c.0.s8 %v307
    %v309 = vlaneseq
    %v310 = vshrl.u32 %v309, 7
    %v311 = vsub.s32 %v308, %v310
    %v312 = vrot.slane %v304, %v311
    %314 = vset.pattern.permute.xlu0 0
    %315 = vperm.xlu0 %314, %v64
    %v316 = vpop.permute.xlu0 %315
    %v319 = vunpack.c.l.s4 839922192
    %v320 = vunpack.c.0.s8 %v319
    %v321 = vlaneseq
    %v322 = vshrl.u32 %v321, 7
    %v323 = vsub.s32 %v320, %v322
    %v324 = vrot.slane %v316, %v323
    %326 = vset.pattern.permute.xlu0 0
    %327 = vperm.xlu0 %326, %v65
    %v328 = vpop.permute.xlu0 %327
    %v331 = vunpack.c.l.s4 839922192
    %v332 = vunpack.c.0.s8 %v331
    %v333 = vlaneseq
    %v334 = vshrl.u32 %v333, 7
    %v335 = vsub.s32 %v332, %v334
    %v336 = vrot.slane %v328, %v335
    %338 = vset.pattern.permute.xlu0 0
    %339 = vperm.xlu0 %338, %v66
    %v340 = vpop.permute.xlu0 %339
    %v343 = vunpack.c.l.s4 839922192
    %v344 = vunpack.c.0.s8 %v343
    %v345 = vlaneseq
    %v346 = vshrl.u32 %v345, 7
    %v347 = vsub.s32 %v344, %v346
    %v348 = vrot.slane %v340, %v347
    %350 = vset.pattern.permute.xlu0 0
    %351 = vperm.xlu0 %350, %v67
    %v352 = vpop.permute.xlu0 %351
    %v355 = vunpack.c.l.s4 839922192
    %v356 = vunpack.c.0.s8 %v355
    %v357 = vlaneseq
    %v358 = vshrl.u32 %v357, 7
    %v359 = vsub.s32 %v356, %v358
    %v360 = vrot.slane %v352, %v359
    %362 = vset.pattern.permute.xlu0 0
    %363 = vperm.xlu0 %362, %v68
    %v364 = vpop.permute.xlu0 %363
    %v367 = vunpack.c.l.s4 839922192
    %v368 = vunpack.c.0.s8 %v367
    %v369 = vlaneseq
    %v370 = vshrl.u32 %v369, 7
    %v371 = vsub.s32 %v368, %v370
    %v372 = vrot.slane %v364, %v371
    %374 = vset.pattern.permute.xlu0 0
    %375 = vperm.xlu0 %374, %v69
    %v376 = vpop.permute.xlu0 %375
    %v379 = vunpack.c.l.s4 839922192
    %v380 = vunpack.c.0.s8 %v379
    %v381 = vlaneseq
    %v382 = vshrl.u32 %v381, 7
    %v383 = vsub.s32 %v380, %v382
    %v384 = vrot.slane %v376, %v383
    %386 = vset.pattern.permute.xlu0 0
    %387 = vperm.xlu0 %386, %v70
    %v388 = vpop.permute.xlu0 %387
    %v391 = vunpack.c.l.s4 839922192
    %v392 = vunpack.c.0.s8 %v391
    %v393 = vlaneseq
    %v394 = vshrl.u32 %v393, 7
    %v395 = vsub.s32 %v392, %v394
    %v396 = vrot.slane %v388, %v395
    %398 = vset.pattern.permute.xlu0 0
    %399 = vperm.xlu0 %398, %v71
    %v400 = vpop.permute.xlu0 %399
    %v403 = vunpack.c.l.s4 839922192
    %v404 = vunpack.c.0.s8 %v403
    %v405 = vlaneseq
    %v406 = vshrl.u32 %v405, 7
    %v407 = vsub.s32 %v404, %v406
    %v408 = vrot.slane %v400, %v407
    %410 = vset.pattern.permute.xlu0 0
    %411 = vperm.xlu0 %410, %v72
    %v412 = vpop.permute.xlu0 %411
    %v415 = vunpack.c.l.s4 839922192
    %v416 = vunpack.c.0.s8 %v415
    %v417 = vlaneseq
    %v418 = vshrl.u32 %v417, 7
    %v419 = vsub.s32 %v416, %v418
    %v420 = vrot.slane %v412, %v419
    %422 = vset.pattern.permute.xlu0 0
    %423 = vperm.xlu0 %422, %v73
    %v424 = vpop.permute.xlu0 %423
    %v427 = vunpack.c.l.s4 839922192
    %v428 = vunpack.c.0.s8 %v427
    %v429 = vlaneseq
    %v430 = vshrl.u32 %v429, 7
    %v431 = vsub.s32 %v428, %v430
    %v432 = vrot.slane %v424, %v431
    %434 = vset.pattern.permute.xlu0 0
    %435 = vperm.xlu0 %434, %v74
    %v436 = vpop.permute.xlu0 %435
    %v439 = vunpack.c.l.s4 839922192
    %v440 = vunpack.c.0.s8 %v439
    %v441 = vlaneseq
    %v442 = vshrl.u32 %v441, 7
    %v443 = vsub.s32 %v440, %v442
    %v444 = vrot.slane %v436, %v443
    %446 = vset.pattern.permute.xlu0 0
    %447 = vperm.xlu0 %446, %v75
    %v448 = vpop.permute.xlu0 %447
    %v451 = vunpack.c.l.s4 839922192
    %v452 = vunpack.c.0.s8 %v451
    %v453 = vlaneseq
    %v454 = vshrl.u32 %v453, 7
    %v455 = vsub.s32 %v452, %v454
    %v456 = vrot.slane %v448, %v455
    %458 = vset.pattern.permute.xlu0 0
    %459 = vperm.xlu0 %458, %v76
    %v460 = vpop.permute.xlu0 %459
    %v463 = vunpack.c.l.s4 839922192
    %v464 = vunpack.c.0.s8 %v463
    %v465 = vlaneseq
    %v466 = vshrl.u32 %v465, 7
    %v467 = vsub.s32 %v464, %v466
    %v468 = vrot.slane %v460, %v467
    %470 = vset.pattern.permute.xlu0 0
    %471 = vperm.xlu0 %470, %v77
    %v472 = vpop.permute.xlu0 %471
    %v475 = vunpack.c.l.s4 839922192
    %v476 = vunpack.c.0.s8 %v475
    %v477 = vlaneseq
    %v478 = vshrl.u32 %v477, 7
    %v479 = vsub.s32 %v476, %v478
    %v480 = vrot.slane %v472, %v479
    %482 = vset.pattern.permute.xlu0 0
    %483 = vperm.xlu0 %482, %v78
    %v484 = vpop.permute.xlu0 %483
    %v487 = vunpack.c.l.s4 839922192
    %v488 = vunpack.c.0.s8 %v487
    %v489 = vlaneseq
    %v490 = vshrl.u32 %v489, 7
    %v491 = vsub.s32 %v488, %v490
    %v492 = vrot.slane %v484, %v491
    %494 = vset.pattern.permute.xlu0 0
    %495 = vperm.xlu0 %494, %v79
    %v496 = vpop.permute.xlu0 %495
    %v499 = vunpack.c.l.s4 839922192
    %v500 = vunpack.c.0.s8 %v499
    %v501 = vlaneseq
    %v502 = vshrl.u32 %v501, 7
    %v503 = vsub.s32 %v500, %v502
    %v504 = vrot.slane %v496, %v503
    %506 = vset.pattern.permute.xlu0 0
    %507 = vperm.xlu0 %506, %v80
    %v508 = vpop.permute.xlu0 %507
    %v511 = vunpack.c.l.s4 839922192
    %v512 = vunpack.c.0.s8 %v511
    %v513 = vlaneseq
    %v514 = vshrl.u32 %v513, 7
    %v515 = vsub.s32 %v512, %v514
    %v516 = vrot.slane %v508, %v515
    %518 = vset.pattern.permute.xlu0 0
    %519 = vperm.xlu0 %518, %v81
    %v520 = vpop.permute.xlu0 %519
    %v523 = vunpack.c.l.s4 839922192
    %v524 = vunpack.c.0.s8 %v523
    %v525 = vlaneseq
    %v526 = vshrl.u32 %v525, 7
    %v527 = vsub.s32 %v524, %v526
    %v528 = vrot.slane %v520, %v527
    %530 = vset.pattern.permute.xlu0 0
    %531 = vperm.xlu0 %530, %v82
    %v532 = vpop.permute.xlu0 %531
    %v535 = vunpack.c.l.s4 839922192
    %v536 = vunpack.c.0.s8 %v535
    %v537 = vlaneseq
    %v538 = vshrl.u32 %v537, 7
    %v539 = vsub.s32 %v536, %v538
    %v540 = vrot.slane %v532, %v539
    %542 = vset.pattern.permute.xlu0 0
    %543 = vperm.xlu0 %542, %v83
    %v544 = vpop.permute.xlu0 %543
    %v547 = vunpack.c.l.s4 839922192
    %v548 = vunpack.c.0.s8 %v547
    %v549 = vlaneseq
    %v550 = vshrl.u32 %v549, 7
    %v551 = vsub.s32 %v548, %v550
    %v552 = vrot.slane %v544, %v551
    %554 = vset.pattern.permute.xlu0 0
    %555 = vperm.xlu0 %554, %v84
    %v556 = vpop.permute.xlu0 %555
    %v559 = vunpack.c.l.s4 839922192
    %v560 = vunpack.c.0.s8 %v559
    %v561 = vlaneseq
    %v562 = vshrl.u32 %v561, 7
    %v563 = vsub.s32 %v560, %v562
    %v564 = vrot.slane %v556, %v563
    %566 = vset.pattern.permute.xlu0 0
    %567 = vperm.xlu0 %566, %v85
    %v568 = vpop.permute.xlu0 %567
    %v571 = vunpack.c.l.s4 839922192
    %v572 = vunpack.c.0.s8 %v571
    %v573 = vlaneseq
    %v574 = vshrl.u32 %v573, 7
    %v575 = vsub.s32 %v572, %v574
    %v576 = vrot.slane %v568, %v575
    %578 = vset.pattern.permute.xlu0 0
    %579 = vperm.xlu0 %578, %v86
    %v580 = vpop.permute.xlu0 %579
    %v583 = vunpack.c.l.s4 839922192
    %v584 = vunpack.c.0.s8 %v583
    %v585 = vlaneseq
    %v586 = vshrl.u32 %v585, 7
    %v587 = vsub.s32 %v584, %v586
    %v588 = vrot.slane %v580, %v587
    %590 = vset.pattern.permute.xlu0 0
    %591 = vperm.xlu0 %590, %v87
    %v592 = vpop.permute.xlu0 %591
    %v595 = vunpack.c.l.s4 839922192
    %v596 = vunpack.c.0.s8 %v595
    %v597 = vlaneseq
    %v598 = vshrl.u32 %v597, 7
    %v599 = vsub.s32 %v596, %v598
    %v600 = vrot.slane %v592, %v599
    %602 = vset.pattern.permute.xlu0 0
    %603 = vperm.xlu0 %602, %v88
    %v604 = vpop.permute.xlu0 %603
    %v607 = vunpack.c.l.s4 839922192
    %v608 = vunpack.c.0.s8 %v607
    %v609 = vlaneseq
    %v610 = vshrl.u32 %v609, 7
    %v611 = vsub.s32 %v608, %v610
    %v612 = vrot.slane %v604, %v611
    %614 = vset.pattern.permute.xlu0 0
    %615 = vperm.xlu0 %614, %v89
    %v616 = vpop.permute.xlu0 %615
    %v619 = vunpack.c.l.s4 839922192
    %v620 = vunpack.c.0.s8 %v619
    %v621 = vlaneseq
    %v622 = vshrl.u32 %v621, 7
    %v623 = vsub.s32 %v620, %v622
    %v624 = vrot.slane %v616, %v623
    %626 = vset.pattern.permute.xlu0 0
    %627 = vperm.xlu0 %626, %v90
    %v628 = vpop.permute.xlu0 %627
    %v631 = vunpack.c.l.s4 839922192
    %v632 = vunpack.c.0.s8 %v631
    %v633 = vlaneseq
    %v634 = vshrl.u32 %v633, 7
    %v635 = vsub.s32 %v632, %v634
    %v636 = vrot.slane %v628, %v635
    %638 = vset.pattern.permute.xlu0 0
    %639 = vperm.xlu0 %638, %v91
    %v640 = vpop.permute.xlu0 %639
    %v643 = vunpack.c.l.s4 839922192
    %v644 = vunpack.c.0.s8 %v643
    %v645 = vlaneseq
    %v646 = vshrl.u32 %v645, 7
    %v647 = vsub.s32 %v644, %v646
    %v648 = vrot.slane %v640, %v647
    %650 = vset.pattern.permute.xlu0 0
    %651 = vperm.xlu0 %650, %v92
    %v652 = vpop.permute.xlu0 %651
    %v655 = vunpack.c.l.s4 839922192
    %v656 = vunpack.c.0.s8 %v655
    %v657 = vlaneseq
    %v658 = vshrl.u32 %v657, 7
    %v659 = vsub.s32 %v656, %v658
    %v660 = vrot.slane %v652, %v659
    %662 = vset.pattern.permute.xlu0 0
    %663 = vperm.xlu0 %662, %v93
    %v664 = vpop.permute.xlu0 %663
    %v667 = vunpack.c.l.s4 839922192
    %v668 = vunpack.c.0.s8 %v667
    %v669 = vlaneseq
    %v670 = vshrl.u32 %v669, 7
    %v671 = vsub.s32 %v668, %v670
    %v672 = vrot.slane %v664, %v671
    %674 = vset.pattern.permute.xlu0 0
    %675 = vperm.xlu0 %674, %v94
    %v676 = vpop.permute.xlu0 %675
    %v679 = vunpack.c.l.s4 839922192
    %v680 = vunpack.c.0.s8 %v679
    %v681 = vlaneseq
    %v682 = vshrl.u32 %v681, 7
    %v683 = vsub.s32 %v680, %v682
    %v684 = vrot.slane %v676, %v683
    %686 = vset.pattern.permute.xlu0 0
    %687 = vperm.xlu0 %686, %v95
    %v688 = vpop.permute.xlu0 %687
    %v691 = vunpack.c.l.s4 839922192
    %v692 = vunpack.c.0.s8 %v691
    %v693 = vlaneseq
    %v694 = vshrl.u32 %v693, 7
    %v695 = vsub.s32 %v692, %v694
    %v696 = vrot.slane %v688, %v695
    %698 = vset.pattern.permute.xlu0 0
    %699 = vperm.xlu0 %698, %v96
    %v700 = vpop.permute.xlu0 %699
    %v703 = vunpack.c.l.s4 839922192
    %v704 = vunpack.c.0.s8 %v703
    %v705 = vlaneseq
    %v706 = vshrl.u32 %v705, 7
    %v707 = vsub.s32 %v704, %v706
    %v708 = vrot.slane %v700, %v707
    %710 = vset.pattern.permute.xlu0 0
    %711 = vperm.xlu0 %710, %v97
    %v712 = vpop.permute.xlu0 %711
    %v715 = vunpack.c.l.s4 839922192
    %v716 = vunpack.c.0.s8 %v715
    %v717 = vlaneseq
    %v718 = vshrl.u32 %v717, 7
    %v719 = vsub.s32 %v716, %v718
    %v720 = vrot.slane %v712, %v719
    %722 = vset.pattern.permute.xlu0 0
    %723 = vperm.xlu0 %722, %v98
    %v724 = vpop.permute.xlu0 %723
    %v727 = vunpack.c.l.s4 839922192
    %v728 = vunpack.c.0.s8 %v727
    %v729 = vlaneseq
    %v730 = vshrl.u32 %v729, 7
    %v731 = vsub.s32 %v728, %v730
    %v732 = vrot.slane %v724, %v731
    %734 = vset.pattern.permute.xlu0 0
    %735 = vperm.xlu0 %734, %v99
    %v736 = vpop.permute.xlu0 %735
    %v739 = vunpack.c.l.s4 839922192
    %v740 = vunpack.c.0.s8 %v739
    %v741 = vlaneseq
    %v742 = vshrl.u32 %v741, 7
    %v743 = vsub.s32 %v740, %v742
    %v744 = vrot.slane %v736, %v743
    %746 = vset.pattern.permute.xlu0 0
    %747 = vperm.xlu0 %746, %v100
    %v748 = vpop.permute.xlu0 %747
    %v751 = vunpack.c.l.s4 839922192
    %v752 = vunpack.c.0.s8 %v751
    %v753 = vlaneseq
    %v754 = vshrl.u32 %v753, 7
    %v755 = vsub.s32 %v752, %v754
    %v756 = vrot.slane %v748, %v755
    %758 = vset.pattern.permute.xlu0 0
    %759 = vperm.xlu0 %758, %v101
    %v760 = vpop.permute.xlu0 %759
    %v763 = vunpack.c.l.s4 839922192
    %v764 = vunpack.c.0.s8 %v763
    %v765 = vlaneseq
    %v766 = vshrl.u32 %v765, 7
    %v767 = vsub.s32 %v764, %v766
    %v768 = vrot.slane %v760, %v767
    %770 = vset.pattern.permute.xlu0 0
    %771 = vperm.xlu0 %770, %v102
    %v772 = vpop.permute.xlu0 %771
    %v775 = vunpack.c.l.s4 839922192
    %v776 = vunpack.c.0.s8 %v775
    %v777 = vlaneseq
    %v778 = vshrl.u32 %v777, 7
    %v779 = vsub.s32 %v776, %v778
    %v780 = vrot.slane %v772, %v779
    %782 = vset.pattern.permute.xlu0 0
    %783 = vperm.xlu0 %782, %v103
    %v784 = vpop.permute.xlu0 %783
    %v787 = vunpack.c.l.s4 839922192
    %v788 = vunpack.c.0.s8 %v787
    %v789 = vlaneseq
    %v790 = vshrl.u32 %v789, 7
    %v791 = vsub.s32 %v788, %v790
    %v792 = vrot.slane %v784, %v791
    %794 = vset.pattern.permute.xlu0 0
    %795 = vperm.xlu0 %794, %v104
    %v796 = vpop.permute.xlu0 %795
    %v799 = vunpack.c.l.s4 839922192
    %v800 = vunpack.c.0.s8 %v799
    %v801 = vlaneseq
    %v802 = vshrl.u32 %v801, 7
    %v803 = vsub.s32 %v800, %v802
    %v804 = vrot.slane %v796, %v803
    %806 = vset.pattern.permute.xlu0 0
    %807 = vperm.xlu0 %806, %v105
    %v808 = vpop.permute.xlu0 %807
    %v811 = vunpack.c.l.s4 839922192
    %v812 = vunpack.c.0.s8 %v811
    %v813 = vlaneseq
    %v814 = vshrl.u32 %v813, 7
    %v815 = vsub.s32 %v812, %v814
    %v816 = vrot.slane %v808, %v815
    %818 = vset.pattern.permute.xlu0 0
    %819 = vperm.xlu0 %818, %v106
    %v820 = vpop.permute.xlu0 %819
    %v823 = vunpack.c.l.s4 839922192
    %v824 = vunpack.c.0.s8 %v823
    %v825 = vlaneseq
    %v826 = vshrl.u32 %v825, 7
    %v827 = vsub.s32 %v824, %v826
    %v828 = vrot.slane %v820, %v827
    %830 = vset.pattern.permute.xlu0 0
    %831 = vperm.xlu0 %830, %v107
    %v832 = vpop.permute.xlu0 %831
    %v835 = vunpack.c.l.s4 839922192
    %v836 = vunpack.c.0.s8 %v835
    %v837 = vlaneseq
    %v838 = vshrl.u32 %v837, 7
    %v839 = vsub.s32 %v836, %v838
    %v840 = vrot.slane %v832, %v839
    %842 = vset.pattern.permute.xlu0 0
    %843 = vperm.xlu0 %842, %v108
    %v844 = vpop.permute.xlu0 %843
    %v847 = vunpack.c.l.s4 839922192
    %v848 = vunpack.c.0.s8 %v847
    %v849 = vlaneseq
    %v850 = vshrl.u32 %v849, 7
    %v851 = vsub.s32 %v848, %v850
    %v852 = vrot.slane %v844, %v851
    %854 = vset.pattern.permute.xlu0 0
    %855 = vperm.xlu0 %854, %v109
    %v856 = vpop.permute.xlu0 %855
    %v859 = vunpack.c.l.s4 839922192
    %v860 = vunpack.c.0.s8 %v859
    %v861 = vlaneseq
    %v862 = vshrl.u32 %v861, 7
    %v863 = vsub.s32 %v860, %v862
    %v864 = vrot.slane %v856, %v863
    %866 = vset.pattern.permute.xlu0 0
    %867 = vperm.xlu0 %866, %v110
    %v868 = vpop.permute.xlu0 %867
    %v871 = vunpack.c.l.s4 839922192
    %v872 = vunpack.c.0.s8 %v871
    %v873 = vlaneseq
    %v874 = vshrl.u32 %v873, 7
    %v875 = vsub.s32 %v872, %v874
    %v876 = vrot.slane %v868, %v875
    %878 = vset.pattern.permute.xlu0 0
    %879 = vperm.xlu0 %878, %v111
    %v880 = vpop.permute.xlu0 %879
    %v883 = vunpack.c.l.s4 839922192
    %v884 = vunpack.c.0.s8 %v883
    %v885 = vlaneseq
    %v886 = vshrl.u32 %v885, 7
    %v887 = vsub.s32 %v884, %v886
    %v888 = vrot.slane %v880, %v887
    %890 = vset.pattern.permute.xlu0 0
    %891 = vperm.xlu0 %890, %v112
    %v892 = vpop.permute.xlu0 %891
    %v895 = vunpack.c.l.s4 839922192
    %v896 = vunpack.c.0.s8 %v895
    %v897 = vlaneseq
    %v898 = vshrl.u32 %v897, 7
    %v899 = vsub.s32 %v896, %v898
    %v900 = vrot.slane %v892, %v899
    %902 = vset.pattern.permute.xlu0 0
    %903 = vperm.xlu0 %902, %v113
    %v904 = vpop.permute.xlu0 %903
    %v907 = vunpack.c.l.s4 839922192
    %v908 = vunpack.c.0.s8 %v907
    %v909 = vlaneseq
    %v910 = vshrl.u32 %v909, 7
    %v911 = vsub.s32 %v908, %v910
    %v912 = vrot.slane %v904, %v911
    %914 = vset.pattern.permute.xlu0 0
    %915 = vperm.xlu0 %914, %v114
    %v916 = vpop.permute.xlu0 %915
    %v919 = vunpack.c.l.s4 839922192
    %v920 = vunpack.c.0.s8 %v919
    %v921 = vlaneseq
    %v922 = vshrl.u32 %v921, 7
    %v923 = vsub.s32 %v920, %v922
    %v924 = vrot.slane %v916, %v923
    %926 = vset.pattern.permute.xlu0 0
    %927 = vperm.xlu0 %926, %v115
    %v928 = vpop.permute.xlu0 %927
    %v931 = vunpack.c.l.s4 839922192
    %v932 = vunpack.c.0.s8 %v931
    %v933 = vlaneseq
    %v934 = vshrl.u32 %v933, 7
    %v935 = vsub.s32 %v932, %v934
    %v936 = vrot.slane %v928, %v935
    %938 = vset.pattern.permute.xlu0 0
    %939 = vperm.xlu0 %938, %v116
    %v940 = vpop.permute.xlu0 %939
    %v943 = vunpack.c.l.s4 839922192
    %v944 = vunpack.c.0.s8 %v943
    %v945 = vlaneseq
    %v946 = vshrl.u32 %v945, 7
    %v947 = vsub.s32 %v944, %v946
    %v948 = vrot.slane %v940, %v947
    %950 = vset.pattern.permute.xlu0 0
    %951 = vperm.xlu0 %950, %v117
    %v952 = vpop.permute.xlu0 %951
    %v955 = vunpack.c.l.s4 839922192
    %v956 = vunpack.c.0.s8 %v955
    %v957 = vlaneseq
    %v958 = vshrl.u32 %v957, 7
    %v959 = vsub.s32 %v956, %v958
    %v960 = vrot.slane %v952, %v959
    %962 = vset.pattern.permute.xlu0 0
    %963 = vperm.xlu0 %962, %v118
    %v964 = vpop.permute.xlu0 %963
    %v967 = vunpack.c.l.s4 839922192
    %v968 = vunpack.c.0.s8 %v967
    %v969 = vlaneseq
    %v970 = vshrl.u32 %v969, 7
    %v971 = vsub.s32 %v968, %v970
    %v972 = vrot.slane %v964, %v971
    %974 = vset.pattern.permute.xlu0 0
    %975 = vperm.xlu0 %974, %v119
    %v976 = vpop.permute.xlu0 %975
    %v979 = vunpack.c.l.s4 839922192
    %v980 = vunpack.c.0.s8 %v979
    %v981 = vlaneseq
    %v982 = vshrl.u32 %v981, 7
    %v983 = vsub.s32 %v980, %v982
    %v984 = vrot.slane %v976, %v983
    %986 = vset.pattern.permute.xlu0 0
    %987 = vperm.xlu0 %986, %v120
    %v988 = vpop.permute.xlu0 %987
    %v991 = vunpack.c.l.s4 839922192
    %v992 = vunpack.c.0.s8 %v991
    %v993 = vlaneseq
    %v994 = vshrl.u32 %v993, 7
    %v995 = vsub.s32 %v992, %v994
    %v996 = vrot.slane %v988, %v995
    %998 = vset.pattern.permute.xlu0 0
    %999 = vperm.xlu0 %998, %v121
    %v1000 = vpop.permute.xlu0 %999
    %v1003 = vunpack.c.l.s4 839922192
    %v1004 = vunpack.c.0.s8 %v1003
    %v1005 = vlaneseq
    %v1006 = vshrl.u32 %v1005, 7
    %v1007 = vsub.s32 %v1004, %v1006
    %v1008 = vrot.slane %v1000, %v1007
    %1010 = vset.pattern.permute.xlu0 0
    %1011 = vperm.xlu0 %1010, %v122
    %v1012 = vpop.permute.xlu0 %1011
    %v1015 = vunpack.c.l.s4 839922192
    %v1016 = vunpack.c.0.s8 %v1015
    %v1017 = vlaneseq
    %v1018 = vshrl.u32 %v1017, 7
    %v1019 = vsub.s32 %v1016, %v1018
    %v1020 = vrot.slane %v1012, %v1019
    %1022 = vset.pattern.permute.xlu0 0
    %1023 = vperm.xlu0 %1022, %v123
    %v1024 = vpop.permute.xlu0 %1023
    %v1027 = vunpack.c.l.s4 839922192
    %v1028 = vunpack.c.0.s8 %v1027
    %v1029 = vlaneseq
    %v1030 = vshrl.u32 %v1029, 7
    %v1031 = vsub.s32 %v1028, %v1030
    %v1032 = vrot.slane %v1024, %v1031
    %1034 = vset.pattern.permute.xlu0 0
    %1035 = vperm.xlu0 %1034, %v124
    %v1036 = vpop.permute.xlu0 %1035
    %v1039 = vunpack.c.l.s4 839922192
    %v1040 = vunpack.c.0.s8 %v1039
    %v1041 = vlaneseq
    %v1042 = vshrl.u32 %v1041, 7
    %v1043 = vsub.s32 %v1040, %v1042
    %v1044 = vrot.slane %v1036, %v1043
    %1046 = vset.pattern.permute.xlu0 0
    %1047 = vperm.xlu0 %1046, %v125
    %v1048 = vpop.permute.xlu0 %1047
    %v1051 = vunpack.c.l.s4 839922192
    %v1052 = vunpack.c.0.s8 %v1051
    %v1053 = vlaneseq
    %v1054 = vshrl.u32 %v1053, 7
    %v1055 = vsub.s32 %v1052, %v1054
    %v1056 = vrot.slane %v1048, %v1055
    %1058 = vset.pattern.permute.xlu0 0
    %1059 = vperm.xlu0 %1058, %v126
    %v1060 = vpop.permute.xlu0 %1059
    %v1063 = vunpack.c.l.s4 839922192
    %v1064 = vunpack.c.0.s8 %v1063
    %v1065 = vlaneseq
    %v1066 = vshrl.u32 %v1065, 7
    %v1067 = vsub.s32 %v1064, %v1066
    %v1068 = vrot.slane %v1060, %v1067
    %1070 = vset.pattern.permute.xlu0 0
    %1071 = vperm.xlu0 %1070, %v127
    %v1072 = vpop.permute.xlu0 %1071
    %v1075 = vunpack.c.l.s4 839922192
    %v1076 = vunpack.c.0.s8 %v1075
    %v1077 = vlaneseq
    %v1078 = vshrl.u32 %v1077, 7
    %v1079 = vsub.s32 %v1076, %v1078
    %v1080 = vrot.slane %v1072, %v1079
    %1082 = vset.pattern.permute.xlu0 0
    %1083 = vperm.xlu0 %1082, %v128
    %v1084 = vpop.permute.xlu0 %1083
    %v1087 = vunpack.c.l.s4 839922192
    %v1088 = vunpack.c.0.s8 %v1087
    %v1089 = vlaneseq
    %v1090 = vshrl.u32 %v1089, 7
    %v1091 = vsub.s32 %v1088, %v1090
    %v1092 = vrot.slane %v1084, %v1091
    %1094 = vset.pattern.permute.xlu0 0
    %1095 = vperm.xlu0 %1094, %v129
    %v1096 = vpop.permute.xlu0 %1095
    %v1099 = vunpack.c.l.s4 839922192
    %v1100 = vunpack.c.0.s8 %v1099
    %v1101 = vlaneseq
    %v1102 = vshrl.u32 %v1101, 7
    %v1103 = vsub.s32 %v1100, %v1102
    %v1104 = vrot.slane %v1096, %v1103
    %1106 = vset.pattern.permute.xlu0 0
    %1107 = vperm.xlu0 %1106, %v130
    %v1108 = vpop.permute.xlu0 %1107
    %v1111 = vunpack.c.l.s4 839922192
    %v1112 = vunpack.c.0.s8 %v1111
    %v1113 = vlaneseq
    %v1114 = vshrl.u32 %v1113, 7
    %v1115 = vsub.s32 %v1112, %v1114
    %v1116 = vrot.slane %v1108, %v1115
    %1118 = vset.pattern.permute.xlu0 0
    %1119 = vperm.xlu0 %1118, %v131
    %v1120 = vpop.permute.xlu0 %1119
    %v1123 = vunpack.c.l.s4 839922192
    %v1124 = vunpack.c.0.s8 %v1123
    %v1125 = vlaneseq
    %v1126 = vshrl.u32 %v1125, 7
    %v1127 = vsub.s32 %v1124, %v1126
    %v1128 = vrot.slane %v1120, %v1127
    %1130 = vset.pattern.permute.xlu0 0
    %1131 = vperm.xlu0 %1130, %v132
    %v1132 = vpop.permute.xlu0 %1131
    %v1135 = vunpack.c.l.s4 839922192
    %v1136 = vunpack.c.0.s8 %v1135
    %v1137 = vlaneseq
    %v1138 = vshrl.u32 %v1137, 7
    %v1139 = vsub.s32 %v1136, %v1138
    %v1140 = vrot.slane %v1132, %v1139
    %1142 = vset.pattern.permute.xlu0 0
    %1143 = vperm.xlu0 %1142, %v133
    %v1144 = vpop.permute.xlu0 %1143
    %v1147 = vunpack.c.l.s4 839922192
    %v1148 = vunpack.c.0.s8 %v1147
    %v1149 = vlaneseq
    %v1150 = vshrl.u32 %v1149, 7
    %v1151 = vsub.s32 %v1148, %v1150
    %v1152 = vrot.slane %v1144, %v1151
    %1154 = vset.pattern.permute.xlu0 0
    %1155 = vperm.xlu0 %1154, %v134
    %v1156 = vpop.permute.xlu0 %1155
    %v1159 = vunpack.c.l.s4 839922192
    %v1160 = vunpack.c.0.s8 %v1159
    %v1161 = vlaneseq
    %v1162 = vshrl.u32 %v1161, 7
    %v1163 = vsub.s32 %v1160, %v1162
    %v1164 = vrot.slane %v1156, %v1163
    %1166 = vset.pattern.permute.xlu0 0
    %1167 = vperm.xlu0 %1166, %v135
    %v1168 = vpop.permute.xlu0 %1167
    %v1171 = vunpack.c.l.s4 839922192
    %v1172 = vunpack.c.0.s8 %v1171
    %v1173 = vlaneseq
    %v1174 = vshrl.u32 %v1173, 7
    %v1175 = vsub.s32 %v1172, %v1174
    %v1176 = vrot.slane %v1168, %v1175
    %1178 = vset.pattern.permute.xlu0 0
    %1179 = vperm.xlu0 %1178, %v136
    %v1180 = vpop.permute.xlu0 %1179
    %v1183 = vunpack.c.l.s4 839922192
    %v1184 = vunpack.c.0.s8 %v1183
    %v1185 = vlaneseq
    %v1186 = vshrl.u32 %v1185, 7
    %v1187 = vsub.s32 %v1184, %v1186
    %v1188 = vrot.slane %v1180, %v1187
    %1190 = vset.pattern.permute.xlu0 0
    %1191 = vperm.xlu0 %1190, %v137
    %v1192 = vpop.permute.xlu0 %1191
    %v1195 = vunpack.c.l.s4 839922192
    %v1196 = vunpack.c.0.s8 %v1195
    %v1197 = vlaneseq
    %v1198 = vshrl.u32 %v1197, 7
    %v1199 = vsub.s32 %v1196, %v1198
    %v1200 = vrot.slane %v1192, %v1199
    %1202 = vset.pattern.permute.xlu0 0
    %1203 = vperm.xlu0 %1202, %v138
    %v1204 = vpop.permute.xlu0 %1203
    %v1207 = vunpack.c.l.s4 839922192
    %v1208 = vunpack.c.0.s8 %v1207
    %v1209 = vlaneseq
    %v1210 = vshrl.u32 %v1209, 7
    %v1211 = vsub.s32 %v1208, %v1210
    %v1212 = vrot.slane %v1204, %v1211
    %1214 = vset.pattern.permute.xlu0 0
    %1215 = vperm.xlu0 %1214, %v139
    %v1216 = vpop.permute.xlu0 %1215
    %v1219 = vunpack.c.l.s4 839922192
    %v1220 = vunpack.c.0.s8 %v1219
    %v1221 = vlaneseq
    %v1222 = vshrl.u32 %v1221, 7
    %v1223 = vsub.s32 %v1220, %v1222
    %v1224 = vrot.slane %v1216, %v1223
    %1226 = vset.pattern.permute.xlu0 0
    %1227 = vperm.xlu0 %1226, %v140
    %v1228 = vpop.permute.xlu0 %1227
    %v1231 = vunpack.c.l.s4 839922192
    %v1232 = vunpack.c.0.s8 %v1231
    %v1233 = vlaneseq
    %v1234 = vshrl.u32 %v1233, 7
    %v1235 = vsub.s32 %v1232, %v1234
    %v1236 = vrot.slane %v1228, %v1235
    %1238 = vset.pattern.permute.xlu0 0
    %1239 = vperm.xlu0 %1238, %v141
    %v1240 = vpop.permute.xlu0 %1239
    %v1243 = vunpack.c.l.s4 839922192
    %v1244 = vunpack.c.0.s8 %v1243
    %v1245 = vlaneseq
    %v1246 = vshrl.u32 %v1245, 7
    %v1247 = vsub.s32 %v1244, %v1246
    %v1248 = vrot.slane %v1240, %v1247
    %1250 = vset.pattern.permute.xlu0 0
    %1251 = vperm.xlu0 %1250, %v142
    %v1252 = vpop.permute.xlu0 %1251
    %v1255 = vunpack.c.l.s4 839922192
    %v1256 = vunpack.c.0.s8 %v1255
    %v1257 = vlaneseq
    %v1258 = vshrl.u32 %v1257, 7
    %v1259 = vsub.s32 %v1256, %v1258
    %v1260 = vrot.slane %v1252, %v1259
    %1262 = vset.pattern.permute.xlu0 0
    %1263 = vperm.xlu0 %1262, %v143
    %v1264 = vpop.permute.xlu0 %1263
    %v1267 = vunpack.c.l.s4 839922192
    %v1268 = vunpack.c.0.s8 %v1267
    %v1269 = vlaneseq
    %v1270 = vshrl.u32 %v1269, 7
    %v1271 = vsub.s32 %v1268, %v1270
    %v1272 = vrot.slane %v1264, %v1271
    %1274 = vset.pattern.permute.xlu0 0
    %1275 = vperm.xlu0 %1274, %v144
    %v1276 = vpop.permute.xlu0 %1275
    %v1279 = vunpack.c.l.s4 839922192
    %v1280 = vunpack.c.0.s8 %v1279
    %v1281 = vlaneseq
    %v1282 = vshrl.u32 %v1281, 7
    %v1283 = vsub.s32 %v1280, %v1282
    %v1284 = vrot.slane %v1276, %v1283
    %1286 = vset.pattern.permute.xlu0 0
    %1287 = vperm.xlu0 %1286, %v145
    %v1288 = vpop.permute.xlu0 %1287
    %v1291 = vunpack.c.l.s4 839922192
    %v1292 = vunpack.c.0.s8 %v1291
    %v1293 = vlaneseq
    %v1294 = vshrl.u32 %v1293, 7
    %v1295 = vsub.s32 %v1292, %v1294
    %v1296 = vrot.slane %v1288, %v1295
    %1298 = vset.pattern.permute.xlu0 0
    %1299 = vperm.xlu0 %1298, %v146
    %v1300 = vpop.permute.xlu0 %1299
    %v1303 = vunpack.c.l.s4 839922192
    %v1304 = vunpack.c.0.s8 %v1303
    %v1305 = vlaneseq
    %v1306 = vshrl.u32 %v1305, 7
    %v1307 = vsub.s32 %v1304, %v1306
    %v1308 = vrot.slane %v1300, %v1307
    %1310 = vset.pattern.permute.xlu0 0
    %1311 = vperm.xlu0 %1310, %v147
    %v1312 = vpop.permute.xlu0 %1311
    %v1315 = vunpack.c.l.s4 839922192
    %v1316 = vunpack.c.0.s8 %v1315
    %v1317 = vlaneseq
    %v1318 = vshrl.u32 %v1317, 7
    %v1319 = vsub.s32 %v1316, %v1318
    %v1320 = vrot.slane %v1312, %v1319
    %1322 = vset.pattern.permute.xlu0 0
    %1323 = vperm.xlu0 %1322, %v148
    %v1324 = vpop.permute.xlu0 %1323
    %v1327 = vunpack.c.l.s4 839922192
    %v1328 = vunpack.c.0.s8 %v1327
    %v1329 = vlaneseq
    %v1330 = vshrl.u32 %v1329, 7
    %v1331 = vsub.s32 %v1328, %v1330
    %v1332 = vrot.slane %v1324, %v1331
    %1334 = vset.pattern.permute.xlu0 0
    %1335 = vperm.xlu0 %1334, %v149
    %v1336 = vpop.permute.xlu0 %1335
    %v1339 = vunpack.c.l.s4 839922192
    %v1340 = vunpack.c.0.s8 %v1339
    %v1341 = vlaneseq
    %v1342 = vshrl.u32 %v1341, 7
    %v1343 = vsub.s32 %v1340, %v1342
    %v1344 = vrot.slane %v1336, %v1343
    %1346 = vset.pattern.permute.xlu0 0
    %1347 = vperm.xlu0 %1346, %v150
    %v1348 = vpop.permute.xlu0 %1347
    %v1351 = vunpack.c.l.s4 839922192
    %v1352 = vunpack.c.0.s8 %v1351
    %v1353 = vlaneseq
    %v1354 = vshrl.u32 %v1353, 7
    %v1355 = vsub.s32 %v1352, %v1354
    %v1356 = vrot.slane %v1348, %v1355
    %1358 = vset.pattern.permute.xlu0 0
    %1359 = vperm.xlu0 %1358, %v151
    %v1360 = vpop.permute.xlu0 %1359
    %v1363 = vunpack.c.l.s4 839922192
    %v1364 = vunpack.c.0.s8 %v1363
    %v1365 = vlaneseq
    %v1366 = vshrl.u32 %v1365, 7
    %v1367 = vsub.s32 %v1364, %v1366
    %v1368 = vrot.slane %v1360, %v1367
    %1370 = vset.pattern.permute.xlu0 0
    %1371 = vperm.xlu0 %1370, %v152
    %v1372 = vpop.permute.xlu0 %1371
    %v1375 = vunpack.c.l.s4 839922192
    %v1376 = vunpack.c.0.s8 %v1375
    %v1377 = vlaneseq
    %v1378 = vshrl.u32 %v1377, 7
    %v1379 = vsub.s32 %v1376, %v1378
    %v1380 = vrot.slane %v1372, %v1379
    %1382 = vset.pattern.permute.xlu0 0
    %1383 = vperm.xlu0 %1382, %v153
    %v1384 = vpop.permute.xlu0 %1383
    %v1387 = vunpack.c.l.s4 839922192
    %v1388 = vunpack.c.0.s8 %v1387
    %v1389 = vlaneseq
    %v1390 = vshrl.u32 %v1389, 7
    %v1391 = vsub.s32 %v1388, %v1390
    %v1392 = vrot.slane %v1384, %v1391
    %1394 = vset.pattern.permute.xlu0 0
    %1395 = vperm.xlu0 %1394, %v154
    %v1396 = vpop.permute.xlu0 %1395
    %v1399 = vunpack.c.l.s4 839922192
    %v1400 = vunpack.c.0.s8 %v1399
    %v1401 = vlaneseq
    %v1402 = vshrl.u32 %v1401, 7
    %v1403 = vsub.s32 %v1400, %v1402
    %v1404 = vrot.slane %v1396, %v1403
    %1406 = vset.pattern.permute.xlu0 0
    %1407 = vperm.xlu0 %1406, %v155
    %v1408 = vpop.permute.xlu0 %1407
    %v1411 = vunpack.c.l.s4 839922192
    %v1412 = vunpack.c.0.s8 %v1411
    %v1413 = vlaneseq
    %v1414 = vshrl.u32 %v1413, 7
    %v1415 = vsub.s32 %v1412, %v1414
    %v1416 = vrot.slane %v1408, %v1415
    %1418 = vset.pattern.permute.xlu0 0
    %1419 = vperm.xlu0 %1418, %v156
    %v1420 = vpop.permute.xlu0 %1419
    %v1423 = vunpack.c.l.s4 839922192
    %v1424 = vunpack.c.0.s8 %v1423
    %v1425 = vlaneseq
    %v1426 = vshrl.u32 %v1425, 7
    %v1427 = vsub.s32 %v1424, %v1426
    %v1428 = vrot.slane %v1420, %v1427
    %1430 = vset.pattern.permute.xlu0 0
    %1431 = vperm.xlu0 %1430, %v157
    %v1432 = vpop.permute.xlu0 %1431
    %v1435 = vunpack.c.l.s4 839922192
    %v1436 = vunpack.c.0.s8 %v1435
    %v1437 = vlaneseq
    %v1438 = vshrl.u32 %v1437, 7
    %v1439 = vsub.s32 %v1436, %v1438
    %v1440 = vrot.slane %v1432, %v1439
    %1442 = vset.pattern.permute.xlu0 0
    %1443 = vperm.xlu0 %1442, %v158
    %v1444 = vpop.permute.xlu0 %1443
    %v1447 = vunpack.c.l.s4 839922192
    %v1448 = vunpack.c.0.s8 %v1447
    %v1449 = vlaneseq
    %v1450 = vshrl.u32 %v1449, 7
    %v1451 = vsub.s32 %v1448, %v1450
    %v1452 = vrot.slane %v1444, %v1451
    %1454 = vset.pattern.permute.xlu0 0
    %1455 = vperm.xlu0 %1454, %v159
    %v1456 = vpop.permute.xlu0 %1455
    %v1459 = vunpack.c.l.s4 839922192
    %v1460 = vunpack.c.0.s8 %v1459
    %v1461 = vlaneseq
    %v1462 = vshrl.u32 %v1461, 7
    %v1463 = vsub.s32 %v1460, %v1462
    %v1464 = vrot.slane %v1456, %v1463
    %1466 = vset.pattern.permute.xlu0 0
    %1467 = vperm.xlu0 %1466, %v160
    %v1468 = vpop.permute.xlu0 %1467
    %v1471 = vunpack.c.l.s4 839922192
    %v1472 = vunpack.c.0.s8 %v1471
    %v1473 = vlaneseq
    %v1474 = vshrl.u32 %v1473, 7
    %v1475 = vsub.s32 %v1472, %v1474
    %v1476 = vrot.slane %v1468, %v1475
    %1478 = vset.pattern.permute.xlu0 0
    %1479 = vperm.xlu0 %1478, %v161
    %v1480 = vpop.permute.xlu0 %1479
    %v1483 = vunpack.c.l.s4 839922192
    %v1484 = vunpack.c.0.s8 %v1483
    %v1485 = vlaneseq
    %v1486 = vshrl.u32 %v1485, 7
    %v1487 = vsub.s32 %v1484, %v1486
    %v1488 = vrot.slane %v1480, %v1487
    %1490 = vset.pattern.permute.xlu0 0
    %1491 = vperm.xlu0 %1490, %v162
    %v1492 = vpop.permute.xlu0 %1491
    %v1495 = vunpack.c.l.s4 839922192
    %v1496 = vunpack.c.0.s8 %v1495
    %v1497 = vlaneseq
    %v1498 = vshrl.u32 %v1497, 7
    %v1499 = vsub.s32 %v1496, %v1498
    %v1500 = vrot.slane %v1492, %v1499
    %1502 = vset.pattern.permute.xlu0 0
    %1503 = vperm.xlu0 %1502, %v163
    %v1504 = vpop.permute.xlu0 %1503
    %v1507 = vunpack.c.l.s4 839922192
    %v1508 = vunpack.c.0.s8 %v1507
    %v1509 = vlaneseq
    %v1510 = vshrl.u32 %v1509, 7
    %v1511 = vsub.s32 %v1508, %v1510
    %v1512 = vrot.slane %v1504, %v1511
    %1514 = vset.pattern.permute.xlu0 0
    %1515 = vperm.xlu0 %1514, %v164
    %v1516 = vpop.permute.xlu0 %1515
    %v1519 = vunpack.c.l.s4 839922192
    %v1520 = vunpack.c.0.s8 %v1519
    %v1521 = vlaneseq
    %v1522 = vshrl.u32 %v1521, 7
    %v1523 = vsub.s32 %v1520, %v1522
    %v1524 = vrot.slane %v1516, %v1523
    %1526 = vset.pattern.permute.xlu0 0
    %1527 = vperm.xlu0 %1526, %v165
    %v1528 = vpop.permute.xlu0 %1527
    %v1531 = vunpack.c.l.s4 839922192
    %v1532 = vunpack.c.0.s8 %v1531
    %v1533 = vlaneseq
    %v1534 = vshrl.u32 %v1533, 7
    %v1535 = vsub.s32 %v1532, %v1534
    %v1536 = vrot.slane %v1528, %v1535
    %1538 = vset.pattern.permute.xlu0 0
    %1539 = vperm.xlu0 %1538, %v166
    %v1540 = vpop.permute.xlu0 %1539
    %v1543 = vunpack.c.l.s4 839922192
    %v1544 = vunpack.c.0.s8 %v1543
    %v1545 = vlaneseq
    %v1546 = vshrl.u32 %v1545, 7
    %v1547 = vsub.s32 %v1544, %v1546
    %v1548 = vrot.slane %v1540, %v1547
    %1550 = vset.pattern.permute.xlu0 0
    %1551 = vperm.xlu0 %1550, %v167
    %v1552 = vpop.permute.xlu0 %1551
    %v1555 = vunpack.c.l.s4 839922192
    %v1556 = vunpack.c.0.s8 %v1555
    %v1557 = vlaneseq
    %v1558 = vshrl.u32 %v1557, 7
    %v1559 = vsub.s32 %v1556, %v1558
    %v1560 = vrot.slane %v1552, %v1559
    %1562 = vset.pattern.permute.xlu0 0
    %1563 = vperm.xlu0 %1562, %v168
    %v1564 = vpop.permute.xlu0 %1563
    %v1567 = vunpack.c.l.s4 839922192
    %v1568 = vunpack.c.0.s8 %v1567
    %v1569 = vlaneseq
    %v1570 = vshrl.u32 %v1569, 7
    %v1571 = vsub.s32 %v1568, %v1570
    %v1572 = vrot.slane %v1564, %v1571
    %1574 = vset.pattern.permute.xlu0 0
    %1575 = vperm.xlu0 %1574, %v169
    %v1576 = vpop.permute.xlu0 %1575
    %v1579 = vunpack.c.l.s4 839922192
    %v1580 = vunpack.c.0.s8 %v1579
    %v1581 = vlaneseq
    %v1582 = vshrl.u32 %v1581, 7
    %v1583 = vsub.s32 %v1580, %v1582
    %v1584 = vrot.slane %v1576, %v1583
    %1586 = vset.pattern.permute.xlu0 0
    %1587 = vperm.xlu0 %1586, %v170
    %v1588 = vpop.permute.xlu0 %1587
    %v1591 = vunpack.c.l.s4 839922192
    %v1592 = vunpack.c.0.s8 %v1591
    %v1593 = vlaneseq
    %v1594 = vshrl.u32 %v1593, 7
    %v1595 = vsub.s32 %v1592, %v1594
    %v1596 = vrot.slane %v1588, %v1595
    %1598 = vset.pattern.permute.xlu0 0
    %1599 = vperm.xlu0 %1598, %v171
    %v1600 = vpop.permute.xlu0 %1599
    %v1603 = vunpack.c.l.s4 839922192
    %v1604 = vunpack.c.0.s8 %v1603
    %v1605 = vlaneseq
    %v1606 = vshrl.u32 %v1605, 7
    %v1607 = vsub.s32 %v1604, %v1606
    %v1608 = vrot.slane %v1600, %v1607
    %1610 = vset.pattern.permute.xlu0 0
    %1611 = vperm.xlu0 %1610, %v172
    %v1612 = vpop.permute.xlu0 %1611
    %v1615 = vunpack.c.l.s4 839922192
    %v1616 = vunpack.c.0.s8 %v1615
    %v1617 = vlaneseq
    %v1618 = vshrl.u32 %v1617, 7
    %v1619 = vsub.s32 %v1616, %v1618
    %v1620 = vrot.slane %v1612, %v1619
    %1622 = vset.pattern.permute.xlu0 0
    %1623 = vperm.xlu0 %1622, %v173
    %v1624 = vpop.permute.xlu0 %1623
    %v1627 = vunpack.c.l.s4 839922192
    %v1628 = vunpack.c.0.s8 %v1627
    %v1629 = vlaneseq
    %v1630 = vshrl.u32 %v1629, 7
    %v1631 = vsub.s32 %v1628, %v1630
    %v1632 = vrot.slane %v1624, %v1631
    %1634 = vset.pattern.permute.xlu0 0
    %1635 = vperm.xlu0 %1634, %v174
    %v1636 = vpop.permute.xlu0 %1635
    %v1639 = vunpack.c.l.s4 839922192
    %v1640 = vunpack.c.0.s8 %v1639
    %v1641 = vlaneseq
    %v1642 = vshrl.u32 %v1641, 7
    %v1643 = vsub.s32 %v1640, %v1642
    %v1644 = vrot.slane %v1636, %v1643
    %1646 = vset.pattern.permute.xlu0 0
    %1647 = vperm.xlu0 %1646, %v175
    %v1648 = vpop.permute.xlu0 %1647
    %v1651 = vunpack.c.l.s4 839922192
    %v1652 = vunpack.c.0.s8 %v1651
    %v1653 = vlaneseq
    %v1654 = vshrl.u32 %v1653, 7
    %v1655 = vsub.s32 %v1652, %v1654
    %v1656 = vrot.slane %v1648, %v1655
    %1658 = vset.pattern.permute.xlu0 0
    %1659 = vperm.xlu0 %1658, %v176
    %v1660 = vpop.permute.xlu0 %1659
    %v1663 = vunpack.c.l.s4 839922192
    %v1664 = vunpack.c.0.s8 %v1663
    %v1665 = vlaneseq
    %v1666 = vshrl.u32 %v1665, 7
    %v1667 = vsub.s32 %v1664, %v1666
    %v1668 = vrot.slane %v1660, %v1667
    %1670 = vset.pattern.permute.xlu0 0
    %1671 = vperm.xlu0 %1670, %v177
    %v1672 = vpop.permute.xlu0 %1671
    %v1675 = vunpack.c.l.s4 839922192
    %v1676 = vunpack.c.0.s8 %v1675
    %v1677 = vlaneseq
    %v1678 = vshrl.u32 %v1677, 7
    %v1679 = vsub.s32 %v1676, %v1678
    %v1680 = vrot.slane %v1672, %v1679
    %1682 = vset.pattern.permute.xlu0 0
    %1683 = vperm.xlu0 %1682, %v178
    %v1684 = vpop.permute.xlu0 %1683
    %v1687 = vunpack.c.l.s4 839922192
    %v1688 = vunpack.c.0.s8 %v1687
    %v1689 = vlaneseq
    %v1690 = vshrl.u32 %v1689, 7
    %v1691 = vsub.s32 %v1688, %v1690
    %v1692 = vrot.slane %v1684, %v1691
    %1694 = vset.pattern.permute.xlu0 0
    %1695 = vperm.xlu0 %1694, %v179
    %v1696 = vpop.permute.xlu0 %1695
    %v1699 = vunpack.c.l.s4 839922192
    %v1700 = vunpack.c.0.s8 %v1699
    %v1701 = vlaneseq
    %v1702 = vshrl.u32 %v1701, 7
    %v1703 = vsub.s32 %v1700, %v1702
    %v1704 = vrot.slane %v1696, %v1703
    %1706 = vset.pattern.permute.xlu0 0
    %1707 = vperm.xlu0 %1706, %v180
    %v1708 = vpop.permute.xlu0 %1707
    %v1711 = vunpack.c.l.s4 839922192
    %v1712 = vunpack.c.0.s8 %v1711
    %v1713 = vlaneseq
    %v1714 = vshrl.u32 %v1713, 7
    %v1715 = vsub.s32 %v1712, %v1714
    %v1716 = vrot.slane %v1708, %v1715
    %v1718 = vpack.i.b16 %v52, %v52
    %v1720 = vlaneseq
    %v1721 = vshrl.u32 %v1720, 7
    %v1722 = vsub.s32 0, %v1721
    %v1723 = vrot.slane %v1718, %v1722
    %v1725 = vunpack.c.l.b16 %v1723
    %v1726 = vpack.c.b16 %v1725, %v1725
    %v1728 = vmul.bf16 %v192, %v1726
    %v1729 = vmul.bf16 %v204, %v1726
    %v1730 = vmul.bf16 %v216, %v1726
    %v1731 = vmul.bf16 %v228, %v1726
    %v1732 = vmul.bf16 %v240, %v1726
    %v1733 = vmul.bf16 %v252, %v1726
    %v1734 = vmul.bf16 %v264, %v1726
    %v1735 = vmul.bf16 %v276, %v1726
    %v1736 = vmul.bf16 %v288, %v1726
    %v1737 = vmul.bf16 %v300, %v1726
    %v1738 = vmul.bf16 %v312, %v1726
    %v1739 = vmul.bf16 %v324, %v1726
    %v1740 = vmul.bf16 %v336, %v1726
    %v1741 = vmul.bf16 %v348, %v1726
    %v1742 = vmul.bf16 %v360, %v1726
    %v1743 = vmul.bf16 %v372, %v1726
    %v1744 = vmul.bf16 %v384, %v1726
    %v1745 = vmul.bf16 %v396, %v1726
    %v1746 = vmul.bf16 %v408, %v1726
    %v1747 = vmul.bf16 %v420, %v1726
    %v1748 = vmul.bf16 %v432, %v1726
    %v1749 = vmul.bf16 %v444, %v1726
    %v1750 = vmul.bf16 %v456, %v1726
    %v1751 = vmul.bf16 %v468, %v1726
    %v1752 = vmul.bf16 %v480, %v1726
    %v1753 = vmul.bf16 %v492, %v1726
    %v1754 = vmul.bf16 %v504, %v1726
    %v1755 = vmul.bf16 %v516, %v1726
    %v1756 = vmul.bf16 %v528, %v1726
    %v1757 = vmul.bf16 %v540, %v1726
    %v1758 = vmul.bf16 %v552, %v1726
    %v1759 = vmul.bf16 %v564, %v1726
    %v1760 = vmul.bf16 %v576, %v1726
    %v1761 = vmul.bf16 %v588, %v1726
    %v1762 = vmul.bf16 %v600, %v1726
    %v1763 = vmul.bf16 %v612, %v1726
    %v1764 = vmul.bf16 %v624, %v1726
    %v1765 = vmul.bf16 %v636, %v1726
    %v1766 = vmul.bf16 %v648, %v1726
    %v1767 = vmul.bf16 %v660, %v1726
    %v1768 = vmul.bf16 %v672, %v1726
    %v1769 = vmul.bf16 %v684, %v1726
    %v1770 = vmul.bf16 %v696, %v1726
    %v1771 = vmul.bf16 %v708, %v1726
    %v1772 = vmul.bf16 %v720, %v1726
    %v1773 = vmul.bf16 %v732, %v1726
    %v1774 = vmul.bf16 %v744, %v1726
    %v1775 = vmul.bf16 %v756, %v1726
    %v1776 = vmul.bf16 %v768, %v1726
    %v1777 = vmul.bf16 %v780, %v1726
    %v1778 = vmul.bf16 %v792, %v1726
    %v1779 = vmul.bf16 %v804, %v1726
    %v1780 = vmul.bf16 %v816, %v1726
    %v1781 = vmul.bf16 %v828, %v1726
    %v1782 = vmul.bf16 %v840, %v1726
    %v1783 = vmul.bf16 %v852, %v1726
    %v1784 = vmul.bf16 %v864, %v1726
    %v1785 = vmul.bf16 %v876, %v1726
    %v1786 = vmul.bf16 %v888, %v1726
    %v1787 = vmul.bf16 %v900, %v1726
    %v1788 = vmul.bf16 %v912, %v1726
    %v1789 = vmul.bf16 %v924, %v1726
    %v1790 = vmul.bf16 %v936, %v1726
    %v1791 = vmul.bf16 %v948, %v1726
    %v1792 = vmul.bf16 %v960, %v1726
    %v1793 = vmul.bf16 %v972, %v1726
    %v1794 = vmul.bf16 %v984, %v1726
    %v1795 = vmul.bf16 %v996, %v1726
    %v1796 = vmul.bf16 %v1008, %v1726
    %v1797 = vmul.bf16 %v1020, %v1726
    %v1798 = vmul.bf16 %v1032, %v1726
    %v1799 = vmul.bf16 %v1044, %v1726
    %v1800 = vmul.bf16 %v1056, %v1726
    %v1801 = vmul.bf16 %v1068, %v1726
    %v1802 = vmul.bf16 %v1080, %v1726
    %v1803 = vmul.bf16 %v1092, %v1726
    %v1804 = vmul.bf16 %v1104, %v1726
    %v1805 = vmul.bf16 %v1116, %v1726
    %v1806 = vmul.bf16 %v1128, %v1726
    %v1807 = vmul.bf16 %v1140, %v1726
    %v1808 = vmul.bf16 %v1152, %v1726
    %v1809 = vmul.bf16 %v1164, %v1726
    %v1810 = vmul.bf16 %v1176, %v1726
    %v1811 = vmul.bf16 %v1188, %v1726
    %v1812 = vmul.bf16 %v1200, %v1726
    %v1813 = vmul.bf16 %v1212, %v1726
    %v1814 = vmul.bf16 %v1224, %v1726
    %v1815 = vmul.bf16 %v1236, %v1726
    %v1816 = vmul.bf16 %v1248, %v1726
    %v1817 = vmul.bf16 %v1260, %v1726
    %v1818 = vmul.bf16 %v1272, %v1726
    %v1819 = vmul.bf16 %v1284, %v1726
    %v1820 = vmul.bf16 %v1296, %v1726
    %v1821 = vmul.bf16 %v1308, %v1726
    %v1822 = vmul.bf16 %v1320, %v1726
    %v1823 = vmul.bf16 %v1332, %v1726
    %v1824 = vmul.bf16 %v1344, %v1726
    %v1825 = vmul.bf16 %v1356, %v1726
    %v1826 = vmul.bf16 %v1368, %v1726
    %v1827 = vmul.bf16 %v1380, %v1726
    %v1828 = vmul.bf16 %v1392, %v1726
    %v1829 = vmul.bf16 %v1404, %v1726
    %v1830 = vmul.bf16 %v1416, %v1726
    %v1831 = vmul.bf16 %v1428, %v1726
    %v1832 = vmul.bf16 %v1440, %v1726
    %v1833 = vmul.bf16 %v1452, %v1726
    %v1834 = vmul.bf16 %v1464, %v1726
    %v1835 = vmul.bf16 %v1476, %v1726
    %v1836 = vmul.bf16 %v1488, %v1726
    %v1837 = vmul.bf16 %v1500, %v1726
    %v1838 = vmul.bf16 %v1512, %v1726
    %v1839 = vmul.bf16 %v1524, %v1726
    %v1840 = vmul.bf16 %v1536, %v1726
    %v1841 = vmul.bf16 %v1548, %v1726
    %v1842 = vmul.bf16 %v1560, %v1726
    %v1843 = vmul.bf16 %v1572, %v1726
    %v1844 = vmul.bf16 %v1584, %v1726
    %v1845 = vmul.bf16 %v1596, %v1726
    %v1846 = vmul.bf16 %v1608, %v1726
    %v1847 = vmul.bf16 %v1620, %v1726
    %v1848 = vmul.bf16 %v1632, %v1726
    %v1849 = vmul.bf16 %v1644, %v1726
    %v1850 = vmul.bf16 %v1656, %v1726
    %v1851 = vmul.bf16 %v1668, %v1726
    %v1852 = vmul.bf16 %v1680, %v1726
    %v1853 = vmul.bf16 %v1692, %v1726
    %v1854 = vmul.bf16 %v1704, %v1726
    %v1855 = vmul.bf16 %v1716, %v1726
    %v1856 = vld [vmem:[%s2] sm:$0xf]
    %v1857 = vld [vmem:[%s2 + $0x4] sm:$0xf]
    %v1858 = vld [vmem:[%s2 + $0x8] sm:$0xf]
    %v1859 = vld [vmem:[%s2 + $0xc] sm:$0xf]
    %v1860 = vld [vmem:[%s2 + $0x10] sm:$0xf]
    %v1861 = vld [vmem:[%s2 + $0x14] sm:$0xf]
    %v1862 = vld [vmem:[%s2 + $0x18] sm:$0xf]
    %v1863 = vld [vmem:[%s2 + $0x1c] sm:$0xf]
    %v1864 = vld [vmem:[%s2 + $0x20] sm:$0xf]
    %v1865 = vld [vmem:[%s2 + $0x24] sm:$0xf]
    %v1866 = vld [vmem:[%s2 + $0x28] sm:$0xf]
    %v1867 = vld [vmem:[%s2 + $0x2c] sm:$0xf]
    %v1868 = vld [vmem:[%s2 + $0x30] sm:$0xf]
    %v1869 = vld [vmem:[%s2 + $0x34] sm:$0xf]
    %v1870 = vld [vmem:[%s2 + $0x38] sm:$0xf]
    %v1871 = vld [vmem:[%s2 + $0x3c] sm:$0xf]
    %v1872 = vld [vmem:[%s2 + $0x40] sm:$0xf]
    %v1873 = vld [vmem:[%s2 + $0x44] sm:$0xf]
    %v1874 = vld [vmem:[%s2 + $0x48] sm:$0xf]
    %v1875 = vld [vmem:[%s2 + $0x4c] sm:$0xf]
    %v1876 = vld [vmem:[%s2 + $0x50] sm:$0xf]
    %v1877 = vld [vmem:[%s2 + $0x54] sm:$0xf]
    %v1878 = vld [vmem:[%s2 + $0x58] sm:$0xf]
    %v1879 = vld [vmem:[%s2 + $0x5c] sm:$0xf]
    %v1880 = vld [vmem:[%s2 + $0x60] sm:$0xf]
    %v1881 = vld [vmem:[%s2 + $0x64] sm:$0xf]
    %v1882 = vld [vmem:[%s2 + $0x68] sm:$0xf]
    %v1883 = vld [vmem:[%s2 + $0x6c] sm:$0xf]
    %v1884 = vld [vmem:[%s2 + $0x70] sm:$0xf]
    %v1885 = vld [vmem:[%s2 + $0x74] sm:$0xf]
    %v1886 = vld [vmem:[%s2 + $0x78] sm:$0xf]
    %v1887 = vld [vmem:[%s2 + $0x7c] sm:$0xf]
    %v1888 = vld [vmem:[%s2 + $0x80] sm:$0xf]
    %v1889 = vld [vmem:[%s2 + $0x84] sm:$0xf]
    %v1890 = vld [vmem:[%s2 + $0x88] sm:$0xf]
    %v1891 = vld [vmem:[%s2 + $0x8c] sm:$0xf]
    %v1892 = vld [vmem:[%s2 + $0x90] sm:$0xf]
    %v1893 = vld [vmem:[%s2 + $0x94] sm:$0xf]
    %v1894 = vld [vmem:[%s2 + $0x98] sm:$0xf]
    %v1895 = vld [vmem:[%s2 + $0x9c] sm:$0xf]
    %v1896 = vld [vmem:[%s2 + $0xa0] sm:$0xf]
    %v1897 = vld [vmem:[%s2 + $0xa4] sm:$0xf]
    %v1898 = vld [vmem:[%s2 + $0xa8] sm:$0xf]
    %v1899 = vld [vmem:[%s2 + $0xac] sm:$0xf]
    %v1900 = vld [vmem:[%s2 + $0xb0] sm:$0xf]
    %v1901 = vld [vmem:[%s2 + $0xb4] sm:$0xf]
    %v1902 = vld [vmem:[%s2 + $0xb8] sm:$0xf]
    %v1903 = vld [vmem:[%s2 + $0xbc] sm:$0xf]
    %v1904 = vld [vmem:[%s2 + $0xc0] sm:$0xf]
    %v1905 = vld [vmem:[%s2 + $0xc4] sm:$0xf]
    %v1906 = vld [vmem:[%s2 + $0xc8] sm:$0xf]
    %v1907 = vld [vmem:[%s2 + $0xcc] sm:$0xf]
    %v1908 = vld [vmem:[%s2 + $0xd0] sm:$0xf]
    %v1909 = vld [vmem:[%s2 + $0xd4] sm:$0xf]
    %v1910 = vld [vmem:[%s2 + $0xd8] sm:$0xf]
    %v1911 = vld [vmem:[%s2 + $0xdc] sm:$0xf]
    %v1912 = vld [vmem:[%s2 + $0xe0] sm:$0xf]
    %v1913 = vld [vmem:[%s2 + $0xe4] sm:$0xf]
    %v1914 = vld [vmem:[%s2 + $0xe8] sm:$0xf]
    %v1915 = vld [vmem:[%s2 + $0xec] sm:$0xf]
    %v1916 = vld [vmem:[%s2 + $0xf0] sm:$0xf]
    %v1917 = vld [vmem:[%s2 + $0xf4] sm:$0xf]
    %v1918 = vld [vmem:[%s2 + $0xf8] sm:$0xf]
    %v1919 = vld [vmem:[%s2 + $0xfc] sm:$0xf]
    %v1920 = vld [vmem:[%s2 + $0x100] sm:$0xf]
    %v1921 = vld [vmem:[%s2 + $0x104] sm:$0xf]
    %v1922 = vld [vmem:[%s2 + $0x108] sm:$0xf]
    %v1923 = vld [vmem:[%s2 + $0x10c] sm:$0xf]
    %v1924 = vld [vmem:[%s2 + $0x110] sm:$0xf]
    %v1925 = vld [vmem:[%s2 + $0x114] sm:$0xf]
    %v1926 = vld [vmem:[%s2 + $0x118] sm:$0xf]
    %v1927 = vld [vmem:[%s2 + $0x11c] sm:$0xf]
    %v1928 = vld [vmem:[%s2 + $0x120] sm:$0xf]
    %v1929 = vld [vmem:[%s2 + $0x124] sm:$0xf]
    %v1930 = vld [vmem:[%s2 + $0x128] sm:$0xf]
    %v1931 = vld [vmem:[%s2 + $0x12c] sm:$0xf]
    %v1932 = vld [vmem:[%s2 + $0x130] sm:$0xf]
    %v1933 = vld [vmem:[%s2 + $0x134] sm:$0xf]
    %v1934 = vld [vmem:[%s2 + $0x138] sm:$0xf]
    %v1935 = vld [vmem:[%s2 + $0x13c] sm:$0xf]
    %v1936 = vld [vmem:[%s2 + $0x140] sm:$0xf]
    %v1937 = vld [vmem:[%s2 + $0x144] sm:$0xf]
    %v1938 = vld [vmem:[%s2 + $0x148] sm:$0xf]
    %v1939 = vld [vmem:[%s2 + $0x14c] sm:$0xf]
    %v1940 = vld [vmem:[%s2 + $0x150] sm:$0xf]
    %v1941 = vld [vmem:[%s2 + $0x154] sm:$0xf]
    %v1942 = vld [vmem:[%s2 + $0x158] sm:$0xf]
    %v1943 = vld [vmem:[%s2 + $0x15c] sm:$0xf]
    %v1944 = vld [vmem:[%s2 + $0x160] sm:$0xf]
    %v1945 = vld [vmem:[%s2 + $0x164] sm:$0xf]
    %v1946 = vld [vmem:[%s2 + $0x168] sm:$0xf]
    %v1947 = vld [vmem:[%s2 + $0x16c] sm:$0xf]
    %v1948 = vld [vmem:[%s2 + $0x170] sm:$0xf]
    %v1949 = vld [vmem:[%s2 + $0x174] sm:$0xf]
    %v1950 = vld [vmem:[%s2 + $0x178] sm:$0xf]
    %v1951 = vld [vmem:[%s2 + $0x17c] sm:$0xf]
    %v1952 = vld [vmem:[%s2 + $0x180] sm:$0xf]
    %v1953 = vld [vmem:[%s2 + $0x184] sm:$0xf]
    %v1954 = vld [vmem:[%s2 + $0x188] sm:$0xf]
    %v1955 = vld [vmem:[%s2 + $0x18c] sm:$0xf]
    %v1956 = vld [vmem:[%s2 + $0x190] sm:$0xf]
    %v1957 = vld [vmem:[%s2 + $0x194] sm:$0xf]
    %v1958 = vld [vmem:[%s2 + $0x198] sm:$0xf]
    %v1959 = vld [vmem:[%s2 + $0x19c] sm:$0xf]
    %v1960 = vld [vmem:[%s2 + $0x1a0] sm:$0xf]
    %v1961 = vld [vmem:[%s2 + $0x1a4] sm:$0xf]
    %v1962 = vld [vmem:[%s2 + $0x1a8] sm:$0xf]
    %v1963 = vld [vmem:[%s2 + $0x1ac] sm:$0xf]
    %v1964 = vld [vmem:[%s2 + $0x1b0] sm:$0xf]
    %v1965 = vld [vmem:[%s2 + $0x1b4] sm:$0xf]
    %v1966 = vld [vmem:[%s2 + $0x1b8] sm:$0xf]
    %v1967 = vld [vmem:[%s2 + $0x1bc] sm:$0xf]
    %v1968 = vld [vmem:[%s2 + $0x1c0] sm:$0xf]
    %v1969 = vld [vmem:[%s2 + $0x1c4] sm:$0xf]
    %v1970 = vld [vmem:[%s2 + $0x1c8] sm:$0xf]
    %v1971 = vld [vmem:[%s2 + $0x1cc] sm:$0xf]
    %v1972 = vld [vmem:[%s2 + $0x1d0] sm:$0xf]
    %v1973 = vld [vmem:[%s2 + $0x1d4] sm:$0xf]
    %v1974 = vld [vmem:[%s2 + $0x1d8] sm:$0xf]
    %v1975 = vld [vmem:[%s2 + $0x1dc] sm:$0xf]
    %v1976 = vld [vmem:[%s2 + $0x1e0] sm:$0xf]
    %v1977 = vld [vmem:[%s2 + $0x1e4] sm:$0xf]
    %v1978 = vld [vmem:[%s2 + $0x1e8] sm:$0xf]
    %v1979 = vld [vmem:[%s2 + $0x1ec] sm:$0xf]
    %v1980 = vld [vmem:[%s2 + $0x1f0] sm:$0xf]
    %v1981 = vld [vmem:[%s2 + $0x1f4] sm:$0xf]
    %v1982 = vld [vmem:[%s2 + $0x1f8] sm:$0xf]
    %v1983 = vld [vmem:[%s2 + $0x1fc] sm:$0xf]
    %1985 = vset.pattern.permute.xlu0 0
    %1986 = vperm.xlu0 %1985, %v1856
    %v1987 = vpop.permute.xlu0 %1986
    %v1990 = vunpack.c.l.s4 839922192
    %v1991 = vunpack.c.0.s8 %v1990
    %v1992 = vlaneseq
    %v1993 = vshrl.u32 %v1992, 7
    %v1994 = vsub.s32 %v1991, %v1993
    %v1995 = vrot.slane %v1987, %v1994
    %1997 = vset.pattern.permute.xlu0 0
    %1998 = vperm.xlu0 %1997, %v1857
    %v1999 = vpop.permute.xlu0 %1998
    %v2002 = vunpack.c.l.s4 839922192
    %v2003 = vunpack.c.0.s8 %v2002
    %v2004 = vlaneseq
    %v2005 = vshrl.u32 %v2004, 7
    %v2006 = vsub.s32 %v2003, %v2005
    %v2007 = vrot.slane %v1999, %v2006
    %2009 = vset.pattern.permute.xlu0 0
    %2010 = vperm.xlu0 %2009, %v1858
    %v2011 = vpop.permute.xlu0 %2010
    %v2014 = vunpack.c.l.s4 839922192
    %v2015 = vunpack.c.0.s8 %v2014
    %v2016 = vlaneseq
    %v2017 = vshrl.u32 %v2016, 7
    %v2018 = vsub.s32 %v2015, %v2017
    %v2019 = vrot.slane %v2011, %v2018
    %2021 = vset.pattern.permute.xlu0 0
    %2022 = vperm.xlu0 %2021, %v1859
    %v2023 = vpop.permute.xlu0 %2022
    %v2026 = vunpack.c.l.s4 839922192
    %v2027 = vunpack.c.0.s8 %v2026
    %v2028 = vlaneseq
    %v2029 = vshrl.u32 %v2028, 7
    %v2030 = vsub.s32 %v2027, %v2029
    %v2031 = vrot.slane %v2023, %v2030
    %2033 = vset.pattern.permute.xlu0 0
    %2034 = vperm.xlu0 %2033, %v1860
    %v2035 = vpop.permute.xlu0 %2034
    %v2038 = vunpack.c.l.s4 839922192
    %v2039 = vunpack.c.0.s8 %v2038
    %v2040 = vlaneseq
    %v2041 = vshrl.u32 %v2040, 7
    %v2042 = vsub.s32 %v2039, %v2041
    %v2043 = vrot.slane %v2035, %v2042
    %2045 = vset.pattern.permute.xlu0 0
    %2046 = vperm.xlu0 %2045, %v1861
    %v2047 = vpop.permute.xlu0 %2046
    %v2050 = vunpack.c.l.s4 839922192
    %v2051 = vunpack.c.0.s8 %v2050
    %v2052 = vlaneseq
    %v2053 = vshrl.u32 %v2052, 7
    %v2054 = vsub.s32 %v2051, %v2053
    %v2055 = vrot.slane %v2047, %v2054
    %2057 = vset.pattern.permute.xlu0 0
    %2058 = vperm.xlu0 %2057, %v1862
    %v2059 = vpop.permute.xlu0 %2058
    %v2062 = vunpack.c.l.s4 839922192
    %v2063 = vunpack.c.0.s8 %v2062
    %v2064 = vlaneseq
    %v2065 = vshrl.u32 %v2064, 7
    %v2066 = vsub.s32 %v2063, %v2065
    %v2067 = vrot.slane %v2059, %v2066
    %2069 = vset.pattern.permute.xlu0 0
    %2070 = vperm.xlu0 %2069, %v1863
    %v2071 = vpop.permute.xlu0 %2070
    %v2074 = vunpack.c.l.s4 839922192
    %v2075 = vunpack.c.0.s8 %v2074
    %v2076 = vlaneseq
    %v2077 = vshrl.u32 %v2076, 7
    %v2078 = vsub.s32 %v2075, %v2077
    %v2079 = vrot.slane %v2071, %v2078
    %2081 = vset.pattern.permute.xlu0 0
    %2082 = vperm.xlu0 %2081, %v1864
    %v2083 = vpop.permute.xlu0 %2082
    %v2086 = vunpack.c.l.s4 839922192
    %v2087 = vunpack.c.0.s8 %v2086
    %v2088 = vlaneseq
    %v2089 = vshrl.u32 %v2088, 7
    %v2090 = vsub.s32 %v2087, %v2089
    %v2091 = vrot.slane %v2083, %v2090
    %2093 = vset.pattern.permute.xlu0 0
    %2094 = vperm.xlu0 %2093, %v1865
    %v2095 = vpop.permute.xlu0 %2094
    %v2098 = vunpack.c.l.s4 839922192
    %v2099 = vunpack.c.0.s8 %v2098
    %v2100 = vlaneseq
    %v2101 = vshrl.u32 %v2100, 7
    %v2102 = vsub.s32 %v2099, %v2101
    %v2103 = vrot.slane %v2095, %v2102
    %2105 = vset.pattern.permute.xlu0 0
    %2106 = vperm.xlu0 %2105, %v1866
    %v2107 = vpop.permute.xlu0 %2106
    %v2110 = vunpack.c.l.s4 839922192
    %v2111 = vunpack.c.0.s8 %v2110
    %v2112 = vlaneseq
    %v2113 = vshrl.u32 %v2112, 7
    %v2114 = vsub.s32 %v2111, %v2113
    %v2115 = vrot.slane %v2107, %v2114
    %2117 = vset.pattern.permute.xlu0 0
    %2118 = vperm.xlu0 %2117, %v1867
    %v2119 = vpop.permute.xlu0 %2118
    %v2122 = vunpack.c.l.s4 839922192
    %v2123 = vunpack.c.0.s8 %v2122
    %v2124 = vlaneseq
    %v2125 = vshrl.u32 %v2124, 7
    %v2126 = vsub.s32 %v2123, %v2125
    %v2127 = vrot.slane %v2119, %v2126
    %2129 = vset.pattern.permute.xlu0 0
    %2130 = vperm.xlu0 %2129, %v1868
    %v2131 = vpop.permute.xlu0 %2130
    %v2134 = vunpack.c.l.s4 839922192
    %v2135 = vunpack.c.0.s8 %v2134
    %v2136 = vlaneseq
    %v2137 = vshrl.u32 %v2136, 7
    %v2138 = vsub.s32 %v2135, %v2137
    %v2139 = vrot.slane %v2131, %v2138
    %2141 = vset.pattern.permute.xlu0 0
    %2142 = vperm.xlu0 %2141, %v1869
    %v2143 = vpop.permute.xlu0 %2142
    %v2146 = vunpack.c.l.s4 839922192
    %v2147 = vunpack.c.0.s8 %v2146
    %v2148 = vlaneseq
    %v2149 = vshrl.u32 %v2148, 7
    %v2150 = vsub.s32 %v2147, %v2149
    %v2151 = vrot.slane %v2143, %v2150
    %2153 = vset.pattern.permute.xlu0 0
    %2154 = vperm.xlu0 %2153, %v1870
    %v2155 = vpop.permute.xlu0 %2154
    %v2158 = vunpack.c.l.s4 839922192
    %v2159 = vunpack.c.0.s8 %v2158
    %v2160 = vlaneseq
    %v2161 = vshrl.u32 %v2160, 7
    %v2162 = vsub.s32 %v2159, %v2161
    %v2163 = vrot.slane %v2155, %v2162
    %2165 = vset.pattern.permute.xlu0 0
    %2166 = vperm.xlu0 %2165, %v1871
    %v2167 = vpop.permute.xlu0 %2166
    %v2170 = vunpack.c.l.s4 839922192
    %v2171 = vunpack.c.0.s8 %v2170
    %v2172 = vlaneseq
    %v2173 = vshrl.u32 %v2172, 7
    %v2174 = vsub.s32 %v2171, %v2173
    %v2175 = vrot.slane %v2167, %v2174
    %2177 = vset.pattern.permute.xlu0 0
    %2178 = vperm.xlu0 %2177, %v1872
    %v2179 = vpop.permute.xlu0 %2178
    %v2182 = vunpack.c.l.s4 839922192
    %v2183 = vunpack.c.0.s8 %v2182
    %v2184 = vlaneseq
    %v2185 = vshrl.u32 %v2184, 7
    %v2186 = vsub.s32 %v2183, %v2185
    %v2187 = vrot.slane %v2179, %v2186
    %2189 = vset.pattern.permute.xlu0 0
    %2190 = vperm.xlu0 %2189, %v1873
    %v2191 = vpop.permute.xlu0 %2190
    %v2194 = vunpack.c.l.s4 839922192
    %v2195 = vunpack.c.0.s8 %v2194
    %v2196 = vlaneseq
    %v2197 = vshrl.u32 %v2196, 7
    %v2198 = vsub.s32 %v2195, %v2197
    %v2199 = vrot.slane %v2191, %v2198
    %2201 = vset.pattern.permute.xlu0 0
    %2202 = vperm.xlu0 %2201, %v1874
    %v2203 = vpop.permute.xlu0 %2202
    %v2206 = vunpack.c.l.s4 839922192
    %v2207 = vunpack.c.0.s8 %v2206
    %v2208 = vlaneseq
    %v2209 = vshrl.u32 %v2208, 7
    %v2210 = vsub.s32 %v2207, %v2209
    %v2211 = vrot.slane %v2203, %v2210
    %2213 = vset.pattern.permute.xlu0 0
    %2214 = vperm.xlu0 %2213, %v1875
    %v2215 = vpop.permute.xlu0 %2214
    %v2218 = vunpack.c.l.s4 839922192
    %v2219 = vunpack.c.0.s8 %v2218
    %v2220 = vlaneseq
    %v2221 = vshrl.u32 %v2220, 7
    %v2222 = vsub.s32 %v2219, %v2221
    %v2223 = vrot.slane %v2215, %v2222
    %2225 = vset.pattern.permute.xlu0 0
    %2226 = vperm.xlu0 %2225, %v1876
    %v2227 = vpop.permute.xlu0 %2226
    %v2230 = vunpack.c.l.s4 839922192
    %v2231 = vunpack.c.0.s8 %v2230
    %v2232 = vlaneseq
    %v2233 = vshrl.u32 %v2232, 7
    %v2234 = vsub.s32 %v2231, %v2233
    %v2235 = vrot.slane %v2227, %v2234
    %2237 = vset.pattern.permute.xlu0 0
    %2238 = vperm.xlu0 %2237, %v1877
    %v2239 = vpop.permute.xlu0 %2238
    %v2242 = vunpack.c.l.s4 839922192
    %v2243 = vunpack.c.0.s8 %v2242
    %v2244 = vlaneseq
    %v2245 = vshrl.u32 %v2244, 7
    %v2246 = vsub.s32 %v2243, %v2245
    %v2247 = vrot.slane %v2239, %v2246
    %2249 = vset.pattern.permute.xlu0 0
    %2250 = vperm.xlu0 %2249, %v1878
    %v2251 = vpop.permute.xlu0 %2250
    %v2254 = vunpack.c.l.s4 839922192
    %v2255 = vunpack.c.0.s8 %v2254
    %v2256 = vlaneseq
    %v2257 = vshrl.u32 %v2256, 7
    %v2258 = vsub.s32 %v2255, %v2257
    %v2259 = vrot.slane %v2251, %v2258
    %2261 = vset.pattern.permute.xlu0 0
    %2262 = vperm.xlu0 %2261, %v1879
    %v2263 = vpop.permute.xlu0 %2262
    %v2266 = vunpack.c.l.s4 839922192
    %v2267 = vunpack.c.0.s8 %v2266
    %v2268 = vlaneseq
    %v2269 = vshrl.u32 %v2268, 7
    %v2270 = vsub.s32 %v2267, %v2269
    %v2271 = vrot.slane %v2263, %v2270
    %2273 = vset.pattern.permute.xlu0 0
    %2274 = vperm.xlu0 %2273, %v1880
    %v2275 = vpop.permute.xlu0 %2274
    %v2278 = vunpack.c.l.s4 839922192
    %v2279 = vunpack.c.0.s8 %v2278
    %v2280 = vlaneseq
    %v2281 = vshrl.u32 %v2280, 7
    %v2282 = vsub.s32 %v2279, %v2281
    %v2283 = vrot.slane %v2275, %v2282
    %2285 = vset.pattern.permute.xlu0 0
    %2286 = vperm.xlu0 %2285, %v1881
    %v2287 = vpop.permute.xlu0 %2286
    %v2290 = vunpack.c.l.s4 839922192
    %v2291 = vunpack.c.0.s8 %v2290
    %v2292 = vlaneseq
    %v2293 = vshrl.u32 %v2292, 7
    %v2294 = vsub.s32 %v2291, %v2293
    %v2295 = vrot.slane %v2287, %v2294
    %2297 = vset.pattern.permute.xlu0 0
    %2298 = vperm.xlu0 %2297, %v1882
    %v2299 = vpop.permute.xlu0 %2298
    %v2302 = vunpack.c.l.s4 839922192
    %v2303 = vunpack.c.0.s8 %v2302
    %v2304 = vlaneseq
    %v2305 = vshrl.u32 %v2304, 7
    %v2306 = vsub.s32 %v2303, %v2305
    %v2307 = vrot.slane %v2299, %v2306
    %2309 = vset.pattern.permute.xlu0 0
    %2310 = vperm.xlu0 %2309, %v1883
    %v2311 = vpop.permute.xlu0 %2310
    %v2314 = vunpack.c.l.s4 839922192
    %v2315 = vunpack.c.0.s8 %v2314
    %v2316 = vlaneseq
    %v2317 = vshrl.u32 %v2316, 7
    %v2318 = vsub.s32 %v2315, %v2317
    %v2319 = vrot.slane %v2311, %v2318
    %2321 = vset.pattern.permute.xlu0 0
    %2322 = vperm.xlu0 %2321, %v1884
    %v2323 = vpop.permute.xlu0 %2322
    %v2326 = vunpack.c.l.s4 839922192
    %v2327 = vunpack.c.0.s8 %v2326
    %v2328 = vlaneseq
    %v2329 = vshrl.u32 %v2328, 7
    %v2330 = vsub.s32 %v2327, %v2329
    %v2331 = vrot.slane %v2323, %v2330
    %2333 = vset.pattern.permute.xlu0 0
    %2334 = vperm.xlu0 %2333, %v1885
    %v2335 = vpop.permute.xlu0 %2334
    %v2338 = vunpack.c.l.s4 839922192
    %v2339 = vunpack.c.0.s8 %v2338
    %v2340 = vlaneseq
    %v2341 = vshrl.u32 %v2340, 7
    %v2342 = vsub.s32 %v2339, %v2341
    %v2343 = vrot.slane %v2335, %v2342
    %2345 = vset.pattern.permute.xlu0 0
    %2346 = vperm.xlu0 %2345, %v1886
    %v2347 = vpop.permute.xlu0 %2346
    %v2350 = vunpack.c.l.s4 839922192
    %v2351 = vunpack.c.0.s8 %v2350
    %v2352 = vlaneseq
    %v2353 = vshrl.u32 %v2352, 7
    %v2354 = vsub.s32 %v2351, %v2353
    %v2355 = vrot.slane %v2347, %v2354
    %2357 = vset.pattern.permute.xlu0 0
    %2358 = vperm.xlu0 %2357, %v1887
    %v2359 = vpop.permute.xlu0 %2358
    %v2362 = vunpack.c.l.s4 839922192
    %v2363 = vunpack.c.0.s8 %v2362
    %v2364 = vlaneseq
    %v2365 = vshrl.u32 %v2364, 7
    %v2366 = vsub.s32 %v2363, %v2365
    %v2367 = vrot.slane %v2359, %v2366
    %2369 = vset.pattern.permute.xlu0 0
    %2370 = vperm.xlu0 %2369, %v1888
    %v2371 = vpop.permute.xlu0 %2370
    %v2374 = vunpack.c.l.s4 839922192
    %v2375 = vunpack.c.0.s8 %v2374
    %v2376 = vlaneseq
    %v2377 = vshrl.u32 %v2376, 7
    %v2378 = vsub.s32 %v2375, %v2377
    %v2379 = vrot.slane %v2371, %v2378
    %2381 = vset.pattern.permute.xlu0 0
    %2382 = vperm.xlu0 %2381, %v1889
    %v2383 = vpop.permute.xlu0 %2382
    %v2386 = vunpack.c.l.s4 839922192
    %v2387 = vunpack.c.0.s8 %v2386
    %v2388 = vlaneseq
    %v2389 = vshrl.u32 %v2388, 7
    %v2390 = vsub.s32 %v2387, %v2389
    %v2391 = vrot.slane %v2383, %v2390
    %2393 = vset.pattern.permute.xlu0 0
    %2394 = vperm.xlu0 %2393, %v1890
    %v2395 = vpop.permute.xlu0 %2394
    %v2398 = vunpack.c.l.s4 839922192
    %v2399 = vunpack.c.0.s8 %v2398
    %v2400 = vlaneseq
    %v2401 = vshrl.u32 %v2400, 7
    %v2402 = vsub.s32 %v2399, %v2401
    %v2403 = vrot.slane %v2395, %v2402
    %2405 = vset.pattern.permute.xlu0 0
    %2406 = vperm.xlu0 %2405, %v1891
    %v2407 = vpop.permute.xlu0 %2406
    %v2410 = vunpack.c.l.s4 839922192
    %v2411 = vunpack.c.0.s8 %v2410
    %v2412 = vlaneseq
    %v2413 = vshrl.u32 %v2412, 7
    %v2414 = vsub.s32 %v2411, %v2413
    %v2415 = vrot.slane %v2407, %v2414
    %2417 = vset.pattern.permute.xlu0 0
    %2418 = vperm.xlu0 %2417, %v1892
    %v2419 = vpop.permute.xlu0 %2418
    %v2422 = vunpack.c.l.s4 839922192
    %v2423 = vunpack.c.0.s8 %v2422
    %v2424 = vlaneseq
    %v2425 = vshrl.u32 %v2424, 7
    %v2426 = vsub.s32 %v2423, %v2425
    %v2427 = vrot.slane %v2419, %v2426
    %2429 = vset.pattern.permute.xlu0 0
    %2430 = vperm.xlu0 %2429, %v1893
    %v2431 = vpop.permute.xlu0 %2430
    %v2434 = vunpack.c.l.s4 839922192
    %v2435 = vunpack.c.0.s8 %v2434
    %v2436 = vlaneseq
    %v2437 = vshrl.u32 %v2436, 7
    %v2438 = vsub.s32 %v2435, %v2437
    %v2439 = vrot.slane %v2431, %v2438
    %2441 = vset.pattern.permute.xlu0 0
    %2442 = vperm.xlu0 %2441, %v1894
    %v2443 = vpop.permute.xlu0 %2442
    %v2446 = vunpack.c.l.s4 839922192
    %v2447 = vunpack.c.0.s8 %v2446
    %v2448 = vlaneseq
    %v2449 = vshrl.u32 %v2448, 7
    %v2450 = vsub.s32 %v2447, %v2449
    %v2451 = vrot.slane %v2443, %v2450
    %2453 = vset.pattern.permute.xlu0 0
    %2454 = vperm.xlu0 %2453, %v1895
    %v2455 = vpop.permute.xlu0 %2454
    %v2458 = vunpack.c.l.s4 839922192
    %v2459 = vunpack.c.0.s8 %v2458
    %v2460 = vlaneseq
    %v2461 = vshrl.u32 %v2460, 7
    %v2462 = vsub.s32 %v2459, %v2461
    %v2463 = vrot.slane %v2455, %v2462
    %2465 = vset.pattern.permute.xlu0 0
    %2466 = vperm.xlu0 %2465, %v1896
    %v2467 = vpop.permute.xlu0 %2466
    %v2470 = vunpack.c.l.s4 839922192
    %v2471 = vunpack.c.0.s8 %v2470
    %v2472 = vlaneseq
    %v2473 = vshrl.u32 %v2472, 7
    %v2474 = vsub.s32 %v2471, %v2473
    %v2475 = vrot.slane %v2467, %v2474
    %2477 = vset.pattern.permute.xlu0 0
    %2478 = vperm.xlu0 %2477, %v1897
    %v2479 = vpop.permute.xlu0 %2478
    %v2482 = vunpack.c.l.s4 839922192
    %v2483 = vunpack.c.0.s8 %v2482
    %v2484 = vlaneseq
    %v2485 = vshrl.u32 %v2484, 7
    %v2486 = vsub.s32 %v2483, %v2485
    %v2487 = vrot.slane %v2479, %v2486
    %2489 = vset.pattern.permute.xlu0 0
    %2490 = vperm.xlu0 %2489, %v1898
    %v2491 = vpop.permute.xlu0 %2490
    %v2494 = vunpack.c.l.s4 839922192
    %v2495 = vunpack.c.0.s8 %v2494
    %v2496 = vlaneseq
    %v2497 = vshrl.u32 %v2496, 7
    %v2498 = vsub.s32 %v2495, %v2497
    %v2499 = vrot.slane %v2491, %v2498
    %2501 = vset.pattern.permute.xlu0 0
    %2502 = vperm.xlu0 %2501, %v1899
    %v2503 = vpop.permute.xlu0 %2502
    %v2506 = vunpack.c.l.s4 839922192
    %v2507 = vunpack.c.0.s8 %v2506
    %v2508 = vlaneseq
    %v2509 = vshrl.u32 %v2508, 7
    %v2510 = vsub.s32 %v2507, %v2509
    %v2511 = vrot.slane %v2503, %v2510
    %2513 = vset.pattern.permute.xlu0 0
    %2514 = vperm.xlu0 %2513, %v1900
    %v2515 = vpop.permute.xlu0 %2514
    %v2518 = vunpack.c.l.s4 839922192
    %v2519 = vunpack.c.0.s8 %v2518
    %v2520 = vlaneseq
    %v2521 = vshrl.u32 %v2520, 7
    %v2522 = vsub.s32 %v2519, %v2521
    %v2523 = vrot.slane %v2515, %v2522
    %2525 = vset.pattern.permute.xlu0 0
    %2526 = vperm.xlu0 %2525, %v1901
    %v2527 = vpop.permute.xlu0 %2526
    %v2530 = vunpack.c.l.s4 839922192
    %v2531 = vunpack.c.0.s8 %v2530
    %v2532 = vlaneseq
    %v2533 = vshrl.u32 %v2532, 7
    %v2534 = vsub.s32 %v2531, %v2533
    %v2535 = vrot.slane %v2527, %v2534
    %2537 = vset.pattern.permute.xlu0 0
    %2538 = vperm.xlu0 %2537, %v1902
    %v2539 = vpop.permute.xlu0 %2538
    %v2542 = vunpack.c.l.s4 839922192
    %v2543 = vunpack.c.0.s8 %v2542
    %v2544 = vlaneseq
    %v2545 = vshrl.u32 %v2544, 7
    %v2546 = vsub.s32 %v2543, %v2545
    %v2547 = vrot.slane %v2539, %v2546
    %2549 = vset.pattern.permute.xlu0 0
    %2550 = vperm.xlu0 %2549, %v1903
    %v2551 = vpop.permute.xlu0 %2550
    %v2554 = vunpack.c.l.s4 839922192
    %v2555 = vunpack.c.0.s8 %v2554
    %v2556 = vlaneseq
    %v2557 = vshrl.u32 %v2556, 7
    %v2558 = vsub.s32 %v2555, %v2557
    %v2559 = vrot.slane %v2551, %v2558
    %2561 = vset.pattern.permute.xlu0 0
    %2562 = vperm.xlu0 %2561, %v1904
    %v2563 = vpop.permute.xlu0 %2562
    %v2566 = vunpack.c.l.s4 839922192
    %v2567 = vunpack.c.0.s8 %v2566
    %v2568 = vlaneseq
    %v2569 = vshrl.u32 %v2568, 7
    %v2570 = vsub.s32 %v2567, %v2569
    %v2571 = vrot.slane %v2563, %v2570
    %2573 = vset.pattern.permute.xlu0 0
    %2574 = vperm.xlu0 %2573, %v1905
    %v2575 = vpop.permute.xlu0 %2574
    %v2578 = vunpack.c.l.s4 839922192
    %v2579 = vunpack.c.0.s8 %v2578
    %v2580 = vlaneseq
    %v2581 = vshrl.u32 %v2580, 7
    %v2582 = vsub.s32 %v2579, %v2581
    %v2583 = vrot.slane %v2575, %v2582
    %2585 = vset.pattern.permute.xlu0 0
    %2586 = vperm.xlu0 %2585, %v1906
    %v2587 = vpop.permute.xlu0 %2586
    %v2590 = vunpack.c.l.s4 839922192
    %v2591 = vunpack.c.0.s8 %v2590
    %v2592 = vlaneseq
    %v2593 = vshrl.u32 %v2592, 7
    %v2594 = vsub.s32 %v2591, %v2593
    %v2595 = vrot.slane %v2587, %v2594
    %2597 = vset.pattern.permute.xlu0 0
    %2598 = vperm.xlu0 %2597, %v1907
    %v2599 = vpop.permute.xlu0 %2598
    %v2602 = vunpack.c.l.s4 839922192
    %v2603 = vunpack.c.0.s8 %v2602
    %v2604 = vlaneseq
    %v2605 = vshrl.u32 %v2604, 7
    %v2606 = vsub.s32 %v2603, %v2605
    %v2607 = vrot.slane %v2599, %v2606
    %2609 = vset.pattern.permute.xlu0 0
    %2610 = vperm.xlu0 %2609, %v1908
    %v2611 = vpop.permute.xlu0 %2610
    %v2614 = vunpack.c.l.s4 839922192
    %v2615 = vunpack.c.0.s8 %v2614
    %v2616 = vlaneseq
    %v2617 = vshrl.u32 %v2616, 7
    %v2618 = vsub.s32 %v2615, %v2617
    %v2619 = vrot.slane %v2611, %v2618
    %2621 = vset.pattern.permute.xlu0 0
    %2622 = vperm.xlu0 %2621, %v1909
    %v2623 = vpop.permute.xlu0 %2622
    %v2626 = vunpack.c.l.s4 839922192
    %v2627 = vunpack.c.0.s8 %v2626
    %v2628 = vlaneseq
    %v2629 = vshrl.u32 %v2628, 7
    %v2630 = vsub.s32 %v2627, %v2629
    %v2631 = vrot.slane %v2623, %v2630
    %2633 = vset.pattern.permute.xlu0 0
    %2634 = vperm.xlu0 %2633, %v1910
    %v2635 = vpop.permute.xlu0 %2634
    %v2638 = vunpack.c.l.s4 839922192
    %v2639 = vunpack.c.0.s8 %v2638
    %v2640 = vlaneseq
    %v2641 = vshrl.u32 %v2640, 7
    %v2642 = vsub.s32 %v2639, %v2641
    %v2643 = vrot.slane %v2635, %v2642
    %2645 = vset.pattern.permute.xlu0 0
    %2646 = vperm.xlu0 %2645, %v1911
    %v2647 = vpop.permute.xlu0 %2646
    %v2650 = vunpack.c.l.s4 839922192
    %v2651 = vunpack.c.0.s8 %v2650
    %v2652 = vlaneseq
    %v2653 = vshrl.u32 %v2652, 7
    %v2654 = vsub.s32 %v2651, %v2653
    %v2655 = vrot.slane %v2647, %v2654
    %2657 = vset.pattern.permute.xlu0 0
    %2658 = vperm.xlu0 %2657, %v1912
    %v2659 = vpop.permute.xlu0 %2658
    %v2662 = vunpack.c.l.s4 839922192
    %v2663 = vunpack.c.0.s8 %v2662
    %v2664 = vlaneseq
    %v2665 = vshrl.u32 %v2664, 7
    %v2666 = vsub.s32 %v2663, %v2665
    %v2667 = vrot.slane %v2659, %v2666
    %2669 = vset.pattern.permute.xlu0 0
    %2670 = vperm.xlu0 %2669, %v1913
    %v2671 = vpop.permute.xlu0 %2670
    %v2674 = vunpack.c.l.s4 839922192
    %v2675 = vunpack.c.0.s8 %v2674
    %v2676 = vlaneseq
    %v2677 = vshrl.u32 %v2676, 7
    %v2678 = vsub.s32 %v2675, %v2677
    %v2679 = vrot.slane %v2671, %v2678
    %2681 = vset.pattern.permute.xlu0 0
    %2682 = vperm.xlu0 %2681, %v1914
    %v2683 = vpop.permute.xlu0 %2682
    %v2686 = vunpack.c.l.s4 839922192
    %v2687 = vunpack.c.0.s8 %v2686
    %v2688 = vlaneseq
    %v2689 = vshrl.u32 %v2688, 7
    %v2690 = vsub.s32 %v2687, %v2689
    %v2691 = vrot.slane %v2683, %v2690
    %2693 = vset.pattern.permute.xlu0 0
    %2694 = vperm.xlu0 %2693, %v1915
    %v2695 = vpop.permute.xlu0 %2694
    %v2698 = vunpack.c.l.s4 839922192
    %v2699 = vunpack.c.0.s8 %v2698
    %v2700 = vlaneseq
    %v2701 = vshrl.u32 %v2700, 7
    %v2702 = vsub.s32 %v2699, %v2701
    %v2703 = vrot.slane %v2695, %v2702
    %2705 = vset.pattern.permute.xlu0 0
    %2706 = vperm.xlu0 %2705, %v1916
    %v2707 = vpop.permute.xlu0 %2706
    %v2710 = vunpack.c.l.s4 839922192
    %v2711 = vunpack.c.0.s8 %v2710
    %v2712 = vlaneseq
    %v2713 = vshrl.u32 %v2712, 7
    %v2714 = vsub.s32 %v2711, %v2713
    %v2715 = vrot.slane %v2707, %v2714
    %2717 = vset.pattern.permute.xlu0 0
    %2718 = vperm.xlu0 %2717, %v1917
    %v2719 = vpop.permute.xlu0 %2718
    %v2722 = vunpack.c.l.s4 839922192
    %v2723 = vunpack.c.0.s8 %v2722
    %v2724 = vlaneseq
    %v2725 = vshrl.u32 %v2724, 7
    %v2726 = vsub.s32 %v2723, %v2725
    %v2727 = vrot.slane %v2719, %v2726
    %2729 = vset.pattern.permute.xlu0 0
    %2730 = vperm.xlu0 %2729, %v1918
    %v2731 = vpop.permute.xlu0 %2730
    %v2734 = vunpack.c.l.s4 839922192
    %v2735 = vunpack.c.0.s8 %v2734
    %v2736 = vlaneseq
    %v2737 = vshrl.u32 %v2736, 7
    %v2738 = vsub.s32 %v2735, %v2737
    %v2739 = vrot.slane %v2731, %v2738
    %2741 = vset.pattern.permute.xlu0 0
    %2742 = vperm.xlu0 %2741, %v1919
    %v2743 = vpop.permute.xlu0 %2742
    %v2746 = vunpack.c.l.s4 839922192
    %v2747 = vunpack.c.0.s8 %v2746
    %v2748 = vlaneseq
    %v2749 = vshrl.u32 %v2748, 7
    %v2750 = vsub.s32 %v2747, %v2749
    %v2751 = vrot.slane %v2743, %v2750
    %2753 = vset.pattern.permute.xlu0 0
    %2754 = vperm.xlu0 %2753, %v1920
    %v2755 = vpop.permute.xlu0 %2754
    %v2758 = vunpack.c.l.s4 839922192
    %v2759 = vunpack.c.0.s8 %v2758
    %v2760 = vlaneseq
    %v2761 = vshrl.u32 %v2760, 7
    %v2762 = vsub.s32 %v2759, %v2761
    %v2763 = vrot.slane %v2755, %v2762
    %2765 = vset.pattern.permute.xlu0 0
    %2766 = vperm.xlu0 %2765, %v1921
    %v2767 = vpop.permute.xlu0 %2766
    %v2770 = vunpack.c.l.s4 839922192
    %v2771 = vunpack.c.0.s8 %v2770
    %v2772 = vlaneseq
    %v2773 = vshrl.u32 %v2772, 7
    %v2774 = vsub.s32 %v2771, %v2773
    %v2775 = vrot.slane %v2767, %v2774
    %2777 = vset.pattern.permute.xlu0 0
    %2778 = vperm.xlu0 %2777, %v1922
    %v2779 = vpop.permute.xlu0 %2778
    %v2782 = vunpack.c.l.s4 839922192
    %v2783 = vunpack.c.0.s8 %v2782
    %v2784 = vlaneseq
    %v2785 = vshrl.u32 %v2784, 7
    %v2786 = vsub.s32 %v2783, %v2785
    %v2787 = vrot.slane %v2779, %v2786
    %2789 = vset.pattern.permute.xlu0 0
    %2790 = vperm.xlu0 %2789, %v1923
    %v2791 = vpop.permute.xlu0 %2790
    %v2794 = vunpack.c.l.s4 839922192
    %v2795 = vunpack.c.0.s8 %v2794
    %v2796 = vlaneseq
    %v2797 = vshrl.u32 %v2796, 7
    %v2798 = vsub.s32 %v2795, %v2797
    %v2799 = vrot.slane %v2791, %v2798
    %2801 = vset.pattern.permute.xlu0 0
    %2802 = vperm.xlu0 %2801, %v1924
    %v2803 = vpop.permute.xlu0 %2802
    %v2806 = vunpack.c.l.s4 839922192
    %v2807 = vunpack.c.0.s8 %v2806
    %v2808 = vlaneseq
    %v2809 = vshrl.u32 %v2808, 7
    %v2810 = vsub.s32 %v2807, %v2809
    %v2811 = vrot.slane %v2803, %v2810
    %2813 = vset.pattern.permute.xlu0 0
    %2814 = vperm.xlu0 %2813, %v1925
    %v2815 = vpop.permute.xlu0 %2814
    %v2818 = vunpack.c.l.s4 839922192
    %v2819 = vunpack.c.0.s8 %v2818
    %v2820 = vlaneseq
    %v2821 = vshrl.u32 %v2820, 7
    %v2822 = vsub.s32 %v2819, %v2821
    %v2823 = vrot.slane %v2815, %v2822
    %2825 = vset.pattern.permute.xlu0 0
    %2826 = vperm.xlu0 %2825, %v1926
    %v2827 = vpop.permute.xlu0 %2826
    %v2830 = vunpack.c.l.s4 839922192
    %v2831 = vunpack.c.0.s8 %v2830
    %v2832 = vlaneseq
    %v2833 = vshrl.u32 %v2832, 7
    %v2834 = vsub.s32 %v2831, %v2833
    %v2835 = vrot.slane %v2827, %v2834
    %2837 = vset.pattern.permute.xlu0 0
    %2838 = vperm.xlu0 %2837, %v1927
    %v2839 = vpop.permute.xlu0 %2838
    %v2842 = vunpack.c.l.s4 839922192
    %v2843 = vunpack.c.0.s8 %v2842
    %v2844 = vlaneseq
    %v2845 = vshrl.u32 %v2844, 7
    %v2846 = vsub.s32 %v2843, %v2845
    %v2847 = vrot.slane %v2839, %v2846
    %2849 = vset.pattern.permute.xlu0 0
    %2850 = vperm.xlu0 %2849, %v1928
    %v2851 = vpop.permute.xlu0 %2850
    %v2854 = vunpack.c.l.s4 839922192
    %v2855 = vunpack.c.0.s8 %v2854
    %v2856 = vlaneseq
    %v2857 = vshrl.u32 %v2856, 7
    %v2858 = vsub.s32 %v2855, %v2857
    %v2859 = vrot.slane %v2851, %v2858
    %2861 = vset.pattern.permute.xlu0 0
    %2862 = vperm.xlu0 %2861, %v1929
    %v2863 = vpop.permute.xlu0 %2862
    %v2866 = vunpack.c.l.s4 839922192
    %v2867 = vunpack.c.0.s8 %v2866
    %v2868 = vlaneseq
    %v2869 = vshrl.u32 %v2868, 7
    %v2870 = vsub.s32 %v2867, %v2869
    %v2871 = vrot.slane %v2863, %v2870
    %2873 = vset.pattern.permute.xlu0 0
    %2874 = vperm.xlu0 %2873, %v1930
    %v2875 = vpop.permute.xlu0 %2874
    %v2878 = vunpack.c.l.s4 839922192
    %v2879 = vunpack.c.0.s8 %v2878
    %v2880 = vlaneseq
    %v2881 = vshrl.u32 %v2880, 7
    %v2882 = vsub.s32 %v2879, %v2881
    %v2883 = vrot.slane %v2875, %v2882
    %2885 = vset.pattern.permute.xlu0 0
    %2886 = vperm.xlu0 %2885, %v1931
    %v2887 = vpop.permute.xlu0 %2886
    %v2890 = vunpack.c.l.s4 839922192
    %v2891 = vunpack.c.0.s8 %v2890
    %v2892 = vlaneseq
    %v2893 = vshrl.u32 %v2892, 7
    %v2894 = vsub.s32 %v2891, %v2893
    %v2895 = vrot.slane %v2887, %v2894
    %2897 = vset.pattern.permute.xlu0 0
    %2898 = vperm.xlu0 %2897, %v1932
    %v2899 = vpop.permute.xlu0 %2898
    %v2902 = vunpack.c.l.s4 839922192
    %v2903 = vunpack.c.0.s8 %v2902
    %v2904 = vlaneseq
    %v2905 = vshrl.u32 %v2904, 7
    %v2906 = vsub.s32 %v2903, %v2905
    %v2907 = vrot.slane %v2899, %v2906
    %2909 = vset.pattern.permute.xlu0 0
    %2910 = vperm.xlu0 %2909, %v1933
    %v2911 = vpop.permute.xlu0 %2910
    %v2914 = vunpack.c.l.s4 839922192
    %v2915 = vunpack.c.0.s8 %v2914
    %v2916 = vlaneseq
    %v2917 = vshrl.u32 %v2916, 7
    %v2918 = vsub.s32 %v2915, %v2917
    %v2919 = vrot.slane %v2911, %v2918
    %2921 = vset.pattern.permute.xlu0 0
    %2922 = vperm.xlu0 %2921, %v1934
    %v2923 = vpop.permute.xlu0 %2922
    %v2926 = vunpack.c.l.s4 839922192
    %v2927 = vunpack.c.0.s8 %v2926
    %v2928 = vlaneseq
    %v2929 = vshrl.u32 %v2928, 7
    %v2930 = vsub.s32 %v2927, %v2929
    %v2931 = vrot.slane %v2923, %v2930
    %2933 = vset.pattern.permute.xlu0 0
    %2934 = vperm.xlu0 %2933, %v1935
    %v2935 = vpop.permute.xlu0 %2934
    %v2938 = vunpack.c.l.s4 839922192
    %v2939 = vunpack.c.0.s8 %v2938
    %v2940 = vlaneseq
    %v2941 = vshrl.u32 %v2940, 7
    %v2942 = vsub.s32 %v2939, %v2941
    %v2943 = vrot.slane %v2935, %v2942
    %2945 = vset.pattern.permute.xlu0 0
    %2946 = vperm.xlu0 %2945, %v1936
    %v2947 = vpop.permute.xlu0 %2946
    %v2950 = vunpack.c.l.s4 839922192
    %v2951 = vunpack.c.0.s8 %v2950
    %v2952 = vlaneseq
    %v2953 = vshrl.u32 %v2952, 7
    %v2954 = vsub.s32 %v2951, %v2953
    %v2955 = vrot.slane %v2947, %v2954
    %2957 = vset.pattern.permute.xlu0 0
    %2958 = vperm.xlu0 %2957, %v1937
    %v2959 = vpop.permute.xlu0 %2958
    %v2962 = vunpack.c.l.s4 839922192
    %v2963 = vunpack.c.0.s8 %v2962
    %v2964 = vlaneseq
    %v2965 = vshrl.u32 %v2964, 7
    %v2966 = vsub.s32 %v2963, %v2965
    %v2967 = vrot.slane %v2959, %v2966
    %2969 = vset.pattern.permute.xlu0 0
    %2970 = vperm.xlu0 %2969, %v1938
    %v2971 = vpop.permute.xlu0 %2970
    %v2974 = vunpack.c.l.s4 839922192
    %v2975 = vunpack.c.0.s8 %v2974
    %v2976 = vlaneseq
    %v2977 = vshrl.u32 %v2976, 7
    %v2978 = vsub.s32 %v2975, %v2977
    %v2979 = vrot.slane %v2971, %v2978
    %2981 = vset.pattern.permute.xlu0 0
    %2982 = vperm.xlu0 %2981, %v1939
    %v2983 = vpop.permute.xlu0 %2982
    %v2986 = vunpack.c.l.s4 839922192
    %v2987 = vunpack.c.0.s8 %v2986
    %v2988 = vlaneseq
    %v2989 = vshrl.u32 %v2988, 7
    %v2990 = vsub.s32 %v2987, %v2989
    %v2991 = vrot.slane %v2983, %v2990
    %2993 = vset.pattern.permute.xlu0 0
    %2994 = vperm.xlu0 %2993, %v1940
    %v2995 = vpop.permute.xlu0 %2994
    %v2998 = vunpack.c.l.s4 839922192
    %v2999 = vunpack.c.0.s8 %v2998
    %v3000 = vlaneseq
    %v3001 = vshrl.u32 %v3000, 7
    %v3002 = vsub.s32 %v2999, %v3001
    %v3003 = vrot.slane %v2995, %v3002
    %3005 = vset.pattern.permute.xlu0 0
    %3006 = vperm.xlu0 %3005, %v1941
    %v3007 = vpop.permute.xlu0 %3006
    %v3010 = vunpack.c.l.s4 839922192
    %v3011 = vunpack.c.0.s8 %v3010
    %v3012 = vlaneseq
    %v3013 = vshrl.u32 %v3012, 7
    %v3014 = vsub.s32 %v3011, %v3013
    %v3015 = vrot.slane %v3007, %v3014
    %3017 = vset.pattern.permute.xlu0 0
    %3018 = vperm.xlu0 %3017, %v1942
    %v3019 = vpop.permute.xlu0 %3018
    %v3022 = vunpack.c.l.s4 839922192
    %v3023 = vunpack.c.0.s8 %v3022
    %v3024 = vlaneseq
    %v3025 = vshrl.u32 %v3024, 7
    %v3026 = vsub.s32 %v3023, %v3025
    %v3027 = vrot.slane %v3019, %v3026
    %3029 = vset.pattern.permute.xlu0 0
    %3030 = vperm.xlu0 %3029, %v1943
    %v3031 = vpop.permute.xlu0 %3030
    %v3034 = vunpack.c.l.s4 839922192
    %v3035 = vunpack.c.0.s8 %v3034
    %v3036 = vlaneseq
    %v3037 = vshrl.u32 %v3036, 7
    %v3038 = vsub.s32 %v3035, %v3037
    %v3039 = vrot.slane %v3031, %v3038
    %3041 = vset.pattern.permute.xlu0 0
    %3042 = vperm.xlu0 %3041, %v1944
    %v3043 = vpop.permute.xlu0 %3042
    %v3046 = vunpack.c.l.s4 839922192
    %v3047 = vunpack.c.0.s8 %v3046
    %v3048 = vlaneseq
    %v3049 = vshrl.u32 %v3048, 7
    %v3050 = vsub.s32 %v3047, %v3049
    %v3051 = vrot.slane %v3043, %v3050
    %3053 = vset.pattern.permute.xlu0 0
    %3054 = vperm.xlu0 %3053, %v1945
    %v3055 = vpop.permute.xlu0 %3054
    %v3058 = vunpack.c.l.s4 839922192
    %v3059 = vunpack.c.0.s8 %v3058
    %v3060 = vlaneseq
    %v3061 = vshrl.u32 %v3060, 7
    %v3062 = vsub.s32 %v3059, %v3061
    %v3063 = vrot.slane %v3055, %v3062
    %3065 = vset.pattern.permute.xlu0 0
    %3066 = vperm.xlu0 %3065, %v1946
    %v3067 = vpop.permute.xlu0 %3066
    %v3070 = vunpack.c.l.s4 839922192
    %v3071 = vunpack.c.0.s8 %v3070
    %v3072 = vlaneseq
    %v3073 = vshrl.u32 %v3072, 7
    %v3074 = vsub.s32 %v3071, %v3073
    %v3075 = vrot.slane %v3067, %v3074
    %3077 = vset.pattern.permute.xlu0 0
    %3078 = vperm.xlu0 %3077, %v1947
    %v3079 = vpop.permute.xlu0 %3078
    %v3082 = vunpack.c.l.s4 839922192
    %v3083 = vunpack.c.0.s8 %v3082
    %v3084 = vlaneseq
    %v3085 = vshrl.u32 %v3084, 7
    %v3086 = vsub.s32 %v3083, %v3085
    %v3087 = vrot.slane %v3079, %v3086
    %3089 = vset.pattern.permute.xlu0 0
    %3090 = vperm.xlu0 %3089, %v1948
    %v3091 = vpop.permute.xlu0 %3090
    %v3094 = vunpack.c.l.s4 839922192
    %v3095 = vunpack.c.0.s8 %v3094
    %v3096 = vlaneseq
    %v3097 = vshrl.u32 %v3096, 7
    %v3098 = vsub.s32 %v3095, %v3097
    %v3099 = vrot.slane %v3091, %v3098
    %3101 = vset.pattern.permute.xlu0 0
    %3102 = vperm.xlu0 %3101, %v1949
    %v3103 = vpop.permute.xlu0 %3102
    %v3106 = vunpack.c.l.s4 839922192
    %v3107 = vunpack.c.0.s8 %v3106
    %v3108 = vlaneseq
    %v3109 = vshrl.u32 %v3108, 7
    %v3110 = vsub.s32 %v3107, %v3109
    %v3111 = vrot.slane %v3103, %v3110
    %3113 = vset.pattern.permute.xlu0 0
    %3114 = vperm.xlu0 %3113, %v1950
    %v3115 = vpop.permute.xlu0 %3114
    %v3118 = vunpack.c.l.s4 839922192
    %v3119 = vunpack.c.0.s8 %v3118
    %v3120 = vlaneseq
    %v3121 = vshrl.u32 %v3120, 7
    %v3122 = vsub.s32 %v3119, %v3121
    %v3123 = vrot.slane %v3115, %v3122
    %3125 = vset.pattern.permute.xlu0 0
    %3126 = vperm.xlu0 %3125, %v1951
    %v3127 = vpop.permute.xlu0 %3126
    %v3130 = vunpack.c.l.s4 839922192
    %v3131 = vunpack.c.0.s8 %v3130
    %v3132 = vlaneseq
    %v3133 = vshrl.u32 %v3132, 7
    %v3134 = vsub.s32 %v3131, %v3133
    %v3135 = vrot.slane %v3127, %v3134
    %3137 = vset.pattern.permute.xlu0 0
    %3138 = vperm.xlu0 %3137, %v1952
    %v3139 = vpop.permute.xlu0 %3138
    %v3142 = vunpack.c.l.s4 839922192
    %v3143 = vunpack.c.0.s8 %v3142
    %v3144 = vlaneseq
    %v3145 = vshrl.u32 %v3144, 7
    %v3146 = vsub.s32 %v3143, %v3145
    %v3147 = vrot.slane %v3139, %v3146
    %3149 = vset.pattern.permute.xlu0 0
    %3150 = vperm.xlu0 %3149, %v1953
    %v3151 = vpop.permute.xlu0 %3150
    %v3154 = vunpack.c.l.s4 839922192
    %v3155 = vunpack.c.0.s8 %v3154
    %v3156 = vlaneseq
    %v3157 = vshrl.u32 %v3156, 7
    %v3158 = vsub.s32 %v3155, %v3157
    %v3159 = vrot.slane %v3151, %v3158
    %3161 = vset.pattern.permute.xlu0 0
    %3162 = vperm.xlu0 %3161, %v1954
    %v3163 = vpop.permute.xlu0 %3162
    %v3166 = vunpack.c.l.s4 839922192
    %v3167 = vunpack.c.0.s8 %v3166
    %v3168 = vlaneseq
    %v3169 = vshrl.u32 %v3168, 7
    %v3170 = vsub.s32 %v3167, %v3169
    %v3171 = vrot.slane %v3163, %v3170
    %3173 = vset.pattern.permute.xlu0 0
    %3174 = vperm.xlu0 %3173, %v1955
    %v3175 = vpop.permute.xlu0 %3174
    %v3178 = vunpack.c.l.s4 839922192
    %v3179 = vunpack.c.0.s8 %v3178
    %v3180 = vlaneseq
    %v3181 = vshrl.u32 %v3180, 7
    %v3182 = vsub.s32 %v3179, %v3181
    %v3183 = vrot.slane %v3175, %v3182
    %3185 = vset.pattern.permute.xlu0 0
    %3186 = vperm.xlu0 %3185, %v1956
    %v3187 = vpop.permute.xlu0 %3186
    %v3190 = vunpack.c.l.s4 839922192
    %v3191 = vunpack.c.0.s8 %v3190
    %v3192 = vlaneseq
    %v3193 = vshrl.u32 %v3192, 7
    %v3194 = vsub.s32 %v3191, %v3193
    %v3195 = vrot.slane %v3187, %v3194
    %3197 = vset.pattern.permute.xlu0 0
    %3198 = vperm.xlu0 %3197, %v1957
    %v3199 = vpop.permute.xlu0 %3198
    %v3202 = vunpack.c.l.s4 839922192
    %v3203 = vunpack.c.0.s8 %v3202
    %v3204 = vlaneseq
    %v3205 = vshrl.u32 %v3204, 7
    %v3206 = vsub.s32 %v3203, %v3205
    %v3207 = vrot.slane %v3199, %v3206
    %3209 = vset.pattern.permute.xlu0 0
    %3210 = vperm.xlu0 %3209, %v1958
    %v3211 = vpop.permute.xlu0 %3210
    %v3214 = vunpack.c.l.s4 839922192
    %v3215 = vunpack.c.0.s8 %v3214
    %v3216 = vlaneseq
    %v3217 = vshrl.u32 %v3216, 7
    %v3218 = vsub.s32 %v3215, %v3217
    %v3219 = vrot.slane %v3211, %v3218
    %3221 = vset.pattern.permute.xlu0 0
    %3222 = vperm.xlu0 %3221, %v1959
    %v3223 = vpop.permute.xlu0 %3222
    %v3226 = vunpack.c.l.s4 839922192
    %v3227 = vunpack.c.0.s8 %v3226
    %v3228 = vlaneseq
    %v3229 = vshrl.u32 %v3228, 7
    %v3230 = vsub.s32 %v3227, %v3229
    %v3231 = vrot.slane %v3223, %v3230
    %3233 = vset.pattern.permute.xlu0 0
    %3234 = vperm.xlu0 %3233, %v1960
    %v3235 = vpop.permute.xlu0 %3234
    %v3238 = vunpack.c.l.s4 839922192
    %v3239 = vunpack.c.0.s8 %v3238
    %v3240 = vlaneseq
    %v3241 = vshrl.u32 %v3240, 7
    %v3242 = vsub.s32 %v3239, %v3241
    %v3243 = vrot.slane %v3235, %v3242
    %3245 = vset.pattern.permute.xlu0 0
    %3246 = vperm.xlu0 %3245, %v1961
    %v3247 = vpop.permute.xlu0 %3246
    %v3250 = vunpack.c.l.s4 839922192
    %v3251 = vunpack.c.0.s8 %v3250
    %v3252 = vlaneseq
    %v3253 = vshrl.u32 %v3252, 7
    %v3254 = vsub.s32 %v3251, %v3253
    %v3255 = vrot.slane %v3247, %v3254
    %3257 = vset.pattern.permute.xlu0 0
    %3258 = vperm.xlu0 %3257, %v1962
    %v3259 = vpop.permute.xlu0 %3258
    %v3262 = vunpack.c.l.s4 839922192
    %v3263 = vunpack.c.0.s8 %v3262
    %v3264 = vlaneseq
    %v3265 = vshrl.u32 %v3264, 7
    %v3266 = vsub.s32 %v3263, %v3265
    %v3267 = vrot.slane %v3259, %v3266
    %3269 = vset.pattern.permute.xlu0 0
    %3270 = vperm.xlu0 %3269, %v1963
    %v3271 = vpop.permute.xlu0 %3270
    %v3274 = vunpack.c.l.s4 839922192
    %v3275 = vunpack.c.0.s8 %v3274
    %v3276 = vlaneseq
    %v3277 = vshrl.u32 %v3276, 7
    %v3278 = vsub.s32 %v3275, %v3277
    %v3279 = vrot.slane %v3271, %v3278
    %3281 = vset.pattern.permute.xlu0 0
    %3282 = vperm.xlu0 %3281, %v1964
    %v3283 = vpop.permute.xlu0 %3282
    %v3286 = vunpack.c.l.s4 839922192
    %v3287 = vunpack.c.0.s8 %v3286
    %v3288 = vlaneseq
    %v3289 = vshrl.u32 %v3288, 7
    %v3290 = vsub.s32 %v3287, %v3289
    %v3291 = vrot.slane %v3283, %v3290
    %3293 = vset.pattern.permute.xlu0 0
    %3294 = vperm.xlu0 %3293, %v1965
    %v3295 = vpop.permute.xlu0 %3294
    %v3298 = vunpack.c.l.s4 839922192
    %v3299 = vunpack.c.0.s8 %v3298
    %v3300 = vlaneseq
    %v3301 = vshrl.u32 %v3300, 7
    %v3302 = vsub.s32 %v3299, %v3301
    %v3303 = vrot.slane %v3295, %v3302
    %3305 = vset.pattern.permute.xlu0 0
    %3306 = vperm.xlu0 %3305, %v1966
    %v3307 = vpop.permute.xlu0 %3306
    %v3310 = vunpack.c.l.s4 839922192
    %v3311 = vunpack.c.0.s8 %v3310
    %v3312 = vlaneseq
    %v3313 = vshrl.u32 %v3312, 7
    %v3314 = vsub.s32 %v3311, %v3313
    %v3315 = vrot.slane %v3307, %v3314
    %3317 = vset.pattern.permute.xlu0 0
    %3318 = vperm.xlu0 %3317, %v1967
    %v3319 = vpop.permute.xlu0 %3318
    %v3322 = vunpack.c.l.s4 839922192
    %v3323 = vunpack.c.0.s8 %v3322
    %v3324 = vlaneseq
    %v3325 = vshrl.u32 %v3324, 7
    %v3326 = vsub.s32 %v3323, %v3325
    %v3327 = vrot.slane %v3319, %v3326
    %3329 = vset.pattern.permute.xlu0 0
    %3330 = vperm.xlu0 %3329, %v1968
    %v3331 = vpop.permute.xlu0 %3330
    %v3334 = vunpack.c.l.s4 839922192
    %v3335 = vunpack.c.0.s8 %v3334
    %v3336 = vlaneseq
    %v3337 = vshrl.u32 %v3336, 7
    %v3338 = vsub.s32 %v3335, %v3337
    %v3339 = vrot.slane %v3331, %v3338
    %3341 = vset.pattern.permute.xlu0 0
    %3342 = vperm.xlu0 %3341, %v1969
    %v3343 = vpop.permute.xlu0 %3342
    %v3346 = vunpack.c.l.s4 839922192
    %v3347 = vunpack.c.0.s8 %v3346
    %v3348 = vlaneseq
    %v3349 = vshrl.u32 %v3348, 7
    %v3350 = vsub.s32 %v3347, %v3349
    %v3351 = vrot.slane %v3343, %v3350
    %3353 = vset.pattern.permute.xlu0 0
    %3354 = vperm.xlu0 %3353, %v1970
    %v3355 = vpop.permute.xlu0 %3354
    %v3358 = vunpack.c.l.s4 839922192
    %v3359 = vunpack.c.0.s8 %v3358
    %v3360 = vlaneseq
    %v3361 = vshrl.u32 %v3360, 7
    %v3362 = vsub.s32 %v3359, %v3361
    %v3363 = vrot.slane %v3355, %v3362
    %3365 = vset.pattern.permute.xlu0 0
    %3366 = vperm.xlu0 %3365, %v1971
    %v3367 = vpop.permute.xlu0 %3366
    %v3370 = vunpack.c.l.s4 839922192
    %v3371 = vunpack.c.0.s8 %v3370
    %v3372 = vlaneseq
    %v3373 = vshrl.u32 %v3372, 7
    %v3374 = vsub.s32 %v3371, %v3373
    %v3375 = vrot.slane %v3367, %v3374
    %3377 = vset.pattern.permute.xlu0 0
    %3378 = vperm.xlu0 %3377, %v1972
    %v3379 = vpop.permute.xlu0 %3378
    %v3382 = vunpack.c.l.s4 839922192
    %v3383 = vunpack.c.0.s8 %v3382
    %v3384 = vlaneseq
    %v3385 = vshrl.u32 %v3384, 7
    %v3386 = vsub.s32 %v3383, %v3385
    %v3387 = vrot.slane %v3379, %v3386
    %3389 = vset.pattern.permute.xlu0 0
    %3390 = vperm.xlu0 %3389, %v1973
    %v3391 = vpop.permute.xlu0 %3390
    %v3394 = vunpack.c.l.s4 839922192
    %v3395 = vunpack.c.0.s8 %v3394
    %v3396 = vlaneseq
    %v3397 = vshrl.u32 %v3396, 7
    %v3398 = vsub.s32 %v3395, %v3397
    %v3399 = vrot.slane %v3391, %v3398
    %3401 = vset.pattern.permute.xlu0 0
    %3402 = vperm.xlu0 %3401, %v1974
    %v3403 = vpop.permute.xlu0 %3402
    %v3406 = vunpack.c.l.s4 839922192
    %v3407 = vunpack.c.0.s8 %v3406
    %v3408 = vlaneseq
    %v3409 = vshrl.u32 %v3408, 7
    %v3410 = vsub.s32 %v3407, %v3409
    %v3411 = vrot.slane %v3403, %v3410
    %3413 = vset.pattern.permute.xlu0 0
    %3414 = vperm.xlu0 %3413, %v1975
    %v3415 = vpop.permute.xlu0 %3414
    %v3418 = vunpack.c.l.s4 839922192
    %v3419 = vunpack.c.0.s8 %v3418
    %v3420 = vlaneseq
    %v3421 = vshrl.u32 %v3420, 7
    %v3422 = vsub.s32 %v3419, %v3421
    %v3423 = vrot.slane %v3415, %v3422
    %3425 = vset.pattern.permute.xlu0 0
    %3426 = vperm.xlu0 %3425, %v1976
    %v3427 = vpop.permute.xlu0 %3426
    %v3430 = vunpack.c.l.s4 839922192
    %v3431 = vunpack.c.0.s8 %v3430
    %v3432 = vlaneseq
    %v3433 = vshrl.u32 %v3432, 7
    %v3434 = vsub.s32 %v3431, %v3433
    %v3435 = vrot.slane %v3427, %v3434
    %3437 = vset.pattern.permute.xlu0 0
    %3438 = vperm.xlu0 %3437, %v1977
    %v3439 = vpop.permute.xlu0 %3438
    %v3442 = vunpack.c.l.s4 839922192
    %v3443 = vunpack.c.0.s8 %v3442
    %v3444 = vlaneseq
    %v3445 = vshrl.u32 %v3444, 7
    %v3446 = vsub.s32 %v3443, %v3445
    %v3447 = vrot.slane %v3439, %v3446
    %3449 = vset.pattern.permute.xlu0 0
    %3450 = vperm.xlu0 %3449, %v1978
    %v3451 = vpop.permute.xlu0 %3450
    %v3454 = vunpack.c.l.s4 839922192
    %v3455 = vunpack.c.0.s8 %v3454
    %v3456 = vlaneseq
    %v3457 = vshrl.u32 %v3456, 7
    %v3458 = vsub.s32 %v3455, %v3457
    %v3459 = vrot.slane %v3451, %v3458
    %3461 = vset.pattern.permute.xlu0 0
    %3462 = vperm.xlu0 %3461, %v1979
    %v3463 = vpop.permute.xlu0 %3462
    %v3466 = vunpack.c.l.s4 839922192
    %v3467 = vunpack.c.0.s8 %v3466
    %v3468 = vlaneseq
    %v3469 = vshrl.u32 %v3468, 7
    %v3470 = vsub.s32 %v3467, %v3469
    %v3471 = vrot.slane %v3463, %v3470
    %3473 = vset.pattern.permute.xlu0 0
    %3474 = vperm.xlu0 %3473, %v1980
    %v3475 = vpop.permute.xlu0 %3474
    %v3478 = vunpack.c.l.s4 839922192
    %v3479 = vunpack.c.0.s8 %v3478
    %v3480 = vlaneseq
    %v3481 = vshrl.u32 %v3480, 7
    %v3482 = vsub.s32 %v3479, %v3481
    %v3483 = vrot.slane %v3475, %v3482
    %3485 = vset.pattern.permute.xlu0 0
    %3486 = vperm.xlu0 %3485, %v1981
    %v3487 = vpop.permute.xlu0 %3486
    %v3490 = vunpack.c.l.s4 839922192
    %v3491 = vunpack.c.0.s8 %v3490
    %v3492 = vlaneseq
    %v3493 = vshrl.u32 %v3492, 7
    %v3494 = vsub.s32 %v3491, %v3493
    %v3495 = vrot.slane %v3487, %v3494
    %3497 = vset.pattern.permute.xlu0 0
    %3498 = vperm.xlu0 %3497, %v1982
    %v3499 = vpop.permute.xlu0 %3498
    %v3502 = vunpack.c.l.s4 839922192
    %v3503 = vunpack.c.0.s8 %v3502
    %v3504 = vlaneseq
    %v3505 = vshrl.u32 %v3504, 7
    %v3506 = vsub.s32 %v3503, %v3505
    %v3507 = vrot.slane %v3499, %v3506
    %3509 = vset.pattern.permute.xlu0 0
    %3510 = vperm.xlu0 %3509, %v1983
    %v3511 = vpop.permute.xlu0 %3510
    %v3514 = vunpack.c.l.s4 839922192
    %v3515 = vunpack.c.0.s8 %v3514
    %v3516 = vlaneseq
    %v3517 = vshrl.u32 %v3516, 7
    %v3518 = vsub.s32 %v3515, %v3517
    %v3519 = vrot.slane %v3511, %v3518
    %v3520 = vadd.bf16 %v1728, %v1995
    %v3521 = vadd.bf16 %v1729, %v2007
    %v3522 = vadd.bf16 %v1730, %v2019
    %v3523 = vadd.bf16 %v1731, %v2031
    %v3524 = vadd.bf16 %v1732, %v2043
    %v3525 = vadd.bf16 %v1733, %v2055
    %v3526 = vadd.bf16 %v1734, %v2067
    %v3527 = vadd.bf16 %v1735, %v2079
    %v3528 = vadd.bf16 %v1736, %v2091
    %v3529 = vadd.bf16 %v1737, %v2103
    %v3530 = vadd.bf16 %v1738, %v2115
    %v3531 = vadd.bf16 %v1739, %v2127
    %v3532 = vadd.bf16 %v1740, %v2139
    %v3533 = vadd.bf16 %v1741, %v2151
    %v3534 = vadd.bf16 %v1742, %v2163
    %v3535 = vadd.bf16 %v1743, %v2175
    %v3536 = vadd.bf16 %v1744, %v2187
    %v3537 = vadd.bf16 %v1745, %v2199
    %v3538 = vadd.bf16 %v1746, %v2211
    %v3539 = vadd.bf16 %v1747, %v2223
    %v3540 = vadd.bf16 %v1748, %v2235
    %v3541 = vadd.bf16 %v1749, %v2247
    %v3542 = vadd.bf16 %v1750, %v2259
    %v3543 = vadd.bf16 %v1751, %v2271
    %v3544 = vadd.bf16 %v1752, %v2283
    %v3545 = vadd.bf16 %v1753, %v2295
    %v3546 = vadd.bf16 %v1754, %v2307
    %v3547 = vadd.bf16 %v1755, %v2319
    %v3548 = vadd.bf16 %v1756, %v2331
    %v3549 = vadd.bf16 %v1757, %v2343
    %v3550 = vadd.bf16 %v1758, %v2355
    %v3551 = vadd.bf16 %v1759, %v2367
    %v3552 = vadd.bf16 %v1760, %v2379
    %v3553 = vadd.bf16 %v1761, %v2391
    %v3554 = vadd.bf16 %v1762, %v2403
    %v3555 = vadd.bf16 %v1763, %v2415
    %v3556 = vadd.bf16 %v1764, %v2427
    %v3557 = vadd.bf16 %v1765, %v2439
    %v3558 = vadd.bf16 %v1766, %v2451
    %v3559 = vadd.bf16 %v1767, %v2463
    %v3560 = vadd.bf16 %v1768, %v2475
    %v3561 = vadd.bf16 %v1769, %v2487
    %v3562 = vadd.bf16 %v1770, %v2499
    %v3563 = vadd.bf16 %v1771, %v2511
    %v3564 = vadd.bf16 %v1772, %v2523
    %v3565 = vadd.bf16 %v1773, %v2535
    %v3566 = vadd.bf16 %v1774, %v2547
    %v3567 = vadd.bf16 %v1775, %v2559
    %v3568 = vadd.bf16 %v1776, %v2571
    %v3569 = vadd.bf16 %v1777, %v2583
    %v3570 = vadd.bf16 %v1778, %v2595
    %v3571 = vadd.bf16 %v1779, %v2607
    %v3572 = vadd.bf16 %v1780, %v2619
    %v3573 = vadd.bf16 %v1781, %v2631
    %v3574 = vadd.bf16 %v1782, %v2643
    %v3575 = vadd.bf16 %v1783, %v2655
    %v3576 = vadd.bf16 %v1784, %v2667
    %v3577 = vadd.bf16 %v1785, %v2679
    %v3578 = vadd.bf16 %v1786, %v2691
    %v3579 = vadd.bf16 %v1787, %v2703
    %v3580 = vadd.bf16 %v1788, %v2715
    %v3581 = vadd.bf16 %v1789, %v2727
    %v3582 = vadd.bf16 %v1790, %v2739
    %v3583 = vadd.bf16 %v1791, %v2751
    %v3584 = vadd.bf16 %v1792, %v2763
    %v3585 = vadd.bf16 %v1793, %v2775
    %v3586 = vadd.bf16 %v1794, %v2787
    %v3587 = vadd.bf16 %v1795, %v2799
    %v3588 = vadd.bf16 %v1796, %v2811
    %v3589 = vadd.bf16 %v1797, %v2823
    %v3590 = vadd.bf16 %v1798, %v2835
    %v3591 = vadd.bf16 %v1799, %v2847
    %v3592 = vadd.bf16 %v1800, %v2859
    %v3593 = vadd.bf16 %v1801, %v2871
    %v3594 = vadd.bf16 %v1802, %v2883
    %v3595 = vadd.bf16 %v1803, %v2895
    %v3596 = vadd.bf16 %v1804, %v2907
    %v3597 = vadd.bf16 %v1805, %v2919
    %v3598 = vadd.bf16 %v1806, %v2931
    %v3599 = vadd.bf16 %v1807, %v2943
    %v3600 = vadd.bf16 %v1808, %v2955
    %v3601 = vadd.bf16 %v1809, %v2967
    %v3602 = vadd.bf16 %v1810, %v2979
    %v3603 = vadd.bf16 %v1811, %v2991
    %v3604 = vadd.bf16 %v1812, %v3003
    %v3605 = vadd.bf16 %v1813, %v3015
    %v3606 = vadd.bf16 %v1814, %v3027
    %v3607 = vadd.bf16 %v1815, %v3039
    %v3608 = vadd.bf16 %v1816, %v3051
    %v3609 = vadd.bf16 %v1817, %v3063
    %v3610 = vadd.bf16 %v1818, %v3075
    %v3611 = vadd.bf16 %v1819, %v3087
    %v3612 = vadd.bf16 %v1820, %v3099
    %v3613 = vadd.bf16 %v1821, %v3111
    %v3614 = vadd.bf16 %v1822, %v3123
    %v3615 = vadd.bf16 %v1823, %v3135
    %v3616 = vadd.bf16 %v1824, %v3147
    %v3617 = vadd.bf16 %v1825, %v3159
    %v3618 = vadd.bf16 %v1826, %v3171
    %v3619 = vadd.bf16 %v1827, %v3183
    %v3620 = vadd.bf16 %v1828, %v3195
    %v3621 = vadd.bf16 %v1829, %v3207
    %v3622 = vadd.bf16 %v1830, %v3219
    %v3623 = vadd.bf16 %v1831, %v3231
    %v3624 = vadd.bf16 %v1832, %v3243
    %v3625 = vadd.bf16 %v1833, %v3255
    %v3626 = vadd.bf16 %v1834, %v3267
    %v3627 = vadd.bf16 %v1835, %v3279
    %v3628 = vadd.bf16 %v1836, %v3291
    %v3629 = vadd.bf16 %v1837, %v3303
    %v3630 = vadd.bf16 %v1838, %v3315
    %v3631 = vadd.bf16 %v1839, %v3327
    %v3632 = vadd.bf16 %v1840, %v3339
    %v3633 = vadd.bf16 %v1841, %v3351
    %v3634 = vadd.bf16 %v1842, %v3363
    %v3635 = vadd.bf16 %v1843, %v3375
    %v3636 = vadd.bf16 %v1844, %v3387
    %v3637 = vadd.bf16 %v1845, %v3399
    %v3638 = vadd.bf16 %v1846, %v3411
    %v3639 = vadd.bf16 %v1847, %v3423
    %v3640 = vadd.bf16 %v1848, %v3435
    %v3641 = vadd.bf16 %v1849, %v3447
    %v3642 = vadd.bf16 %v1850, %v3459
    %v3643 = vadd.bf16 %v1851, %v3471
    %v3644 = vadd.bf16 %v1852, %v3483
    %v3645 = vadd.bf16 %v1853, %v3495
    %v3646 = vadd.bf16 %v1854, %v3507
    %v3647 = vadd.bf16 %v1855, %v3519
    %vm3648 = vcmp.gt.bf16.partialorder %v3520, 0
    %vm3649 = vcmp.gt.bf16.partialorder %v3521, 0
    %vm3650 = vcmp.gt.bf16.partialorder %v3522, 0
    %vm3651 = vcmp.gt.bf16.partialorder %v3523, 0
    %vm3652 = vcmp.gt.bf16.partialorder %v3524, 0
    %vm3653 = vcmp.gt.bf16.partialorder %v3525, 0
    %vm3654 = vcmp.gt.bf16.partialorder %v3526, 0
    %vm3655 = vcmp.gt.bf16.partialorder %v3527, 0
    %vm3656 = vcmp.gt.bf16.partialorder %v3528, 0
    %vm3657 = vcmp.gt.bf16.partialorder %v3529, 0
    %vm3658 = vcmp.gt.bf16.partialorder %v3530, 0
    %vm3659 = vcmp.gt.bf16.partialorder %v3531, 0
    %vm3660 = vcmp.gt.bf16.partialorder %v3532, 0
    %vm3661 = vcmp.gt.bf16.partialorder %v3533, 0
    %vm3662 = vcmp.gt.bf16.partialorder %v3534, 0
    %vm3663 = vcmp.gt.bf16.partialorder %v3535, 0
    %vm3664 = vcmp.gt.bf16.partialorder %v3536, 0
    %vm3665 = vcmp.gt.bf16.partialorder %v3537, 0
    %vm3666 = vcmp.gt.bf16.partialorder %v3538, 0
    %vm3667 = vcmp.gt.bf16.partialorder %v3539, 0
    %vm3668 = vcmp.gt.bf16.partialorder %v3540, 0
    %vm3669 = vcmp.gt.bf16.partialorder %v3541, 0
    %vm3670 = vcmp.gt.bf16.partialorder %v3542, 0
    %vm3671 = vcmp.gt.bf16.partialorder %v3543, 0
    %vm3672 = vcmp.gt.bf16.partialorder %v3544, 0
    %vm3673 = vcmp.gt.bf16.partialorder %v3545, 0
    %vm3674 = vcmp.gt.bf16.partialorder %v3546, 0
    %vm3675 = vcmp.gt.bf16.partialorder %v3547, 0
    %vm3676 = vcmp.gt.bf16.partialorder %v3548, 0
    %vm3677 = vcmp.gt.bf16.partialorder %v3549, 0
    %vm3678 = vcmp.gt.bf16.partialorder %v3550, 0
    %vm3679 = vcmp.gt.bf16.partialorder %v3551, 0
    %vm3680 = vcmp.gt.bf16.partialorder %v3552, 0
    %vm3681 = vcmp.gt.bf16.partialorder %v3553, 0
    %vm3682 = vcmp.gt.bf16.partialorder %v3554, 0
    %vm3683 = vcmp.gt.bf16.partialorder %v3555, 0
    %vm3684 = vcmp.gt.bf16.partialorder %v3556, 0
    %vm3685 = vcmp.gt.bf16.partialorder %v3557, 0
    %vm3686 = vcmp.gt.bf16.partialorder %v3558, 0
    %vm3687 = vcmp.gt.bf16.partialorder %v3559, 0
    %vm3688 = vcmp.gt.bf16.partialorder %v3560, 0
    %vm3689 = vcmp.gt.bf16.partialorder %v3561, 0
    %vm3690 = vcmp.gt.bf16.partialorder %v3562, 0
    %vm3691 = vcmp.gt.bf16.partialorder %v3563, 0
    %vm3692 = vcmp.gt.bf16.partialorder %v3564, 0
    %vm3693 = vcmp.gt.bf16.partialorder %v3565, 0
    %vm3694 = vcmp.gt.bf16.partialorder %v3566, 0
    %vm3695 = vcmp.gt.bf16.partialorder %v3567, 0
    %vm3696 = vcmp.gt.bf16.partialorder %v3568, 0
    %vm3697 = vcmp.gt.bf16.partialorder %v3569, 0
    %vm3698 = vcmp.gt.bf16.partialorder %v3570, 0
    %vm3699 = vcmp.gt.bf16.partialorder %v3571, 0
    %vm3700 = vcmp.gt.bf16.partialorder %v3572, 0
    %vm3701 = vcmp.gt.bf16.partialorder %v3573, 0
    %vm3702 = vcmp.gt.bf16.partialorder %v3574, 0
    %vm3703 = vcmp.gt.bf16.partialorder %v3575, 0
    %vm3704 = vcmp.gt.bf16.partialorder %v3576, 0
    %vm3705 = vcmp.gt.bf16.partialorder %v3577, 0
    %vm3706 = vcmp.gt.bf16.partialorder %v3578, 0
    %vm3707 = vcmp.gt.bf16.partialorder %v3579, 0
    %vm3708 = vcmp.gt.bf16.partialorder %v3580, 0
    %vm3709 = vcmp.gt.bf16.partialorder %v3581, 0
    %vm3710 = vcmp.gt.bf16.partialorder %v3582, 0
    %vm3711 = vcmp.gt.bf16.partialorder %v3583, 0
    %vm3712 = vcmp.gt.bf16.partialorder %v3584, 0
    %vm3713 = vcmp.gt.bf16.partialorder %v3585, 0
    %vm3714 = vcmp.gt.bf16.partialorder %v3586, 0
    %vm3715 = vcmp.gt.bf16.partialorder %v3587, 0
    %vm3716 = vcmp.gt.bf16.partialorder %v3588, 0
    %vm3717 = vcmp.gt.bf16.partialorder %v3589, 0
    %vm3718 = vcmp.gt.bf16.partialorder %v3590, 0
    %vm3719 = vcmp.gt.bf16.partialorder %v3591, 0
    %vm3720 = vcmp.gt.bf16.partialorder %v3592, 0
    %vm3721 = vcmp.gt.bf16.partialorder %v3593, 0
    %vm3722 = vcmp.gt.bf16.partialorder %v3594, 0
    %vm3723 = vcmp.gt.bf16.partialorder %v3595, 0
    %vm3724 = vcmp.gt.bf16.partialorder %v3596, 0
    %vm3725 = vcmp.gt.bf16.partialorder %v3597, 0
    %vm3726 = vcmp.gt.bf16.partialorder %v3598, 0
    %vm3727 = vcmp.gt.bf16.partialorder %v3599, 0
    %vm3728 = vcmp.gt.bf16.partialorder %v3600, 0
    %vm3729 = vcmp.gt.bf16.partialorder %v3601, 0
    %vm3730 = vcmp.gt.bf16.partialorder %v3602, 0
    %vm3731 = vcmp.gt.bf16.partialorder %v3603, 0
    %vm3732 = vcmp.gt.bf16.partialorder %v3604, 0
    %vm3733 = vcmp.gt.bf16.partialorder %v3605, 0
    %vm3734 = vcmp.gt.bf16.partialorder %v3606, 0
    %vm3735 = vcmp.gt.bf16.partialorder %v3607, 0
    %vm3736 = vcmp.gt.bf16.partialorder %v3608, 0
    %vm3737 = vcmp.gt.bf16.partialorder %v3609, 0
    %vm3738 = vcmp.gt.bf16.partialorder %v3610, 0
    %vm3739 = vcmp.gt.bf16.partialorder %v3611, 0
    %vm3740 = vcmp.gt.bf16.partialorder %v3612, 0
    %vm3741 = vcmp.gt.bf16.partialorder %v3613, 0
    %vm3742 = vcmp.gt.bf16.partialorder %v3614, 0
    %vm3743 = vcmp.gt.bf16.partialorder %v3615, 0
    %vm3744 = vcmp.gt.bf16.partialorder %v3616, 0
    %vm3745 = vcmp.gt.bf16.partialorder %v3617, 0
    %vm3746 = vcmp.gt.bf16.partialorder %v3618, 0
    %vm3747 = vcmp.gt.bf16.partialorder %v3619, 0
    %vm3748 = vcmp.gt.bf16.partialorder %v3620, 0
    %vm3749 = vcmp.gt.bf16.partialorder %v3621, 0
    %vm3750 = vcmp.gt.bf16.partialorder %v3622, 0
    %vm3751 = vcmp.gt.bf16.partialorder %v3623, 0
    %vm3752 = vcmp.gt.bf16.partialorder %v3624, 0
    %vm3753 = vcmp.gt.bf16.partialorder %v3625, 0
    %vm3754 = vcmp.gt.bf16.partialorder %v3626, 0
    %vm3755 = vcmp.gt.bf16.partialorder %v3627, 0
    %vm3756 = vcmp.gt.bf16.partialorder %v3628, 0
    %vm3757 = vcmp.gt.bf16.partialorder %v3629, 0
    %vm3758 = vcmp.gt.bf16.partialorder %v3630, 0
    %vm3759 = vcmp.gt.bf16.partialorder %v3631, 0
    %vm3760 = vcmp.gt.bf16.partialorder %v3632, 0
    %vm3761 = vcmp.gt.bf16.partialorder %v3633, 0
    %vm3762 = vcmp.gt.bf16.partialorder %v3634, 0
    %vm3763 = vcmp.gt.bf16.partialorder %v3635, 0
    %vm3764 = vcmp.gt.bf16.partialorder %v3636, 0
    %vm3765 = vcmp.gt.bf16.partialorder %v3637, 0
    %vm3766 = vcmp.gt.bf16.partialorder %v3638, 0
    %vm3767 = vcmp.gt.bf16.partialorder %v3639, 0
    %vm3768 = vcmp.gt.bf16.partialorder %v3640, 0
    %vm3769 = vcmp.gt.bf16.partialorder %v3641, 0
    %vm3770 = vcmp.gt.bf16.partialorder %v3642, 0
    %vm3771 = vcmp.gt.bf16.partialorder %v3643, 0
    %vm3772 = vcmp.gt.bf16.partialorder %v3644, 0
    %vm3773 = vcmp.gt.bf16.partialorder %v3645, 0
    %vm3774 = vcmp.gt.bf16.partialorder %v3646, 0
    %vm3775 = vcmp.gt.bf16.partialorder %v3647, 0
    %v3776 = vmul.bf16 %v3520, 1045249613
    %v3777 = vmul.bf16 %v3521, 1045249613
    %v3778 = vmul.bf16 %v3522, 1045249613
    %v3779 = vmul.bf16 %v3523, 1045249613
    %v3780 = vmul.bf16 %v3524, 1045249613
    %v3781 = vmul.bf16 %v3525, 1045249613
    %v3782 = vmul.bf16 %v3526, 1045249613
    %v3783 = vmul.bf16 %v3527, 1045249613
    %v3784 = vmul.bf16 %v3528, 1045249613
    %v3785 = vmul.bf16 %v3529, 1045249613
    %v3786 = vmul.bf16 %v3530, 1045249613
    %v3787 = vmul.bf16 %v3531, 1045249613
    %v3788 = vmul.bf16 %v3532, 1045249613
    %v3789 = vmul.bf16 %v3533, 1045249613
    %v3790 = vmul.bf16 %v3534, 1045249613
    %v3791 = vmul.bf16 %v3535, 1045249613
    %v3792 = vmul.bf16 %v3536, 1045249613
    %v3793 = vmul.bf16 %v3537, 1045249613
    %v3794 = vmul.bf16 %v3538, 1045249613
    %v3795 = vmul.bf16 %v3539, 1045249613
    %v3796 = vmul.bf16 %v3540, 1045249613
    %v3797 = vmul.bf16 %v3541, 1045249613
    %v3798 = vmul.bf16 %v3542, 1045249613
    %v3799 = vmul.bf16 %v3543, 1045249613
    %v3800 = vmul.bf16 %v3544, 1045249613
    %v3801 = vmul.bf16 %v3545, 1045249613
    %v3802 = vmul.bf16 %v3546, 1045249613
    %v3803 = vmul.bf16 %v3547, 1045249613
    %v3804 = vmul.bf16 %v3548, 1045249613
    %v3805 = vmul.bf16 %v3549, 1045249613
    %v3806 = vmul.bf16 %v3550, 1045249613
    %v3807 = vmul.bf16 %v3551, 1045249613
    %v3808 = vmul.bf16 %v3552, 1045249613
    %v3809 = vmul.bf16 %v3553, 1045249613
    %v3810 = vmul.bf16 %v3554, 1045249613
    %v3811 = vmul.bf16 %v3555, 1045249613
    %v3812 = vmul.bf16 %v3556, 1045249613
    %v3813 = vmul.bf16 %v3557, 1045249613
    %v3814 = vmul.bf16 %v3558, 1045249613
    %v3815 = vmul.bf16 %v3559, 1045249613
    %v3816 = vmul.bf16 %v3560, 1045249613
    %v3817 = vmul.bf16 %v3561, 1045249613
    %v3818 = vmul.bf16 %v3562, 1045249613
    %v3819 = vmul.bf16 %v3563, 1045249613
    %v3820 = vmul.bf16 %v3564, 1045249613
    %v3821 = vmul.bf16 %v3565, 1045249613
    %v3822 = vmul.bf16 %v3566, 1045249613
    %v3823 = vmul.bf16 %v3567, 1045249613
    %v3824 = vmul.bf16 %v3568, 1045249613
    %v3825 = vmul.bf16 %v3569, 1045249613
    %v3826 = vmul.bf16 %v3570, 1045249613
    %v3827 = vmul.bf16 %v3571, 1045249613
    %v3828 = vmul.bf16 %v3572, 1045249613
    %v3829 = vmul.bf16 %v3573, 1045249613
    %v3830 = vmul.bf16 %v3574, 1045249613
    %v3831 = vmul.bf16 %v3575, 1045249613
    %v3832 = vmul.bf16 %v3576, 1045249613
    %v3833 = vmul.bf16 %v3577, 1045249613
    %v3834 = vmul.bf16 %v3578, 1045249613
    %v3835 = vmul.bf16 %v3579, 1045249613
    %v3836 = vmul.bf16 %v3580, 1045249613
    %v3837 = vmul.bf16 %v3581, 1045249613
    %v3838 = vmul.bf16 %v3582, 1045249613
    %v3839 = vmul.bf16 %v3583, 1045249613
    %v3840 = vmul.bf16 %v3584, 1045249613
    %v3841 = vmul.bf16 %v3585, 1045249613
    %v3842 = vmul.bf16 %v3586, 1045249613
    %v3843 = vmul.bf16 %v3587, 1045249613
    %v3844 = vmul.bf16 %v3588, 1045249613
    %v3845 = vmul.bf16 %v3589, 1045249613
    %v3846 = vmul.bf16 %v3590, 1045249613
    %v3847 = vmul.bf16 %v3591, 1045249613
    %v3848 = vmul.bf16 %v3592, 1045249613
    %v3849 = vmul.bf16 %v3593, 1045249613
    %v3850 = vmul.bf16 %v3594, 1045249613
    %v3851 = vmul.bf16 %v3595, 1045249613
    %v3852 = vmul.bf16 %v3596, 1045249613
    %v3853 = vmul.bf16 %v3597, 1045249613
    %v3854 = vmul.bf16 %v3598, 1045249613
    %v3855 = vmul.bf16 %v3599, 1045249613
    %v3856 = vmul.bf16 %v3600, 1045249613
    %v3857 = vmul.bf16 %v3601, 1045249613
    %v3858 = vmul.bf16 %v3602, 1045249613
    %v3859 = vmul.bf16 %v3603, 1045249613
    %v3860 = vmul.bf16 %v3604, 1045249613
    %v3861 = vmul.bf16 %v3605, 1045249613
    %v3862 = vmul.bf16 %v3606, 1045249613
    %v3863 = vmul.bf16 %v3607, 1045249613
    %v3864 = vmul.bf16 %v3608, 1045249613
    %v3865 = vmul.bf16 %v3609, 1045249613
    %v3866 = vmul.bf16 %v3610, 1045249613
    %v3867 = vmul.bf16 %v3611, 1045249613
    %v3868 = vmul.bf16 %v3612, 1045249613
    %v3869 = vmul.bf16 %v3613, 1045249613
    %v3870 = vmul.bf16 %v3614, 1045249613
    %v3871 = vmul.bf16 %v3615, 1045249613
    %v3872 = vmul.bf16 %v3616, 1045249613
    %v3873 = vmul.bf16 %v3617, 1045249613
    %v3874 = vmul.bf16 %v3618, 1045249613
    %v3875 = vmul.bf16 %v3619, 1045249613
    %v3876 = vmul.bf16 %v3620, 1045249613
    %v3877 = vmul.bf16 %v3621, 1045249613
    %v3878 = vmul.bf16 %v3622, 1045249613
    %v3879 = vmul.bf16 %v3623, 1045249613
    %v3880 = vmul.bf16 %v3624, 1045249613
    %v3881 = vmul.bf16 %v3625, 1045249613
    %v3882 = vmul.bf16 %v3626, 1045249613
    %v3883 = vmul.bf16 %v3627, 1045249613
    %v3884 = vmul.bf16 %v3628, 1045249613
    %v3885 = vmul.bf16 %v3629, 1045249613
    %v3886 = vmul.bf16 %v3630, 1045249613
    %v3887 = vmul.bf16 %v3631, 1045249613
    %v3888 = vmul.bf16 %v3632, 1045249613
    %v3889 = vmul.bf16 %v3633, 1045249613
    %v3890 = vmul.bf16 %v3634, 1045249613
    %v3891 = vmul.bf16 %v3635, 1045249613
    %v3892 = vmul.bf16 %v3636, 1045249613
    %v3893 = vmul.bf16 %v3637, 1045249613
    %v3894 = vmul.bf16 %v3638, 1045249613
    %v3895 = vmul.bf16 %v3639, 1045249613
    %v3896 = vmul.bf16 %v3640, 1045249613
    %v3897 = vmul.bf16 %v3641, 1045249613
    %v3898 = vmul.bf16 %v3642, 1045249613
    %v3899 = vmul.bf16 %v3643, 1045249613
    %v3900 = vmul.bf16 %v3644, 1045249613
    %v3901 = vmul.bf16 %v3645, 1045249613
    %v3902 = vmul.bf16 %v3646, 1045249613
    %v3903 = vmul.bf16 %v3647, 1045249613
    %v3904 = vsel %vm3648, %v3520, %v3776
    %v3905 = vsel %vm3649, %v3521, %v3777
    %v3906 = vsel %vm3650, %v3522, %v3778
    %v3907 = vsel %vm3651, %v3523, %v3779
    %v3908 = vsel %vm3652, %v3524, %v3780
    %v3909 = vsel %vm3653, %v3525, %v3781
    %v3910 = vsel %vm3654, %v3526, %v3782
    %v3911 = vsel %vm3655, %v3527, %v3783
    %v3912 = vsel %vm3656, %v3528, %v3784
    %v3913 = vsel %vm3657, %v3529, %v3785
    %v3914 = vsel %vm3658, %v3530, %v3786
    %v3915 = vsel %vm3659, %v3531, %v3787
    %v3916 = vsel %vm3660, %v3532, %v3788
    %v3917 = vsel %vm3661, %v3533, %v3789
    %v3918 = vsel %vm3662, %v3534, %v3790
    %v3919 = vsel %vm3663, %v3535, %v3791
    %v3920 = vsel %vm3664, %v3536, %v3792
    %v3921 = vsel %vm3665, %v3537, %v3793
    %v3922 = vsel %vm3666, %v3538, %v3794
    %v3923 = vsel %vm3667, %v3539, %v3795
    %v3924 = vsel %vm3668, %v3540, %v3796
    %v3925 = vsel %vm3669, %v3541, %v3797
    %v3926 = vsel %vm3670, %v3542, %v3798
    %v3927 = vsel %vm3671, %v3543, %v3799
    %v3928 = vsel %vm3672, %v3544, %v3800
    %v3929 = vsel %vm3673, %v3545, %v3801
    %v3930 = vsel %vm3674, %v3546, %v3802
    %v3931 = vsel %vm3675, %v3547, %v3803
    %v3932 = vsel %vm3676, %v3548, %v3804
    %v3933 = vsel %vm3677, %v3549, %v3805
    %v3934 = vsel %vm3678, %v3550, %v3806
    %v3935 = vsel %vm3679, %v3551, %v3807
    %v3936 = vsel %vm3680, %v3552, %v3808
    %v3937 = vsel %vm3681, %v3553, %v3809
    %v3938 = vsel %vm3682, %v3554, %v3810
    %v3939 = vsel %vm3683, %v3555, %v3811
    %v3940 = vsel %vm3684, %v3556, %v3812
    %v3941 = vsel %vm3685, %v3557, %v3813
    %v3942 = vsel %vm3686, %v3558, %v3814
    %v3943 = vsel %vm3687, %v3559, %v3815
    %v3944 = vsel %vm3688, %v3560, %v3816
    %v3945 = vsel %vm3689, %v3561, %v3817
    %v3946 = vsel %vm3690, %v3562, %v3818
    %v3947 = vsel %vm3691, %v3563, %v3819
    %v3948 = vsel %vm3692, %v3564, %v3820
    %v3949 = vsel %vm3693, %v3565, %v3821
    %v3950 = vsel %vm3694, %v3566, %v3822
    %v3951 = vsel %vm3695, %v3567, %v3823
    %v3952 = vsel %vm3696, %v3568, %v3824
    %v3953 = vsel %vm3697, %v3569, %v3825
    %v3954 = vsel %vm3698, %v3570, %v3826
    %v3955 = vsel %vm3699, %v3571, %v3827
    %v3956 = vsel %vm3700, %v3572, %v3828
    %v3957 = vsel %vm3701, %v3573, %v3829
    %v3958 = vsel %vm3702, %v3574, %v3830
    %v3959 = vsel %vm3703, %v3575, %v3831
    %v3960 = vsel %vm3704, %v3576, %v3832
    %v3961 = vsel %vm3705, %v3577, %v3833
    %v3962 = vsel %vm3706, %v3578, %v3834
    %v3963 = vsel %vm3707, %v3579, %v3835
    %v3964 = vsel %vm3708, %v3580, %v3836
    %v3965 = vsel %vm3709, %v3581, %v3837
    %v3966 = vsel %vm3710, %v3582, %v3838
    %v3967 = vsel %vm3711, %v3583, %v3839
    %v3968 = vsel %vm3712, %v3584, %v3840
    %v3969 = vsel %vm3713, %v3585, %v3841
    %v3970 = vsel %vm3714, %v3586, %v3842
    %v3971 = vsel %vm3715, %v3587, %v3843
    %v3972 = vsel %vm3716, %v3588, %v3844
    %v3973 = vsel %vm3717, %v3589, %v3845
    %v3974 = vsel %vm3718, %v3590, %v3846
    %v3975 = vsel %vm3719, %v3591, %v3847
    %v3976 = vsel %vm3720, %v3592, %v3848
    %v3977 = vsel %vm3721, %v3593, %v3849
    %v3978 = vsel %vm3722, %v3594, %v3850
    %v3979 = vsel %vm3723, %v3595, %v3851
    %v3980 = vsel %vm3724, %v3596, %v3852
    %v3981 = vsel %vm3725, %v3597, %v3853
    %v3982 = vsel %vm3726, %v3598, %v3854
    %v3983 = vsel %vm3727, %v3599, %v3855
    %v3984 = vsel %vm3728, %v3600, %v3856
    %v3985 = vsel %vm3729, %v3601, %v3857
    %v3986 = vsel %vm3730, %v3602, %v3858
    %v3987 = vsel %vm3731, %v3603, %v3859
    %v3988 = vsel %vm3732, %v3604, %v3860
    %v3989 = vsel %vm3733, %v3605, %v3861
    %v3990 = vsel %vm3734, %v3606, %v3862
    %v3991 = vsel %vm3735, %v3607, %v3863
    %v3992 = vsel %vm3736, %v3608, %v3864
    %v3993 = vsel %vm3737, %v3609, %v3865
    %v3994 = vsel %vm3738, %v3610, %v3866
    %v3995 = vsel %vm3739, %v3611, %v3867
    %v3996 = vsel %vm3740, %v3612, %v3868
    %v3997 = vsel %vm3741, %v3613, %v3869
    %v3998 = vsel %vm3742, %v3614, %v3870
    %v3999 = vsel %vm3743, %v3615, %v3871
    %v4000 = vsel %vm3744, %v3616, %v3872
    %v4001 = vsel %vm3745, %v3617, %v3873
    %v4002 = vsel %vm3746, %v3618, %v3874
    %v4003 = vsel %vm3747, %v3619, %v3875
    %v4004 = vsel %vm3748, %v3620, %v3876
    %v4005 = vsel %vm3749, %v3621, %v3877
    %v4006 = vsel %vm3750, %v3622, %v3878
    %v4007 = vsel %vm3751, %v3623, %v3879
    %v4008 = vsel %vm3752, %v3624, %v3880
    %v4009 = vsel %vm3753, %v3625, %v3881
    %v4010 = vsel %vm3754, %v3626, %v3882
    %v4011 = vsel %vm3755, %v3627, %v3883
    %v4012 = vsel %vm3756, %v3628, %v3884
    %v4013 = vsel %vm3757, %v3629, %v3885
    %v4014 = vsel %vm3758, %v3630, %v3886
    %v4015 = vsel %vm3759, %v3631, %v3887
    %v4016 = vsel %vm3760, %v3632, %v3888
    %v4017 = vsel %vm3761, %v3633, %v3889
    %v4018 = vsel %vm3762, %v3634, %v3890
    %v4019 = vsel %vm3763, %v3635, %v3891
    %v4020 = vsel %vm3764, %v3636, %v3892
    %v4021 = vsel %vm3765, %v3637, %v3893
    %v4022 = vsel %vm3766, %v3638, %v3894
    %v4023 = vsel %vm3767, %v3639, %v3895
    %v4024 = vsel %vm3768, %v3640, %v3896
    %v4025 = vsel %vm3769, %v3641, %v3897
    %v4026 = vsel %vm3770, %v3642, %v3898
    %v4027 = vsel %vm3771, %v3643, %v3899
    %v4028 = vsel %vm3772, %v3644, %v3900
    %v4029 = vsel %vm3773, %v3645, %v3901
    %v4030 = vsel %vm3774, %v3646, %v3902
    %v4031 = vsel %vm3775, %v3647, %v3903
    %v4032 = vld [vmem:[#allocation3] sm:$0xff]
    %v4033 = vld [vmem:[#allocation3 + $0x8] sm:$0xff]
    %v4034 = vld [vmem:[#allocation3 + $0x10] sm:$0xff]
    %v4035 = vld [vmem:[#allocation3 + $0x18] sm:$0xff]
    %v4036 = vld [vmem:[#allocation3 + $0x20] sm:$0xff]
    %v4037 = vld [vmem:[#allocation3 + $0x28] sm:$0xff]
    %v4038 = vld [vmem:[#allocation3 + $0x30] sm:$0xff]
    %v4039 = vld [vmem:[#allocation3 + $0x38] sm:$0xff]
    %v4040 = vld [vmem:[#allocation3 + $0x40] sm:$0xff]
    %v4041 = vld [vmem:[#allocation3 + $0x48] sm:$0xff]
    %v4042 = vld [vmem:[#allocation3 + $0x50] sm:$0xff]
    %v4043 = vld [vmem:[#allocation3 + $0x58] sm:$0xff]
    %v4044 = vld [vmem:[#allocation3 + $0x60] sm:$0xff]
    %v4045 = vld [vmem:[#allocation3 + $0x68] sm:$0xff]
    %v4046 = vld [vmem:[#allocation3 + $0x70] sm:$0xff]
    %v4047 = vld [vmem:[#allocation3 + $0x78] sm:$0xff]
    %v4048 = vld [vmem:[#allocation3 + $0x80] sm:$0xff]
    %v4049 = vld [vmem:[#allocation3 + $0x88] sm:$0xff]
    %v4050 = vld [vmem:[#allocation3 + $0x90] sm:$0xff]
    %v4051 = vld [vmem:[#allocation3 + $0x98] sm:$0xff]
    %v4052 = vld [vmem:[#allocation3 + $0xa0] sm:$0xff]
    %v4053 = vld [vmem:[#allocation3 + $0xa8] sm:$0xff]
    %v4054 = vld [vmem:[#allocation3 + $0xb0] sm:$0xff]
    %v4055 = vld [vmem:[#allocation3 + $0xb8] sm:$0xff]
    %v4056 = vld [vmem:[#allocation3 + $0xc0] sm:$0xff]
    %v4057 = vld [vmem:[#allocation3 + $0xc8] sm:$0xff]
    %v4058 = vld [vmem:[#allocation3 + $0xd0] sm:$0xff]
    %v4059 = vld [vmem:[#allocation3 + $0xd8] sm:$0xff]
    %v4060 = vld [vmem:[#allocation3 + $0xe0] sm:$0xff]
    %v4061 = vld [vmem:[#allocation3 + $0xe8] sm:$0xff]
    %v4062 = vld [vmem:[#allocation3 + $0xf0] sm:$0xff]
    %v4063 = vld [vmem:[#allocation3 + $0xf8] sm:$0xff]
    %v4064 = vld [vmem:[#allocation3 + $0x100] sm:$0xff]
    %v4065 = vld [vmem:[#allocation3 + $0x108] sm:$0xff]
    %v4066 = vld [vmem:[#allocation3 + $0x110] sm:$0xff]
    %v4067 = vld [vmem:[#allocation3 + $0x118] sm:$0xff]
    %v4068 = vld [vmem:[#allocation3 + $0x120] sm:$0xff]
    %v4069 = vld [vmem:[#allocation3 + $0x128] sm:$0xff]
    %v4070 = vld [vmem:[#allocation3 + $0x130] sm:$0xff]
    %v4071 = vld [vmem:[#allocation3 + $0x138] sm:$0xff]
    %v4072 = vld [vmem:[#allocation3 + $0x140] sm:$0xff]
    %v4073 = vld [vmem:[#allocation3 + $0x148] sm:$0xff]
    %v4074 = vld [vmem:[#allocation3 + $0x150] sm:$0xff]
    %v4075 = vld [vmem:[#allocation3 + $0x158] sm:$0xff]
    %v4076 = vld [vmem:[#allocation3 + $0x160] sm:$0xff]
    %v4077 = vld [vmem:[#allocation3 + $0x168] sm:$0xff]
    %v4078 = vld [vmem:[#allocation3 + $0x170] sm:$0xff]
    %v4079 = vld [vmem:[#allocation3 + $0x178] sm:$0xff]
    %v4080 = vld [vmem:[#allocation3 + $0x180] sm:$0xff]
    %v4081 = vld [vmem:[#allocation3 + $0x188] sm:$0xff]
    %v4082 = vld [vmem:[#allocation3 + $0x190] sm:$0xff]
    %v4083 = vld [vmem:[#allocation3 + $0x198] sm:$0xff]
    %v4084 = vld [vmem:[#allocation3 + $0x1a0] sm:$0xff]
    %v4085 = vld [vmem:[#allocation3 + $0x1a8] sm:$0xff]
    %v4086 = vld [vmem:[#allocation3 + $0x1b0] sm:$0xff]
    %v4087 = vld [vmem:[#allocation3 + $0x1b8] sm:$0xff]
    %v4088 = vld [vmem:[#allocation3 + $0x1c0] sm:$0xff]
    %v4089 = vld [vmem:[#allocation3 + $0x1c8] sm:$0xff]
    %v4090 = vld [vmem:[#allocation3 + $0x1d0] sm:$0xff]
    %v4091 = vld [vmem:[#allocation3 + $0x1d8] sm:$0xff]
    %v4092 = vld [vmem:[#allocation3 + $0x1e0] sm:$0xff]
    %v4093 = vld [vmem:[#allocation3 + $0x1e8] sm:$0xff]
    %v4094 = vld [vmem:[#allocation3 + $0x1f0] sm:$0xff]
    %v4095 = vld [vmem:[#allocation3 + $0x1f8] sm:$0xff]
    %v4096 = vld [vmem:[#allocation3 + $0x200] sm:$0xff]
    %v4097 = vld [vmem:[#allocation3 + $0x208] sm:$0xff]
    %v4098 = vld [vmem:[#allocation3 + $0x210] sm:$0xff]
    %v4099 = vld [vmem:[#allocation3 + $0x218] sm:$0xff]
    %v4100 = vld [vmem:[#allocation3 + $0x220] sm:$0xff]
    %v4101 = vld [vmem:[#allocation3 + $0x228] sm:$0xff]
    %v4102 = vld [vmem:[#allocation3 + $0x230] sm:$0xff]
    %v4103 = vld [vmem:[#allocation3 + $0x238] sm:$0xff]
    %v4104 = vld [vmem:[#allocation3 + $0x240] sm:$0xff]
    %v4105 = vld [vmem:[#allocation3 + $0x248] sm:$0xff]
    %v4106 = vld [vmem:[#allocation3 + $0x250] sm:$0xff]
    %v4107 = vld [vmem:[#allocation3 + $0x258] sm:$0xff]
    %v4108 = vld [vmem:[#allocation3 + $0x260] sm:$0xff]
    %v4109 = vld [vmem:[#allocation3 + $0x268] sm:$0xff]
    %v4110 = vld [vmem:[#allocation3 + $0x270] sm:$0xff]
    %v4111 = vld [vmem:[#allocation3 + $0x278] sm:$0xff]
    %v4112 = vld [vmem:[#allocation3 + $0x280] sm:$0xff]
    %v4113 = vld [vmem:[#allocation3 + $0x288] sm:$0xff]
    %v4114 = vld [vmem:[#allocation3 + $0x290] sm:$0xff]
    %v4115 = vld [vmem:[#allocation3 + $0x298] sm:$0xff]
    %v4116 = vld [vmem:[#allocation3 + $0x2a0] sm:$0xff]
    %v4117 = vld [vmem:[#allocation3 + $0x2a8] sm:$0xff]
    %v4118 = vld [vmem:[#allocation3 + $0x2b0] sm:$0xff]
    %v4119 = vld [vmem:[#allocation3 + $0x2b8] sm:$0xff]
    %v4120 = vld [vmem:[#allocation3 + $0x2c0] sm:$0xff]
    %v4121 = vld [vmem:[#allocation3 + $0x2c8] sm:$0xff]
    %v4122 = vld [vmem:[#allocation3 + $0x2d0] sm:$0xff]
    %v4123 = vld [vmem:[#allocation3 + $0x2d8] sm:$0xff]
    %v4124 = vld [vmem:[#allocation3 + $0x2e0] sm:$0xff]
    %v4125 = vld [vmem:[#allocation3 + $0x2e8] sm:$0xff]
    %v4126 = vld [vmem:[#allocation3 + $0x2f0] sm:$0xff]
    %v4127 = vld [vmem:[#allocation3 + $0x2f8] sm:$0xff]
    %v4128 = vld [vmem:[#allocation3 + $0x300] sm:$0xff]
    %v4129 = vld [vmem:[#allocation3 + $0x308] sm:$0xff]
    %v4130 = vld [vmem:[#allocation3 + $0x310] sm:$0xff]
    %v4131 = vld [vmem:[#allocation3 + $0x318] sm:$0xff]
    %v4132 = vld [vmem:[#allocation3 + $0x320] sm:$0xff]
    %v4133 = vld [vmem:[#allocation3 + $0x328] sm:$0xff]
    %v4134 = vld [vmem:[#allocation3 + $0x330] sm:$0xff]
    %v4135 = vld [vmem:[#allocation3 + $0x338] sm:$0xff]
    %v4136 = vld [vmem:[#allocation3 + $0x340] sm:$0xff]
    %v4137 = vld [vmem:[#allocation3 + $0x348] sm:$0xff]
    %v4138 = vld [vmem:[#allocation3 + $0x350] sm:$0xff]
    %v4139 = vld [vmem:[#allocation3 + $0x358] sm:$0xff]
    %v4140 = vld [vmem:[#allocation3 + $0x360] sm:$0xff]
    %v4141 = vld [vmem:[#allocation3 + $0x368] sm:$0xff]
    %v4142 = vld [vmem:[#allocation3 + $0x370] sm:$0xff]
    %v4143 = vld [vmem:[#allocation3 + $0x378] sm:$0xff]
    %v4144 = vld [vmem:[#allocation3 + $0x380] sm:$0xff]
    %v4145 = vld [vmem:[#allocation3 + $0x388] sm:$0xff]
    %v4146 = vld [vmem:[#allocation3 + $0x390] sm:$0xff]
    %v4147 = vld [vmem:[#allocation3 + $0x398] sm:$0xff]
    %v4148 = vld [vmem:[#allocation3 + $0x3a0] sm:$0xff]
    %v4149 = vld [vmem:[#allocation3 + $0x3a8] sm:$0xff]
    %v4150 = vld [vmem:[#allocation3 + $0x3b0] sm:$0xff]
    %v4151 = vld [vmem:[#allocation3 + $0x3b8] sm:$0xff]
    %v4152 = vld [vmem:[#allocation3 + $0x3c0] sm:$0xff]
    %v4153 = vld [vmem:[#allocation3 + $0x3c8] sm:$0xff]
    %v4154 = vld [vmem:[#allocation3 + $0x3d0] sm:$0xff]
    %v4155 = vld [vmem:[#allocation3 + $0x3d8] sm:$0xff]
    %v4156 = vld [vmem:[#allocation3 + $0x3e0] sm:$0xff]
    %v4157 = vld [vmem:[#allocation3 + $0x3e8] sm:$0xff]
    %v4158 = vld [vmem:[#allocation3 + $0x3f0] sm:$0xff]
    %v4159 = vld [vmem:[#allocation3 + $0x3f8] sm:$0xff]
    %v4160 = vld [vmem:[#allocation3 + $0x400] sm:$0xff]
    %v4161 = vld [vmem:[#allocation3 + $0x408] sm:$0xff]
    %v4162 = vld [vmem:[#allocation3 + $0x410] sm:$0xff]
    %v4163 = vld [vmem:[#allocation3 + $0x418] sm:$0xff]
    %v4164 = vld [vmem:[#allocation3 + $0x420] sm:$0xff]
    %v4165 = vld [vmem:[#allocation3 + $0x428] sm:$0xff]
    %v4166 = vld [vmem:[#allocation3 + $0x430] sm:$0xff]
    %v4167 = vld [vmem:[#allocation3 + $0x438] sm:$0xff]
    %v4168 = vld [vmem:[#allocation3 + $0x440] sm:$0xff]
    %v4169 = vld [vmem:[#allocation3 + $0x448] sm:$0xff]
    %v4170 = vld [vmem:[#allocation3 + $0x450] sm:$0xff]
    %v4171 = vld [vmem:[#allocation3 + $0x458] sm:$0xff]
    %v4172 = vld [vmem:[#allocation3 + $0x460] sm:$0xff]
    %v4173 = vld [vmem:[#allocation3 + $0x468] sm:$0xff]
    %v4174 = vld [vmem:[#allocation3 + $0x470] sm:$0xff]
    %v4175 = vld [vmem:[#allocation3 + $0x478] sm:$0xff]
    %v4176 = vld [vmem:[#allocation3 + $0x480] sm:$0xff]
    %v4177 = vld [vmem:[#allocation3 + $0x488] sm:$0xff]
    %v4178 = vld [vmem:[#allocation3 + $0x490] sm:$0xff]
    %v4179 = vld [vmem:[#allocation3 + $0x498] sm:$0xff]
    %v4180 = vld [vmem:[#allocation3 + $0x4a0] sm:$0xff]
    %v4181 = vld [vmem:[#allocation3 + $0x4a8] sm:$0xff]
    %v4182 = vld [vmem:[#allocation3 + $0x4b0] sm:$0xff]
    %v4183 = vld [vmem:[#allocation3 + $0x4b8] sm:$0xff]
    %v4184 = vld [vmem:[#allocation3 + $0x4c0] sm:$0xff]
    %v4185 = vld [vmem:[#allocation3 + $0x4c8] sm:$0xff]
    %v4186 = vld [vmem:[#allocation3 + $0x4d0] sm:$0xff]
    %v4187 = vld [vmem:[#allocation3 + $0x4d8] sm:$0xff]
    %v4188 = vld [vmem:[#allocation3 + $0x4e0] sm:$0xff]
    %v4189 = vld [vmem:[#allocation3 + $0x4e8] sm:$0xff]
    %v4190 = vld [vmem:[#allocation3 + $0x4f0] sm:$0xff]
    %v4191 = vld [vmem:[#allocation3 + $0x4f8] sm:$0xff]
    %v4192 = vld [vmem:[#allocation3 + $0x500] sm:$0xff]
    %v4193 = vld [vmem:[#allocation3 + $0x508] sm:$0xff]
    %v4194 = vld [vmem:[#allocation3 + $0x510] sm:$0xff]
    %v4195 = vld [vmem:[#allocation3 + $0x518] sm:$0xff]
    %v4196 = vld [vmem:[#allocation3 + $0x520] sm:$0xff]
    %v4197 = vld [vmem:[#allocation3 + $0x528] sm:$0xff]
    %v4198 = vld [vmem:[#allocation3 + $0x530] sm:$0xff]
    %v4199 = vld [vmem:[#allocation3 + $0x538] sm:$0xff]
    %v4200 = vld [vmem:[#allocation3 + $0x540] sm:$0xff]
    %v4201 = vld [vmem:[#allocation3 + $0x548] sm:$0xff]
    %v4202 = vld [vmem:[#allocation3 + $0x550] sm:$0xff]
    %v4203 = vld [vmem:[#allocation3 + $0x558] sm:$0xff]
    %v4204 = vld [vmem:[#allocation3 + $0x560] sm:$0xff]
    %v4205 = vld [vmem:[#allocation3 + $0x568] sm:$0xff]
    %v4206 = vld [vmem:[#allocation3 + $0x570] sm:$0xff]
    %v4207 = vld [vmem:[#allocation3 + $0x578] sm:$0xff]
    %v4208 = vld [vmem:[#allocation3 + $0x580] sm:$0xff]
    %v4209 = vld [vmem:[#allocation3 + $0x588] sm:$0xff]
    %v4210 = vld [vmem:[#allocation3 + $0x590] sm:$0xff]
    %v4211 = vld [vmem:[#allocation3 + $0x598] sm:$0xff]
    %v4212 = vld [vmem:[#allocation3 + $0x5a0] sm:$0xff]
    %v4213 = vld [vmem:[#allocation3 + $0x5a8] sm:$0xff]
    %v4214 = vld [vmem:[#allocation3 + $0x5b0] sm:$0xff]
    %v4215 = vld [vmem:[#allocation3 + $0x5b8] sm:$0xff]
    %v4216 = vld [vmem:[#allocation3 + $0x5c0] sm:$0xff]
    %v4217 = vld [vmem:[#allocation3 + $0x5c8] sm:$0xff]
    %v4218 = vld [vmem:[#allocation3 + $0x5d0] sm:$0xff]
    %v4219 = vld [vmem:[#allocation3 + $0x5d8] sm:$0xff]
    %v4220 = vld [vmem:[#allocation3 + $0x5e0] sm:$0xff]
    %v4221 = vld [vmem:[#allocation3 + $0x5e8] sm:$0xff]
    %v4222 = vld [vmem:[#allocation3 + $0x5f0] sm:$0xff]
    %v4223 = vld [vmem:[#allocation3 + $0x5f8] sm:$0xff]
    %v4224 = vld [vmem:[#allocation3 + $0x600] sm:$0xff]
    %v4225 = vld [vmem:[#allocation3 + $0x608] sm:$0xff]
    %v4226 = vld [vmem:[#allocation3 + $0x610] sm:$0xff]
    %v4227 = vld [vmem:[#allocation3 + $0x618] sm:$0xff]
    %v4228 = vld [vmem:[#allocation3 + $0x620] sm:$0xff]
    %v4229 = vld [vmem:[#allocation3 + $0x628] sm:$0xff]
    %v4230 = vld [vmem:[#allocation3 + $0x630] sm:$0xff]
    %v4231 = vld [vmem:[#allocation3 + $0x638] sm:$0xff]
    %v4232 = vld [vmem:[#allocation3 + $0x640] sm:$0xff]
    %v4233 = vld [vmem:[#allocation3 + $0x648] sm:$0xff]
    %v4234 = vld [vmem:[#allocation3 + $0x650] sm:$0xff]
    %v4235 = vld [vmem:[#allocation3 + $0x658] sm:$0xff]
    %v4236 = vld [vmem:[#allocation3 + $0x660] sm:$0xff]
    %v4237 = vld [vmem:[#allocation3 + $0x668] sm:$0xff]
    %v4238 = vld [vmem:[#allocation3 + $0x670] sm:$0xff]
    %v4239 = vld [vmem:[#allocation3 + $0x678] sm:$0xff]
    %v4240 = vld [vmem:[#allocation3 + $0x680] sm:$0xff]
    %v4241 = vld [vmem:[#allocation3 + $0x688] sm:$0xff]
    %v4242 = vld [vmem:[#allocation3 + $0x690] sm:$0xff]
    %v4243 = vld [vmem:[#allocation3 + $0x698] sm:$0xff]
    %v4244 = vld [vmem:[#allocation3 + $0x6a0] sm:$0xff]
    %v4245 = vld [vmem:[#allocation3 + $0x6a8] sm:$0xff]
    %v4246 = vld [vmem:[#allocation3 + $0x6b0] sm:$0xff]
    %v4247 = vld [vmem:[#allocation3 + $0x6b8] sm:$0xff]
    %v4248 = vld [vmem:[#allocation3 + $0x6c0] sm:$0xff]
    %v4249 = vld [vmem:[#allocation3 + $0x6c8] sm:$0xff]
    %v4250 = vld [vmem:[#allocation3 + $0x6d0] sm:$0xff]
    %v4251 = vld [vmem:[#allocation3 + $0x6d8] sm:$0xff]
    %v4252 = vld [vmem:[#allocation3 + $0x6e0] sm:$0xff]
    %v4253 = vld [vmem:[#allocation3 + $0x6e8] sm:$0xff]
    %v4254 = vld [vmem:[#allocation3 + $0x6f0] sm:$0xff]
    %v4255 = vld [vmem:[#allocation3 + $0x6f8] sm:$0xff]
    %v4256 = vld [vmem:[#allocation3 + $0x700] sm:$0xff]
    %v4257 = vld [vmem:[#allocation3 + $0x708] sm:$0xff]
    %v4258 = vld [vmem:[#allocation3 + $0x710] sm:$0xff]
    %v4259 = vld [vmem:[#allocation3 + $0x718] sm:$0xff]
    %v4260 = vld [vmem:[#allocation3 + $0x720] sm:$0xff]
    %v4261 = vld [vmem:[#allocation3 + $0x728] sm:$0xff]
    %v4262 = vld [vmem:[#allocation3 + $0x730] sm:$0xff]
    %v4263 = vld [vmem:[#allocation3 + $0x738] sm:$0xff]
    %v4264 = vld [vmem:[#allocation3 + $0x740] sm:$0xff]
    %v4265 = vld [vmem:[#allocation3 + $0x748] sm:$0xff]
    %v4266 = vld [vmem:[#allocation3 + $0x750] sm:$0xff]
    %v4267 = vld [vmem:[#allocation3 + $0x758] sm:$0xff]
    %v4268 = vld [vmem:[#allocation3 + $0x760] sm:$0xff]
    %v4269 = vld [vmem:[#allocation3 + $0x768] sm:$0xff]
    %v4270 = vld [vmem:[#allocation3 + $0x770] sm:$0xff]
    %v4271 = vld [vmem:[#allocation3 + $0x778] sm:$0xff]
    %v4272 = vld [vmem:[#allocation3 + $0x780] sm:$0xff]
    %v4273 = vld [vmem:[#allocation3 + $0x788] sm:$0xff]
    %v4274 = vld [vmem:[#allocation3 + $0x790] sm:$0xff]
    %v4275 = vld [vmem:[#allocation3 + $0x798] sm:$0xff]
    %v4276 = vld [vmem:[#allocation3 + $0x7a0] sm:$0xff]
    %v4277 = vld [vmem:[#allocation3 + $0x7a8] sm:$0xff]
    %v4278 = vld [vmem:[#allocation3 + $0x7b0] sm:$0xff]
    %v4279 = vld [vmem:[#allocation3 + $0x7b8] sm:$0xff]
    %v4280 = vld [vmem:[#allocation3 + $0x7c0] sm:$0xff]
    %v4281 = vld [vmem:[#allocation3 + $0x7c8] sm:$0xff]
    %v4282 = vld [vmem:[#allocation3 + $0x7d0] sm:$0xff]
    %v4283 = vld [vmem:[#allocation3 + $0x7d8] sm:$0xff]
    %v4284 = vld [vmem:[#allocation3 + $0x7e0] sm:$0xff]
    %v4285 = vld [vmem:[#allocation3 + $0x7e8] sm:$0xff]
    %v4286 = vld [vmem:[#allocation3 + $0x7f0] sm:$0xff]
    %v4287 = vld [vmem:[#allocation3 + $0x7f8] sm:$0xff]
    %v4544 = vunpack.c.l.b16 %v4032
    %v4545 = vunpack.c.h.b16 %v4032
    %v4546 = vunpack.c.l.b16 %v4033
    %v4547 = vunpack.c.h.b16 %v4033
    %v4548 = vunpack.c.l.b16 %v4034
    %v4549 = vunpack.c.h.b16 %v4034
    %v4550 = vunpack.c.l.b16 %v4035
    %v4551 = vunpack.c.h.b16 %v4035
    %v4552 = vunpack.c.l.b16 %v4036
    %v4553 = vunpack.c.h.b16 %v4036
    %v4554 = vunpack.c.l.b16 %v4037
    %v4555 = vunpack.c.h.b16 %v4037
    %v4556 = vunpack.c.l.b16 %v4038
    %v4557 = vunpack.c.h.b16 %v4038
    %v4558 = vunpack.c.l.b16 %v4039
    %v4559 = vunpack.c.h.b16 %v4039
    %v4560 = vunpack.c.l.b16 %v4040
    %v4561 = vunpack.c.h.b16 %v4040
    %v4562 = vunpack.c.l.b16 %v4041
    %v4563 = vunpack.c.h.b16 %v4041
    %v4564 = vunpack.c.l.b16 %v4042
    %v4565 = vunpack.c.h.b16 %v4042
    %v4566 = vunpack.c.l.b16 %v4043
    %v4567 = vunpack.c.h.b16 %v4043
    %v4568 = vunpack.c.l.b16 %v4044
    %v4569 = vunpack.c.h.b16 %v4044
    %v4570 = vunpack.c.l.b16 %v4045
    %v4571 = vunpack.c.h.b16 %v4045
    %v4572 = vunpack.c.l.b16 %v4046
    %v4573 = vunpack.c.h.b16 %v4046
    %v4574 = vunpack.c.l.b16 %v4047
    %v4575 = vunpack.c.h.b16 %v4047
    %v4576 = vunpack.c.l.b16 %v4048
    %v4577 = vunpack.c.h.b16 %v4048
    %v4578 = vunpack.c.l.b16 %v4049
    %v4579 = vunpack.c.h.b16 %v4049
    %v4580 = vunpack.c.l.b16 %v4050
    %v4581 = vunpack.c.h.b16 %v4050
    %v4582 = vunpack.c.l.b16 %v4051
    %v4583 = vunpack.c.h.b16 %v4051
    %v4584 = vunpack.c.l.b16 %v4052
    %v4585 = vunpack.c.h.b16 %v4052
    %v4586 = vunpack.c.l.b16 %v4053
    %v4587 = vunpack.c.h.b16 %v4053
    %v4588 = vunpack.c.l.b16 %v4054
    %v4589 = vunpack.c.h.b16 %v4054
    %v4590 = vunpack.c.l.b16 %v4055
    %v4591 = vunpack.c.h.b16 %v4055
    %v4592 = vunpack.c.l.b16 %v4056
    %v4593 = vunpack.c.h.b16 %v4056
    %v4594 = vunpack.c.l.b16 %v4057
    %v4595 = vunpack.c.h.b16 %v4057
    %v4596 = vunpack.c.l.b16 %v4058
    %v4597 = vunpack.c.h.b16 %v4058
    %v4598 = vunpack.c.l.b16 %v4059
    %v4599 = vunpack.c.h.b16 %v4059
    %v4600 = vunpack.c.l.b16 %v4060
    %v4601 = vunpack.c.h.b16 %v4060
    %v4602 = vunpack.c.l.b16 %v4061
    %v4603 = vunpack.c.h.b16 %v4061
    %v4604 = vunpack.c.l.b16 %v4062
    %v4605 = vunpack.c.h.b16 %v4062
    %v4606 = vunpack.c.l.b16 %v4063
    %v4607 = vunpack.c.h.b16 %v4063
    %v4608 = vunpack.c.l.b16 %v4064
    %v4609 = vunpack.c.h.b16 %v4064
    %v4610 = vunpack.c.l.b16 %v4065
    %v4611 = vunpack.c.h.b16 %v4065
    %v4612 = vunpack.c.l.b16 %v4066
    %v4613 = vunpack.c.h.b16 %v4066
    %v4614 = vunpack.c.l.b16 %v4067
    %v4615 = vunpack.c.h.b16 %v4067
    %v4616 = vunpack.c.l.b16 %v4068
    %v4617 = vunpack.c.h.b16 %v4068
    %v4618 = vunpack.c.l.b16 %v4069
    %v4619 = vunpack.c.h.b16 %v4069
    %v4620 = vunpack.c.l.b16 %v4070
    %v4621 = vunpack.c.h.b16 %v4070
    %v4622 = vunpack.c.l.b16 %v4071
    %v4623 = vunpack.c.h.b16 %v4071
    %v4624 = vunpack.c.l.b16 %v4072
    %v4625 = vunpack.c.h.b16 %v4072
    %v4626 = vunpack.c.l.b16 %v4073
    %v4627 = vunpack.c.h.b16 %v4073
    %v4628 = vunpack.c.l.b16 %v4074
    %v4629 = vunpack.c.h.b16 %v4074
    %v4630 = vunpack.c.l.b16 %v4075
    %v4631 = vunpack.c.h.b16 %v4075
    %v4632 = vunpack.c.l.b16 %v4076
    %v4633 = vunpack.c.h.b16 %v4076
    %v4634 = vunpack.c.l.b16 %v4077
    %v4635 = vunpack.c.h.b16 %v4077
    %v4636 = vunpack.c.l.b16 %v4078
    %v4637 = vunpack.c.h.b16 %v4078
    %v4638 = vunpack.c.l.b16 %v4079
    %v4639 = vunpack.c.h.b16 %v4079
    %v4640 = vunpack.c.l.b16 %v4080
    %v4641 = vunpack.c.h.b16 %v4080
    %v4642 = vunpack.c.l.b16 %v4081
    %v4643 = vunpack.c.h.b16 %v4081
    %v4644 = vunpack.c.l.b16 %v4082
    %v4645 = vunpack.c.h.b16 %v4082
    %v4646 = vunpack.c.l.b16 %v4083
    %v4647 = vunpack.c.h.b16 %v4083
    %v4648 = vunpack.c.l.b16 %v4084
    %v4649 = vunpack.c.h.b16 %v4084
    %v4650 = vunpack.c.l.b16 %v4085
    %v4651 = vunpack.c.h.b16 %v4085
    %v4652 = vunpack.c.l.b16 %v4086
    %v4653 = vunpack.c.h.b16 %v4086
    %v4654 = vunpack.c.l.b16 %v4087
    %v4655 = vunpack.c.h.b16 %v4087
    %v4656 = vunpack.c.l.b16 %v4088
    %v4657 = vunpack.c.h.b16 %v4088
    %v4658 = vunpack.c.l.b16 %v4089
    %v4659 = vunpack.c.h.b16 %v4089
    %v4660 = vunpack.c.l.b16 %v4090
    %v4661 = vunpack.c.h.b16 %v4090
    %v4662 = vunpack.c.l.b16 %v4091
    %v4663 = vunpack.c.h.b16 %v4091
    %v4664 = vunpack.c.l.b16 %v4092
    %v4665 = vunpack.c.h.b16 %v4092
    %v4666 = vunpack.c.l.b16 %v4093
    %v4667 = vunpack.c.h.b16 %v4093
    %v4668 = vunpack.c.l.b16 %v4094
    %v4669 = vunpack.c.h.b16 %v4094
    %v4670 = vunpack.c.l.b16 %v4095
    %v4671 = vunpack.c.h.b16 %v4095
    %v4672 = vunpack.c.l.b16 %v4096
    %v4673 = vunpack.c.h.b16 %v4096
    %v4674 = vunpack.c.l.b16 %v4097
    %v4675 = vunpack.c.h.b16 %v4097
    %v4676 = vunpack.c.l.b16 %v4098
    %v4677 = vunpack.c.h.b16 %v4098
    %v4678 = vunpack.c.l.b16 %v4099
    %v4679 = vunpack.c.h.b16 %v4099
    %v4680 = vunpack.c.l.b16 %v4100
    %v4681 = vunpack.c.h.b16 %v4100
    %v4682 = vunpack.c.l.b16 %v4101
    %v4683 = vunpack.c.h.b16 %v4101
    %v4684 = vunpack.c.l.b16 %v4102
    %v4685 = vunpack.c.h.b16 %v4102
    %v4686 = vunpack.c.l.b16 %v4103
    %v4687 = vunpack.c.h.b16 %v4103
    %v4688 = vunpack.c.l.b16 %v4104
    %v4689 = vunpack.c.h.b16 %v4104
    %v4690 = vunpack.c.l.b16 %v4105
    %v4691 = vunpack.c.h.b16 %v4105
    %v4692 = vunpack.c.l.b16 %v4106
    %v4693 = vunpack.c.h.b16 %v4106
    %v4694 = vunpack.c.l.b16 %v4107
    %v4695 = vunpack.c.h.b16 %v4107
    %v4696 = vunpack.c.l.b16 %v4108
    %v4697 = vunpack.c.h.b16 %v4108
    %v4698 = vunpack.c.l.b16 %v4109
    %v4699 = vunpack.c.h.b16 %v4109
    %v4700 = vunpack.c.l.b16 %v4110
    %v4701 = vunpack.c.h.b16 %v4110
    %v4702 = vunpack.c.l.b16 %v4111
    %v4703 = vunpack.c.h.b16 %v4111
    %v4704 = vunpack.c.l.b16 %v4112
    %v4705 = vunpack.c.h.b16 %v4112
    %v4706 = vunpack.c.l.b16 %v4113
    %v4707 = vunpack.c.h.b16 %v4113
    %v4708 = vunpack.c.l.b16 %v4114
    %v4709 = vunpack.c.h.b16 %v4114
    %v4710 = vunpack.c.l.b16 %v4115
    %v4711 = vunpack.c.h.b16 %v4115
    %v4712 = vunpack.c.l.b16 %v4116
    %v4713 = vunpack.c.h.b16 %v4116
    %v4714 = vunpack.c.l.b16 %v4117
    %v4715 = vunpack.c.h.b16 %v4117
    %v4716 = vunpack.c.l.b16 %v4118
    %v4717 = vunpack.c.h.b16 %v4118
    %v4718 = vunpack.c.l.b16 %v4119
    %v4719 = vunpack.c.h.b16 %v4119
    %v4720 = vunpack.c.l.b16 %v4120
    %v4721 = vunpack.c.h.b16 %v4120
    %v4722 = vunpack.c.l.b16 %v4121
    %v4723 = vunpack.c.h.b16 %v4121
    %v4724 = vunpack.c.l.b16 %v4122
    %v4725 = vunpack.c.h.b16 %v4122
    %v4726 = vunpack.c.l.b16 %v4123
    %v4727 = vunpack.c.h.b16 %v4123
    %v4728 = vunpack.c.l.b16 %v4124
    %v4729 = vunpack.c.h.b16 %v4124
    %v4730 = vunpack.c.l.b16 %v4125
    %v4731 = vunpack.c.h.b16 %v4125
    %v4732 = vunpack.c.l.b16 %v4126
    %v4733 = vunpack.c.h.b16 %v4126
    %v4734 = vunpack.c.l.b16 %v4127
    %v4735 = vunpack.c.h.b16 %v4127
    %v4736 = vunpack.c.l.b16 %v4128
    %v4737 = vunpack.c.h.b16 %v4128
    %v4738 = vunpack.c.l.b16 %v4129
    %v4739 = vunpack.c.h.b16 %v4129
    %v4740 = vunpack.c.l.b16 %v4130
    %v4741 = vunpack.c.h.b16 %v4130
    %v4742 = vunpack.c.l.b16 %v4131
    %v4743 = vunpack.c.h.b16 %v4131
    %v4744 = vunpack.c.l.b16 %v4132
    %v4745 = vunpack.c.h.b16 %v4132
    %v4746 = vunpack.c.l.b16 %v4133
    %v4747 = vunpack.c.h.b16 %v4133
    %v4748 = vunpack.c.l.b16 %v4134
    %v4749 = vunpack.c.h.b16 %v4134
    %v4750 = vunpack.c.l.b16 %v4135
    %v4751 = vunpack.c.h.b16 %v4135
    %v4752 = vunpack.c.l.b16 %v4136
    %v4753 = vunpack.c.h.b16 %v4136
    %v4754 = vunpack.c.l.b16 %v4137
    %v4755 = vunpack.c.h.b16 %v4137
    %v4756 = vunpack.c.l.b16 %v4138
    %v4757 = vunpack.c.h.b16 %v4138
    %v4758 = vunpack.c.l.b16 %v4139
    %v4759 = vunpack.c.h.b16 %v4139
    %v4760 = vunpack.c.l.b16 %v4140
    %v4761 = vunpack.c.h.b16 %v4140
    %v4762 = vunpack.c.l.b16 %v4141
    %v4763 = vunpack.c.h.b16 %v4141
    %v4764 = vunpack.c.l.b16 %v4142
    %v4765 = vunpack.c.h.b16 %v4142
    %v4766 = vunpack.c.l.b16 %v4143
    %v4767 = vunpack.c.h.b16 %v4143
    %v4768 = vunpack.c.l.b16 %v4144
    %v4769 = vunpack.c.h.b16 %v4144
    %v4770 = vunpack.c.l.b16 %v4145
    %v4771 = vunpack.c.h.b16 %v4145
    %v4772 = vunpack.c.l.b16 %v4146
    %v4773 = vunpack.c.h.b16 %v4146
    %v4774 = vunpack.c.l.b16 %v4147
    %v4775 = vunpack.c.h.b16 %v4147
    %v4776 = vunpack.c.l.b16 %v4148
    %v4777 = vunpack.c.h.b16 %v4148
    %v4778 = vunpack.c.l.b16 %v4149
    %v4779 = vunpack.c.h.b16 %v4149
    %v4780 = vunpack.c.l.b16 %v4150
    %v4781 = vunpack.c.h.b16 %v4150
    %v4782 = vunpack.c.l.b16 %v4151
    %v4783 = vunpack.c.h.b16 %v4151
    %v4784 = vunpack.c.l.b16 %v4152
    %v4785 = vunpack.c.h.b16 %v4152
    %v4786 = vunpack.c.l.b16 %v4153
    %v4787 = vunpack.c.h.b16 %v4153
    %v4788 = vunpack.c.l.b16 %v4154
    %v4789 = vunpack.c.h.b16 %v4154
    %v4790 = vunpack.c.l.b16 %v4155
    %v4791 = vunpack.c.h.b16 %v4155
    %v4792 = vunpack.c.l.b16 %v4156
    %v4793 = vunpack.c.h.b16 %v4156
    %v4794 = vunpack.c.l.b16 %v4157
    %v4795 = vunpack.c.h.b16 %v4157
    %v4796 = vunpack.c.l.b16 %v4158
    %v4797 = vunpack.c.h.b16 %v4158
    %v4798 = vunpack.c.l.b16 %v4159
    %v4799 = vunpack.c.h.b16 %v4159
    %v4800 = vunpack.c.l.b16 %v4160
    %v4801 = vunpack.c.h.b16 %v4160
    %v4802 = vunpack.c.l.b16 %v4161
    %v4803 = vunpack.c.h.b16 %v4161
    %v4804 = vunpack.c.l.b16 %v4162
    %v4805 = vunpack.c.h.b16 %v4162
    %v4806 = vunpack.c.l.b16 %v4163
    %v4807 = vunpack.c.h.b16 %v4163
    %v4808 = vunpack.c.l.b16 %v4164
    %v4809 = vunpack.c.h.b16 %v4164
    %v4810 = vunpack.c.l.b16 %v4165
    %v4811 = vunpack.c.h.b16 %v4165
    %v4812 = vunpack.c.l.b16 %v4166
    %v4813 = vunpack.c.h.b16 %v4166
    %v4814 = vunpack.c.l.b16 %v4167
    %v4815 = vunpack.c.h.b16 %v4167
    %v4816 = vunpack.c.l.b16 %v4168
    %v4817 = vunpack.c.h.b16 %v4168
    %v4818 = vunpack.c.l.b16 %v4169
    %v4819 = vunpack.c.h.b16 %v4169
    %v4820 = vunpack.c.l.b16 %v4170
    %v4821 = vunpack.c.h.b16 %v4170
    %v4822 = vunpack.c.l.b16 %v4171
    %v4823 = vunpack.c.h.b16 %v4171
    %v4824 = vunpack.c.l.b16 %v4172
    %v4825 = vunpack.c.h.b16 %v4172
    %v4826 = vunpack.c.l.b16 %v4173
    %v4827 = vunpack.c.h.b16 %v4173
    %v4828 = vunpack.c.l.b16 %v4174
    %v4829 = vunpack.c.h.b16 %v4174
    %v4830 = vunpack.c.l.b16 %v4175
    %v4831 = vunpack.c.h.b16 %v4175
    %v4832 = vunpack.c.l.b16 %v4176
    %v4833 = vunpack.c.h.b16 %v4176
    %v4834 = vunpack.c.l.b16 %v4177
    %v4835 = vunpack.c.h.b16 %v4177
    %v4836 = vunpack.c.l.b16 %v4178
    %v4837 = vunpack.c.h.b16 %v4178
    %v4838 = vunpack.c.l.b16 %v4179
    %v4839 = vunpack.c.h.b16 %v4179
    %v4840 = vunpack.c.l.b16 %v4180
    %v4841 = vunpack.c.h.b16 %v4180
    %v4842 = vunpack.c.l.b16 %v4181
    %v4843 = vunpack.c.h.b16 %v4181
    %v4844 = vunpack.c.l.b16 %v4182
    %v4845 = vunpack.c.h.b16 %v4182
    %v4846 = vunpack.c.l.b16 %v4183
    %v4847 = vunpack.c.h.b16 %v4183
    %v4848 = vunpack.c.l.b16 %v4184
    %v4849 = vunpack.c.h.b16 %v4184
    %v4850 = vunpack.c.l.b16 %v4185
    %v4851 = vunpack.c.h.b16 %v4185
    %v4852 = vunpack.c.l.b16 %v4186
    %v4853 = vunpack.c.h.b16 %v4186
    %v4854 = vunpack.c.l.b16 %v4187
    %v4855 = vunpack.c.h.b16 %v4187
    %v4856 = vunpack.c.l.b16 %v4188
    %v4857 = vunpack.c.h.b16 %v4188
    %v4858 = vunpack.c.l.b16 %v4189
    %v4859 = vunpack.c.h.b16 %v4189
    %v4860 = vunpack.c.l.b16 %v4190
    %v4861 = vunpack.c.h.b16 %v4190
    %v4862 = vunpack.c.l.b16 %v4191
    %v4863 = vunpack.c.h.b16 %v4191
    %v4864 = vunpack.c.l.b16 %v4192
    %v4865 = vunpack.c.h.b16 %v4192
    %v4866 = vunpack.c.l.b16 %v4193
    %v4867 = vunpack.c.h.b16 %v4193
    %v4868 = vunpack.c.l.b16 %v4194
    %v4869 = vunpack.c.h.b16 %v4194
    %v4870 = vunpack.c.l.b16 %v4195
    %v4871 = vunpack.c.h.b16 %v4195
    %v4872 = vunpack.c.l.b16 %v4196
    %v4873 = vunpack.c.h.b16 %v4196
    %v4874 = vunpack.c.l.b16 %v4197
    %v4875 = vunpack.c.h.b16 %v4197
    %v4876 = vunpack.c.l.b16 %v4198
    %v4877 = vunpack.c.h.b16 %v4198
    %v4878 = vunpack.c.l.b16 %v4199
    %v4879 = vunpack.c.h.b16 %v4199
    %v4880 = vunpack.c.l.b16 %v4200
    %v4881 = vunpack.c.h.b16 %v4200
    %v4882 = vunpack.c.l.b16 %v4201
    %v4883 = vunpack.c.h.b16 %v4201
    %v4884 = vunpack.c.l.b16 %v4202
    %v4885 = vunpack.c.h.b16 %v4202
    %v4886 = vunpack.c.l.b16 %v4203
    %v4887 = vunpack.c.h.b16 %v4203
    %v4888 = vunpack.c.l.b16 %v4204
    %v4889 = vunpack.c.h.b16 %v4204
    %v4890 = vunpack.c.l.b16 %v4205
    %v4891 = vunpack.c.h.b16 %v4205
    %v4892 = vunpack.c.l.b16 %v4206
    %v4893 = vunpack.c.h.b16 %v4206
    %v4894 = vunpack.c.l.b16 %v4207
    %v4895 = vunpack.c.h.b16 %v4207
    %v4896 = vunpack.c.l.b16 %v4208
    %v4897 = vunpack.c.h.b16 %v4208
    %v4898 = vunpack.c.l.b16 %v4209
    %v4899 = vunpack.c.h.b16 %v4209
    %v4900 = vunpack.c.l.b16 %v4210
    %v4901 = vunpack.c.h.b16 %v4210
    %v4902 = vunpack.c.l.b16 %v4211
    %v4903 = vunpack.c.h.b16 %v4211
    %v4904 = vunpack.c.l.b16 %v4212
    %v4905 = vunpack.c.h.b16 %v4212
    %v4906 = vunpack.c.l.b16 %v4213
    %v4907 = vunpack.c.h.b16 %v4213
    %v4908 = vunpack.c.l.b16 %v4214
    %v4909 = vunpack.c.h.b16 %v4214
    %v4910 = vunpack.c.l.b16 %v4215
    %v4911 = vunpack.c.h.b16 %v4215
    %v4912 = vunpack.c.l.b16 %v4216
    %v4913 = vunpack.c.h.b16 %v4216
    %v4914 = vunpack.c.l.b16 %v4217
    %v4915 = vunpack.c.h.b16 %v4217
    %v4916 = vunpack.c.l.b16 %v4218
    %v4917 = vunpack.c.h.b16 %v4218
    %v4918 = vunpack.c.l.b16 %v4219
    %v4919 = vunpack.c.h.b16 %v4219
    %v4920 = vunpack.c.l.b16 %v4220
    %v4921 = vunpack.c.h.b16 %v4220
    %v4922 = vunpack.c.l.b16 %v4221
    %v4923 = vunpack.c.h.b16 %v4221
    %v4924 = vunpack.c.l.b16 %v4222
    %v4925 = vunpack.c.h.b16 %v4222
    %v4926 = vunpack.c.l.b16 %v4223
    %v4927 = vunpack.c.h.b16 %v4223
    %v4928 = vunpack.c.l.b16 %v4224
    %v4929 = vunpack.c.h.b16 %v4224
    %v4930 = vunpack.c.l.b16 %v4225
    %v4931 = vunpack.c.h.b16 %v4225
    %v4932 = vunpack.c.l.b16 %v4226
    %v4933 = vunpack.c.h.b16 %v4226
    %v4934 = vunpack.c.l.b16 %v4227
    %v4935 = vunpack.c.h.b16 %v4227
    %v4936 = vunpack.c.l.b16 %v4228
    %v4937 = vunpack.c.h.b16 %v4228
    %v4938 = vunpack.c.l.b16 %v4229
    %v4939 = vunpack.c.h.b16 %v4229
    %v4940 = vunpack.c.l.b16 %v4230
    %v4941 = vunpack.c.h.b16 %v4230
    %v4942 = vunpack.c.l.b16 %v4231
    %v4943 = vunpack.c.h.b16 %v4231
    %v4944 = vunpack.c.l.b16 %v4232
    %v4945 = vunpack.c.h.b16 %v4232
    %v4946 = vunpack.c.l.b16 %v4233
    %v4947 = vunpack.c.h.b16 %v4233
    %v4948 = vunpack.c.l.b16 %v4234
    %v4949 = vunpack.c.h.b16 %v4234
    %v4950 = vunpack.c.l.b16 %v4235
    %v4951 = vunpack.c.h.b16 %v4235
    %v4952 = vunpack.c.l.b16 %v4236
    %v4953 = vunpack.c.h.b16 %v4236
    %v4954 = vunpack.c.l.b16 %v4237
    %v4955 = vunpack.c.h.b16 %v4237
    %v4956 = vunpack.c.l.b16 %v4238
    %v4957 = vunpack.c.h.b16 %v4238
    %v4958 = vunpack.c.l.b16 %v4239
    %v4959 = vunpack.c.h.b16 %v4239
    %v4960 = vunpack.c.l.b16 %v4240
    %v4961 = vunpack.c.h.b16 %v4240
    %v4962 = vunpack.c.l.b16 %v4241
    %v4963 = vunpack.c.h.b16 %v4241
    %v4964 = vunpack.c.l.b16 %v4242
    %v4965 = vunpack.c.h.b16 %v4242
    %v4966 = vunpack.c.l.b16 %v4243
    %v4967 = vunpack.c.h.b16 %v4243
    %v4968 = vunpack.c.l.b16 %v4244
    %v4969 = vunpack.c.h.b16 %v4244
    %v4970 = vunpack.c.l.b16 %v4245
    %v4971 = vunpack.c.h.b16 %v4245
    %v4972 = vunpack.c.l.b16 %v4246
    %v4973 = vunpack.c.h.b16 %v4246
    %v4974 = vunpack.c.l.b16 %v4247
    %v4975 = vunpack.c.h.b16 %v4247
    %v4976 = vunpack.c.l.b16 %v4248
    %v4977 = vunpack.c.h.b16 %v4248
    %v4978 = vunpack.c.l.b16 %v4249
    %v4979 = vunpack.c.h.b16 %v4249
    %v4980 = vunpack.c.l.b16 %v4250
    %v4981 = vunpack.c.h.b16 %v4250
    %v4982 = vunpack.c.l.b16 %v4251
    %v4983 = vunpack.c.h.b16 %v4251
    %v4984 = vunpack.c.l.b16 %v4252
    %v4985 = vunpack.c.h.b16 %v4252
    %v4986 = vunpack.c.l.b16 %v4253
    %v4987 = vunpack.c.h.b16 %v4253
    %v4988 = vunpack.c.l.b16 %v4254
    %v4989 = vunpack.c.h.b16 %v4254
    %v4990 = vunpack.c.l.b16 %v4255
    %v4991 = vunpack.c.h.b16 %v4255
    %v4992 = vunpack.c.l.b16 %v4256
    %v4993 = vunpack.c.h.b16 %v4256
    %v4994 = vunpack.c.l.b16 %v4257
    %v4995 = vunpack.c.h.b16 %v4257
    %v4996 = vunpack.c.l.b16 %v4258
    %v4997 = vunpack.c.h.b16 %v4258
    %v4998 = vunpack.c.l.b16 %v4259
    %v4999 = vunpack.c.h.b16 %v4259
    %v5000 = vunpack.c.l.b16 %v4260
    %v5001 = vunpack.c.h.b16 %v4260
    %v5002 = vunpack.c.l.b16 %v4261
    %v5003 = vunpack.c.h.b16 %v4261
    %v5004 = vunpack.c.l.b16 %v4262
    %v5005 = vunpack.c.h.b16 %v4262
    %v5006 = vunpack.c.l.b16 %v4263
    %v5007 = vunpack.c.h.b16 %v4263
    %v5008 = vunpack.c.l.b16 %v4264
    %v5009 = vunpack.c.h.b16 %v4264
    %v5010 = vunpack.c.l.b16 %v4265
    %v5011 = vunpack.c.h.b16 %v4265
    %v5012 = vunpack.c.l.b16 %v4266
    %v5013 = vunpack.c.h.b16 %v4266
    %v5014 = vunpack.c.l.b16 %v4267
    %v5015 = vunpack.c.h.b16 %v4267
    %v5016 = vunpack.c.l.b16 %v4268
    %v5017 = vunpack.c.h.b16 %v4268
    %v5018 = vunpack.c.l.b16 %v4269
    %v5019 = vunpack.c.h.b16 %v4269
    %v5020 = vunpack.c.l.b16 %v4270
    %v5021 = vunpack.c.h.b16 %v4270
    %v5022 = vunpack.c.l.b16 %v4271
    %v5023 = vunpack.c.h.b16 %v4271
    %v5024 = vunpack.c.l.b16 %v4272
    %v5025 = vunpack.c.h.b16 %v4272
    %v5026 = vunpack.c.l.b16 %v4273
    %v5027 = vunpack.c.h.b16 %v4273
    %v5028 = vunpack.c.l.b16 %v4274
    %v5029 = vunpack.c.h.b16 %v4274
    %v5030 = vunpack.c.l.b16 %v4275
    %v5031 = vunpack.c.h.b16 %v4275
    %v5032 = vunpack.c.l.b16 %v4276
    %v5033 = vunpack.c.h.b16 %v4276
    %v5034 = vunpack.c.l.b16 %v4277
    %v5035 = vunpack.c.h.b16 %v4277
    %v5036 = vunpack.c.l.b16 %v4278
    %v5037 = vunpack.c.h.b16 %v4278
    %v5038 = vunpack.c.l.b16 %v4279
    %v5039 = vunpack.c.h.b16 %v4279
    %v5040 = vunpack.c.l.b16 %v4280
    %v5041 = vunpack.c.h.b16 %v4280
    %v5042 = vunpack.c.l.b16 %v4281
    %v5043 = vunpack.c.h.b16 %v4281
    %v5044 = vunpack.c.l.b16 %v4282
    %v5045 = vunpack.c.h.b16 %v4282
    %v5046 = vunpack.c.l.b16 %v4283
    %v5047 = vunpack.c.h.b16 %v4283
    %v5048 = vunpack.c.l.b16 %v4284
    %v5049 = vunpack.c.h.b16 %v4284
    %v5050 = vunpack.c.l.b16 %v4285
    %v5051 = vunpack.c.h.b16 %v4285
    %v5052 = vunpack.c.l.b16 %v4286
    %v5053 = vunpack.c.h.b16 %v4286
    %v5054 = vunpack.c.l.b16 %v4287
    %v5055 = vunpack.c.h.b16 %v4287
    %v5056 = vpack.c.b16 %v4552, %v4544
    %v5057 = vpack.c.b16 %v4553, %v4545
    %v5058 = vpack.c.b16 %v4554, %v4546
    %v5059 = vpack.c.b16 %v4555, %v4547
    %v5060 = vpack.c.b16 %v4556, %v4548
    %v5061 = vpack.c.b16 %v4557, %v4549
    %v5062 = vpack.c.b16 %v4558, %v4550
    %v5063 = vpack.c.b16 %v4559, %v4551
    %v5064 = vpack.c.b16 %v4568, %v4560
    %v5065 = vpack.c.b16 %v4569, %v4561
    %v5066 = vpack.c.b16 %v4570, %v4562
    %v5067 = vpack.c.b16 %v4571, %v4563
    %v5068 = vpack.c.b16 %v4572, %v4564
    %v5069 = vpack.c.b16 %v4573, %v4565
    %v5070 = vpack.c.b16 %v4574, %v4566
    %v5071 = vpack.c.b16 %v4575, %v4567
    %v5072 = vpack.c.b16 %v4584, %v4576
    %v5073 = vpack.c.b16 %v4585, %v4577
    %v5074 = vpack.c.b16 %v4586, %v4578
    %v5075 = vpack.c.b16 %v4587, %v4579
    %v5076 = vpack.c.b16 %v4588, %v4580
    %v5077 = vpack.c.b16 %v4589, %v4581
    %v5078 = vpack.c.b16 %v4590, %v4582
    %v5079 = vpack.c.b16 %v4591, %v4583
    %v5080 = vpack.c.b16 %v4600, %v4592
    %v5081 = vpack.c.b16 %v4601, %v4593
    %v5082 = vpack.c.b16 %v4602, %v4594
    %v5083 = vpack.c.b16 %v4603, %v4595
    %v5084 = vpack.c.b16 %v4604, %v4596
    %v5085 = vpack.c.b16 %v4605, %v4597
    %v5086 = vpack.c.b16 %v4606, %v4598
    %v5087 = vpack.c.b16 %v4607, %v4599
    %v5088 = vpack.c.b16 %v4616, %v4608
    %v5089 = vpack.c.b16 %v4617, %v4609
    %v5090 = vpack.c.b16 %v4618, %v4610
    %v5091 = vpack.c.b16 %v4619, %v4611
    %v5092 = vpack.c.b16 %v4620, %v4612
    %v5093 = vpack.c.b16 %v4621, %v4613
    %v5094 = vpack.c.b16 %v4622, %v4614
    %v5095 = vpack.c.b16 %v4623, %v4615
    %v5096 = vpack.c.b16 %v4632, %v4624
    %v5097 = vpack.c.b16 %v4633, %v4625
    %v5098 = vpack.c.b16 %v4634, %v4626
    %v5099 = vpack.c.b16 %v4635, %v4627
    %v5100 = vpack.c.b16 %v4636, %v4628
    %v5101 = vpack.c.b16 %v4637, %v4629
    %v5102 = vpack.c.b16 %v4638, %v4630
    %v5103 = vpack.c.b16 %v4639, %v4631
    %v5104 = vpack.c.b16 %v4648, %v4640
    %v5105 = vpack.c.b16 %v4649, %v4641
    %v5106 = vpack.c.b16 %v4650, %v4642
    %v5107 = vpack.c.b16 %v4651, %v4643
    %v5108 = vpack.c.b16 %v4652, %v4644
    %v5109 = vpack.c.b16 %v4653, %v4645
    %v5110 = vpack.c.b16 %v4654, %v4646
    %v5111 = vpack.c.b16 %v4655, %v4647
    %v5112 = vpack.c.b16 %v4664, %v4656
    %v5113 = vpack.c.b16 %v4665, %v4657
    %v5114 = vpack.c.b16 %v4666, %v4658
    %v5115 = vpack.c.b16 %v4667, %v4659
    %v5116 = vpack.c.b16 %v4668, %v4660
    %v5117 = vpack.c.b16 %v4669, %v4661
    %v5118 = vpack.c.b16 %v4670, %v4662
    %v5119 = vpack.c.b16 %v4671, %v4663
    %v5120 = vpack.c.b16 %v4680, %v4672
    %v5121 = vpack.c.b16 %v4681, %v4673
    %v5122 = vpack.c.b16 %v4682, %v4674
    %v5123 = vpack.c.b16 %v4683, %v4675
    %v5124 = vpack.c.b16 %v4684, %v4676
    %v5125 = vpack.c.b16 %v4685, %v4677
    %v5126 = vpack.c.b16 %v4686, %v4678
    %v5127 = vpack.c.b16 %v4687, %v4679
    %v5128 = vpack.c.b16 %v4696, %v4688
    %v5129 = vpack.c.b16 %v4697, %v4689
    %v5130 = vpack.c.b16 %v4698, %v4690
    %v5131 = vpack.c.b16 %v4699, %v4691
    %v5132 = vpack.c.b16 %v4700, %v4692
    %v5133 = vpack.c.b16 %v4701, %v4693
    %v5134 = vpack.c.b16 %v4702, %v4694
    %v5135 = vpack.c.b16 %v4703, %v4695
    %v5136 = vpack.c.b16 %v4712, %v4704
    %v5137 = vpack.c.b16 %v4713, %v4705
    %v5138 = vpack.c.b16 %v4714, %v4706
    %v5139 = vpack.c.b16 %v4715, %v4707
    %v5140 = vpack.c.b16 %v4716, %v4708
    %v5141 = vpack.c.b16 %v4717, %v4709
    %v5142 = vpack.c.b16 %v4718, %v4710
    %v5143 = vpack.c.b16 %v4719, %v4711
    %v5144 = vpack.c.b16 %v4728, %v4720
    %v5145 = vpack.c.b16 %v4729, %v4721
    %v5146 = vpack.c.b16 %v4730, %v4722
    %v5147 = vpack.c.b16 %v4731, %v4723
    %v5148 = vpack.c.b16 %v4732, %v4724
    %v5149 = vpack.c.b16 %v4733, %v4725
    %v5150 = vpack.c.b16 %v4734, %v4726
    %v5151 = vpack.c.b16 %v4735, %v4727
    %v5152 = vpack.c.b16 %v4744, %v4736
    %v5153 = vpack.c.b16 %v4745, %v4737
    %v5154 = vpack.c.b16 %v4746, %v4738
    %v5155 = vpack.c.b16 %v4747, %v4739
    %v5156 = vpack.c.b16 %v4748, %v4740
    %v5157 = vpack.c.b16 %v4749, %v4741
    %v5158 = vpack.c.b16 %v4750, %v4742
    %v5159 = vpack.c.b16 %v4751, %v4743
    %v5160 = vpack.c.b16 %v4760, %v4752
    %v5161 = vpack.c.b16 %v4761, %v4753
    %v5162 = vpack.c.b16 %v4762, %v4754
    %v5163 = vpack.c.b16 %v4763, %v4755
    %v5164 = vpack.c.b16 %v4764, %v4756
    %v5165 = vpack.c.b16 %v4765, %v4757
    %v5166 = vpack.c.b16 %v4766, %v4758
    %v5167 = vpack.c.b16 %v4767, %v4759
    %v5168 = vpack.c.b16 %v4776, %v4768
    %v5169 = vpack.c.b16 %v4777, %v4769
    %v5170 = vpack.c.b16 %v4778, %v4770
    %v5171 = vpack.c.b16 %v4779, %v4771
    %v5172 = vpack.c.b16 %v4780, %v4772
    %v5173 = vpack.c.b16 %v4781, %v4773
    %v5174 = vpack.c.b16 %v4782, %v4774
    %v5175 = vpack.c.b16 %v4783, %v4775
    %v5176 = vpack.c.b16 %v4792, %v4784
    %v5177 = vpack.c.b16 %v4793, %v4785
    %v5178 = vpack.c.b16 %v4794, %v4786
    %v5179 = vpack.c.b16 %v4795, %v4787
    %v5180 = vpack.c.b16 %v4796, %v4788
    %v5181 = vpack.c.b16 %v4797, %v4789
    %v5182 = vpack.c.b16 %v4798, %v4790
    %v5183 = vpack.c.b16 %v4799, %v4791
    %v5184 = vpack.c.b16 %v4808, %v4800
    %v5185 = vpack.c.b16 %v4809, %v4801
    %v5186 = vpack.c.b16 %v4810, %v4802
    %v5187 = vpack.c.b16 %v4811, %v4803
    %v5188 = vpack.c.b16 %v4812, %v4804
    %v5189 = vpack.c.b16 %v4813, %v4805
    %v5190 = vpack.c.b16 %v4814, %v4806
    %v5191 = vpack.c.b16 %v4815, %v4807
    %v5192 = vpack.c.b16 %v4824, %v4816
    %v5193 = vpack.c.b16 %v4825, %v4817
    %v5194 = vpack.c.b16 %v4826, %v4818
    %v5195 = vpack.c.b16 %v4827, %v4819
    %v5196 = vpack.c.b16 %v4828, %v4820
    %v5197 = vpack.c.b16 %v4829, %v4821
    %v5198 = vpack.c.b16 %v4830, %v4822
    %v5199 = vpack.c.b16 %v4831, %v4823
    %v5200 = vpack.c.b16 %v4840, %v4832
    %v5201 = vpack.c.b16 %v4841, %v4833
    %v5202 = vpack.c.b16 %v4842, %v4834
    %v5203 = vpack.c.b16 %v4843, %v4835
    %v5204 = vpack.c.b16 %v4844, %v4836
    %v5205 = vpack.c.b16 %v4845, %v4837
    %v5206 = vpack.c.b16 %v4846, %v4838
    %v5207 = vpack.c.b16 %v4847, %v4839
    %v5208 = vpack.c.b16 %v4856, %v4848
    %v5209 = vpack.c.b16 %v4857, %v4849
    %v5210 = vpack.c.b16 %v4858, %v4850
    %v5211 = vpack.c.b16 %v4859, %v4851
    %v5212 = vpack.c.b16 %v4860, %v4852
    %v5213 = vpack.c.b16 %v4861, %v4853
    %v5214 = vpack.c.b16 %v4862, %v4854
    %v5215 = vpack.c.b16 %v4863, %v4855
    %v5216 = vpack.c.b16 %v4872, %v4864
    %v5217 = vpack.c.b16 %v4873, %v4865
    %v5218 = vpack.c.b16 %v4874, %v4866
    %v5219 = vpack.c.b16 %v4875, %v4867
    %v5220 = vpack.c.b16 %v4876, %v4868
    %v5221 = vpack.c.b16 %v4877, %v4869
    %v5222 = vpack.c.b16 %v4878, %v4870
    %v5223 = vpack.c.b16 %v4879, %v4871
    %v5224 = vpack.c.b16 %v4888, %v4880
    %v5225 = vpack.c.b16 %v4889, %v4881
    %v5226 = vpack.c.b16 %v4890, %v4882
    %v5227 = vpack.c.b16 %v4891, %v4883
    %v5228 = vpack.c.b16 %v4892, %v4884
    %v5229 = vpack.c.b16 %v4893, %v4885
    %v5230 = vpack.c.b16 %v4894, %v4886
    %v5231 = vpack.c.b16 %v4895, %v4887
    %v5232 = vpack.c.b16 %v4904, %v4896
    %v5233 = vpack.c.b16 %v4905, %v4897
    %v5234 = vpack.c.b16 %v4906, %v4898
    %v5235 = vpack.c.b16 %v4907, %v4899
    %v5236 = vpack.c.b16 %v4908, %v4900
    %v5237 = vpack.c.b16 %v4909, %v4901
    %v5238 = vpack.c.b16 %v4910, %v4902
    %v5239 = vpack.c.b16 %v4911, %v4903
    %v5240 = vpack.c.b16 %v4920, %v4912
    %v5241 = vpack.c.b16 %v4921, %v4913
    %v5242 = vpack.c.b16 %v4922, %v4914
    %v5243 = vpack.c.b16 %v4923, %v4915
    %v5244 = vpack.c.b16 %v4924, %v4916
    %v5245 = vpack.c.b16 %v4925, %v4917
    %v5246 = vpack.c.b16 %v4926, %v4918
    %v5247 = vpack.c.b16 %v4927, %v4919
    %v5248 = vpack.c.b16 %v4936, %v4928
    %v5249 = vpack.c.b16 %v4937, %v4929
    %v5250 = vpack.c.b16 %v4938, %v4930
    %v5251 = vpack.c.b16 %v4939, %v4931
    %v5252 = vpack.c.b16 %v4940, %v4932
    %v5253 = vpack.c.b16 %v4941, %v4933
    %v5254 = vpack.c.b16 %v4942, %v4934
    %v5255 = vpack.c.b16 %v4943, %v4935
    %v5256 = vpack.c.b16 %v4952, %v4944
    %v5257 = vpack.c.b16 %v4953, %v4945
    %v5258 = vpack.c.b16 %v4954, %v4946
    %v5259 = vpack.c.b16 %v4955, %v4947
    %v5260 = vpack.c.b16 %v4956, %v4948
    %v5261 = vpack.c.b16 %v4957, %v4949
    %v5262 = vpack.c.b16 %v4958, %v4950
    %v5263 = vpack.c.b16 %v4959, %v4951
    %v5264 = vpack.c.b16 %v4968, %v4960
    %v5265 = vpack.c.b16 %v4969, %v4961
    %v5266 = vpack.c.b16 %v4970, %v4962
    %v5267 = vpack.c.b16 %v4971, %v4963
    %v5268 = vpack.c.b16 %v4972, %v4964
    %v5269 = vpack.c.b16 %v4973, %v4965
    %v5270 = vpack.c.b16 %v4974, %v4966
    %v5271 = vpack.c.b16 %v4975, %v4967
    %v5272 = vpack.c.b16 %v4984, %v4976
    %v5273 = vpack.c.b16 %v4985, %v4977
    %v5274 = vpack.c.b16 %v4986, %v4978
    %v5275 = vpack.c.b16 %v4987, %v4979
    %v5276 = vpack.c.b16 %v4988, %v4980
    %v5277 = vpack.c.b16 %v4989, %v4981
    %v5278 = vpack.c.b16 %v4990, %v4982
    %v5279 = vpack.c.b16 %v4991, %v4983
    %v5280 = vpack.c.b16 %v5000, %v4992
    %v5281 = vpack.c.b16 %v5001, %v4993
    %v5282 = vpack.c.b16 %v5002, %v4994
    %v5283 = vpack.c.b16 %v5003, %v4995
    %v5284 = vpack.c.b16 %v5004, %v4996
    %v5285 = vpack.c.b16 %v5005, %v4997
    %v5286 = vpack.c.b16 %v5006, %v4998
    %v5287 = vpack.c.b16 %v5007, %v4999
    %v5288 = vpack.c.b16 %v5016, %v5008
    %v5289 = vpack.c.b16 %v5017, %v5009
    %v5290 = vpack.c.b16 %v5018, %v5010
    %v5291 = vpack.c.b16 %v5019, %v5011
    %v5292 = vpack.c.b16 %v5020, %v5012
    %v5293 = vpack.c.b16 %v5021, %v5013
    %v5294 = vpack.c.b16 %v5022, %v5014
    %v5295 = vpack.c.b16 %v5023, %v5015
    %v5296 = vpack.c.b16 %v5032, %v5024
    %v5297 = vpack.c.b16 %v5033, %v5025
    %v5298 = vpack.c.b16 %v5034, %v5026
    %v5299 = vpack.c.b16 %v5035, %v5027
    %v5300 = vpack.c.b16 %v5036, %v5028
    %v5301 = vpack.c.b16 %v5037, %v5029
    %v5302 = vpack.c.b16 %v5038, %v5030
    %v5303 = vpack.c.b16 %v5039, %v5031
    %v5304 = vpack.c.b16 %v5048, %v5040
    %v5305 = vpack.c.b16 %v5049, %v5041
    %v5306 = vpack.c.b16 %v5050, %v5042
    %v5307 = vpack.c.b16 %v5051, %v5043
    %v5308 = vpack.c.b16 %v5052, %v5044
    %v5309 = vpack.c.b16 %v5053, %v5045
    %v5310 = vpack.c.b16 %v5054, %v5046
    %v5311 = vpack.c.b16 %v5055, %v5047
    %v5696 = vunpack.c.l.b16 %v3904
    %v5697 = vunpack.c.l.b16 %v3905
    %v5698 = vunpack.c.l.b16 %v3906
    %v5699 = vunpack.c.l.b16 %v3907
    %v5700 = vunpack.c.l.b16 %v3908
    %v5701 = vunpack.c.l.b16 %v3909
    %v5702 = vunpack.c.l.b16 %v3910
    %v5703 = vunpack.c.l.b16 %v3911
    %v5704 = vunpack.c.l.b16 %v3912
    %v5705 = vunpack.c.l.b16 %v3913
    %v5706 = vunpack.c.l.b16 %v3914
    %v5707 = vunpack.c.l.b16 %v3915
    %v5708 = vunpack.c.l.b16 %v3916
    %v5709 = vunpack.c.l.b16 %v3917
    %v5710 = vunpack.c.l.b16 %v3918
    %v5711 = vunpack.c.l.b16 %v3919
    %v5712 = vunpack.c.l.b16 %v3920
    %v5713 = vunpack.c.l.b16 %v3921
    %v5714 = vunpack.c.l.b16 %v3922
    %v5715 = vunpack.c.l.b16 %v3923
    %v5716 = vunpack.c.l.b16 %v3924
    %v5717 = vunpack.c.l.b16 %v3925
    %v5718 = vunpack.c.l.b16 %v3926
    %v5719 = vunpack.c.l.b16 %v3927
    %v5720 = vunpack.c.l.b16 %v3928
    %v5721 = vunpack.c.l.b16 %v3929
    %v5722 = vunpack.c.l.b16 %v3930
    %v5723 = vunpack.c.l.b16 %v3931
    %v5724 = vunpack.c.l.b16 %v3932
    %v5725 = vunpack.c.l.b16 %v3933
    %v5726 = vunpack.c.l.b16 %v3934
    %v5727 = vunpack.c.l.b16 %v3935
    %v5728 = vunpack.c.l.b16 %v3936
    %v5729 = vunpack.c.l.b16 %v3937
    %v5730 = vunpack.c.l.b16 %v3938
    %v5731 = vunpack.c.l.b16 %v3939
    %v5732 = vunpack.c.l.b16 %v3940
    %v5733 = vunpack.c.l.b16 %v3941
    %v5734 = vunpack.c.l.b16 %v3942
    %v5735 = vunpack.c.l.b16 %v3943
    %v5736 = vunpack.c.l.b16 %v3944
    %v5737 = vunpack.c.l.b16 %v3945
    %v5738 = vunpack.c.l.b16 %v3946
    %v5739 = vunpack.c.l.b16 %v3947
    %v5740 = vunpack.c.l.b16 %v3948
    %v5741 = vunpack.c.l.b16 %v3949
    %v5742 = vunpack.c.l.b16 %v3950
    %v5743 = vunpack.c.l.b16 %v3951
    %v5744 = vunpack.c.l.b16 %v3952
    %v5745 = vunpack.c.l.b16 %v3953
    %v5746 = vunpack.c.l.b16 %v3954
    %v5747 = vunpack.c.l.b16 %v3955
    %v5748 = vunpack.c.l.b16 %v3956
    %v5749 = vunpack.c.l.b16 %v3957
    %v5750 = vunpack.c.l.b16 %v3958
    %v5751 = vunpack.c.l.b16 %v3959
    %v5752 = vunpack.c.l.b16 %v3960
    %v5753 = vunpack.c.l.b16 %v3961
    %v5754 = vunpack.c.l.b16 %v3962
    %v5755 = vunpack.c.l.b16 %v3963
    %v5756 = vunpack.c.l.b16 %v3964
    %v5757 = vunpack.c.l.b16 %v3965
    %v5758 = vunpack.c.l.b16 %v3966
    %v5759 = vunpack.c.l.b16 %v3967
    %v5760 = vunpack.c.l.b16 %v3968
    %v5761 = vunpack.c.l.b16 %v3969
    %v5762 = vunpack.c.l.b16 %v3970
    %v5763 = vunpack.c.l.b16 %v3971
    %v5764 = vunpack.c.l.b16 %v3972
    %v5765 = vunpack.c.l.b16 %v3973
    %v5766 = vunpack.c.l.b16 %v3974
    %v5767 = vunpack.c.l.b16 %v3975
    %v5768 = vunpack.c.l.b16 %v3976
    %v5769 = vunpack.c.l.b16 %v3977
    %v5770 = vunpack.c.l.b16 %v3978
    %v5771 = vunpack.c.l.b16 %v3979
    %v5772 = vunpack.c.l.b16 %v3980
    %v5773 = vunpack.c.l.b16 %v3981
    %v5774 = vunpack.c.l.b16 %v3982
    %v5775 = vunpack.c.l.b16 %v3983
    %v5776 = vunpack.c.l.b16 %v3984
    %v5777 = vunpack.c.l.b16 %v3985
    %v5778 = vunpack.c.l.b16 %v3986
    %v5779 = vunpack.c.l.b16 %v3987
    %v5780 = vunpack.c.l.b16 %v3988
    %v5781 = vunpack.c.l.b16 %v3989
    %v5782 = vunpack.c.l.b16 %v3990
    %v5783 = vunpack.c.l.b16 %v3991
    %v5784 = vunpack.c.l.b16 %v3992
    %v5785 = vunpack.c.l.b16 %v3993
    %v5786 = vunpack.c.l.b16 %v3994
    %v5787 = vunpack.c.l.b16 %v3995
    %v5788 = vunpack.c.l.b16 %v3996
    %v5789 = vunpack.c.l.b16 %v3997
    %v5790 = vunpack.c.l.b16 %v3998
    %v5791 = vunpack.c.l.b16 %v3999
    %v5792 = vunpack.c.l.b16 %v4000
    %v5793 = vunpack.c.l.b16 %v4001
    %v5794 = vunpack.c.l.b16 %v4002
    %v5795 = vunpack.c.l.b16 %v4003
    %v5796 = vunpack.c.l.b16 %v4004
    %v5797 = vunpack.c.l.b16 %v4005
    %v5798 = vunpack.c.l.b16 %v4006
    %v5799 = vunpack.c.l.b16 %v4007
    %v5800 = vunpack.c.l.b16 %v4008
    %v5801 = vunpack.c.l.b16 %v4009
    %v5802 = vunpack.c.l.b16 %v4010
    %v5803 = vunpack.c.l.b16 %v4011
    %v5804 = vunpack.c.l.b16 %v4012
    %v5805 = vunpack.c.l.b16 %v4013
    %v5806 = vunpack.c.l.b16 %v4014
    %v5807 = vunpack.c.l.b16 %v4015
    %v5808 = vunpack.c.l.b16 %v4016
    %v5809 = vunpack.c.l.b16 %v4017
    %v5810 = vunpack.c.l.b16 %v4018
    %v5811 = vunpack.c.l.b16 %v4019
    %v5812 = vunpack.c.l.b16 %v4020
    %v5813 = vunpack.c.l.b16 %v4021
    %v5814 = vunpack.c.l.b16 %v4022
    %v5815 = vunpack.c.l.b16 %v4023
    %v5816 = vunpack.c.l.b16 %v4024
    %v5817 = vunpack.c.l.b16 %v4025
    %v5818 = vunpack.c.l.b16 %v4026
    %v5819 = vunpack.c.l.b16 %v4027
    %v5820 = vunpack.c.l.b16 %v4028
    %v5821 = vunpack.c.l.b16 %v4029
    %v5822 = vunpack.c.l.b16 %v4030
    %v5823 = vunpack.c.l.b16 %v4031
    %v5824 = vpack.c.b16 %v5697, %v5696
    %v5825 = vpack.c.b16 %v5699, %v5698
    %v5826 = vpack.c.b16 %v5701, %v5700
    %v5827 = vpack.c.b16 %v5703, %v5702
    %v5828 = vpack.c.b16 %v5705, %v5704
    %v5829 = vpack.c.b16 %v5707, %v5706
    %v5830 = vpack.c.b16 %v5709, %v5708
    %v5831 = vpack.c.b16 %v5711, %v5710
    %v5832 = vpack.c.b16 %v5713, %v5712
    %v5833 = vpack.c.b16 %v5715, %v5714
    %v5834 = vpack.c.b16 %v5717, %v5716
    %v5835 = vpack.c.b16 %v5719, %v5718
    %v5836 = vpack.c.b16 %v5721, %v5720
    %v5837 = vpack.c.b16 %v5723, %v5722
    %v5838 = vpack.c.b16 %v5725, %v5724
    %v5839 = vpack.c.b16 %v5727, %v5726
    %v5840 = vpack.c.b16 %v5729, %v5728
    %v5841 = vpack.c.b16 %v5731, %v5730
    %v5842 = vpack.c.b16 %v5733, %v5732
    %v5843 = vpack.c.b16 %v5735, %v5734
    %v5844 = vpack.c.b16 %v5737, %v5736
    %v5845 = vpack.c.b16 %v5739, %v5738
    %v5846 = vpack.c.b16 %v5741, %v5740
    %v5847 = vpack.c.b16 %v5743, %v5742
    %v5848 = vpack.c.b16 %v5745, %v5744
    %v5849 = vpack.c.b16 %v5747, %v5746
    %v5850 = vpack.c.b16 %v5749, %v5748
    %v5851 = vpack.c.b16 %v5751, %v5750
    %v5852 = vpack.c.b16 %v5753, %v5752
    %v5853 = vpack.c.b16 %v5755, %v5754
    %v5854 = vpack.c.b16 %v5757, %v5756
    %v5855 = vpack.c.b16 %v5759, %v5758
    %v5856 = vpack.c.b16 %v5761, %v5760
    %v5857 = vpack.c.b16 %v5763, %v5762
    %v5858 = vpack.c.b16 %v5765, %v5764
    %v5859 = vpack.c.b16 %v5767, %v5766
    %v5860 = vpack.c.b16 %v5769, %v5768
    %v5861 = vpack.c.b16 %v5771, %v5770
    %v5862 = vpack.c.b16 %v5773, %v5772
    %v5863 = vpack.c.b16 %v5775, %v5774
    %v5864 = vpack.c.b16 %v5777, %v5776
    %v5865 = vpack.c.b16 %v5779, %v5778
    %v5866 = vpack.c.b16 %v5781, %v5780
    %v5867 = vpack.c.b16 %v5783, %v5782
    %v5868 = vpack.c.b16 %v5785, %v5784
    %v5869 = vpack.c.b16 %v5787, %v5786
    %v5870 = vpack.c.b16 %v5789, %v5788
    %v5871 = vpack.c.b16 %v5791, %v5790
    %v5872 = vpack.c.b16 %v5793, %v5792
    %v5873 = vpack.c.b16 %v5795, %v5794
    %v5874 = vpack.c.b16 %v5797, %v5796
    %v5875 = vpack.c.b16 %v5799, %v5798
    %v5876 = vpack.c.b16 %v5801, %v5800
    %v5877 = vpack.c.b16 %v5803, %v5802
    %v5878 = vpack.c.b16 %v5805, %v5804
    %v5879 = vpack.c.b16 %v5807, %v5806
    %v5880 = vpack.c.b16 %v5809, %v5808
    %v5881 = vpack.c.b16 %v5811, %v5810
    %v5882 = vpack.c.b16 %v5813, %v5812
    %v5883 = vpack.c.b16 %v5815, %v5814
    %v5884 = vpack.c.b16 %v5817, %v5816
    %v5885 = vpack.c.b16 %v5819, %v5818
    %v5886 = vpack.c.b16 %v5821, %v5820
    %v5887 = vpack.c.b16 %v5823, %v5822
    %5952 = vmatprep.subr.bf16.mxu0 0
    %5953 = vmatpush1.bf16.msra.mxu0 %v5831
    %5954 = vmatprep.subr.bf16.mxu0 0
    %5955 = vmatpush1.bf16.msra.mxu0 %v5830
    %5956 = vmatprep.subr.bf16.mxu0 0
    %5957 = vmatpush1.bf16.msra.mxu0 %v5829
    %5958 = vmatprep.subr.bf16.mxu0 0
    %5959 = vmatpush1.bf16.msra.mxu0 %v5828
    %5960 = vmatprep.subr.bf16.mxu0 0
    %5961 = vmatpush1.bf16.msra.mxu0 %v5827
    %5962 = vmatprep.subr.bf16.mxu0 0
    %5963 = vmatpush1.bf16.msra.mxu0 %v5826
    %5964 = vmatprep.subr.bf16.mxu0 0
    %5965 = vmatpush1.bf16.msra.mxu0 %v5825
    %5966 = vmatprep.subr.bf16.mxu0 0
    %5967 = vmatpush1.bf16.msra.mxu0 %v5824
    %5968 = vmatprep.subr.bf16.mxu0 0
    %5969 = vmatpush2.bf16.msra.mxu0 %v5839
    %5970 = vmatprep.subr.bf16.mxu0 0
    %5971 = vmatpush2.bf16.msra.mxu0 %v5838
    %5972 = vmatprep.subr.bf16.mxu0 0
    %5973 = vmatpush2.bf16.msra.mxu0 %v5837
    %5974 = vmatprep.subr.bf16.mxu0 0
    %5975 = vmatpush2.bf16.msra.mxu0 %v5836
    %5976 = vmatprep.subr.bf16.mxu0 0
    %5977 = vmatpush2.bf16.msra.mxu0 %v5835
    %5978 = vmatprep.subr.bf16.mxu0 0
    %5979 = vmatpush2.bf16.msra.mxu0 %v5834
    %5980 = vmatprep.subr.bf16.mxu0 0
    %5981 = vmatpush2.bf16.msra.mxu0 %v5833
    %5982 = vmatprep.subr.bf16.mxu0 0
    %5983 = vmatpush2.bf16.msra.mxu0 %v5832
    %5984 = vmatprep.mubr.bf16.mxu0 %v5057
    %5985 = vmatmul.mubr.bf16.gmra.mxu0 %v5056
    %v5986 = vpop.f32.mrf.mxu0
    %v5987 = vadd.f32 0.0, %v5986
    %v5988 = vpop.f32.mrf.mxu0
    %v5989 = vpop.f32.mrf.mxu0
    %v5990 = vadd.f32 0.0, %v5989
    %v5991 = vpop.f32.mrf.mxu0
    %5992 = vmatprep.mubr.bf16.mxu0 %v5065
    %5993 = vmatmul.mubr.bf16.gmra.mxu0 %v5064
    %v5994 = vpop.f32.mrf.mxu0
    %v5995 = vadd.f32 0.0, %v5994
    %v5996 = vpop.f32.mrf.mxu0
    %v5997 = vpop.f32.mrf.mxu0
    %v5998 = vadd.f32 0.0, %v5997
    %v5999 = vpop.f32.mrf.mxu0
    %6000 = vmatprep.mubr.bf16.mxu0 %v5073
    %6001 = vmatmul.mubr.bf16.gmra.mxu0 %v5072
    %v6002 = vpop.f32.mrf.mxu0
    %v6003 = vadd.f32 0.0, %v6002
    %v6004 = vpop.f32.mrf.mxu0
    %v6005 = vpop.f32.mrf.mxu0
    %v6006 = vadd.f32 0.0, %v6005
    %v6007 = vpop.f32.mrf.mxu0
    %6008 = vmatprep.mubr.bf16.mxu0 %v5081
    %6009 = vmatmul.mubr.bf16.gmra.mxu0 %v5080
    %v6010 = vpop.f32.mrf.mxu0
    %v6011 = vadd.f32 0.0, %v6010
    %v6012 = vpop.f32.mrf.mxu0
    %v6013 = vpop.f32.mrf.mxu0
    %v6014 = vadd.f32 0.0, %v6013
    %v6015 = vpop.f32.mrf.mxu0
    %6016 = vmatprep.mubr.bf16.mxu0 %v5089
    %6017 = vmatmul.mubr.bf16.gmra.mxu0 %v5088
    %v6018 = vpop.f32.mrf.mxu0
    %v6019 = vadd.f32 0.0, %v6018
    %v6020 = vpop.f32.mrf.mxu0
    %v6021 = vpop.f32.mrf.mxu0
    %v6022 = vadd.f32 0.0, %v6021
    %v6023 = vpop.f32.mrf.mxu0
    %6024 = vmatprep.mubr.bf16.mxu0 %v5097
    %6025 = vmatmul.mubr.bf16.gmra.mxu0 %v5096
    %v6026 = vpop.f32.mrf.mxu0
    %v6027 = vadd.f32 0.0, %v6026
    %v6028 = vpop.f32.mrf.mxu0
    %v6029 = vpop.f32.mrf.mxu0
    %v6030 = vadd.f32 0.0, %v6029
    %v6031 = vpop.f32.mrf.mxu0
    %6032 = vmatprep.mubr.bf16.mxu0 %v5105
    %6033 = vmatmul.mubr.bf16.gmra.mxu0 %v5104
    %v6034 = vpop.f32.mrf.mxu0
    %v6035 = vadd.f32 0.0, %v6034
    %v6036 = vpop.f32.mrf.mxu0
    %v6037 = vpop.f32.mrf.mxu0
    %v6038 = vadd.f32 0.0, %v6037
    %v6039 = vpop.f32.mrf.mxu0
    %6040 = vmatprep.mubr.bf16.mxu0 %v5113
    %6041 = vmatmul.mubr.bf16.gmra.mxu0 %v5112
    %v6042 = vpop.f32.mrf.mxu0
    %v6043 = vadd.f32 0.0, %v6042
    %v6044 = vpop.f32.mrf.mxu0
    %v6045 = vpop.f32.mrf.mxu0
    %v6046 = vadd.f32 0.0, %v6045
    %v6047 = vpop.f32.mrf.mxu0
    %6048 = vmatprep.mubr.bf16.mxu0 %v5121
    %6049 = vmatmul.mubr.bf16.gmra.mxu0 %v5120
    %v6050 = vpop.f32.mrf.mxu0
    %v6051 = vadd.f32 0.0, %v6050
    %v6052 = vpop.f32.mrf.mxu0
    %v6053 = vpop.f32.mrf.mxu0
    %v6054 = vadd.f32 0.0, %v6053
    %v6055 = vpop.f32.mrf.mxu0
    %6056 = vmatprep.mubr.bf16.mxu0 %v5129
    %6057 = vmatmul.mubr.bf16.gmra.mxu0 %v5128
    %v6058 = vpop.f32.mrf.mxu0
    %v6059 = vadd.f32 0.0, %v6058
    %v6060 = vpop.f32.mrf.mxu0
    %v6061 = vpop.f32.mrf.mxu0
    %v6062 = vadd.f32 0.0, %v6061
    %v6063 = vpop.f32.mrf.mxu0
    %6064 = vmatprep.mubr.bf16.mxu0 %v5137
    %6065 = vmatmul.mubr.bf16.gmra.mxu0 %v5136
    %v6066 = vpop.f32.mrf.mxu0
    %v6067 = vadd.f32 0.0, %v6066
    %v6068 = vpop.f32.mrf.mxu0
    %v6069 = vpop.f32.mrf.mxu0
    %v6070 = vadd.f32 0.0, %v6069
    %v6071 = vpop.f32.mrf.mxu0
    %6072 = vmatprep.mubr.bf16.mxu0 %v5145
    %6073 = vmatmul.mubr.bf16.gmra.mxu0 %v5144
    %v6074 = vpop.f32.mrf.mxu0
    %v6075 = vadd.f32 0.0, %v6074
    %v6076 = vpop.f32.mrf.mxu0
    %v6077 = vpop.f32.mrf.mxu0
    %v6078 = vadd.f32 0.0, %v6077
    %v6079 = vpop.f32.mrf.mxu0
    %6080 = vmatprep.mubr.bf16.mxu0 %v5153
    %6081 = vmatmul.mubr.bf16.gmra.mxu0 %v5152
    %v6082 = vpop.f32.mrf.mxu0
    %v6083 = vadd.f32 0.0, %v6082
    %v6084 = vpop.f32.mrf.mxu0
    %v6085 = vpop.f32.mrf.mxu0
    %v6086 = vadd.f32 0.0, %v6085
    %v6087 = vpop.f32.mrf.mxu0
    %6088 = vmatprep.mubr.bf16.mxu0 %v5161
    %6089 = vmatmul.mubr.bf16.gmra.mxu0 %v5160
    %v6090 = vpop.f32.mrf.mxu0
    %v6091 = vadd.f32 0.0, %v6090
    %v6092 = vpop.f32.mrf.mxu0
    %v6093 = vpop.f32.mrf.mxu0
    %v6094 = vadd.f32 0.0, %v6093
    %v6095 = vpop.f32.mrf.mxu0
    %6096 = vmatprep.mubr.bf16.mxu0 %v5169
    %6097 = vmatmul.mubr.bf16.gmra.mxu0 %v5168
    %v6098 = vpop.f32.mrf.mxu0
    %v6099 = vadd.f32 0.0, %v6098
    %v6100 = vpop.f32.mrf.mxu0
    %v6101 = vpop.f32.mrf.mxu0
    %v6102 = vadd.f32 0.0, %v6101
    %v6103 = vpop.f32.mrf.mxu0
    %6104 = vmatprep.mubr.bf16.mxu0 %v5177
    %6105 = vmatmul.mubr.bf16.gmra.mxu0 %v5176
    %v6106 = vpop.f32.mrf.mxu0
    %v6107 = vadd.f32 0.0, %v6106
    %v6108 = vpop.f32.mrf.mxu0
    %v6109 = vpop.f32.mrf.mxu0
    %v6110 = vadd.f32 0.0, %v6109
    %v6111 = vpop.f32.mrf.mxu0
    %6112 = vmatprep.mubr.bf16.mxu0 %v5185
    %6113 = vmatmul.mubr.bf16.gmra.mxu0 %v5184
    %v6114 = vpop.f32.mrf.mxu0
    %v6115 = vadd.f32 0.0, %v6114
    %v6116 = vpop.f32.mrf.mxu0
    %v6117 = vpop.f32.mrf.mxu0
    %v6118 = vadd.f32 0.0, %v6117
    %v6119 = vpop.f32.mrf.mxu0
    %6120 = vmatprep.mubr.bf16.mxu0 %v5193
    %6121 = vmatmul.mubr.bf16.gmra.mxu0 %v5192
    %v6122 = vpop.f32.mrf.mxu0
    %v6123 = vadd.f32 0.0, %v6122
    %v6124 = vpop.f32.mrf.mxu0
    %v6125 = vpop.f32.mrf.mxu0
    %v6126 = vadd.f32 0.0, %v6125
    %v6127 = vpop.f32.mrf.mxu0
    %6128 = vmatprep.mubr.bf16.mxu0 %v5201
    %6129 = vmatmul.mubr.bf16.gmra.mxu0 %v5200
    %v6130 = vpop.f32.mrf.mxu0
    %v6131 = vadd.f32 0.0, %v6130
    %v6132 = vpop.f32.mrf.mxu0
    %v6133 = vpop.f32.mrf.mxu0
    %v6134 = vadd.f32 0.0, %v6133
    %v6135 = vpop.f32.mrf.mxu0
    %6136 = vmatprep.mubr.bf16.mxu0 %v5209
    %6137 = vmatmul.mubr.bf16.gmra.mxu0 %v5208
    %v6138 = vpop.f32.mrf.mxu0
    %v6139 = vadd.f32 0.0, %v6138
    %v6140 = vpop.f32.mrf.mxu0
    %v6141 = vpop.f32.mrf.mxu0
    %v6142 = vadd.f32 0.0, %v6141
    %v6143 = vpop.f32.mrf.mxu0
    %6144 = vmatprep.mubr.bf16.mxu0 %v5217
    %6145 = vmatmul.mubr.bf16.gmra.mxu0 %v5216
    %v6146 = vpop.f32.mrf.mxu0
    %v6147 = vadd.f32 0.0, %v6146
    %v6148 = vpop.f32.mrf.mxu0
    %v6149 = vpop.f32.mrf.mxu0
    %v6150 = vadd.f32 0.0, %v6149
    %v6151 = vpop.f32.mrf.mxu0
    %6152 = vmatprep.mubr.bf16.mxu0 %v5225
    %6153 = vmatmul.mubr.bf16.gmra.mxu0 %v5224
    %v6154 = vpop.f32.mrf.mxu0
    %v6155 = vadd.f32 0.0, %v6154
    %v6156 = vpop.f32.mrf.mxu0
    %v6157 = vpop.f32.mrf.mxu0
    %v6158 = vadd.f32 0.0, %v6157
    %v6159 = vpop.f32.mrf.mxu0
    %6160 = vmatprep.mubr.bf16.mxu0 %v5233
    %6161 = vmatmul.mubr.bf16.gmra.mxu0 %v5232
    %v6162 = vpop.f32.mrf.mxu0
    %v6163 = vadd.f32 0.0, %v6162
    %v6164 = vpop.f32.mrf.mxu0
    %v6165 = vpop.f32.mrf.mxu0
    %v6166 = vadd.f32 0.0, %v6165
    %v6167 = vpop.f32.mrf.mxu0
    %6168 = vmatprep.mubr.bf16.mxu0 %v5241
    %6169 = vmatmul.mubr.bf16.gmra.mxu0 %v5240
    %v6170 = vpop.f32.mrf.mxu0
    %v6171 = vadd.f32 0.0, %v6170
    %v6172 = vpop.f32.mrf.mxu0
    %v6173 = vpop.f32.mrf.mxu0
    %v6174 = vadd.f32 0.0, %v6173
    %v6175 = vpop.f32.mrf.mxu0
    %6176 = vmatprep.mubr.bf16.mxu0 %v5249
    %6177 = vmatmul.mubr.bf16.gmra.mxu0 %v5248
    %v6178 = vpop.f32.mrf.mxu0
    %v6179 = vadd.f32 0.0, %v6178
    %v6180 = vpop.f32.mrf.mxu0
    %v6181 = vpop.f32.mrf.mxu0
    %v6182 = vadd.f32 0.0, %v6181
    %v6183 = vpop.f32.mrf.mxu0
    %6184 = vmatprep.mubr.bf16.mxu0 %v5257
    %6185 = vmatmul.mubr.bf16.gmra.mxu0 %v5256
    %v6186 = vpop.f32.mrf.mxu0
    %v6187 = vadd.f32 0.0, %v6186
    %v6188 = vpop.f32.mrf.mxu0
    %v6189 = vpop.f32.mrf.mxu0
    %v6190 = vadd.f32 0.0, %v6189
    %v6191 = vpop.f32.mrf.mxu0
    %6192 = vmatprep.mubr.bf16.mxu0 %v5265
    %6193 = vmatmul.mubr.bf16.gmra.mxu0 %v5264
    %v6194 = vpop.f32.mrf.mxu0
    %v6195 = vadd.f32 0.0, %v6194
    %v6196 = vpop.f32.mrf.mxu0
    %v6197 = vpop.f32.mrf.mxu0
    %v6198 = vadd.f32 0.0, %v6197
    %v6199 = vpop.f32.mrf.mxu0
    %6200 = vmatprep.mubr.bf16.mxu0 %v5273
    %6201 = vmatmul.mubr.bf16.gmra.mxu0 %v5272
    %v6202 = vpop.f32.mrf.mxu0
    %v6203 = vadd.f32 0.0, %v6202
    %v6204 = vpop.f32.mrf.mxu0
    %v6205 = vpop.f32.mrf.mxu0
    %v6206 = vadd.f32 0.0, %v6205
    %v6207 = vpop.f32.mrf.mxu0
    %6208 = vmatprep.mubr.bf16.mxu0 %v5281
    %6209 = vmatmul.mubr.bf16.gmra.mxu0 %v5280
    %v6210 = vpop.f32.mrf.mxu0
    %v6211 = vadd.f32 0.0, %v6210
    %v6212 = vpop.f32.mrf.mxu0
    %v6213 = vpop.f32.mrf.mxu0
    %v6214 = vadd.f32 0.0, %v6213
    %v6215 = vpop.f32.mrf.mxu0
    %6216 = vmatprep.mubr.bf16.mxu0 %v5289
    %6217 = vmatmul.mubr.bf16.gmra.mxu0 %v5288
    %v6218 = vpop.f32.mrf.mxu0
    %v6219 = vadd.f32 0.0, %v6218
    %v6220 = vpop.f32.mrf.mxu0
    %v6221 = vpop.f32.mrf.mxu0
    %v6222 = vadd.f32 0.0, %v6221
    %v6223 = vpop.f32.mrf.mxu0
    %6224 = vmatprep.mubr.bf16.mxu0 %v5297
    %6225 = vmatmul.mubr.bf16.gmra.mxu0 %v5296
    %v6226 = vpop.f32.mrf.mxu0
    %v6227 = vadd.f32 0.0, %v6226
    %v6228 = vpop.f32.mrf.mxu0
    %v6229 = vpop.f32.mrf.mxu0
    %v6230 = vadd.f32 0.0, %v6229
    %v6231 = vpop.f32.mrf.mxu0
    %6232 = vmatprep.mubr.bf16.mxu0 %v5305
    %6233 = vmatmul.mubr.bf16.gmra.mxu0 %v5304
    %v6234 = vpop.f32.mrf.mxu0
    %v6235 = vadd.f32 0.0, %v6234
    %v6236 = vpop.f32.mrf.mxu0
    %v6237 = vpop.f32.mrf.mxu0
    %v6238 = vadd.f32 0.0, %v6237
    %v6239 = vpop.f32.mrf.mxu0
    %6240 = vdwg.mxu0
    %6241 = vmatprep.subr.bf16.mxu0 0
    %6242 = vmatpush1.bf16.msra.mxu0 %v5847
    %6243 = vmatprep.subr.bf16.mxu0 0
    %6244 = vmatpush1.bf16.msra.mxu0 %v5846
    %6245 = vmatprep.subr.bf16.mxu0 0
    %6246 = vmatpush1.bf16.msra.mxu0 %v5845
    %6247 = vmatprep.subr.bf16.mxu0 0
    %6248 = vmatpush1.bf16.msra.mxu0 %v5844
    %6249 = vmatprep.subr.bf16.mxu0 0
    %6250 = vmatpush1.bf16.msra.mxu0 %v5843
    %6251 = vmatprep.subr.bf16.mxu0 0
    %6252 = vmatpush1.bf16.msra.mxu0 %v5842
    %6253 = vmatprep.subr.bf16.mxu0 0
    %6254 = vmatpush1.bf16.msra.mxu0 %v5841
    %6255 = vmatprep.subr.bf16.mxu0 0
    %6256 = vmatpush1.bf16.msra.mxu0 %v5840
    %6257 = vmatprep.subr.bf16.mxu0 0
    %6258 = vmatpush2.bf16.msra.mxu0 %v5855
    %6259 = vmatprep.subr.bf16.mxu0 0
    %6260 = vmatpush2.bf16.msra.mxu0 %v5854
    %6261 = vmatprep.subr.bf16.mxu0 0
    %6262 = vmatpush2.bf16.msra.mxu0 %v5853
    %6263 = vmatprep.subr.bf16.mxu0 0
    %6264 = vmatpush2.bf16.msra.mxu0 %v5852
    %6265 = vmatprep.subr.bf16.mxu0 0
    %6266 = vmatpush2.bf16.msra.mxu0 %v5851
    %6267 = vmatprep.subr.bf16.mxu0 0
    %6268 = vmatpush2.bf16.msra.mxu0 %v5850
    %6269 = vmatprep.subr.bf16.mxu0 0
    %6270 = vmatpush2.bf16.msra.mxu0 %v5849
    %6271 = vmatprep.subr.bf16.mxu0 0
    %6272 = vmatpush2.bf16.msra.mxu0 %v5848
    %6273 = vmatprep.mubr.bf16.mxu0 %v5059
    %6274 = vmatmul.mubr.bf16.gmra.mxu0 %v5058
    %v6275 = vpop.f32.mrf.mxu0
    %v6276 = vadd.f32 %v5987, %v6275
    %v6277 = vpop.f32.mrf.mxu0
    %v6278 = vpop.f32.mrf.mxu0
    %v6279 = vadd.f32 %v5990, %v6278
    %v6280 = vpop.f32.mrf.mxu0
    %6281 = vmatprep.mubr.bf16.mxu0 %v5067
    %6282 = vmatmul.mubr.bf16.gmra.mxu0 %v5066
    %v6283 = vpop.f32.mrf.mxu0
    %v6284 = vadd.f32 %v5995, %v6283
    %v6285 = vpop.f32.mrf.mxu0
    %v6286 = vpop.f32.mrf.mxu0
    %v6287 = vadd.f32 %v5998, %v6286
    %v6288 = vpop.f32.mrf.mxu0
    %6289 = vmatprep.mubr.bf16.mxu0 %v5075
    %6290 = vmatmul.mubr.bf16.gmra.mxu0 %v5074
    %v6291 = vpop.f32.mrf.mxu0
    %v6292 = vadd.f32 %v6003, %v6291
    %v6293 = vpop.f32.mrf.mxu0
    %v6294 = vpop.f32.mrf.mxu0
    %v6295 = vadd.f32 %v6006, %v6294
    %v6296 = vpop.f32.mrf.mxu0
    %6297 = vmatprep.mubr.bf16.mxu0 %v5083
    %6298 = vmatmul.mubr.bf16.gmra.mxu0 %v5082
    %v6299 = vpop.f32.mrf.mxu0
    %v6300 = vadd.f32 %v6011, %v6299
    %v6301 = vpop.f32.mrf.mxu0
    %v6302 = vpop.f32.mrf.mxu0
    %v6303 = vadd.f32 %v6014, %v6302
    %v6304 = vpop.f32.mrf.mxu0
    %6305 = vmatprep.mubr.bf16.mxu0 %v5091
    %6306 = vmatmul.mubr.bf16.gmra.mxu0 %v5090
    %v6307 = vpop.f32.mrf.mxu0
    %v6308 = vadd.f32 %v6019, %v6307
    %v6309 = vpop.f32.mrf.mxu0
    %v6310 = vpop.f32.mrf.mxu0
    %v6311 = vadd.f32 %v6022, %v6310
    %v6312 = vpop.f32.mrf.mxu0
    %6313 = vmatprep.mubr.bf16.mxu0 %v5099
    %6314 = vmatmul.mubr.bf16.gmra.mxu0 %v5098
    %v6315 = vpop.f32.mrf.mxu0
    %v6316 = vadd.f32 %v6027, %v6315
    %v6317 = vpop.f32.mrf.mxu0
    %v6318 = vpop.f32.mrf.mxu0
    %v6319 = vadd.f32 %v6030, %v6318
    %v6320 = vpop.f32.mrf.mxu0
    %6321 = vmatprep.mubr.bf16.mxu0 %v5107
    %6322 = vmatmul.mubr.bf16.gmra.mxu0 %v5106
    %v6323 = vpop.f32.mrf.mxu0
    %v6324 = vadd.f32 %v6035, %v6323
    %v6325 = vpop.f32.mrf.mxu0
    %v6326 = vpop.f32.mrf.mxu0
    %v6327 = vadd.f32 %v6038, %v6326
    %v6328 = vpop.f32.mrf.mxu0
    %6329 = vmatprep.mubr.bf16.mxu0 %v5115
    %6330 = vmatmul.mubr.bf16.gmra.mxu0 %v5114
    %v6331 = vpop.f32.mrf.mxu0
    %v6332 = vadd.f32 %v6043, %v6331
    %v6333 = vpop.f32.mrf.mxu0
    %v6334 = vpop.f32.mrf.mxu0
    %v6335 = vadd.f32 %v6046, %v6334
    %v6336 = vpop.f32.mrf.mxu0
    %6337 = vmatprep.mubr.bf16.mxu0 %v5123
    %6338 = vmatmul.mubr.bf16.gmra.mxu0 %v5122
    %v6339 = vpop.f32.mrf.mxu0
    %v6340 = vadd.f32 %v6051, %v6339
    %v6341 = vpop.f32.mrf.mxu0
    %v6342 = vpop.f32.mrf.mxu0
    %v6343 = vadd.f32 %v6054, %v6342
    %v6344 = vpop.f32.mrf.mxu0
    %6345 = vmatprep.mubr.bf16.mxu0 %v5131
    %6346 = vmatmul.mubr.bf16.gmra.mxu0 %v5130
    %v6347 = vpop.f32.mrf.mxu0
    %v6348 = vadd.f32 %v6059, %v6347
    %v6349 = vpop.f32.mrf.mxu0
    %v6350 = vpop.f32.mrf.mxu0
    %v6351 = vadd.f32 %v6062, %v6350
    %v6352 = vpop.f32.mrf.mxu0
    %6353 = vmatprep.mubr.bf16.mxu0 %v5139
    %6354 = vmatmul.mubr.bf16.gmra.mxu0 %v5138
    %v6355 = vpop.f32.mrf.mxu0
    %v6356 = vadd.f32 %v6067, %v6355
    %v6357 = vpop.f32.mrf.mxu0
    %v6358 = vpop.f32.mrf.mxu0
    %v6359 = vadd.f32 %v6070, %v6358
    %v6360 = vpop.f32.mrf.mxu0
    %6361 = vmatprep.mubr.bf16.mxu0 %v5147
    %6362 = vmatmul.mubr.bf16.gmra.mxu0 %v5146
    %v6363 = vpop.f32.mrf.mxu0
    %v6364 = vadd.f32 %v6075, %v6363
    %v6365 = vpop.f32.mrf.mxu0
    %v6366 = vpop.f32.mrf.mxu0
    %v6367 = vadd.f32 %v6078, %v6366
    %v6368 = vpop.f32.mrf.mxu0
    %6369 = vmatprep.mubr.bf16.mxu0 %v5155
    %6370 = vmatmul.mubr.bf16.gmra.mxu0 %v5154
    %v6371 = vpop.f32.mrf.mxu0
    %v6372 = vadd.f32 %v6083, %v6371
    %v6373 = vpop.f32.mrf.mxu0
    %v6374 = vpop.f32.mrf.mxu0
    %v6375 = vadd.f32 %v6086, %v6374
    %v6376 = vpop.f32.mrf.mxu0
    %6377 = vmatprep.mubr.bf16.mxu0 %v5163
    %6378 = vmatmul.mubr.bf16.gmra.mxu0 %v5162
    %v6379 = vpop.f32.mrf.mxu0
    %v6380 = vadd.f32 %v6091, %v6379
    %v6381 = vpop.f32.mrf.mxu0
    %v6382 = vpop.f32.mrf.mxu0
    %v6383 = vadd.f32 %v6094, %v6382
    %v6384 = vpop.f32.mrf.mxu0
    %6385 = vmatprep.mubr.bf16.mxu0 %v5171
    %6386 = vmatmul.mubr.bf16.gmra.mxu0 %v5170
    %v6387 = vpop.f32.mrf.mxu0
    %v6388 = vadd.f32 %v6099, %v6387
    %v6389 = vpop.f32.mrf.mxu0
    %v6390 = vpop.f32.mrf.mxu0
    %v6391 = vadd.f32 %v6102, %v6390
    %v6392 = vpop.f32.mrf.mxu0
    %6393 = vmatprep.mubr.bf16.mxu0 %v5179
    %6394 = vmatmul.mubr.bf16.gmra.mxu0 %v5178
    %v6395 = vpop.f32.mrf.mxu0
    %v6396 = vadd.f32 %v6107, %v6395
    %v6397 = vpop.f32.mrf.mxu0
    %v6398 = vpop.f32.mrf.mxu0
    %v6399 = vadd.f32 %v6110, %v6398
    %v6400 = vpop.f32.mrf.mxu0
    %6401 = vmatprep.mubr.bf16.mxu0 %v5187
    %6402 = vmatmul.mubr.bf16.gmra.mxu0 %v5186
    %v6403 = vpop.f32.mrf.mxu0
    %v6404 = vadd.f32 %v6115, %v6403
    %v6405 = vpop.f32.mrf.mxu0
    %v6406 = vpop.f32.mrf.mxu0
    %v6407 = vadd.f32 %v6118, %v6406
    %v6408 = vpop.f32.mrf.mxu0
    %6409 = vmatprep.mubr.bf16.mxu0 %v5195
    %6410 = vmatmul.mubr.bf16.gmra.mxu0 %v5194
    %v6411 = vpop.f32.mrf.mxu0
    %v6412 = vadd.f32 %v6123, %v6411
    %v6413 = vpop.f32.mrf.mxu0
    %v6414 = vpop.f32.mrf.mxu0
    %v6415 = vadd.f32 %v6126, %v6414
    %v6416 = vpop.f32.mrf.mxu0
    %6417 = vmatprep.mubr.bf16.mxu0 %v5203
    %6418 = vmatmul.mubr.bf16.gmra.mxu0 %v5202
    %v6419 = vpop.f32.mrf.mxu0
    %v6420 = vadd.f32 %v6131, %v6419
    %v6421 = vpop.f32.mrf.mxu0
    %v6422 = vpop.f32.mrf.mxu0
    %v6423 = vadd.f32 %v6134, %v6422
    %v6424 = vpop.f32.mrf.mxu0
    %6425 = vmatprep.mubr.bf16.mxu0 %v5211
    %6426 = vmatmul.mubr.bf16.gmra.mxu0 %v5210
    %v6427 = vpop.f32.mrf.mxu0
    %v6428 = vadd.f32 %v6139, %v6427
    %v6429 = vpop.f32.mrf.mxu0
    %v6430 = vpop.f32.mrf.mxu0
    %v6431 = vadd.f32 %v6142, %v6430
    %v6432 = vpop.f32.mrf.mxu0
    %6433 = vmatprep.mubr.bf16.mxu0 %v5219
    %6434 = vmatmul.mubr.bf16.gmra.mxu0 %v5218
    %v6435 = vpop.f32.mrf.mxu0
    %v6436 = vadd.f32 %v6147, %v6435
    %v6437 = vpop.f32.mrf.mxu0
    %v6438 = vpop.f32.mrf.mxu0
    %v6439 = vadd.f32 %v6150, %v6438
    %v6440 = vpop.f32.mrf.mxu0
    %6441 = vmatprep.mubr.bf16.mxu0 %v5227
    %6442 = vmatmul.mubr.bf16.gmra.mxu0 %v5226
    %v6443 = vpop.f32.mrf.mxu0
    %v6444 = vadd.f32 %v6155, %v6443
    %v6445 = vpop.f32.mrf.mxu0
    %v6446 = vpop.f32.mrf.mxu0
    %v6447 = vadd.f32 %v6158, %v6446
    %v6448 = vpop.f32.mrf.mxu0
    %6449 = vmatprep.mubr.bf16.mxu0 %v5235
    %6450 = vmatmul.mubr.bf16.gmra.mxu0 %v5234
    %v6451 = vpop.f32.mrf.mxu0
    %v6452 = vadd.f32 %v6163, %v6451
    %v6453 = vpop.f32.mrf.mxu0
    %v6454 = vpop.f32.mrf.mxu0
    %v6455 = vadd.f32 %v6166, %v6454
    %v6456 = vpop.f32.mrf.mxu0
    %6457 = vmatprep.mubr.bf16.mxu0 %v5243
    %6458 = vmatmul.mubr.bf16.gmra.mxu0 %v5242
    %v6459 = vpop.f32.mrf.mxu0
    %v6460 = vadd.f32 %v6171, %v6459
    %v6461 = vpop.f32.mrf.mxu0
    %v6462 = vpop.f32.mrf.mxu0
    %v6463 = vadd.f32 %v6174, %v6462
    %v6464 = vpop.f32.mrf.mxu0
    %6465 = vmatprep.mubr.bf16.mxu0 %v5251
    %6466 = vmatmul.mubr.bf16.gmra.mxu0 %v5250
    %v6467 = vpop.f32.mrf.mxu0
    %v6468 = vadd.f32 %v6179, %v6467
    %v6469 = vpop.f32.mrf.mxu0
    %v6470 = vpop.f32.mrf.mxu0
    %v6471 = vadd.f32 %v6182, %v6470
    %v6472 = vpop.f32.mrf.mxu0
    %6473 = vmatprep.mubr.bf16.mxu0 %v5259
    %6474 = vmatmul.mubr.bf16.gmra.mxu0 %v5258
    %v6475 = vpop.f32.mrf.mxu0
    %v6476 = vadd.f32 %v6187, %v6475
    %v6477 = vpop.f32.mrf.mxu0
    %v6478 = vpop.f32.mrf.mxu0
    %v6479 = vadd.f32 %v6190, %v6478
    %v6480 = vpop.f32.mrf.mxu0
    %6481 = vmatprep.mubr.bf16.mxu0 %v5267
    %6482 = vmatmul.mubr.bf16.gmra.mxu0 %v5266
    %v6483 = vpop.f32.mrf.mxu0
    %v6484 = vadd.f32 %v6195, %v6483
    %v6485 = vpop.f32.mrf.mxu0
    %v6486 = vpop.f32.mrf.mxu0
    %v6487 = vadd.f32 %v6198, %v6486
    %v6488 = vpop.f32.mrf.mxu0
    %6489 = vmatprep.mubr.bf16.mxu0 %v5275
    %6490 = vmatmul.mubr.bf16.gmra.mxu0 %v5274
    %v6491 = vpop.f32.mrf.mxu0
    %v6492 = vadd.f32 %v6203, %v6491
    %v6493 = vpop.f32.mrf.mxu0
    %v6494 = vpop.f32.mrf.mxu0
    %v6495 = vadd.f32 %v6206, %v6494
    %v6496 = vpop.f32.mrf.mxu0
    %6497 = vmatprep.mubr.bf16.mxu0 %v5283
    %6498 = vmatmul.mubr.bf16.gmra.mxu0 %v5282
    %v6499 = vpop.f32.mrf.mxu0
    %v6500 = vadd.f32 %v6211, %v6499
    %v6501 = vpop.f32.mrf.mxu0
    %v6502 = vpop.f32.mrf.mxu0
    %v6503 = vadd.f32 %v6214, %v6502
    %v6504 = vpop.f32.mrf.mxu0
    %6505 = vmatprep.mubr.bf16.mxu0 %v5291
    %6506 = vmatmul.mubr.bf16.gmra.mxu0 %v5290
    %v6507 = vpop.f32.mrf.mxu0
    %v6508 = vadd.f32 %v6219, %v6507
    %v6509 = vpop.f32.mrf.mxu0
    %v6510 = vpop.f32.mrf.mxu0
    %v6511 = vadd.f32 %v6222, %v6510
    %v6512 = vpop.f32.mrf.mxu0
    %6513 = vmatprep.mubr.bf16.mxu0 %v5299
    %6514 = vmatmul.mubr.bf16.gmra.mxu0 %v5298
    %v6515 = vpop.f32.mrf.mxu0
    %v6516 = vadd.f32 %v6227, %v6515
    %v6517 = vpop.f32.mrf.mxu0
    %v6518 = vpop.f32.mrf.mxu0
    %v6519 = vadd.f32 %v6230, %v6518
    %v6520 = vpop.f32.mrf.mxu0
    %6521 = vmatprep.mubr.bf16.mxu0 %v5307
    %6522 = vmatmul.mubr.bf16.gmra.mxu0 %v5306
    %v6523 = vpop.f32.mrf.mxu0
    %v6524 = vadd.f32 %v6235, %v6523
    %v6525 = vpop.f32.mrf.mxu0
    %v6526 = vpop.f32.mrf.mxu0
    %v6527 = vadd.f32 %v6238, %v6526
    %v6528 = vpop.f32.mrf.mxu0
    %6529 = vdwg.mxu0
    %6530 = vmatprep.subr.bf16.mxu0 0
    %6531 = vmatpush1.bf16.msra.mxu0 %v5863
    %6532 = vmatprep.subr.bf16.mxu0 0
    %6533 = vmatpush1.bf16.msra.mxu0 %v5862
    %6534 = vmatprep.subr.bf16.mxu0 0
    %6535 = vmatpush1.bf16.msra.mxu0 %v5861
    %6536 = vmatprep.subr.bf16.mxu0 0
    %6537 = vmatpush1.bf16.msra.mxu0 %v5860
    %6538 = vmatprep.subr.bf16.mxu0 0
    %6539 = vmatpush1.bf16.msra.mxu0 %v5859
    %6540 = vmatprep.subr.bf16.mxu0 0
    %6541 = vmatpush1.bf16.msra.mxu0 %v5858
    %6542 = vmatprep.subr.bf16.mxu0 0
    %6543 = vmatpush1.bf16.msra.mxu0 %v5857
    %6544 = vmatprep.subr.bf16.mxu0 0
    %6545 = vmatpush1.bf16.msra.mxu0 %v5856
    %6546 = vmatprep.subr.bf16.mxu0 0
    %6547 = vmatpush2.bf16.msra.mxu0 %v5871
    %6548 = vmatprep.subr.bf16.mxu0 0
    %6549 = vmatpush2.bf16.msra.mxu0 %v5870
    %6550 = vmatprep.subr.bf16.mxu0 0
    %6551 = vmatpush2.bf16.msra.mxu0 %v5869
    %6552 = vmatprep.subr.bf16.mxu0 0
    %6553 = vmatpush2.bf16.msra.mxu0 %v5868
    %6554 = vmatprep.subr.bf16.mxu0 0
    %6555 = vmatpush2.bf16.msra.mxu0 %v5867
    %6556 = vmatprep.subr.bf16.mxu0 0
    %6557 = vmatpush2.bf16.msra.mxu0 %v5866
    %6558 = vmatprep.subr.bf16.mxu0 0
    %6559 = vmatpush2.bf16.msra.mxu0 %v5865
    %6560 = vmatprep.subr.bf16.mxu0 0
    %6561 = vmatpush2.bf16.msra.mxu0 %v5864
    %6562 = vmatprep.mubr.bf16.mxu0 %v5061
    %6563 = vmatmul.mubr.bf16.gmra.mxu0 %v5060
    %v6564 = vpop.f32.mrf.mxu0
    %v6565 = vadd.f32 %v6276, %v6564
    %v6566 = vpop.f32.mrf.mxu0
    %v6567 = vpop.f32.mrf.mxu0
    %v6568 = vadd.f32 %v6279, %v6567
    %v6569 = vpop.f32.mrf.mxu0
    %6570 = vmatprep.mubr.bf16.mxu0 %v5069
    %6571 = vmatmul.mubr.bf16.gmra.mxu0 %v5068
    %v6572 = vpop.f32.mrf.mxu0
    %v6573 = vadd.f32 %v6284, %v6572
    %v6574 = vpop.f32.mrf.mxu0
    %v6575 = vpop.f32.mrf.mxu0
    %v6576 = vadd.f32 %v6287, %v6575
    %v6577 = vpop.f32.mrf.mxu0
    %6578 = vmatprep.mubr.bf16.mxu0 %v5077
    %6579 = vmatmul.mubr.bf16.gmra.mxu0 %v5076
    %v6580 = vpop.f32.mrf.mxu0
    %v6581 = vadd.f32 %v6292, %v6580
    %v6582 = vpop.f32.mrf.mxu0
    %v6583 = vpop.f32.mrf.mxu0
    %v6584 = vadd.f32 %v6295, %v6583
    %v6585 = vpop.f32.mrf.mxu0
    %6586 = vmatprep.mubr.bf16.mxu0 %v5085
    %6587 = vmatmul.mubr.bf16.gmra.mxu0 %v5084
    %v6588 = vpop.f32.mrf.mxu0
    %v6589 = vadd.f32 %v6300, %v6588
    %v6590 = vpop.f32.mrf.mxu0
    %v6591 = vpop.f32.mrf.mxu0
    %v6592 = vadd.f32 %v6303, %v6591
    %v6593 = vpop.f32.mrf.mxu0
    %6594 = vmatprep.mubr.bf16.mxu0 %v5093
    %6595 = vmatmul.mubr.bf16.gmra.mxu0 %v5092
    %v6596 = vpop.f32.mrf.mxu0
    %v6597 = vadd.f32 %v6308, %v6596
    %v6598 = vpop.f32.mrf.mxu0
    %v6599 = vpop.f32.mrf.mxu0
    %v6600 = vadd.f32 %v6311, %v6599
    %v6601 = vpop.f32.mrf.mxu0
    %6602 = vmatprep.mubr.bf16.mxu0 %v5101
    %6603 = vmatmul.mubr.bf16.gmra.mxu0 %v5100
    %v6604 = vpop.f32.mrf.mxu0
    %v6605 = vadd.f32 %v6316, %v6604
    %v6606 = vpop.f32.mrf.mxu0
    %v6607 = vpop.f32.mrf.mxu0
    %v6608 = vadd.f32 %v6319, %v6607
    %v6609 = vpop.f32.mrf.mxu0
    %6610 = vmatprep.mubr.bf16.mxu0 %v5109
    %6611 = vmatmul.mubr.bf16.gmra.mxu0 %v5108
    %v6612 = vpop.f32.mrf.mxu0
    %v6613 = vadd.f32 %v6324, %v6612
    %v6614 = vpop.f32.mrf.mxu0
    %v6615 = vpop.f32.mrf.mxu0
    %v6616 = vadd.f32 %v6327, %v6615
    %v6617 = vpop.f32.mrf.mxu0
    %6618 = vmatprep.mubr.bf16.mxu0 %v5117
    %6619 = vmatmul.mubr.bf16.gmra.mxu0 %v5116
    %v6620 = vpop.f32.mrf.mxu0
    %v6621 = vadd.f32 %v6332, %v6620
    %v6622 = vpop.f32.mrf.mxu0
    %v6623 = vpop.f32.mrf.mxu0
    %v6624 = vadd.f32 %v6335, %v6623
    %v6625 = vpop.f32.mrf.mxu0
    %6626 = vmatprep.mubr.bf16.mxu0 %v5125
    %6627 = vmatmul.mubr.bf16.gmra.mxu0 %v5124
    %v6628 = vpop.f32.mrf.mxu0
    %v6629 = vadd.f32 %v6340, %v6628
    %v6630 = vpop.f32.mrf.mxu0
    %v6631 = vpop.f32.mrf.mxu0
    %v6632 = vadd.f32 %v6343, %v6631
    %v6633 = vpop.f32.mrf.mxu0
    %6634 = vmatprep.mubr.bf16.mxu0 %v5133
    %6635 = vmatmul.mubr.bf16.gmra.mxu0 %v5132
    %v6636 = vpop.f32.mrf.mxu0
    %v6637 = vadd.f32 %v6348, %v6636
    %v6638 = vpop.f32.mrf.mxu0
    %v6639 = vpop.f32.mrf.mxu0
    %v6640 = vadd.f32 %v6351, %v6639
    %v6641 = vpop.f32.mrf.mxu0
    %6642 = vmatprep.mubr.bf16.mxu0 %v5141
    %6643 = vmatmul.mubr.bf16.gmra.mxu0 %v5140
    %v6644 = vpop.f32.mrf.mxu0
    %v6645 = vadd.f32 %v6356, %v6644
    %v6646 = vpop.f32.mrf.mxu0
    %v6647 = vpop.f32.mrf.mxu0
    %v6648 = vadd.f32 %v6359, %v6647
    %v6649 = vpop.f32.mrf.mxu0
    %6650 = vmatprep.mubr.bf16.mxu0 %v5149
    %6651 = vmatmul.mubr.bf16.gmra.mxu0 %v5148
    %v6652 = vpop.f32.mrf.mxu0
    %v6653 = vadd.f32 %v6364, %v6652
    %v6654 = vpop.f32.mrf.mxu0
    %v6655 = vpop.f32.mrf.mxu0
    %v6656 = vadd.f32 %v6367, %v6655
    %v6657 = vpop.f32.mrf.mxu0
    %6658 = vmatprep.mubr.bf16.mxu0 %v5157
    %6659 = vmatmul.mubr.bf16.gmra.mxu0 %v5156
    %v6660 = vpop.f32.mrf.mxu0
    %v6661 = vadd.f32 %v6372, %v6660
    %v6662 = vpop.f32.mrf.mxu0
    %v6663 = vpop.f32.mrf.mxu0
    %v6664 = vadd.f32 %v6375, %v6663
    %v6665 = vpop.f32.mrf.mxu0
    %6666 = vmatprep.mubr.bf16.mxu0 %v5165
    %6667 = vmatmul.mubr.bf16.gmra.mxu0 %v5164
    %v6668 = vpop.f32.mrf.mxu0
    %v6669 = vadd.f32 %v6380, %v6668
    %v6670 = vpop.f32.mrf.mxu0
    %v6671 = vpop.f32.mrf.mxu0
    %v6672 = vadd.f32 %v6383, %v6671
    %v6673 = vpop.f32.mrf.mxu0
    %6674 = vmatprep.mubr.bf16.mxu0 %v5173
    %6675 = vmatmul.mubr.bf16.gmra.mxu0 %v5172
    %v6676 = vpop.f32.mrf.mxu0
    %v6677 = vadd.f32 %v6388, %v6676
    %v6678 = vpop.f32.mrf.mxu0
    %v6679 = vpop.f32.mrf.mxu0
    %v6680 = vadd.f32 %v6391, %v6679
    %v6681 = vpop.f32.mrf.mxu0
    %6682 = vmatprep.mubr.bf16.mxu0 %v5181
    %6683 = vmatmul.mubr.bf16.gmra.mxu0 %v5180
    %v6684 = vpop.f32.mrf.mxu0
    %v6685 = vadd.f32 %v6396, %v6684
    %v6686 = vpop.f32.mrf.mxu0
    %v6687 = vpop.f32.mrf.mxu0
    %v6688 = vadd.f32 %v6399, %v6687
    %v6689 = vpop.f32.mrf.mxu0
    %6690 = vmatprep.mubr.bf16.mxu0 %v5189
    %6691 = vmatmul.mubr.bf16.gmra.mxu0 %v5188
    %v6692 = vpop.f32.mrf.mxu0
    %v6693 = vadd.f32 %v6404, %v6692
    %v6694 = vpop.f32.mrf.mxu0
    %v6695 = vpop.f32.mrf.mxu0
    %v6696 = vadd.f32 %v6407, %v6695
    %v6697 = vpop.f32.mrf.mxu0
    %6698 = vmatprep.mubr.bf16.mxu0 %v5197
    %6699 = vmatmul.mubr.bf16.gmra.mxu0 %v5196
    %v6700 = vpop.f32.mrf.mxu0
    %v6701 = vadd.f32 %v6412, %v6700
    %v6702 = vpop.f32.mrf.mxu0
    %v6703 = vpop.f32.mrf.mxu0
    %v6704 = vadd.f32 %v6415, %v6703
    %v6705 = vpop.f32.mrf.mxu0
    %6706 = vmatprep.mubr.bf16.mxu0 %v5205
    %6707 = vmatmul.mubr.bf16.gmra.mxu0 %v5204
    %v6708 = vpop.f32.mrf.mxu0
    %v6709 = vadd.f32 %v6420, %v6708
    %v6710 = vpop.f32.mrf.mxu0
    %v6711 = vpop.f32.mrf.mxu0
    %v6712 = vadd.f32 %v6423, %v6711
    %v6713 = vpop.f32.mrf.mxu0
    %6714 = vmatprep.mubr.bf16.mxu0 %v5213
    %6715 = vmatmul.mubr.bf16.gmra.mxu0 %v5212
    %v6716 = vpop.f32.mrf.mxu0
    %v6717 = vadd.f32 %v6428, %v6716
    %v6718 = vpop.f32.mrf.mxu0
    %v6719 = vpop.f32.mrf.mxu0
    %v6720 = vadd.f32 %v6431, %v6719
    %v6721 = vpop.f32.mrf.mxu0
    %6722 = vmatprep.mubr.bf16.mxu0 %v5221
    %6723 = vmatmul.mubr.bf16.gmra.mxu0 %v5220
    %v6724 = vpop.f32.mrf.mxu0
    %v6725 = vadd.f32 %v6436, %v6724
    %v6726 = vpop.f32.mrf.mxu0
    %v6727 = vpop.f32.mrf.mxu0
    %v6728 = vadd.f32 %v6439, %v6727
    %v6729 = vpop.f32.mrf.mxu0
    %6730 = vmatprep.mubr.bf16.mxu0 %v5229
    %6731 = vmatmul.mubr.bf16.gmra.mxu0 %v5228
    %v6732 = vpop.f32.mrf.mxu0
    %v6733 = vadd.f32 %v6444, %v6732
    %v6734 = vpop.f32.mrf.mxu0
    %v6735 = vpop.f32.mrf.mxu0
    %v6736 = vadd.f32 %v6447, %v6735
    %v6737 = vpop.f32.mrf.mxu0
    %6738 = vmatprep.mubr.bf16.mxu0 %v5237
    %6739 = vmatmul.mubr.bf16.gmra.mxu0 %v5236
    %v6740 = vpop.f32.mrf.mxu0
    %v6741 = vadd.f32 %v6452, %v6740
    %v6742 = vpop.f32.mrf.mxu0
    %v6743 = vpop.f32.mrf.mxu0
    %v6744 = vadd.f32 %v6455, %v6743
    %v6745 = vpop.f32.mrf.mxu0
    %6746 = vmatprep.mubr.bf16.mxu0 %v5245
    %6747 = vmatmul.mubr.bf16.gmra.mxu0 %v5244
    %v6748 = vpop.f32.mrf.mxu0
    %v6749 = vadd.f32 %v6460, %v6748
    %v6750 = vpop.f32.mrf.mxu0
    %v6751 = vpop.f32.mrf.mxu0
    %v6752 = vadd.f32 %v6463, %v6751
    %v6753 = vpop.f32.mrf.mxu0
    %6754 = vmatprep.mubr.bf16.mxu0 %v5253
    %6755 = vmatmul.mubr.bf16.gmra.mxu0 %v5252
    %v6756 = vpop.f32.mrf.mxu0
    %v6757 = vadd.f32 %v6468, %v6756
    %v6758 = vpop.f32.mrf.mxu0
    %v6759 = vpop.f32.mrf.mxu0
    %v6760 = vadd.f32 %v6471, %v6759
    %v6761 = vpop.f32.mrf.mxu0
    %6762 = vmatprep.mubr.bf16.mxu0 %v5261
    %6763 = vmatmul.mubr.bf16.gmra.mxu0 %v5260
    %v6764 = vpop.f32.mrf.mxu0
    %v6765 = vadd.f32 %v6476, %v6764
    %v6766 = vpop.f32.mrf.mxu0
    %v6767 = vpop.f32.mrf.mxu0
    %v6768 = vadd.f32 %v6479, %v6767
    %v6769 = vpop.f32.mrf.mxu0
    %6770 = vmatprep.mubr.bf16.mxu0 %v5269
    %6771 = vmatmul.mubr.bf16.gmra.mxu0 %v5268
    %v6772 = vpop.f32.mrf.mxu0
    %v6773 = vadd.f32 %v6484, %v6772
    %v6774 = vpop.f32.mrf.mxu0
    %v6775 = vpop.f32.mrf.mxu0
    %v6776 = vadd.f32 %v6487, %v6775
    %v6777 = vpop.f32.mrf.mxu0
    %6778 = vmatprep.mubr.bf16.mxu0 %v5277
    %6779 = vmatmul.mubr.bf16.gmra.mxu0 %v5276
    %v6780 = vpop.f32.mrf.mxu0
    %v6781 = vadd.f32 %v6492, %v6780
    %v6782 = vpop.f32.mrf.mxu0
    %v6783 = vpop.f32.mrf.mxu0
    %v6784 = vadd.f32 %v6495, %v6783
    %v6785 = vpop.f32.mrf.mxu0
    %6786 = vmatprep.mubr.bf16.mxu0 %v5285
    %6787 = vmatmul.mubr.bf16.gmra.mxu0 %v5284
    %v6788 = vpop.f32.mrf.mxu0
    %v6789 = vadd.f32 %v6500, %v6788
    %v6790 = vpop.f32.mrf.mxu0
    %v6791 = vpop.f32.mrf.mxu0
    %v6792 = vadd.f32 %v6503, %v6791
    %v6793 = vpop.f32.mrf.mxu0
    %6794 = vmatprep.mubr.bf16.mxu0 %v5293
    %6795 = vmatmul.mubr.bf16.gmra.mxu0 %v5292
    %v6796 = vpop.f32.mrf.mxu0
    %v6797 = vadd.f32 %v6508, %v6796
    %v6798 = vpop.f32.mrf.mxu0
    %v6799 = vpop.f32.mrf.mxu0
    %v6800 = vadd.f32 %v6511, %v6799
    %v6801 = vpop.f32.mrf.mxu0
    %6802 = vmatprep.mubr.bf16.mxu0 %v5301
    %6803 = vmatmul.mubr.bf16.gmra.mxu0 %v5300
    %v6804 = vpop.f32.mrf.mxu0
    %v6805 = vadd.f32 %v6516, %v6804
    %v6806 = vpop.f32.mrf.mxu0
    %v6807 = vpop.f32.mrf.mxu0
    %v6808 = vadd.f32 %v6519, %v6807
    %v6809 = vpop.f32.mrf.mxu0
    %6810 = vmatprep.mubr.bf16.mxu0 %v5309
    %6811 = vmatmul.mubr.bf16.gmra.mxu0 %v5308
    %v6812 = vpop.f32.mrf.mxu0
    %v6813 = vadd.f32 %v6524, %v6812
    %v6814 = vpop.f32.mrf.mxu0
    %v6815 = vpop.f32.mrf.mxu0
    %v6816 = vadd.f32 %v6527, %v6815
    %v6817 = vpop.f32.mrf.mxu0
    %6818 = vdwg.mxu0
    %6819 = vmatprep.subr.bf16.mxu0 0
    %6820 = vmatpush1.bf16.msra.mxu0 %v5879
    %6821 = vmatprep.subr.bf16.mxu0 0
    %6822 = vmatpush1.bf16.msra.mxu0 %v5878
    %6823 = vmatprep.subr.bf16.mxu0 0
    %6824 = vmatpush1.bf16.msra.mxu0 %v5877
    %6825 = vmatprep.subr.bf16.mxu0 0
    %6826 = vmatpush1.bf16.msra.mxu0 %v5876
    %6827 = vmatprep.subr.bf16.mxu0 0
    %6828 = vmatpush1.bf16.msra.mxu0 %v5875
    %6829 = vmatprep.subr.bf16.mxu0 0
    %6830 = vmatpush1.bf16.msra.mxu0 %v5874
    %6831 = vmatprep.subr.bf16.mxu0 0
    %6832 = vmatpush1.bf16.msra.mxu0 %v5873
    %6833 = vmatprep.subr.bf16.mxu0 0
    %6834 = vmatpush1.bf16.msra.mxu0 %v5872
    %6835 = vmatprep.subr.bf16.mxu0 0
    %6836 = vmatpush2.bf16.msra.mxu0 %v5887
    %6837 = vmatprep.subr.bf16.mxu0 0
    %6838 = vmatpush2.bf16.msra.mxu0 %v5886
    %6839 = vmatprep.subr.bf16.mxu0 0
    %6840 = vmatpush2.bf16.msra.mxu0 %v5885
    %6841 = vmatprep.subr.bf16.mxu0 0
    %6842 = vmatpush2.bf16.msra.mxu0 %v5884
    %6843 = vmatprep.subr.bf16.mxu0 0
    %6844 = vmatpush2.bf16.msra.mxu0 %v5883
    %6845 = vmatprep.subr.bf16.mxu0 0
    %6846 = vmatpush2.bf16.msra.mxu0 %v5882
    %6847 = vmatprep.subr.bf16.mxu0 0
    %6848 = vmatpush2.bf16.msra.mxu0 %v5881
    %6849 = vmatprep.subr.bf16.mxu0 0
    %6850 = vmatpush2.bf16.msra.mxu0 %v5880
    %6851 = vmatprep.mubr.bf16.mxu0 %v5063
    %6852 = vmatmul.mubr.bf16.gmra.mxu0 %v5062
    %v6853 = vpop.f32.mrf.mxu0
    %v6854 = vadd.f32 %v6565, %v6853
    %v6855 = vpop.f32.mrf.mxu0
    %v6856 = vpop.f32.mrf.mxu0
    %v6857 = vadd.f32 %v6568, %v6856
    %v6858 = vpop.f32.mrf.mxu0
    %6859 = vmatprep.mubr.bf16.mxu0 %v5071
    %6860 = vmatmul.mubr.bf16.gmra.mxu0 %v5070
    %v6861 = vpop.f32.mrf.mxu0
    %v6862 = vadd.f32 %v6573, %v6861
    %v6863 = vpop.f32.mrf.mxu0
    %v6864 = vpop.f32.mrf.mxu0
    %v6865 = vadd.f32 %v6576, %v6864
    %v6866 = vpop.f32.mrf.mxu0
    %6867 = vmatprep.mubr.bf16.mxu0 %v5079
    %6868 = vmatmul.mubr.bf16.gmra.mxu0 %v5078
    %v6869 = vpop.f32.mrf.mxu0
    %v6870 = vadd.f32 %v6581, %v6869
    %v6871 = vpop.f32.mrf.mxu0
    %v6872 = vpop.f32.mrf.mxu0
    %v6873 = vadd.f32 %v6584, %v6872
    %v6874 = vpop.f32.mrf.mxu0
    %6875 = vmatprep.mubr.bf16.mxu0 %v5087
    %6876 = vmatmul.mubr.bf16.gmra.mxu0 %v5086
    %v6877 = vpop.f32.mrf.mxu0
    %v6878 = vadd.f32 %v6589, %v6877
    %v6879 = vpop.f32.mrf.mxu0
    %v6880 = vpop.f32.mrf.mxu0
    %v6881 = vadd.f32 %v6592, %v6880
    %v6882 = vpop.f32.mrf.mxu0
    %6883 = vmatprep.mubr.bf16.mxu0 %v5095
    %6884 = vmatmul.mubr.bf16.gmra.mxu0 %v5094
    %v6885 = vpop.f32.mrf.mxu0
    %v6886 = vadd.f32 %v6597, %v6885
    %v6887 = vpop.f32.mrf.mxu0
    %v6888 = vpop.f32.mrf.mxu0
    %v6889 = vadd.f32 %v6600, %v6888
    %v6890 = vpop.f32.mrf.mxu0
    %6891 = vmatprep.mubr.bf16.mxu0 %v5103
    %6892 = vmatmul.mubr.bf16.gmra.mxu0 %v5102
    %v6893 = vpop.f32.mrf.mxu0
    %v6894 = vadd.f32 %v6605, %v6893
    %v6895 = vpop.f32.mrf.mxu0
    %v6896 = vpop.f32.mrf.mxu0
    %v6897 = vadd.f32 %v6608, %v6896
    %v6898 = vpop.f32.mrf.mxu0
    %6899 = vmatprep.mubr.bf16.mxu0 %v5111
    %6900 = vmatmul.mubr.bf16.gmra.mxu0 %v5110
    %v6901 = vpop.f32.mrf.mxu0
    %v6902 = vadd.f32 %v6613, %v6901
    %v6903 = vpop.f32.mrf.mxu0
    %v6904 = vpop.f32.mrf.mxu0
    %v6905 = vadd.f32 %v6616, %v6904
    %v6906 = vpop.f32.mrf.mxu0
    %6907 = vmatprep.mubr.bf16.mxu0 %v5119
    %6908 = vmatmul.mubr.bf16.gmra.mxu0 %v5118
    %v6909 = vpop.f32.mrf.mxu0
    %v6910 = vadd.f32 %v6621, %v6909
    %v6911 = vpop.f32.mrf.mxu0
    %v6912 = vpop.f32.mrf.mxu0
    %v6913 = vadd.f32 %v6624, %v6912
    %v6914 = vpop.f32.mrf.mxu0
    %6915 = vmatprep.mubr.bf16.mxu0 %v5127
    %6916 = vmatmul.mubr.bf16.gmra.mxu0 %v5126
    %v6917 = vpop.f32.mrf.mxu0
    %v6918 = vadd.f32 %v6629, %v6917
    %v6919 = vpop.f32.mrf.mxu0
    %v6920 = vpop.f32.mrf.mxu0
    %v6921 = vadd.f32 %v6632, %v6920
    %v6922 = vpop.f32.mrf.mxu0
    %6923 = vmatprep.mubr.bf16.mxu0 %v5135
    %6924 = vmatmul.mubr.bf16.gmra.mxu0 %v5134
    %v6925 = vpop.f32.mrf.mxu0
    %v6926 = vadd.f32 %v6637, %v6925
    %v6927 = vpop.f32.mrf.mxu0
    %v6928 = vpop.f32.mrf.mxu0
    %v6929 = vadd.f32 %v6640, %v6928
    %v6930 = vpop.f32.mrf.mxu0
    %6931 = vmatprep.mubr.bf16.mxu0 %v5143
    %6932 = vmatmul.mubr.bf16.gmra.mxu0 %v5142
    %v6933 = vpop.f32.mrf.mxu0
    %v6934 = vadd.f32 %v6645, %v6933
    %v6935 = vpop.f32.mrf.mxu0
    %v6936 = vpop.f32.mrf.mxu0
    %v6937 = vadd.f32 %v6648, %v6936
    %v6938 = vpop.f32.mrf.mxu0
    %6939 = vmatprep.mubr.bf16.mxu0 %v5151
    %6940 = vmatmul.mubr.bf16.gmra.mxu0 %v5150
    %v6941 = vpop.f32.mrf.mxu0
    %v6942 = vadd.f32 %v6653, %v6941
    %v6943 = vpop.f32.mrf.mxu0
    %v6944 = vpop.f32.mrf.mxu0
    %v6945 = vadd.f32 %v6656, %v6944
    %v6946 = vpop.f32.mrf.mxu0
    %6947 = vmatprep.mubr.bf16.mxu0 %v5159
    %6948 = vmatmul.mubr.bf16.gmra.mxu0 %v5158
    %v6949 = vpop.f32.mrf.mxu0
    %v6950 = vadd.f32 %v6661, %v6949
    %v6951 = vpop.f32.mrf.mxu0
    %v6952 = vpop.f32.mrf.mxu0
    %v6953 = vadd.f32 %v6664, %v6952
    %v6954 = vpop.f32.mrf.mxu0
    %6955 = vmatprep.mubr.bf16.mxu0 %v5167
    %6956 = vmatmul.mubr.bf16.gmra.mxu0 %v5166
    %v6957 = vpop.f32.mrf.mxu0
    %v6958 = vadd.f32 %v6669, %v6957
    %v6959 = vpop.f32.mrf.mxu0
    %v6960 = vpop.f32.mrf.mxu0
    %v6961 = vadd.f32 %v6672, %v6960
    %v6962 = vpop.f32.mrf.mxu0
    %6963 = vmatprep.mubr.bf16.mxu0 %v5175
    %6964 = vmatmul.mubr.bf16.gmra.mxu0 %v5174
    %v6965 = vpop.f32.mrf.mxu0
    %v6966 = vadd.f32 %v6677, %v6965
    %v6967 = vpop.f32.mrf.mxu0
    %v6968 = vpop.f32.mrf.mxu0
    %v6969 = vadd.f32 %v6680, %v6968
    %v6970 = vpop.f32.mrf.mxu0
    %6971 = vmatprep.mubr.bf16.mxu0 %v5183
    %6972 = vmatmul.mubr.bf16.gmra.mxu0 %v5182
    %v6973 = vpop.f32.mrf.mxu0
    %v6974 = vadd.f32 %v6685, %v6973
    %v6975 = vpop.f32.mrf.mxu0
    %v6976 = vpop.f32.mrf.mxu0
    %v6977 = vadd.f32 %v6688, %v6976
    %v6978 = vpop.f32.mrf.mxu0
    %6979 = vmatprep.mubr.bf16.mxu0 %v5191
    %6980 = vmatmul.mubr.bf16.gmra.mxu0 %v5190
    %v6981 = vpop.f32.mrf.mxu0
    %v6982 = vadd.f32 %v6693, %v6981
    %v6983 = vpop.f32.mrf.mxu0
    %v6984 = vpop.f32.mrf.mxu0
    %v6985 = vadd.f32 %v6696, %v6984
    %v6986 = vpop.f32.mrf.mxu0
    %6987 = vmatprep.mubr.bf16.mxu0 %v5199
    %6988 = vmatmul.mubr.bf16.gmra.mxu0 %v5198
    %v6989 = vpop.f32.mrf.mxu0
    %v6990 = vadd.f32 %v6701, %v6989
    %v6991 = vpop.f32.mrf.mxu0
    %v6992 = vpop.f32.mrf.mxu0
    %v6993 = vadd.f32 %v6704, %v6992
    %v6994 = vpop.f32.mrf.mxu0
    %6995 = vmatprep.mubr.bf16.mxu0 %v5207
    %6996 = vmatmul.mubr.bf16.gmra.mxu0 %v5206
    %v6997 = vpop.f32.mrf.mxu0
    %v6998 = vadd.f32 %v6709, %v6997
    %v6999 = vpop.f32.mrf.mxu0
    %v7000 = vpop.f32.mrf.mxu0
    %v7001 = vadd.f32 %v6712, %v7000
    %v7002 = vpop.f32.mrf.mxu0
    %7003 = vmatprep.mubr.bf16.mxu0 %v5215
    %7004 = vmatmul.mubr.bf16.gmra.mxu0 %v5214
    %v7005 = vpop.f32.mrf.mxu0
    %v7006 = vadd.f32 %v6717, %v7005
    %v7007 = vpop.f32.mrf.mxu0
    %v7008 = vpop.f32.mrf.mxu0
    %v7009 = vadd.f32 %v6720, %v7008
    %v7010 = vpop.f32.mrf.mxu0
    %7011 = vmatprep.mubr.bf16.mxu0 %v5223
    %7012 = vmatmul.mubr.bf16.gmra.mxu0 %v5222
    %v7013 = vpop.f32.mrf.mxu0
    %v7014 = vadd.f32 %v6725, %v7013
    %v7015 = vpop.f32.mrf.mxu0
    %v7016 = vpop.f32.mrf.mxu0
    %v7017 = vadd.f32 %v6728, %v7016
    %v7018 = vpop.f32.mrf.mxu0
    %7019 = vmatprep.mubr.bf16.mxu0 %v5231
    %7020 = vmatmul.mubr.bf16.gmra.mxu0 %v5230
    %v7021 = vpop.f32.mrf.mxu0
    %v7022 = vadd.f32 %v6733, %v7021
    %v7023 = vpop.f32.mrf.mxu0
    %v7024 = vpop.f32.mrf.mxu0
    %v7025 = vadd.f32 %v6736, %v7024
    %v7026 = vpop.f32.mrf.mxu0
    %7027 = vmatprep.mubr.bf16.mxu0 %v5239
    %7028 = vmatmul.mubr.bf16.gmra.mxu0 %v5238
    %v7029 = vpop.f32.mrf.mxu0
    %v7030 = vadd.f32 %v6741, %v7029
    %v7031 = vpop.f32.mrf.mxu0
    %v7032 = vpop.f32.mrf.mxu0
    %v7033 = vadd.f32 %v6744, %v7032
    %v7034 = vpop.f32.mrf.mxu0
    %7035 = vmatprep.mubr.bf16.mxu0 %v5247
    %7036 = vmatmul.mubr.bf16.gmra.mxu0 %v5246
    %v7037 = vpop.f32.mrf.mxu0
    %v7038 = vadd.f32 %v6749, %v7037
    %v7039 = vpop.f32.mrf.mxu0
    %v7040 = vpop.f32.mrf.mxu0
    %v7041 = vadd.f32 %v6752, %v7040
    %v7042 = vpop.f32.mrf.mxu0
    %7043 = vmatprep.mubr.bf16.mxu0 %v5255
    %7044 = vmatmul.mubr.bf16.gmra.mxu0 %v5254
    %v7045 = vpop.f32.mrf.mxu0
    %v7046 = vadd.f32 %v6757, %v7045
    %v7047 = vpop.f32.mrf.mxu0
    %v7048 = vpop.f32.mrf.mxu0
    %v7049 = vadd.f32 %v6760, %v7048
    %v7050 = vpop.f32.mrf.mxu0
    %7051 = vmatprep.mubr.bf16.mxu0 %v5263
    %7052 = vmatmul.mubr.bf16.gmra.mxu0 %v5262
    %v7053 = vpop.f32.mrf.mxu0
    %v7054 = vadd.f32 %v6765, %v7053
    %v7055 = vpop.f32.mrf.mxu0
    %v7056 = vpop.f32.mrf.mxu0
    %v7057 = vadd.f32 %v6768, %v7056
    %v7058 = vpop.f32.mrf.mxu0
    %7059 = vmatprep.mubr.bf16.mxu0 %v5271
    %7060 = vmatmul.mubr.bf16.gmra.mxu0 %v5270
    %v7061 = vpop.f32.mrf.mxu0
    %v7062 = vadd.f32 %v6773, %v7061
    %v7063 = vpop.f32.mrf.mxu0
    %v7064 = vpop.f32.mrf.mxu0
    %v7065 = vadd.f32 %v6776, %v7064
    %v7066 = vpop.f32.mrf.mxu0
    %7067 = vmatprep.mubr.bf16.mxu0 %v5279
    %7068 = vmatmul.mubr.bf16.gmra.mxu0 %v5278
    %v7069 = vpop.f32.mrf.mxu0
    %v7070 = vadd.f32 %v6781, %v7069
    %v7071 = vpop.f32.mrf.mxu0
    %v7072 = vpop.f32.mrf.mxu0
    %v7073 = vadd.f32 %v6784, %v7072
    %v7074 = vpop.f32.mrf.mxu0
    %7075 = vmatprep.mubr.bf16.mxu0 %v5287
    %7076 = vmatmul.mubr.bf16.gmra.mxu0 %v5286
    %v7077 = vpop.f32.mrf.mxu0
    %v7078 = vadd.f32 %v6789, %v7077
    %v7079 = vpop.f32.mrf.mxu0
    %v7080 = vpop.f32.mrf.mxu0
    %v7081 = vadd.f32 %v6792, %v7080
    %v7082 = vpop.f32.mrf.mxu0
    %7083 = vmatprep.mubr.bf16.mxu0 %v5295
    %7084 = vmatmul.mubr.bf16.gmra.mxu0 %v5294
    %v7085 = vpop.f32.mrf.mxu0
    %v7086 = vadd.f32 %v6797, %v7085
    %v7087 = vpop.f32.mrf.mxu0
    %v7088 = vpop.f32.mrf.mxu0
    %v7089 = vadd.f32 %v6800, %v7088
    %v7090 = vpop.f32.mrf.mxu0
    %7091 = vmatprep.mubr.bf16.mxu0 %v5303
    %7092 = vmatmul.mubr.bf16.gmra.mxu0 %v5302
    %v7093 = vpop.f32.mrf.mxu0
    %v7094 = vadd.f32 %v6805, %v7093
    %v7095 = vpop.f32.mrf.mxu0
    %v7096 = vpop.f32.mrf.mxu0
    %v7097 = vadd.f32 %v6808, %v7096
    %v7098 = vpop.f32.mrf.mxu0
    %7099 = vmatprep.mubr.bf16.mxu0 %v5311
    %7100 = vmatmul.mubr.bf16.gmra.mxu0 %v5310
    %v7101 = vpop.f32.mrf.mxu0
    %v7102 = vadd.f32 %v6813, %v7101
    %v7103 = vpop.f32.mrf.mxu0
    %v7104 = vpop.f32.mrf.mxu0
    %v7105 = vadd.f32 %v6816, %v7104
    %v7106 = vpop.f32.mrf.mxu0
    %7107 = vdwg.mxu0
    %v7108 = vpack.c.bf16 %v6857, %v6854
    %v7109 = vpack.c.bf16 %v6865, %v6862
    %v7110 = vpack.c.bf16 %v6873, %v6870
    %v7111 = vpack.c.bf16 %v6881, %v6878
    %v7112 = vpack.c.bf16 %v6889, %v6886
    %v7113 = vpack.c.bf16 %v6897, %v6894
    %v7114 = vpack.c.bf16 %v6905, %v6902
    %v7115 = vpack.c.bf16 %v6913, %v6910
    %v7116 = vpack.c.bf16 %v6921, %v6918
    %v7117 = vpack.c.bf16 %v6929, %v6926
    %v7118 = vpack.c.bf16 %v6937, %v6934
    %v7119 = vpack.c.bf16 %v6945, %v6942
    %v7120 = vpack.c.bf16 %v6953, %v6950
    %v7121 = vpack.c.bf16 %v6961, %v6958
    %v7122 = vpack.c.bf16 %v6969, %v6966
    %v7123 = vpack.c.bf16 %v6977, %v6974
    %v7124 = vpack.c.bf16 %v6985, %v6982
    %v7125 = vpack.c.bf16 %v6993, %v6990
    %v7126 = vpack.c.bf16 %v7001, %v6998
    %v7127 = vpack.c.bf16 %v7009, %v7006
    %v7128 = vpack.c.bf16 %v7017, %v7014
    %v7129 = vpack.c.bf16 %v7025, %v7022
    %v7130 = vpack.c.bf16 %v7033, %v7030
    %v7131 = vpack.c.bf16 %v7041, %v7038
    %v7132 = vpack.c.bf16 %v7049, %v7046
    %v7133 = vpack.c.bf16 %v7057, %v7054
    %v7134 = vpack.c.bf16 %v7065, %v7062
    %v7135 = vpack.c.bf16 %v7073, %v7070
    %v7136 = vpack.c.bf16 %v7081, %v7078
    %v7137 = vpack.c.bf16 %v7089, %v7086
    %v7138 = vpack.c.bf16 %v7097, %v7094
    %v7139 = vpack.c.bf16 %v7105, %v7102
    %v7140 = vld [vmem:[%s4] sm:$0xf]
    %v7141 = vld [vmem:[%s4 + $0x4] sm:$0xf]
    %v7142 = vld [vmem:[%s4 + $0x8] sm:$0xf]
    %v7143 = vld [vmem:[%s4 + $0xc] sm:$0xf]
    %v7144 = vld [vmem:[%s4 + $0x10] sm:$0xf]
    %v7145 = vld [vmem:[%s4 + $0x14] sm:$0xf]
    %v7146 = vld [vmem:[%s4 + $0x18] sm:$0xf]
    %v7147 = vld [vmem:[%s4 + $0x1c] sm:$0xf]
    %v7148 = vld [vmem:[%s4 + $0x20] sm:$0xf]
    %v7149 = vld [vmem:[%s4 + $0x24] sm:$0xf]
    %v7150 = vld [vmem:[%s4 + $0x28] sm:$0xf]
    %v7151 = vld [vmem:[%s4 + $0x2c] sm:$0xf]
    %v7152 = vld [vmem:[%s4 + $0x30] sm:$0xf]
    %v7153 = vld [vmem:[%s4 + $0x34] sm:$0xf]
    %v7154 = vld [vmem:[%s4 + $0x38] sm:$0xf]
    %v7155 = vld [vmem:[%s4 + $0x3c] sm:$0xf]
    %v7156 = vld [vmem:[%s4 + $0x40] sm:$0xf]
    %v7157 = vld [vmem:[%s4 + $0x44] sm:$0xf]
    %v7158 = vld [vmem:[%s4 + $0x48] sm:$0xf]
    %v7159 = vld [vmem:[%s4 + $0x4c] sm:$0xf]
    %v7160 = vld [vmem:[%s4 + $0x50] sm:$0xf]
    %v7161 = vld [vmem:[%s4 + $0x54] sm:$0xf]
    %v7162 = vld [vmem:[%s4 + $0x58] sm:$0xf]
    %v7163 = vld [vmem:[%s4 + $0x5c] sm:$0xf]
    %v7164 = vld [vmem:[%s4 + $0x60] sm:$0xf]
    %v7165 = vld [vmem:[%s4 + $0x64] sm:$0xf]
    %v7166 = vld [vmem:[%s4 + $0x68] sm:$0xf]
    %v7167 = vld [vmem:[%s4 + $0x6c] sm:$0xf]
    %v7168 = vld [vmem:[%s4 + $0x70] sm:$0xf]
    %v7169 = vld [vmem:[%s4 + $0x74] sm:$0xf]
    %v7170 = vld [vmem:[%s4 + $0x78] sm:$0xf]
    %v7171 = vld [vmem:[%s4 + $0x7c] sm:$0xf]
    %v7172 = vld [vmem:[%s4 + $0x80] sm:$0xf]
    %v7173 = vld [vmem:[%s4 + $0x84] sm:$0xf]
    %v7174 = vld [vmem:[%s4 + $0x88] sm:$0xf]
    %v7175 = vld [vmem:[%s4 + $0x8c] sm:$0xf]
    %v7176 = vld [vmem:[%s4 + $0x90] sm:$0xf]
    %v7177 = vld [vmem:[%s4 + $0x94] sm:$0xf]
    %v7178 = vld [vmem:[%s4 + $0x98] sm:$0xf]
    %v7179 = vld [vmem:[%s4 + $0x9c] sm:$0xf]
    %v7180 = vld [vmem:[%s4 + $0xa0] sm:$0xf]
    %v7181 = vld [vmem:[%s4 + $0xa4] sm:$0xf]
    %v7182 = vld [vmem:[%s4 + $0xa8] sm:$0xf]
    %v7183 = vld [vmem:[%s4 + $0xac] sm:$0xf]
    %v7184 = vld [vmem:[%s4 + $0xb0] sm:$0xf]
    %v7185 = vld [vmem:[%s4 + $0xb4] sm:$0xf]
    %v7186 = vld [vmem:[%s4 + $0xb8] sm:$0xf]
    %v7187 = vld [vmem:[%s4 + $0xbc] sm:$0xf]
    %v7188 = vld [vmem:[%s4 + $0xc0] sm:$0xf]
    %v7189 = vld [vmem:[%s4 + $0xc4] sm:$0xf]
    %v7190 = vld [vmem:[%s4 + $0xc8] sm:$0xf]
    %v7191 = vld [vmem:[%s4 + $0xcc] sm:$0xf]
    %v7192 = vld [vmem:[%s4 + $0xd0] sm:$0xf]
    %v7193 = vld [vmem:[%s4 + $0xd4] sm:$0xf]
    %v7194 = vld [vmem:[%s4 + $0xd8] sm:$0xf]
    %v7195 = vld [vmem:[%s4 + $0xdc] sm:$0xf]
    %v7196 = vld [vmem:[%s4 + $0xe0] sm:$0xf]
    %v7197 = vld [vmem:[%s4 + $0xe4] sm:$0xf]
    %v7198 = vld [vmem:[%s4 + $0xe8] sm:$0xf]
    %v7199 = vld [vmem:[%s4 + $0xec] sm:$0xf]
    %v7200 = vld [vmem:[%s4 + $0xf0] sm:$0xf]
    %v7201 = vld [vmem:[%s4 + $0xf4] sm:$0xf]
    %v7202 = vld [vmem:[%s4 + $0xf8] sm:$0xf]
    %v7203 = vld [vmem:[%s4 + $0xfc] sm:$0xf]
    %7205 = vset.pattern.permute.xlu0 0
    %7206 = vperm.xlu0 %7205, %v7140
    %v7207 = vpop.permute.xlu0 %7206
    %v7210 = vunpack.c.l.s4 839922192
    %v7211 = vunpack.c.0.s8 %v7210
    %v7212 = vlaneseq
    %v7213 = vshrl.u32 %v7212, 7
    %v7214 = vsub.s32 %v7211, %v7213
    %v7215 = vrot.slane %v7207, %v7214
    %7217 = vset.pattern.permute.xlu0 0
    %7218 = vperm.xlu0 %7217, %v7141
    %v7219 = vpop.permute.xlu0 %7218
    %v7222 = vunpack.c.l.s4 839922192
    %v7223 = vunpack.c.0.s8 %v7222
    %v7224 = vlaneseq
    %v7225 = vshrl.u32 %v7224, 7
    %v7226 = vsub.s32 %v7223, %v7225
    %v7227 = vrot.slane %v7219, %v7226
    %7229 = vset.pattern.permute.xlu0 0
    %7230 = vperm.xlu0 %7229, %v7142
    %v7231 = vpop.permute.xlu0 %7230
    %v7234 = vunpack.c.l.s4 839922192
    %v7235 = vunpack.c.0.s8 %v7234
    %v7236 = vlaneseq
    %v7237 = vshrl.u32 %v7236, 7
    %v7238 = vsub.s32 %v7235, %v7237
    %v7239 = vrot.slane %v7231, %v7238
    %7241 = vset.pattern.permute.xlu0 0
    %7242 = vperm.xlu0 %7241, %v7143
    %v7243 = vpop.permute.xlu0 %7242
    %v7246 = vunpack.c.l.s4 839922192
    %v7247 = vunpack.c.0.s8 %v7246
    %v7248 = vlaneseq
    %v7249 = vshrl.u32 %v7248, 7
    %v7250 = vsub.s32 %v7247, %v7249
    %v7251 = vrot.slane %v7243, %v7250
    %7253 = vset.pattern.permute.xlu0 0
    %7254 = vperm.xlu0 %7253, %v7144
    %v7255 = vpop.permute.xlu0 %7254
    %v7258 = vunpack.c.l.s4 839922192
    %v7259 = vunpack.c.0.s8 %v7258
    %v7260 = vlaneseq
    %v7261 = vshrl.u32 %v7260, 7
    %v7262 = vsub.s32 %v7259, %v7261
    %v7263 = vrot.slane %v7255, %v7262
    %7265 = vset.pattern.permute.xlu0 0
    %7266 = vperm.xlu0 %7265, %v7145
    %v7267 = vpop.permute.xlu0 %7266
    %v7270 = vunpack.c.l.s4 839922192
    %v7271 = vunpack.c.0.s8 %v7270
    %v7272 = vlaneseq
    %v7273 = vshrl.u32 %v7272, 7
    %v7274 = vsub.s32 %v7271, %v7273
    %v7275 = vrot.slane %v7267, %v7274
    %7277 = vset.pattern.permute.xlu0 0
    %7278 = vperm.xlu0 %7277, %v7146
    %v7279 = vpop.permute.xlu0 %7278
    %v7282 = vunpack.c.l.s4 839922192
    %v7283 = vunpack.c.0.s8 %v7282
    %v7284 = vlaneseq
    %v7285 = vshrl.u32 %v7284, 7
    %v7286 = vsub.s32 %v7283, %v7285
    %v7287 = vrot.slane %v7279, %v7286
    %7289 = vset.pattern.permute.xlu0 0
    %7290 = vperm.xlu0 %7289, %v7147
    %v7291 = vpop.permute.xlu0 %7290
    %v7294 = vunpack.c.l.s4 839922192
    %v7295 = vunpack.c.0.s8 %v7294
    %v7296 = vlaneseq
    %v7297 = vshrl.u32 %v7296, 7
    %v7298 = vsub.s32 %v7295, %v7297
    %v7299 = vrot.slane %v7291, %v7298
    %7301 = vset.pattern.permute.xlu0 0
    %7302 = vperm.xlu0 %7301, %v7148
    %v7303 = vpop.permute.xlu0 %7302
    %v7306 = vunpack.c.l.s4 839922192
    %v7307 = vunpack.c.0.s8 %v7306
    %v7308 = vlaneseq
    %v7309 = vshrl.u32 %v7308, 7
    %v7310 = vsub.s32 %v7307, %v7309
    %v7311 = vrot.slane %v7303, %v7310
    %7313 = vset.pattern.permute.xlu0 0
    %7314 = vperm.xlu0 %7313, %v7149
    %v7315 = vpop.permute.xlu0 %7314
    %v7318 = vunpack.c.l.s4 839922192
    %v7319 = vunpack.c.0.s8 %v7318
    %v7320 = vlaneseq
    %v7321 = vshrl.u32 %v7320, 7
    %v7322 = vsub.s32 %v7319, %v7321
    %v7323 = vrot.slane %v7315, %v7322
    %7325 = vset.pattern.permute.xlu0 0
    %7326 = vperm.xlu0 %7325, %v7150
    %v7327 = vpop.permute.xlu0 %7326
    %v7330 = vunpack.c.l.s4 839922192
    %v7331 = vunpack.c.0.s8 %v7330
    %v7332 = vlaneseq
    %v7333 = vshrl.u32 %v7332, 7
    %v7334 = vsub.s32 %v7331, %v7333
    %v7335 = vrot.slane %v7327, %v7334
    %7337 = vset.pattern.permute.xlu0 0
    %7338 = vperm.xlu0 %7337, %v7151
    %v7339 = vpop.permute.xlu0 %7338
    %v7342 = vunpack.c.l.s4 839922192
    %v7343 = vunpack.c.0.s8 %v7342
    %v7344 = vlaneseq
    %v7345 = vshrl.u32 %v7344, 7
    %v7346 = vsub.s32 %v7343, %v7345
    %v7347 = vrot.slane %v7339, %v7346
    %7349 = vset.pattern.permute.xlu0 0
    %7350 = vperm.xlu0 %7349, %v7152
    %v7351 = vpop.permute.xlu0 %7350
    %v7354 = vunpack.c.l.s4 839922192
    %v7355 = vunpack.c.0.s8 %v7354
    %v7356 = vlaneseq
    %v7357 = vshrl.u32 %v7356, 7
    %v7358 = vsub.s32 %v7355, %v7357
    %v7359 = vrot.slane %v7351, %v7358
    %7361 = vset.pattern.permute.xlu0 0
    %7362 = vperm.xlu0 %7361, %v7153
    %v7363 = vpop.permute.xlu0 %7362
    %v7366 = vunpack.c.l.s4 839922192
    %v7367 = vunpack.c.0.s8 %v7366
    %v7368 = vlaneseq
    %v7369 = vshrl.u32 %v7368, 7
    %v7370 = vsub.s32 %v7367, %v7369
    %v7371 = vrot.slane %v7363, %v7370
    %7373 = vset.pattern.permute.xlu0 0
    %7374 = vperm.xlu0 %7373, %v7154
    %v7375 = vpop.permute.xlu0 %7374
    %v7378 = vunpack.c.l.s4 839922192
    %v7379 = vunpack.c.0.s8 %v7378
    %v7380 = vlaneseq
    %v7381 = vshrl.u32 %v7380, 7
    %v7382 = vsub.s32 %v7379, %v7381
    %v7383 = vrot.slane %v7375, %v7382
    %7385 = vset.pattern.permute.xlu0 0
    %7386 = vperm.xlu0 %7385, %v7155
    %v7387 = vpop.permute.xlu0 %7386
    %v7390 = vunpack.c.l.s4 839922192
    %v7391 = vunpack.c.0.s8 %v7390
    %v7392 = vlaneseq
    %v7393 = vshrl.u32 %v7392, 7
    %v7394 = vsub.s32 %v7391, %v7393
    %v7395 = vrot.slane %v7387, %v7394
    %7397 = vset.pattern.permute.xlu0 0
    %7398 = vperm.xlu0 %7397, %v7156
    %v7399 = vpop.permute.xlu0 %7398
    %v7402 = vunpack.c.l.s4 839922192
    %v7403 = vunpack.c.0.s8 %v7402
    %v7404 = vlaneseq
    %v7405 = vshrl.u32 %v7404, 7
    %v7406 = vsub.s32 %v7403, %v7405
    %v7407 = vrot.slane %v7399, %v7406
    %7409 = vset.pattern.permute.xlu0 0
    %7410 = vperm.xlu0 %7409, %v7157
    %v7411 = vpop.permute.xlu0 %7410
    %v7414 = vunpack.c.l.s4 839922192
    %v7415 = vunpack.c.0.s8 %v7414
    %v7416 = vlaneseq
    %v7417 = vshrl.u32 %v7416, 7
    %v7418 = vsub.s32 %v7415, %v7417
    %v7419 = vrot.slane %v7411, %v7418
    %7421 = vset.pattern.permute.xlu0 0
    %7422 = vperm.xlu0 %7421, %v7158
    %v7423 = vpop.permute.xlu0 %7422
    %v7426 = vunpack.c.l.s4 839922192
    %v7427 = vunpack.c.0.s8 %v7426
    %v7428 = vlaneseq
    %v7429 = vshrl.u32 %v7428, 7
    %v7430 = vsub.s32 %v7427, %v7429
    %v7431 = vrot.slane %v7423, %v7430
    %7433 = vset.pattern.permute.xlu0 0
    %7434 = vperm.xlu0 %7433, %v7159
    %v7435 = vpop.permute.xlu0 %7434
    %v7438 = vunpack.c.l.s4 839922192
    %v7439 = vunpack.c.0.s8 %v7438
    %v7440 = vlaneseq
    %v7441 = vshrl.u32 %v7440, 7
    %v7442 = vsub.s32 %v7439, %v7441
    %v7443 = vrot.slane %v7435, %v7442
    %7445 = vset.pattern.permute.xlu0 0
    %7446 = vperm.xlu0 %7445, %v7160
    %v7447 = vpop.permute.xlu0 %7446
    %v7450 = vunpack.c.l.s4 839922192
    %v7451 = vunpack.c.0.s8 %v7450
    %v7452 = vlaneseq
    %v7453 = vshrl.u32 %v7452, 7
    %v7454 = vsub.s32 %v7451, %v7453
    %v7455 = vrot.slane %v7447, %v7454
    %7457 = vset.pattern.permute.xlu0 0
    %7458 = vperm.xlu0 %7457, %v7161
    %v7459 = vpop.permute.xlu0 %7458
    %v7462 = vunpack.c.l.s4 839922192
    %v7463 = vunpack.c.0.s8 %v7462
    %v7464 = vlaneseq
    %v7465 = vshrl.u32 %v7464, 7
    %v7466 = vsub.s32 %v7463, %v7465
    %v7467 = vrot.slane %v7459, %v7466
    %7469 = vset.pattern.permute.xlu0 0
    %7470 = vperm.xlu0 %7469, %v7162
    %v7471 = vpop.permute.xlu0 %7470
    %v7474 = vunpack.c.l.s4 839922192
    %v7475 = vunpack.c.0.s8 %v7474
    %v7476 = vlaneseq
    %v7477 = vshrl.u32 %v7476, 7
    %v7478 = vsub.s32 %v7475, %v7477
    %v7479 = vrot.slane %v7471, %v7478
    %7481 = vset.pattern.permute.xlu0 0
    %7482 = vperm.xlu0 %7481, %v7163
    %v7483 = vpop.permute.xlu0 %7482
    %v7486 = vunpack.c.l.s4 839922192
    %v7487 = vunpack.c.0.s8 %v7486
    %v7488 = vlaneseq
    %v7489 = vshrl.u32 %v7488, 7
    %v7490 = vsub.s32 %v7487, %v7489
    %v7491 = vrot.slane %v7483, %v7490
    %7493 = vset.pattern.permute.xlu0 0
    %7494 = vperm.xlu0 %7493, %v7164
    %v7495 = vpop.permute.xlu0 %7494
    %v7498 = vunpack.c.l.s4 839922192
    %v7499 = vunpack.c.0.s8 %v7498
    %v7500 = vlaneseq
    %v7501 = vshrl.u32 %v7500, 7
    %v7502 = vsub.s32 %v7499, %v7501
    %v7503 = vrot.slane %v7495, %v7502
    %7505 = vset.pattern.permute.xlu0 0
    %7506 = vperm.xlu0 %7505, %v7165
    %v7507 = vpop.permute.xlu0 %7506
    %v7510 = vunpack.c.l.s4 839922192
    %v7511 = vunpack.c.0.s8 %v7510
    %v7512 = vlaneseq
    %v7513 = vshrl.u32 %v7512, 7
    %v7514 = vsub.s32 %v7511, %v7513
    %v7515 = vrot.slane %v7507, %v7514
    %7517 = vset.pattern.permute.xlu0 0
    %7518 = vperm.xlu0 %7517, %v7166
    %v7519 = vpop.permute.xlu0 %7518
    %v7522 = vunpack.c.l.s4 839922192
    %v7523 = vunpack.c.0.s8 %v7522
    %v7524 = vlaneseq
    %v7525 = vshrl.u32 %v7524, 7
    %v7526 = vsub.s32 %v7523, %v7525
    %v7527 = vrot.slane %v7519, %v7526
    %7529 = vset.pattern.permute.xlu0 0
    %7530 = vperm.xlu0 %7529, %v7167
    %v7531 = vpop.permute.xlu0 %7530
    %v7534 = vunpack.c.l.s4 839922192
    %v7535 = vunpack.c.0.s8 %v7534
    %v7536 = vlaneseq
    %v7537 = vshrl.u32 %v7536, 7
    %v7538 = vsub.s32 %v7535, %v7537
    %v7539 = vrot.slane %v7531, %v7538
    %7541 = vset.pattern.permute.xlu0 0
    %7542 = vperm.xlu0 %7541, %v7168
    %v7543 = vpop.permute.xlu0 %7542
    %v7546 = vunpack.c.l.s4 839922192
    %v7547 = vunpack.c.0.s8 %v7546
    %v7548 = vlaneseq
    %v7549 = vshrl.u32 %v7548, 7
    %v7550 = vsub.s32 %v7547, %v7549
    %v7551 = vrot.slane %v7543, %v7550
    %7553 = vset.pattern.permute.xlu0 0
    %7554 = vperm.xlu0 %7553, %v7169
    %v7555 = vpop.permute.xlu0 %7554
    %v7558 = vunpack.c.l.s4 839922192
    %v7559 = vunpack.c.0.s8 %v7558
    %v7560 = vlaneseq
    %v7561 = vshrl.u32 %v7560, 7
    %v7562 = vsub.s32 %v7559, %v7561
    %v7563 = vrot.slane %v7555, %v7562
    %7565 = vset.pattern.permute.xlu0 0
    %7566 = vperm.xlu0 %7565, %v7170
    %v7567 = vpop.permute.xlu0 %7566
    %v7570 = vunpack.c.l.s4 839922192
    %v7571 = vunpack.c.0.s8 %v7570
    %v7572 = vlaneseq
    %v7573 = vshrl.u32 %v7572, 7
    %v7574 = vsub.s32 %v7571, %v7573
    %v7575 = vrot.slane %v7567, %v7574
    %7577 = vset.pattern.permute.xlu0 0
    %7578 = vperm.xlu0 %7577, %v7171
    %v7579 = vpop.permute.xlu0 %7578
    %v7582 = vunpack.c.l.s4 839922192
    %v7583 = vunpack.c.0.s8 %v7582
    %v7584 = vlaneseq
    %v7585 = vshrl.u32 %v7584, 7
    %v7586 = vsub.s32 %v7583, %v7585
    %v7587 = vrot.slane %v7579, %v7586
    %7589 = vset.pattern.permute.xlu0 0
    %7590 = vperm.xlu0 %7589, %v7172
    %v7591 = vpop.permute.xlu0 %7590
    %v7594 = vunpack.c.l.s4 839922192
    %v7595 = vunpack.c.0.s8 %v7594
    %v7596 = vlaneseq
    %v7597 = vshrl.u32 %v7596, 7
    %v7598 = vsub.s32 %v7595, %v7597
    %v7599 = vrot.slane %v7591, %v7598
    %7601 = vset.pattern.permute.xlu0 0
    %7602 = vperm.xlu0 %7601, %v7173
    %v7603 = vpop.permute.xlu0 %7602
    %v7606 = vunpack.c.l.s4 839922192
    %v7607 = vunpack.c.0.s8 %v7606
    %v7608 = vlaneseq
    %v7609 = vshrl.u32 %v7608, 7
    %v7610 = vsub.s32 %v7607, %v7609
    %v7611 = vrot.slane %v7603, %v7610
    %7613 = vset.pattern.permute.xlu0 0
    %7614 = vperm.xlu0 %7613, %v7174
    %v7615 = vpop.permute.xlu0 %7614
    %v7618 = vunpack.c.l.s4 839922192
    %v7619 = vunpack.c.0.s8 %v7618
    %v7620 = vlaneseq
    %v7621 = vshrl.u32 %v7620, 7
    %v7622 = vsub.s32 %v7619, %v7621
    %v7623 = vrot.slane %v7615, %v7622
    %7625 = vset.pattern.permute.xlu0 0
    %7626 = vperm.xlu0 %7625, %v7175
    %v7627 = vpop.permute.xlu0 %7626
    %v7630 = vunpack.c.l.s4 839922192
    %v7631 = vunpack.c.0.s8 %v7630
    %v7632 = vlaneseq
    %v7633 = vshrl.u32 %v7632, 7
    %v7634 = vsub.s32 %v7631, %v7633
    %v7635 = vrot.slane %v7627, %v7634
    %7637 = vset.pattern.permute.xlu0 0
    %7638 = vperm.xlu0 %7637, %v7176
    %v7639 = vpop.permute.xlu0 %7638
    %v7642 = vunpack.c.l.s4 839922192
    %v7643 = vunpack.c.0.s8 %v7642
    %v7644 = vlaneseq
    %v7645 = vshrl.u32 %v7644, 7
    %v7646 = vsub.s32 %v7643, %v7645
    %v7647 = vrot.slane %v7639, %v7646
    %7649 = vset.pattern.permute.xlu0 0
    %7650 = vperm.xlu0 %7649, %v7177
    %v7651 = vpop.permute.xlu0 %7650
    %v7654 = vunpack.c.l.s4 839922192
    %v7655 = vunpack.c.0.s8 %v7654
    %v7656 = vlaneseq
    %v7657 = vshrl.u32 %v7656, 7
    %v7658 = vsub.s32 %v7655, %v7657
    %v7659 = vrot.slane %v7651, %v7658
    %7661 = vset.pattern.permute.xlu0 0
    %7662 = vperm.xlu0 %7661, %v7178
    %v7663 = vpop.permute.xlu0 %7662
    %v7666 = vunpack.c.l.s4 839922192
    %v7667 = vunpack.c.0.s8 %v7666
    %v7668 = vlaneseq
    %v7669 = vshrl.u32 %v7668, 7
    %v7670 = vsub.s32 %v7667, %v7669
    %v7671 = vrot.slane %v7663, %v7670
    %7673 = vset.pattern.permute.xlu0 0
    %7674 = vperm.xlu0 %7673, %v7179
    %v7675 = vpop.permute.xlu0 %7674
    %v7678 = vunpack.c.l.s4 839922192
    %v7679 = vunpack.c.0.s8 %v7678
    %v7680 = vlaneseq
    %v7681 = vshrl.u32 %v7680, 7
    %v7682 = vsub.s32 %v7679, %v7681
    %v7683 = vrot.slane %v7675, %v7682
    %7685 = vset.pattern.permute.xlu0 0
    %7686 = vperm.xlu0 %7685, %v7180
    %v7687 = vpop.permute.xlu0 %7686
    %v7690 = vunpack.c.l.s4 839922192
    %v7691 = vunpack.c.0.s8 %v7690
    %v7692 = vlaneseq
    %v7693 = vshrl.u32 %v7692, 7
    %v7694 = vsub.s32 %v7691, %v7693
    %v7695 = vrot.slane %v7687, %v7694
    %7697 = vset.pattern.permute.xlu0 0
    %7698 = vperm.xlu0 %7697, %v7181
    %v7699 = vpop.permute.xlu0 %7698
    %v7702 = vunpack.c.l.s4 839922192
    %v7703 = vunpack.c.0.s8 %v7702
    %v7704 = vlaneseq
    %v7705 = vshrl.u32 %v7704, 7
    %v7706 = vsub.s32 %v7703, %v7705
    %v7707 = vrot.slane %v7699, %v7706
    %7709 = vset.pattern.permute.xlu0 0
    %7710 = vperm.xlu0 %7709, %v7182
    %v7711 = vpop.permute.xlu0 %7710
    %v7714 = vunpack.c.l.s4 839922192
    %v7715 = vunpack.c.0.s8 %v7714
    %v7716 = vlaneseq
    %v7717 = vshrl.u32 %v7716, 7
    %v7718 = vsub.s32 %v7715, %v7717
    %v7719 = vrot.slane %v7711, %v7718
    %7721 = vset.pattern.permute.xlu0 0
    %7722 = vperm.xlu0 %7721, %v7183
    %v7723 = vpop.permute.xlu0 %7722
    %v7726 = vunpack.c.l.s4 839922192
    %v7727 = vunpack.c.0.s8 %v7726
    %v7728 = vlaneseq
    %v7729 = vshrl.u32 %v7728, 7
    %v7730 = vsub.s32 %v7727, %v7729
    %v7731 = vrot.slane %v7723, %v7730
    %7733 = vset.pattern.permute.xlu0 0
    %7734 = vperm.xlu0 %7733, %v7184
    %v7735 = vpop.permute.xlu0 %7734
    %v7738 = vunpack.c.l.s4 839922192
    %v7739 = vunpack.c.0.s8 %v7738
    %v7740 = vlaneseq
    %v7741 = vshrl.u32 %v7740, 7
    %v7742 = vsub.s32 %v7739, %v7741
    %v7743 = vrot.slane %v7735, %v7742
    %7745 = vset.pattern.permute.xlu0 0
    %7746 = vperm.xlu0 %7745, %v7185
    %v7747 = vpop.permute.xlu0 %7746
    %v7750 = vunpack.c.l.s4 839922192
    %v7751 = vunpack.c.0.s8 %v7750
    %v7752 = vlaneseq
    %v7753 = vshrl.u32 %v7752, 7
    %v7754 = vsub.s32 %v7751, %v7753
    %v7755 = vrot.slane %v7747, %v7754
    %7757 = vset.pattern.permute.xlu0 0
    %7758 = vperm.xlu0 %7757, %v7186
    %v7759 = vpop.permute.xlu0 %7758
    %v7762 = vunpack.c.l.s4 839922192
    %v7763 = vunpack.c.0.s8 %v7762
    %v7764 = vlaneseq
    %v7765 = vshrl.u32 %v7764, 7
    %v7766 = vsub.s32 %v7763, %v7765
    %v7767 = vrot.slane %v7759, %v7766
    %7769 = vset.pattern.permute.xlu0 0
    %7770 = vperm.xlu0 %7769, %v7187
    %v7771 = vpop.permute.xlu0 %7770
    %v7774 = vunpack.c.l.s4 839922192
    %v7775 = vunpack.c.0.s8 %v7774
    %v7776 = vlaneseq
    %v7777 = vshrl.u32 %v7776, 7
    %v7778 = vsub.s32 %v7775, %v7777
    %v7779 = vrot.slane %v7771, %v7778
    %7781 = vset.pattern.permute.xlu0 0
    %7782 = vperm.xlu0 %7781, %v7188
    %v7783 = vpop.permute.xlu0 %7782
    %v7786 = vunpack.c.l.s4 839922192
    %v7787 = vunpack.c.0.s8 %v7786
    %v7788 = vlaneseq
    %v7789 = vshrl.u32 %v7788, 7
    %v7790 = vsub.s32 %v7787, %v7789
    %v7791 = vrot.slane %v7783, %v7790
    %7793 = vset.pattern.permute.xlu0 0
    %7794 = vperm.xlu0 %7793, %v7189
    %v7795 = vpop.permute.xlu0 %7794
    %v7798 = vunpack.c.l.s4 839922192
    %v7799 = vunpack.c.0.s8 %v7798
    %v7800 = vlaneseq
    %v7801 = vshrl.u32 %v7800, 7
    %v7802 = vsub.s32 %v7799, %v7801
    %v7803 = vrot.slane %v7795, %v7802
    %7805 = vset.pattern.permute.xlu0 0
    %7806 = vperm.xlu0 %7805, %v7190
    %v7807 = vpop.permute.xlu0 %7806
    %v7810 = vunpack.c.l.s4 839922192
    %v7811 = vunpack.c.0.s8 %v7810
    %v7812 = vlaneseq
    %v7813 = vshrl.u32 %v7812, 7
    %v7814 = vsub.s32 %v7811, %v7813
    %v7815 = vrot.slane %v7807, %v7814
    %7817 = vset.pattern.permute.xlu0 0
    %7818 = vperm.xlu0 %7817, %v7191
    %v7819 = vpop.permute.xlu0 %7818
    %v7822 = vunpack.c.l.s4 839922192
    %v7823 = vunpack.c.0.s8 %v7822
    %v7824 = vlaneseq
    %v7825 = vshrl.u32 %v7824, 7
    %v7826 = vsub.s32 %v7823, %v7825
    %v7827 = vrot.slane %v7819, %v7826
    %7829 = vset.pattern.permute.xlu0 0
    %7830 = vperm.xlu0 %7829, %v7192
    %v7831 = vpop.permute.xlu0 %7830
    %v7834 = vunpack.c.l.s4 839922192
    %v7835 = vunpack.c.0.s8 %v7834
    %v7836 = vlaneseq
    %v7837 = vshrl.u32 %v7836, 7
    %v7838 = vsub.s32 %v7835, %v7837
    %v7839 = vrot.slane %v7831, %v7838
    %7841 = vset.pattern.permute.xlu0 0
    %7842 = vperm.xlu0 %7841, %v7193
    %v7843 = vpop.permute.xlu0 %7842
    %v7846 = vunpack.c.l.s4 839922192
    %v7847 = vunpack.c.0.s8 %v7846
    %v7848 = vlaneseq
    %v7849 = vshrl.u32 %v7848, 7
    %v7850 = vsub.s32 %v7847, %v7849
    %v7851 = vrot.slane %v7843, %v7850
    %7853 = vset.pattern.permute.xlu0 0
    %7854 = vperm.xlu0 %7853, %v7194
    %v7855 = vpop.permute.xlu0 %7854
    %v7858 = vunpack.c.l.s4 839922192
    %v7859 = vunpack.c.0.s8 %v7858
    %v7860 = vlaneseq
    %v7861 = vshrl.u32 %v7860, 7
    %v7862 = vsub.s32 %v7859, %v7861
    %v7863 = vrot.slane %v7855, %v7862
    %7865 = vset.pattern.permute.xlu0 0
    %7866 = vperm.xlu0 %7865, %v7195
    %v7867 = vpop.permute.xlu0 %7866
    %v7870 = vunpack.c.l.s4 839922192
    %v7871 = vunpack.c.0.s8 %v7870
    %v7872 = vlaneseq
    %v7873 = vshrl.u32 %v7872, 7
    %v7874 = vsub.s32 %v7871, %v7873
    %v7875 = vrot.slane %v7867, %v7874
    %7877 = vset.pattern.permute.xlu0 0
    %7878 = vperm.xlu0 %7877, %v7196
    %v7879 = vpop.permute.xlu0 %7878
    %v7882 = vunpack.c.l.s4 839922192
    %v7883 = vunpack.c.0.s8 %v7882
    %v7884 = vlaneseq
    %v7885 = vshrl.u32 %v7884, 7
    %v7886 = vsub.s32 %v7883, %v7885
    %v7887 = vrot.slane %v7879, %v7886
    %7889 = vset.pattern.permute.xlu0 0
    %7890 = vperm.xlu0 %7889, %v7197
    %v7891 = vpop.permute.xlu0 %7890
    %v7894 = vunpack.c.l.s4 839922192
    %v7895 = vunpack.c.0.s8 %v7894
    %v7896 = vlaneseq
    %v7897 = vshrl.u32 %v7896, 7
    %v7898 = vsub.s32 %v7895, %v7897
    %v7899 = vrot.slane %v7891, %v7898
    %7901 = vset.pattern.permute.xlu0 0
    %7902 = vperm.xlu0 %7901, %v7198
    %v7903 = vpop.permute.xlu0 %7902
    %v7906 = vunpack.c.l.s4 839922192
    %v7907 = vunpack.c.0.s8 %v7906
    %v7908 = vlaneseq
    %v7909 = vshrl.u32 %v7908, 7
    %v7910 = vsub.s32 %v7907, %v7909
    %v7911 = vrot.slane %v7903, %v7910
    %7913 = vset.pattern.permute.xlu0 0
    %7914 = vperm.xlu0 %7913, %v7199
    %v7915 = vpop.permute.xlu0 %7914
    %v7918 = vunpack.c.l.s4 839922192
    %v7919 = vunpack.c.0.s8 %v7918
    %v7920 = vlaneseq
    %v7921 = vshrl.u32 %v7920, 7
    %v7922 = vsub.s32 %v7919, %v7921
    %v7923 = vrot.slane %v7915, %v7922
    %7925 = vset.pattern.permute.xlu0 0
    %7926 = vperm.xlu0 %7925, %v7200
    %v7927 = vpop.permute.xlu0 %7926
    %v7930 = vunpack.c.l.s4 839922192
    %v7931 = vunpack.c.0.s8 %v7930
    %v7932 = vlaneseq
    %v7933 = vshrl.u32 %v7932, 7
    %v7934 = vsub.s32 %v7931, %v7933
    %v7935 = vrot.slane %v7927, %v7934
    %7937 = vset.pattern.permute.xlu0 0
    %7938 = vperm.xlu0 %7937, %v7201
    %v7939 = vpop.permute.xlu0 %7938
    %v7942 = vunpack.c.l.s4 839922192
    %v7943 = vunpack.c.0.s8 %v7942
    %v7944 = vlaneseq
    %v7945 = vshrl.u32 %v7944, 7
    %v7946 = vsub.s32 %v7943, %v7945
    %v7947 = vrot.slane %v7939, %v7946
    %7949 = vset.pattern.permute.xlu0 0
    %7950 = vperm.xlu0 %7949, %v7202
    %v7951 = vpop.permute.xlu0 %7950
    %v7954 = vunpack.c.l.s4 839922192
    %v7955 = vunpack.c.0.s8 %v7954
    %v7956 = vlaneseq
    %v7957 = vshrl.u32 %v7956, 7
    %v7958 = vsub.s32 %v7955, %v7957
    %v7959 = vrot.slane %v7951, %v7958
    %7961 = vset.pattern.permute.xlu0 0
    %7962 = vperm.xlu0 %7961, %v7203
    %v7963 = vpop.permute.xlu0 %7962
    %v7966 = vunpack.c.l.s4 839922192
    %v7967 = vunpack.c.0.s8 %v7966
    %v7968 = vlaneseq
    %v7969 = vshrl.u32 %v7968, 7
    %v7970 = vsub.s32 %v7967, %v7969
    %v7971 = vrot.slane %v7963, %v7970
    %v8036 = vunpack.c.l.b16 %v7215
    %v8037 = vunpack.c.l.b16 %v7227
    %v8038 = vunpack.c.l.b16 %v7239
    %v8039 = vunpack.c.l.b16 %v7251
    %v8040 = vunpack.c.l.b16 %v7263
    %v8041 = vunpack.c.l.b16 %v7275
    %v8042 = vunpack.c.l.b16 %v7287
    %v8043 = vunpack.c.l.b16 %v7299
    %v8044 = vunpack.c.l.b16 %v7311
    %v8045 = vunpack.c.l.b16 %v7323
    %v8046 = vunpack.c.l.b16 %v7335
    %v8047 = vunpack.c.l.b16 %v7347
    %v8048 = vunpack.c.l.b16 %v7359
    %v8049 = vunpack.c.l.b16 %v7371
    %v8050 = vunpack.c.l.b16 %v7383
    %v8051 = vunpack.c.l.b16 %v7395
    %v8052 = vunpack.c.l.b16 %v7407
    %v8053 = vunpack.c.l.b16 %v7419
    %v8054 = vunpack.c.l.b16 %v7431
    %v8055 = vunpack.c.l.b16 %v7443
    %v8056 = vunpack.c.l.b16 %v7455
    %v8057 = vunpack.c.l.b16 %v7467
    %v8058 = vunpack.c.l.b16 %v7479
    %v8059 = vunpack.c.l.b16 %v7491
    %v8060 = vunpack.c.l.b16 %v7503
    %v8061 = vunpack.c.l.b16 %v7515
    %v8062 = vunpack.c.l.b16 %v7527
    %v8063 = vunpack.c.l.b16 %v7539
    %v8064 = vunpack.c.l.b16 %v7551
    %v8065 = vunpack.c.l.b16 %v7563
    %v8066 = vunpack.c.l.b16 %v7575
    %v8067 = vunpack.c.l.b16 %v7587
    %v8068 = vunpack.c.l.b16 %v7599
    %v8069 = vunpack.c.l.b16 %v7611
    %v8070 = vunpack.c.l.b16 %v7623
    %v8071 = vunpack.c.l.b16 %v7635
    %v8072 = vunpack.c.l.b16 %v7647
    %v8073 = vunpack.c.l.b16 %v7659
    %v8074 = vunpack.c.l.b16 %v7671
    %v8075 = vunpack.c.l.b16 %v7683
    %v8076 = vunpack.c.l.b16 %v7695
    %v8077 = vunpack.c.l.b16 %v7707
    %v8078 = vunpack.c.l.b16 %v7719
    %v8079 = vunpack.c.l.b16 %v7731
    %v8080 = vunpack.c.l.b16 %v7743
    %v8081 = vunpack.c.l.b16 %v7755
    %v8082 = vunpack.c.l.b16 %v7767
    %v8083 = vunpack.c.l.b16 %v7779
    %v8084 = vunpack.c.l.b16 %v7791
    %v8085 = vunpack.c.l.b16 %v7803
    %v8086 = vunpack.c.l.b16 %v7815
    %v8087 = vunpack.c.l.b16 %v7827
    %v8088 = vunpack.c.l.b16 %v7839
    %v8089 = vunpack.c.l.b16 %v7851
    %v8090 = vunpack.c.l.b16 %v7863
    %v8091 = vunpack.c.l.b16 %v7875
    %v8092 = vunpack.c.l.b16 %v7887
    %v8093 = vunpack.c.l.b16 %v7899
    %v8094 = vunpack.c.l.b16 %v7911
    %v8095 = vunpack.c.l.b16 %v7923
    %v8096 = vunpack.c.l.b16 %v7935
    %v8097 = vunpack.c.l.b16 %v7947
    %v8098 = vunpack.c.l.b16 %v7959
    %v8099 = vunpack.c.l.b16 %v7971
    %v8100 = vpack.c.b16 %v8037, %v8036
    %v8101 = vpack.c.b16 %v8039, %v8038
    %v8102 = vpack.c.b16 %v8041, %v8040
    %v8103 = vpack.c.b16 %v8043, %v8042
    %v8104 = vpack.c.b16 %v8045, %v8044
    %v8105 = vpack.c.b16 %v8047, %v8046
    %v8106 = vpack.c.b16 %v8049, %v8048
    %v8107 = vpack.c.b16 %v8051, %v8050
    %v8108 = vpack.c.b16 %v8053, %v8052
    %v8109 = vpack.c.b16 %v8055, %v8054
    %v8110 = vpack.c.b16 %v8057, %v8056
    %v8111 = vpack.c.b16 %v8059, %v8058
    %v8112 = vpack.c.b16 %v8061, %v8060
    %v8113 = vpack.c.b16 %v8063, %v8062
    %v8114 = vpack.c.b16 %v8065, %v8064
    %v8115 = vpack.c.b16 %v8067, %v8066
    %v8116 = vpack.c.b16 %v8069, %v8068
    %v8117 = vpack.c.b16 %v8071, %v8070
    %v8118 = vpack.c.b16 %v8073, %v8072
    %v8119 = vpack.c.b16 %v8075, %v8074
    %v8120 = vpack.c.b16 %v8077, %v8076
    %v8121 = vpack.c.b16 %v8079, %v8078
    %v8122 = vpack.c.b16 %v8081, %v8080
    %v8123 = vpack.c.b16 %v8083, %v8082
    %v8124 = vpack.c.b16 %v8085, %v8084
    %v8125 = vpack.c.b16 %v8087, %v8086
    %v8126 = vpack.c.b16 %v8089, %v8088
    %v8127 = vpack.c.b16 %v8091, %v8090
    %v8128 = vpack.c.b16 %v8093, %v8092
    %v8129 = vpack.c.b16 %v8095, %v8094
    %v8130 = vpack.c.b16 %v8097, %v8096
    %v8131 = vpack.c.b16 %v8099, %v8098
    %v8164 = vadd.bf16 %v7108, %v8100
    %v8165 = vadd.bf16 %v7109, %v8101
    %v8166 = vadd.bf16 %v7110, %v8102
    %v8167 = vadd.bf16 %v7111, %v8103
    %v8168 = vadd.bf16 %v7112, %v8104
    %v8169 = vadd.bf16 %v7113, %v8105
    %v8170 = vadd.bf16 %v7114, %v8106
    %v8171 = vadd.bf16 %v7115, %v8107
    %v8172 = vadd.bf16 %v7116, %v8108
    %v8173 = vadd.bf16 %v7117, %v8109
    %v8174 = vadd.bf16 %v7118, %v8110
    %v8175 = vadd.bf16 %v7119, %v8111
    %v8176 = vadd.bf16 %v7120, %v8112
    %v8177 = vadd.bf16 %v7121, %v8113
    %v8178 = vadd.bf16 %v7122, %v8114
    %v8179 = vadd.bf16 %v7123, %v8115
    %v8180 = vadd.bf16 %v7124, %v8116
    %v8181 = vadd.bf16 %v7125, %v8117
    %v8182 = vadd.bf16 %v7126, %v8118
    %v8183 = vadd.bf16 %v7127, %v8119
    %v8184 = vadd.bf16 %v7128, %v8120
    %v8185 = vadd.bf16 %v7129, %v8121
    %v8186 = vadd.bf16 %v7130, %v8122
    %v8187 = vadd.bf16 %v7131, %v8123
    %v8188 = vadd.bf16 %v7132, %v8124
    %v8189 = vadd.bf16 %v7133, %v8125
    %v8190 = vadd.bf16 %v7134, %v8126
    %v8191 = vadd.bf16 %v7135, %v8127
    %v8192 = vadd.bf16 %v7136, %v8128
    %v8193 = vadd.bf16 %v7137, %v8129
    %v8194 = vadd.bf16 %v7138, %v8130
    %v8195 = vadd.bf16 %v7139, %v8131
    %vm8196 = vcmp.gt.bf16.partialorder %v8164, 0
    %vm8197 = vcmp.gt.bf16.partialorder %v8165, 0
    %vm8198 = vcmp.gt.bf16.partialorder %v8166, 0
    %vm8199 = vcmp.gt.bf16.partialorder %v8167, 0
    %vm8200 = vcmp.gt.bf16.partialorder %v8168, 0
    %vm8201 = vcmp.gt.bf16.partialorder %v8169, 0
    %vm8202 = vcmp.gt.bf16.partialorder %v8170, 0
    %vm8203 = vcmp.gt.bf16.partialorder %v8171, 0
    %vm8204 = vcmp.gt.bf16.partialorder %v8172, 0
    %vm8205 = vcmp.gt.bf16.partialorder %v8173, 0
    %vm8206 = vcmp.gt.bf16.partialorder %v8174, 0
    %vm8207 = vcmp.gt.bf16.partialorder %v8175, 0
    %vm8208 = vcmp.gt.bf16.partialorder %v8176, 0
    %vm8209 = vcmp.gt.bf16.partialorder %v8177, 0
    %vm8210 = vcmp.gt.bf16.partialorder %v8178, 0
    %vm8211 = vcmp.gt.bf16.partialorder %v8179, 0
    %vm8212 = vcmp.gt.bf16.partialorder %v8180, 0
    %vm8213 = vcmp.gt.bf16.partialorder %v8181, 0
    %vm8214 = vcmp.gt.bf16.partialorder %v8182, 0
    %vm8215 = vcmp.gt.bf16.partialorder %v8183, 0
    %vm8216 = vcmp.gt.bf16.partialorder %v8184, 0
    %vm8217 = vcmp.gt.bf16.partialorder %v8185, 0
    %vm8218 = vcmp.gt.bf16.partialorder %v8186, 0
    %vm8219 = vcmp.gt.bf16.partialorder %v8187, 0
    %vm8220 = vcmp.gt.bf16.partialorder %v8188, 0
    %vm8221 = vcmp.gt.bf16.partialorder %v8189, 0
    %vm8222 = vcmp.gt.bf16.partialorder %v8190, 0
    %vm8223 = vcmp.gt.bf16.partialorder %v8191, 0
    %vm8224 = vcmp.gt.bf16.partialorder %v8192, 0
    %vm8225 = vcmp.gt.bf16.partialorder %v8193, 0
    %vm8226 = vcmp.gt.bf16.partialorder %v8194, 0
    %vm8227 = vcmp.gt.bf16.partialorder %v8195, 0
    %v8228 = vmul.bf16 %v8164, 1045249613
    %v8229 = vmul.bf16 %v8165, 1045249613
    %v8230 = vmul.bf16 %v8166, 1045249613
    %v8231 = vmul.bf16 %v8167, 1045249613
    %v8232 = vmul.bf16 %v8168, 1045249613
    %v8233 = vmul.bf16 %v8169, 1045249613
    %v8234 = vmul.bf16 %v8170, 1045249613
    %v8235 = vmul.bf16 %v8171, 1045249613
    %v8236 = vmul.bf16 %v8172, 1045249613
    %v8237 = vmul.bf16 %v8173, 1045249613
    %v8238 = vmul.bf16 %v8174, 1045249613
    %v8239 = vmul.bf16 %v8175, 1045249613
    %v8240 = vmul.bf16 %v8176, 1045249613
    %v8241 = vmul.bf16 %v8177, 1045249613
    %v8242 = vmul.bf16 %v8178, 1045249613
    %v8243 = vmul.bf16 %v8179, 1045249613
    %v8244 = vmul.bf16 %v8180, 1045249613
    %v8245 = vmul.bf16 %v8181, 1045249613
    %v8246 = vmul.bf16 %v8182, 1045249613
    %v8247 = vmul.bf16 %v8183, 1045249613
    %v8248 = vmul.bf16 %v8184, 1045249613
    %v8249 = vmul.bf16 %v8185, 1045249613
    %v8250 = vmul.bf16 %v8186, 1045249613
    %v8251 = vmul.bf16 %v8187, 1045249613
    %v8252 = vmul.bf16 %v8188, 1045249613
    %v8253 = vmul.bf16 %v8189, 1045249613
    %v8254 = vmul.bf16 %v8190, 1045249613
    %v8255 = vmul.bf16 %v8191, 1045249613
    %v8256 = vmul.bf16 %v8192, 1045249613
    %v8257 = vmul.bf16 %v8193, 1045249613
    %v8258 = vmul.bf16 %v8194, 1045249613
    %v8259 = vmul.bf16 %v8195, 1045249613
    %v8260 = vsel %vm8196, %v8164, %v8228
    %v8261 = vsel %vm8197, %v8165, %v8229
    %v8262 = vsel %vm8198, %v8166, %v8230
    %v8263 = vsel %vm8199, %v8167, %v8231
    %v8264 = vsel %vm8200, %v8168, %v8232
    %v8265 = vsel %vm8201, %v8169, %v8233
    %v8266 = vsel %vm8202, %v8170, %v8234
    %v8267 = vsel %vm8203, %v8171, %v8235
    %v8268 = vsel %vm8204, %v8172, %v8236
    %v8269 = vsel %vm8205, %v8173, %v8237
    %v8270 = vsel %vm8206, %v8174, %v8238
    %v8271 = vsel %vm8207, %v8175, %v8239
    %v8272 = vsel %vm8208, %v8176, %v8240
    %v8273 = vsel %vm8209, %v8177, %v8241
    %v8274 = vsel %vm8210, %v8178, %v8242
    %v8275 = vsel %vm8211, %v8179, %v8243
    %v8276 = vsel %vm8212, %v8180, %v8244
    %v8277 = vsel %vm8213, %v8181, %v8245
    %v8278 = vsel %vm8214, %v8182, %v8246
    %v8279 = vsel %vm8215, %v8183, %v8247
    %v8280 = vsel %vm8216, %v8184, %v8248
    %v8281 = vsel %vm8217, %v8185, %v8249
    %v8282 = vsel %vm8218, %v8186, %v8250
    %v8283 = vsel %vm8219, %v8187, %v8251
    %v8284 = vsel %vm8220, %v8188, %v8252
    %v8285 = vsel %vm8221, %v8189, %v8253
    %v8286 = vsel %vm8222, %v8190, %v8254
    %v8287 = vsel %vm8223, %v8191, %v8255
    %v8288 = vsel %vm8224, %v8192, %v8256
    %v8289 = vsel %vm8225, %v8193, %v8257
    %v8290 = vsel %vm8226, %v8194, %v8258
    %v8291 = vsel %vm8227, %v8195, %v8259
    %v8292 = vld [vmem:[%s5] sm:$0xff]
    %v8293 = vld [vmem:[%s5 + $0x8] sm:$0xff]
    %v8294 = vld [vmem:[%s5 + $0x10] sm:$0xff]
    %v8295 = vld [vmem:[%s5 + $0x18] sm:$0xff]
    %v8296 = vld [vmem:[%s5 + $0x20] sm:$0xff]
    %v8297 = vld [vmem:[%s5 + $0x28] sm:$0xff]
    %v8298 = vld [vmem:[%s5 + $0x30] sm:$0xff]
    %v8299 = vld [vmem:[%s5 + $0x38] sm:$0xff]
    %v8300 = vld [vmem:[%s5 + $0x40] sm:$0xff]
    %v8301 = vld [vmem:[%s5 + $0x48] sm:$0xff]
    %v8302 = vld [vmem:[%s5 + $0x50] sm:$0xff]
    %v8303 = vld [vmem:[%s5 + $0x58] sm:$0xff]
    %v8304 = vld [vmem:[%s5 + $0x60] sm:$0xff]
    %v8305 = vld [vmem:[%s5 + $0x68] sm:$0xff]
    %v8306 = vld [vmem:[%s5 + $0x70] sm:$0xff]
    %v8307 = vld [vmem:[%s5 + $0x78] sm:$0xff]
    %v8308 = vld [vmem:[%s5 + $0x80] sm:$0xff]
    %v8309 = vld [vmem:[%s5 + $0x88] sm:$0xff]
    %v8310 = vld [vmem:[%s5 + $0x90] sm:$0xff]
    %v8311 = vld [vmem:[%s5 + $0x98] sm:$0xff]
    %v8312 = vld [vmem:[%s5 + $0xa0] sm:$0xff]
    %v8313 = vld [vmem:[%s5 + $0xa8] sm:$0xff]
    %v8314 = vld [vmem:[%s5 + $0xb0] sm:$0xff]
    %v8315 = vld [vmem:[%s5 + $0xb8] sm:$0xff]
    %v8316 = vld [vmem:[%s5 + $0xc0] sm:$0xff]
    %v8317 = vld [vmem:[%s5 + $0xc8] sm:$0xff]
    %v8318 = vld [vmem:[%s5 + $0xd0] sm:$0xff]
    %v8319 = vld [vmem:[%s5 + $0xd8] sm:$0xff]
    %v8320 = vld [vmem:[%s5 + $0xe0] sm:$0xff]
    %v8321 = vld [vmem:[%s5 + $0xe8] sm:$0xff]
    %v8322 = vld [vmem:[%s5 + $0xf0] sm:$0xff]
    %v8323 = vld [vmem:[%s5 + $0xf8] sm:$0xff]
    %v8324 = vld [vmem:[%s5 + $0x100] sm:$0xff]
    %v8325 = vld [vmem:[%s5 + $0x108] sm:$0xff]
    %v8326 = vld [vmem:[%s5 + $0x110] sm:$0xff]
    %v8327 = vld [vmem:[%s5 + $0x118] sm:$0xff]
    %v8328 = vld [vmem:[%s5 + $0x120] sm:$0xff]
    %v8329 = vld [vmem:[%s5 + $0x128] sm:$0xff]
    %v8330 = vld [vmem:[%s5 + $0x130] sm:$0xff]
    %v8331 = vld [vmem:[%s5 + $0x138] sm:$0xff]
    %v8332 = vld [vmem:[%s5 + $0x140] sm:$0xff]
    %v8333 = vld [vmem:[%s5 + $0x148] sm:$0xff]
    %v8334 = vld [vmem:[%s5 + $0x150] sm:$0xff]
    %v8335 = vld [vmem:[%s5 + $0x158] sm:$0xff]
    %v8336 = vld [vmem:[%s5 + $0x160] sm:$0xff]
    %v8337 = vld [vmem:[%s5 + $0x168] sm:$0xff]
    %v8338 = vld [vmem:[%s5 + $0x170] sm:$0xff]
    %v8339 = vld [vmem:[%s5 + $0x178] sm:$0xff]
    %v8340 = vld [vmem:[%s5 + $0x180] sm:$0xff]
    %v8341 = vld [vmem:[%s5 + $0x188] sm:$0xff]
    %v8342 = vld [vmem:[%s5 + $0x190] sm:$0xff]
    %v8343 = vld [vmem:[%s5 + $0x198] sm:$0xff]
    %v8344 = vld [vmem:[%s5 + $0x1a0] sm:$0xff]
    %v8345 = vld [vmem:[%s5 + $0x1a8] sm:$0xff]
    %v8346 = vld [vmem:[%s5 + $0x1b0] sm:$0xff]
    %v8347 = vld [vmem:[%s5 + $0x1b8] sm:$0xff]
    %v8348 = vld [vmem:[%s5 + $0x1c0] sm:$0xff]
    %v8349 = vld [vmem:[%s5 + $0x1c8] sm:$0xff]
    %v8350 = vld [vmem:[%s5 + $0x1d0] sm:$0xff]
    %v8351 = vld [vmem:[%s5 + $0x1d8] sm:$0xff]
    %v8352 = vld [vmem:[%s5 + $0x1e0] sm:$0xff]
    %v8353 = vld [vmem:[%s5 + $0x1e8] sm:$0xff]
    %v8354 = vld [vmem:[%s5 + $0x1f0] sm:$0xff]
    %v8355 = vld [vmem:[%s5 + $0x1f8] sm:$0xff]
    %v8356 = vld [vmem:[%s6] sm:$0xff]
    %v8357 = vld [vmem:[%s6 + $0x8] sm:$0xff]
    %v8358 = vld [vmem:[%s6 + $0x10] sm:$0xff]
    %v8359 = vld [vmem:[%s6 + $0x18] sm:$0xff]
    %v8360 = vld [vmem:[%s6 + $0x20] sm:$0xff]
    %v8361 = vld [vmem:[%s6 + $0x28] sm:$0xff]
    %v8362 = vld [vmem:[%s6 + $0x30] sm:$0xff]
    %v8363 = vld [vmem:[%s6 + $0x38] sm:$0xff]
    %v8364 = vld [vmem:[%s6 + $0x40] sm:$0xff]
    %v8365 = vld [vmem:[%s6 + $0x48] sm:$0xff]
    %v8366 = vld [vmem:[%s6 + $0x50] sm:$0xff]
    %v8367 = vld [vmem:[%s6 + $0x58] sm:$0xff]
    %v8368 = vld [vmem:[%s6 + $0x60] sm:$0xff]
    %v8369 = vld [vmem:[%s6 + $0x68] sm:$0xff]
    %v8370 = vld [vmem:[%s6 + $0x70] sm:$0xff]
    %v8371 = vld [vmem:[%s6 + $0x78] sm:$0xff]
    %v8372 = vld [vmem:[%s6 + $0x80] sm:$0xff]
    %v8373 = vld [vmem:[%s6 + $0x88] sm:$0xff]
    %v8374 = vld [vmem:[%s6 + $0x90] sm:$0xff]
    %v8375 = vld [vmem:[%s6 + $0x98] sm:$0xff]
    %v8376 = vld [vmem:[%s6 + $0xa0] sm:$0xff]
    %v8377 = vld [vmem:[%s6 + $0xa8] sm:$0xff]
    %v8378 = vld [vmem:[%s6 + $0xb0] sm:$0xff]
    %v8379 = vld [vmem:[%s6 + $0xb8] sm:$0xff]
    %v8380 = vld [vmem:[%s6 + $0xc0] sm:$0xff]
    %v8381 = vld [vmem:[%s6 + $0xc8] sm:$0xff]
    %v8382 = vld [vmem:[%s6 + $0xd0] sm:$0xff]
    %v8383 = vld [vmem:[%s6 + $0xd8] sm:$0xff]
    %v8384 = vld [vmem:[%s6 + $0xe0] sm:$0xff]
    %v8385 = vld [vmem:[%s6 + $0xe8] sm:$0xff]
    %v8386 = vld [vmem:[%s6 + $0xf0] sm:$0xff]
    %v8387 = vld [vmem:[%s6 + $0xf8] sm:$0xff]
    %8389 = vset.pattern.permute.xlu0 0
    %8390 = vperm.xlu0 %8389, %v8356
    %v8391 = vpop.permute.xlu0 %8390
    %8394 = vset.pattern.permute.xlu0 0
    %8395 = vperm.xlu0 %8394, %v8357
    %v8396 = vpop.permute.xlu0 %8395
    %8399 = vset.pattern.permute.xlu0 0
    %8400 = vperm.xlu0 %8399, %v8358
    %v8401 = vpop.permute.xlu0 %8400
    %8404 = vset.pattern.permute.xlu0 0
    %8405 = vperm.xlu0 %8404, %v8359
    %v8406 = vpop.permute.xlu0 %8405
    %8409 = vset.pattern.permute.xlu0 0
    %8410 = vperm.xlu0 %8409, %v8360
    %v8411 = vpop.permute.xlu0 %8410
    %8414 = vset.pattern.permute.xlu0 0
    %8415 = vperm.xlu0 %8414, %v8361
    %v8416 = vpop.permute.xlu0 %8415
    %8419 = vset.pattern.permute.xlu0 0
    %8420 = vperm.xlu0 %8419, %v8362
    %v8421 = vpop.permute.xlu0 %8420
    %8424 = vset.pattern.permute.xlu0 0
    %8425 = vperm.xlu0 %8424, %v8363
    %v8426 = vpop.permute.xlu0 %8425
    %8429 = vset.pattern.permute.xlu0 0
    %8430 = vperm.xlu0 %8429, %v8364
    %v8431 = vpop.permute.xlu0 %8430
    %8434 = vset.pattern.permute.xlu0 0
    %8435 = vperm.xlu0 %8434, %v8365
    %v8436 = vpop.permute.xlu0 %8435
    %8439 = vset.pattern.permute.xlu0 0
    %8440 = vperm.xlu0 %8439, %v8366
    %v8441 = vpop.permute.xlu0 %8440
    %8444 = vset.pattern.permute.xlu0 0
    %8445 = vperm.xlu0 %8444, %v8367
    %v8446 = vpop.permute.xlu0 %8445
    %8449 = vset.pattern.permute.xlu0 0
    %8450 = vperm.xlu0 %8449, %v8368
    %v8451 = vpop.permute.xlu0 %8450
    %8454 = vset.pattern.permute.xlu0 0
    %8455 = vperm.xlu0 %8454, %v8369
    %v8456 = vpop.permute.xlu0 %8455
    %8459 = vset.pattern.permute.xlu0 0
    %8460 = vperm.xlu0 %8459, %v8370
    %v8461 = vpop.permute.xlu0 %8460
    %8464 = vset.pattern.permute.xlu0 0
    %8465 = vperm.xlu0 %8464, %v8371
    %v8466 = vpop.permute.xlu0 %8465
    %8469 = vset.pattern.permute.xlu0 0
    %8470 = vperm.xlu0 %8469, %v8372
    %v8471 = vpop.permute.xlu0 %8470
    %8474 = vset.pattern.permute.xlu0 0
    %8475 = vperm.xlu0 %8474, %v8373
    %v8476 = vpop.permute.xlu0 %8475
    %8479 = vset.pattern.permute.xlu0 0
    %8480 = vperm.xlu0 %8479, %v8374
    %v8481 = vpop.permute.xlu0 %8480
    %8484 = vset.pattern.permute.xlu0 0
    %8485 = vperm.xlu0 %8484, %v8375
    %v8486 = vpop.permute.xlu0 %8485
    %8489 = vset.pattern.permute.xlu0 0
    %8490 = vperm.xlu0 %8489, %v8376
    %v8491 = vpop.permute.xlu0 %8490
    %8494 = vset.pattern.permute.xlu0 0
    %8495 = vperm.xlu0 %8494, %v8377
    %v8496 = vpop.permute.xlu0 %8495
    %8499 = vset.pattern.permute.xlu0 0
    %8500 = vperm.xlu0 %8499, %v8378
    %v8501 = vpop.permute.xlu0 %8500
    %8504 = vset.pattern.permute.xlu0 0
    %8505 = vperm.xlu0 %8504, %v8379
    %v8506 = vpop.permute.xlu0 %8505
    %8509 = vset.pattern.permute.xlu0 0
    %8510 = vperm.xlu0 %8509, %v8380
    %v8511 = vpop.permute.xlu0 %8510
    %8514 = vset.pattern.permute.xlu0 0
    %8515 = vperm.xlu0 %8514, %v8381
    %v8516 = vpop.permute.xlu0 %8515
    %8519 = vset.pattern.permute.xlu0 0
    %8520 = vperm.xlu0 %8519, %v8382
    %v8521 = vpop.permute.xlu0 %8520
    %8524 = vset.pattern.permute.xlu0 0
    %8525 = vperm.xlu0 %8524, %v8383
    %v8526 = vpop.permute.xlu0 %8525
    %8529 = vset.pattern.permute.xlu0 0
    %8530 = vperm.xlu0 %8529, %v8384
    %v8531 = vpop.permute.xlu0 %8530
    %8534 = vset.pattern.permute.xlu0 0
    %8535 = vperm.xlu0 %8534, %v8385
    %v8536 = vpop.permute.xlu0 %8535
    %8539 = vset.pattern.permute.xlu0 0
    %8540 = vperm.xlu0 %8539, %v8386
    %v8541 = vpop.permute.xlu0 %8540
    %8544 = vset.pattern.permute.xlu0 0
    %8545 = vperm.xlu0 %8544, %v8387
    %v8546 = vpop.permute.xlu0 %8545
    %v8612 = vunpack.c.l.b16 %v8292
    %v8613 = vunpack.c.h.b16 %v8292
    %v8614 = vunpack.c.l.b16 %v8293
    %v8615 = vunpack.c.h.b16 %v8293
    %v8616 = vunpack.c.l.b16 %v8294
    %v8617 = vunpack.c.h.b16 %v8294
    %v8618 = vunpack.c.l.b16 %v8295
    %v8619 = vunpack.c.h.b16 %v8295
    %v8620 = vunpack.c.l.b16 %v8296
    %v8621 = vunpack.c.h.b16 %v8296
    %v8622 = vunpack.c.l.b16 %v8297
    %v8623 = vunpack.c.h.b16 %v8297
    %v8624 = vunpack.c.l.b16 %v8298
    %v8625 = vunpack.c.h.b16 %v8298
    %v8626 = vunpack.c.l.b16 %v8299
    %v8627 = vunpack.c.h.b16 %v8299
    %v8628 = vunpack.c.l.b16 %v8300
    %v8629 = vunpack.c.h.b16 %v8300
    %v8630 = vunpack.c.l.b16 %v8301
    %v8631 = vunpack.c.h.b16 %v8301
    %v8632 = vunpack.c.l.b16 %v8302
    %v8633 = vunpack.c.h.b16 %v8302
    %v8634 = vunpack.c.l.b16 %v8303
    %v8635 = vunpack.c.h.b16 %v8303
    %v8636 = vunpack.c.l.b16 %v8304
    %v8637 = vunpack.c.h.b16 %v8304
    %v8638 = vunpack.c.l.b16 %v8305
    %v8639 = vunpack.c.h.b16 %v8305
    %v8640 = vunpack.c.l.b16 %v8306
    %v8641 = vunpack.c.h.b16 %v8306
    %v8642 = vunpack.c.l.b16 %v8307
    %v8643 = vunpack.c.h.b16 %v8307
    %v8644 = vunpack.c.l.b16 %v8308
    %v8645 = vunpack.c.h.b16 %v8308
    %v8646 = vunpack.c.l.b16 %v8309
    %v8647 = vunpack.c.h.b16 %v8309
    %v8648 = vunpack.c.l.b16 %v8310
    %v8649 = vunpack.c.h.b16 %v8310
    %v8650 = vunpack.c.l.b16 %v8311
    %v8651 = vunpack.c.h.b16 %v8311
    %v8652 = vunpack.c.l.b16 %v8312
    %v8653 = vunpack.c.h.b16 %v8312
    %v8654 = vunpack.c.l.b16 %v8313
    %v8655 = vunpack.c.h.b16 %v8313
    %v8656 = vunpack.c.l.b16 %v8314
    %v8657 = vunpack.c.h.b16 %v8314
    %v8658 = vunpack.c.l.b16 %v8315
    %v8659 = vunpack.c.h.b16 %v8315
    %v8660 = vunpack.c.l.b16 %v8316
    %v8661 = vunpack.c.h.b16 %v8316
    %v8662 = vunpack.c.l.b16 %v8317
    %v8663 = vunpack.c.h.b16 %v8317
    %v8664 = vunpack.c.l.b16 %v8318
    %v8665 = vunpack.c.h.b16 %v8318
    %v8666 = vunpack.c.l.b16 %v8319
    %v8667 = vunpack.c.h.b16 %v8319
    %v8668 = vunpack.c.l.b16 %v8320
    %v8669 = vunpack.c.h.b16 %v8320
    %v8670 = vunpack.c.l.b16 %v8321
    %v8671 = vunpack.c.h.b16 %v8321
    %v8672 = vunpack.c.l.b16 %v8322
    %v8673 = vunpack.c.h.b16 %v8322
    %v8674 = vunpack.c.l.b16 %v8323
    %v8675 = vunpack.c.h.b16 %v8323
    %v8676 = vunpack.c.l.b16 %v8324
    %v8677 = vunpack.c.h.b16 %v8324
    %v8678 = vunpack.c.l.b16 %v8325
    %v8679 = vunpack.c.h.b16 %v8325
    %v8680 = vunpack.c.l.b16 %v8326
    %v8681 = vunpack.c.h.b16 %v8326
    %v8682 = vunpack.c.l.b16 %v8327
    %v8683 = vunpack.c.h.b16 %v8327
    %v8684 = vunpack.c.l.b16 %v8328
    %v8685 = vunpack.c.h.b16 %v8328
    %v8686 = vunpack.c.l.b16 %v8329
    %v8687 = vunpack.c.h.b16 %v8329
    %v8688 = vunpack.c.l.b16 %v8330
    %v8689 = vunpack.c.h.b16 %v8330
    %v8690 = vunpack.c.l.b16 %v8331
    %v8691 = vunpack.c.h.b16 %v8331
    %v8692 = vunpack.c.l.b16 %v8332
    %v8693 = vunpack.c.h.b16 %v8332
    %v8694 = vunpack.c.l.b16 %v8333
    %v8695 = vunpack.c.h.b16 %v8333
    %v8696 = vunpack.c.l.b16 %v8334
    %v8697 = vunpack.c.h.b16 %v8334
    %v8698 = vunpack.c.l.b16 %v8335
    %v8699 = vunpack.c.h.b16 %v8335
    %v8700 = vunpack.c.l.b16 %v8336
    %v8701 = vunpack.c.h.b16 %v8336
    %v8702 = vunpack.c.l.b16 %v8337
    %v8703 = vunpack.c.h.b16 %v8337
    %v8704 = vunpack.c.l.b16 %v8338
    %v8705 = vunpack.c.h.b16 %v8338
    %v8706 = vunpack.c.l.b16 %v8339
    %v8707 = vunpack.c.h.b16 %v8339
    %v8708 = vunpack.c.l.b16 %v8340
    %v8709 = vunpack.c.h.b16 %v8340
    %v8710 = vunpack.c.l.b16 %v8341
    %v8711 = vunpack.c.h.b16 %v8341
    %v8712 = vunpack.c.l.b16 %v8342
    %v8713 = vunpack.c.h.b16 %v8342
    %v8714 = vunpack.c.l.b16 %v8343
    %v8715 = vunpack.c.h.b16 %v8343
    %v8716 = vunpack.c.l.b16 %v8344
    %v8717 = vunpack.c.h.b16 %v8344
    %v8718 = vunpack.c.l.b16 %v8345
    %v8719 = vunpack.c.h.b16 %v8345
    %v8720 = vunpack.c.l.b16 %v8346
    %v8721 = vunpack.c.h.b16 %v8346
    %v8722 = vunpack.c.l.b16 %v8347
    %v8723 = vunpack.c.h.b16 %v8347
    %v8724 = vunpack.c.l.b16 %v8348
    %v8725 = vunpack.c.h.b16 %v8348
    %v8726 = vunpack.c.l.b16 %v8349
    %v8727 = vunpack.c.h.b16 %v8349
    %v8728 = vunpack.c.l.b16 %v8350
    %v8729 = vunpack.c.h.b16 %v8350
    %v8730 = vunpack.c.l.b16 %v8351
    %v8731 = vunpack.c.h.b16 %v8351
    %v8732 = vunpack.c.l.b16 %v8352
    %v8733 = vunpack.c.h.b16 %v8352
    %v8734 = vunpack.c.l.b16 %v8353
    %v8735 = vunpack.c.h.b16 %v8353
    %v8736 = vunpack.c.l.b16 %v8354
    %v8737 = vunpack.c.h.b16 %v8354
    %v8738 = vunpack.c.l.b16 %v8355
    %v8739 = vunpack.c.h.b16 %v8355
    %v8740 = vpack.c.b16 %v8616, %v8612
    %v8741 = vpack.c.b16 %v8617, %v8613
    %v8742 = vpack.c.b16 %v8618, %v8614
    %v8743 = vpack.c.b16 %v8619, %v8615
    %v8744 = vpack.c.b16 %v8624, %v8620
    %v8745 = vpack.c.b16 %v8625, %v8621
    %v8746 = vpack.c.b16 %v8626, %v8622
    %v8747 = vpack.c.b16 %v8627, %v8623
    %v8748 = vpack.c.b16 %v8632, %v8628
    %v8749 = vpack.c.b16 %v8633, %v8629
    %v8750 = vpack.c.b16 %v8634, %v8630
    %v8751 = vpack.c.b16 %v8635, %v8631
    %v8752 = vpack.c.b16 %v8640, %v8636
    %v8753 = vpack.c.b16 %v8641, %v8637
    %v8754 = vpack.c.b16 %v8642, %v8638
    %v8755 = vpack.c.b16 %v8643, %v8639
    %v8756 = vpack.c.b16 %v8648, %v8644
    %v8757 = vpack.c.b16 %v8649, %v8645
    %v8758 = vpack.c.b16 %v8650, %v8646
    %v8759 = vpack.c.b16 %v8651, %v8647
    %v8760 = vpack.c.b16 %v8656, %v8652
    %v8761 = vpack.c.b16 %v8657, %v8653
    %v8762 = vpack.c.b16 %v8658, %v8654
    %v8763 = vpack.c.b16 %v8659, %v8655
    %v8764 = vpack.c.b16 %v8664, %v8660
    %v8765 = vpack.c.b16 %v8665, %v8661
    %v8766 = vpack.c.b16 %v8666, %v8662
    %v8767 = vpack.c.b16 %v8667, %v8663
    %v8768 = vpack.c.b16 %v8672, %v8668
    %v8769 = vpack.c.b16 %v8673, %v8669
    %v8770 = vpack.c.b16 %v8674, %v8670
    %v8771 = vpack.c.b16 %v8675, %v8671
    %v8772 = vpack.c.b16 %v8680, %v8676
    %v8773 = vpack.c.b16 %v8681, %v8677
    %v8774 = vpack.c.b16 %v8682, %v8678
    %v8775 = vpack.c.b16 %v8683, %v8679
    %v8776 = vpack.c.b16 %v8688, %v8684
    %v8777 = vpack.c.b16 %v8689, %v8685
    %v8778 = vpack.c.b16 %v8690, %v8686
    %v8779 = vpack.c.b16 %v8691, %v8687
    %v8780 = vpack.c.b16 %v8696, %v8692
    %v8781 = vpack.c.b16 %v8697, %v8693
    %v8782 = vpack.c.b16 %v8698, %v8694
    %v8783 = vpack.c.b16 %v8699, %v8695
    %v8784 = vpack.c.b16 %v8704, %v8700
    %v8785 = vpack.c.b16 %v8705, %v8701
    %v8786 = vpack.c.b16 %v8706, %v8702
    %v8787 = vpack.c.b16 %v8707, %v8703
    %v8788 = vpack.c.b16 %v8712, %v8708
    %v8789 = vpack.c.b16 %v8713, %v8709
    %v8790 = vpack.c.b16 %v8714, %v8710
    %v8791 = vpack.c.b16 %v8715, %v8711
    %v8792 = vpack.c.b16 %v8720, %v8716
    %v8793 = vpack.c.b16 %v8721, %v8717
    %v8794 = vpack.c.b16 %v8722, %v8718
    %v8795 = vpack.c.b16 %v8723, %v8719
    %v8796 = vpack.c.b16 %v8728, %v8724
    %v8797 = vpack.c.b16 %v8729, %v8725
    %v8798 = vpack.c.b16 %v8730, %v8726
    %v8799 = vpack.c.b16 %v8731, %v8727
    %v8800 = vpack.c.b16 %v8736, %v8732
    %v8801 = vpack.c.b16 %v8737, %v8733
    %v8802 = vpack.c.b16 %v8738, %v8734
    %v8803 = vpack.c.b16 %v8739, %v8735
    %8868 = vmatprep.subr.bf16.mxu0 0
    %8869 = vmatpush1.bf16.msra.mxu0 %v8267
    %8870 = vmatprep.subr.bf16.mxu0 0
    %8871 = vmatpush1.bf16.msra.mxu0 %v8266
    %8872 = vmatprep.subr.bf16.mxu0 0
    %8873 = vmatpush1.bf16.msra.mxu0 %v8265
    %8874 = vmatprep.subr.bf16.mxu0 0
    %8875 = vmatpush1.bf16.msra.mxu0 %v8264
    %8876 = vmatprep.subr.bf16.mxu0 0
    %8877 = vmatpush1.bf16.msra.mxu0 %v8263
    %8878 = vmatprep.subr.bf16.mxu0 0
    %8879 = vmatpush1.bf16.msra.mxu0 %v8262
    %8880 = vmatprep.subr.bf16.mxu0 0
    %8881 = vmatpush1.bf16.msra.mxu0 %v8261
    %8882 = vmatprep.subr.bf16.mxu0 0
    %8883 = vmatpush1.bf16.msra.mxu0 %v8260
    %8884 = vmatprep.subr.bf16.mxu0 0
    %8885 = vmatpush2.bf16.msra.mxu0 %v8275
    %8886 = vmatprep.subr.bf16.mxu0 0
    %8887 = vmatpush2.bf16.msra.mxu0 %v8274
    %8888 = vmatprep.subr.bf16.mxu0 0
    %8889 = vmatpush2.bf16.msra.mxu0 %v8273
    %8890 = vmatprep.subr.bf16.mxu0 0
    %8891 = vmatpush2.bf16.msra.mxu0 %v8272
    %8892 = vmatprep.subr.bf16.mxu0 0
    %8893 = vmatpush2.bf16.msra.mxu0 %v8271
    %8894 = vmatprep.subr.bf16.mxu0 0
    %8895 = vmatpush2.bf16.msra.mxu0 %v8270
    %8896 = vmatprep.subr.bf16.mxu0 0
    %8897 = vmatpush2.bf16.msra.mxu0 %v8269
    %8898 = vmatprep.subr.bf16.mxu0 0
    %8899 = vmatpush2.bf16.msra.mxu0 %v8268
    %8900 = vmatprep.mubr.bf16.mxu0 %v8741
    %8901 = vmatmul.mubr.bf16.gmra.mxu0 %v8740
    %v8902 = vpop.f32.mrf.mxu0
    %v8903 = vadd.f32 %v8391, %v8902
    %v8904 = vpop.f32.mrf.mxu0
    %v8905 = vpop.f32.mrf.mxu0
    %v8906 = vadd.f32 %v8396, %v8905
    %v8907 = vpop.f32.mrf.mxu0
    %8908 = vmatprep.mubr.bf16.mxu0 %v8745
    %8909 = vmatmul.mubr.bf16.gmra.mxu0 %v8744
    %v8910 = vpop.f32.mrf.mxu0
    %v8911 = vadd.f32 %v8401, %v8910
    %v8912 = vpop.f32.mrf.mxu0
    %v8913 = vpop.f32.mrf.mxu0
    %v8914 = vadd.f32 %v8406, %v8913
    %v8915 = vpop.f32.mrf.mxu0
    %8916 = vmatprep.mubr.bf16.mxu0 %v8749
    %8917 = vmatmul.mubr.bf16.gmra.mxu0 %v8748
    %v8918 = vpop.f32.mrf.mxu0
    %v8919 = vadd.f32 %v8411, %v8918
    %v8920 = vpop.f32.mrf.mxu0
    %v8921 = vpop.f32.mrf.mxu0
    %v8922 = vadd.f32 %v8416, %v8921
    %v8923 = vpop.f32.mrf.mxu0
    %8924 = vmatprep.mubr.bf16.mxu0 %v8753
    %8925 = vmatmul.mubr.bf16.gmra.mxu0 %v8752
    %v8926 = vpop.f32.mrf.mxu0
    %v8927 = vadd.f32 %v8421, %v8926
    %v8928 = vpop.f32.mrf.mxu0
    %v8929 = vpop.f32.mrf.mxu0
    %v8930 = vadd.f32 %v8426, %v8929
    %v8931 = vpop.f32.mrf.mxu0
    %8932 = vmatprep.mubr.bf16.mxu0 %v8757
    %8933 = vmatmul.mubr.bf16.gmra.mxu0 %v8756
    %v8934 = vpop.f32.mrf.mxu0
    %v8935 = vadd.f32 %v8431, %v8934
    %v8936 = vpop.f32.mrf.mxu0
    %v8937 = vpop.f32.mrf.mxu0
    %v8938 = vadd.f32 %v8436, %v8937
    %v8939 = vpop.f32.mrf.mxu0
    %8940 = vmatprep.mubr.bf16.mxu0 %v8761
    %8941 = vmatmul.mubr.bf16.gmra.mxu0 %v8760
    %v8942 = vpop.f32.mrf.mxu0
    %v8943 = vadd.f32 %v8441, %v8942
    %v8944 = vpop.f32.mrf.mxu0
    %v8945 = vpop.f32.mrf.mxu0
    %v8946 = vadd.f32 %v8446, %v8945
    %v8947 = vpop.f32.mrf.mxu0
    %8948 = vmatprep.mubr.bf16.mxu0 %v8765
    %8949 = vmatmul.mubr.bf16.gmra.mxu0 %v8764
    %v8950 = vpop.f32.mrf.mxu0
    %v8951 = vadd.f32 %v8451, %v8950
    %v8952 = vpop.f32.mrf.mxu0
    %v8953 = vpop.f32.mrf.mxu0
    %v8954 = vadd.f32 %v8456, %v8953
    %v8955 = vpop.f32.mrf.mxu0
    %8956 = vmatprep.mubr.bf16.mxu0 %v8769
    %8957 = vmatmul.mubr.bf16.gmra.mxu0 %v8768
    %v8958 = vpop.f32.mrf.mxu0
    %v8959 = vadd.f32 %v8461, %v8958
    %v8960 = vpop.f32.mrf.mxu0
    %v8961 = vpop.f32.mrf.mxu0
    %v8962 = vadd.f32 %v8466, %v8961
    %v8963 = vpop.f32.mrf.mxu0
    %8964 = vmatprep.mubr.bf16.mxu0 %v8773
    %8965 = vmatmul.mubr.bf16.gmra.mxu0 %v8772
    %v8966 = vpop.f32.mrf.mxu0
    %v8967 = vadd.f32 %v8471, %v8966
    %v8968 = vpop.f32.mrf.mxu0
    %v8969 = vpop.f32.mrf.mxu0
    %v8970 = vadd.f32 %v8476, %v8969
    %v8971 = vpop.f32.mrf.mxu0
    %8972 = vmatprep.mubr.bf16.mxu0 %v8777
    %8973 = vmatmul.mubr.bf16.gmra.mxu0 %v8776
    %v8974 = vpop.f32.mrf.mxu0
    %v8975 = vadd.f32 %v8481, %v8974
    %v8976 = vpop.f32.mrf.mxu0
    %v8977 = vpop.f32.mrf.mxu0
    %v8978 = vadd.f32 %v8486, %v8977
    %v8979 = vpop.f32.mrf.mxu0
    %8980 = vmatprep.mubr.bf16.mxu0 %v8781
    %8981 = vmatmul.mubr.bf16.gmra.mxu0 %v8780
    %v8982 = vpop.f32.mrf.mxu0
    %v8983 = vadd.f32 %v8491, %v8982
    %v8984 = vpop.f32.mrf.mxu0
    %v8985 = vpop.f32.mrf.mxu0
    %v8986 = vadd.f32 %v8496, %v8985
    %v8987 = vpop.f32.mrf.mxu0
    %8988 = vmatprep.mubr.bf16.mxu0 %v8785
    %8989 = vmatmul.mubr.bf16.gmra.mxu0 %v8784
    %v8990 = vpop.f32.mrf.mxu0
    %v8991 = vadd.f32 %v8501, %v8990
    %v8992 = vpop.f32.mrf.mxu0
    %v8993 = vpop.f32.mrf.mxu0
    %v8994 = vadd.f32 %v8506, %v8993
    %v8995 = vpop.f32.mrf.mxu0
    %8996 = vmatprep.mubr.bf16.mxu0 %v8789
    %8997 = vmatmul.mubr.bf16.gmra.mxu0 %v8788
    %v8998 = vpop.f32.mrf.mxu0
    %v8999 = vadd.f32 %v8511, %v8998
    %v9000 = vpop.f32.mrf.mxu0
    %v9001 = vpop.f32.mrf.mxu0
    %v9002 = vadd.f32 %v8516, %v9001
    %v9003 = vpop.f32.mrf.mxu0
    %9004 = vmatprep.mubr.bf16.mxu0 %v8793
    %9005 = vmatmul.mubr.bf16.gmra.mxu0 %v8792
    %v9006 = vpop.f32.mrf.mxu0
    %v9007 = vadd.f32 %v8521, %v9006
    %v9008 = vpop.f32.mrf.mxu0
    %v9009 = vpop.f32.mrf.mxu0
    %v9010 = vadd.f32 %v8526, %v9009
    %v9011 = vpop.f32.mrf.mxu0
    %9012 = vmatprep.mubr.bf16.mxu0 %v8797
    %9013 = vmatmul.mubr.bf16.gmra.mxu0 %v8796
    %v9014 = vpop.f32.mrf.mxu0
    %v9015 = vadd.f32 %v8531, %v9014
    %v9016 = vpop.f32.mrf.mxu0
    %v9017 = vpop.f32.mrf.mxu0
    %v9018 = vadd.f32 %v8536, %v9017
    %v9019 = vpop.f32.mrf.mxu0
    %9020 = vmatprep.mubr.bf16.mxu0 %v8801
    %9021 = vmatmul.mubr.bf16.gmra.mxu0 %v8800
    %v9022 = vpop.f32.mrf.mxu0
    %v9023 = vadd.f32 %v8541, %v9022
    %v9024 = vpop.f32.mrf.mxu0
    %v9025 = vpop.f32.mrf.mxu0
    %v9026 = vadd.f32 %v8546, %v9025
    %v9027 = vpop.f32.mrf.mxu0
    %9028 = vdwg.mxu0
    %9029 = vmatprep.subr.bf16.mxu0 0
    %9030 = vmatpush1.bf16.msra.mxu0 %v8283
    %9031 = vmatprep.subr.bf16.mxu0 0
    %9032 = vmatpush1.bf16.msra.mxu0 %v8282
    %9033 = vmatprep.subr.bf16.mxu0 0
    %9034 = vmatpush1.bf16.msra.mxu0 %v8281
    %9035 = vmatprep.subr.bf16.mxu0 0
    %9036 = vmatpush1.bf16.msra.mxu0 %v8280
    %9037 = vmatprep.subr.bf16.mxu0 0
    %9038 = vmatpush1.bf16.msra.mxu0 %v8279
    %9039 = vmatprep.subr.bf16.mxu0 0
    %9040 = vmatpush1.bf16.msra.mxu0 %v8278
    %9041 = vmatprep.subr.bf16.mxu0 0
    %9042 = vmatpush1.bf16.msra.mxu0 %v8277
    %9043 = vmatprep.subr.bf16.mxu0 0
    %9044 = vmatpush1.bf16.msra.mxu0 %v8276
    %9045 = vmatprep.subr.bf16.mxu0 0
    %9046 = vmatpush2.bf16.msra.mxu0 %v8291
    %9047 = vmatprep.subr.bf16.mxu0 0
    %9048 = vmatpush2.bf16.msra.mxu0 %v8290
    %9049 = vmatprep.subr.bf16.mxu0 0
    %9050 = vmatpush2.bf16.msra.mxu0 %v8289
    %9051 = vmatprep.subr.bf16.mxu0 0
    %9052 = vmatpush2.bf16.msra.mxu0 %v8288
    %9053 = vmatprep.subr.bf16.mxu0 0
    %9054 = vmatpush2.bf16.msra.mxu0 %v8287
    %9055 = vmatprep.subr.bf16.mxu0 0
    %9056 = vmatpush2.bf16.msra.mxu0 %v8286
    %9057 = vmatprep.subr.bf16.mxu0 0
    %9058 = vmatpush2.bf16.msra.mxu0 %v8285
    %9059 = vmatprep.subr.bf16.mxu0 0
    %9060 = vmatpush2.bf16.msra.mxu0 %v8284
    %9061 = vmatprep.mubr.bf16.mxu0 %v8743
    %9062 = vmatmul.mubr.bf16.gmra.mxu0 %v8742
    %v9063 = vpop.f32.mrf.mxu0
    %v9064 = vadd.f32 %v8903, %v9063
    %v9065 = vpop.f32.mrf.mxu0
    %v9066 = vpop.f32.mrf.mxu0
    %v9067 = vadd.f32 %v8906, %v9066
    %v9068 = vpop.f32.mrf.mxu0
    %9069 = vmatprep.mubr.bf16.mxu0 %v8747
    %9070 = vmatmul.mubr.bf16.gmra.mxu0 %v8746
    %v9071 = vpop.f32.mrf.mxu0
    %v9072 = vadd.f32 %v8911, %v9071
    %v9073 = vpop.f32.mrf.mxu0
    %v9074 = vpop.f32.mrf.mxu0
    %v9075 = vadd.f32 %v8914, %v9074
    %v9076 = vpop.f32.mrf.mxu0
    %9077 = vmatprep.mubr.bf16.mxu0 %v8751
    %9078 = vmatmul.mubr.bf16.gmra.mxu0 %v8750
    %v9079 = vpop.f32.mrf.mxu0
    %v9080 = vadd.f32 %v8919, %v9079
    %v9081 = vpop.f32.mrf.mxu0
    %v9082 = vpop.f32.mrf.mxu0
    %v9083 = vadd.f32 %v8922, %v9082
    %v9084 = vpop.f32.mrf.mxu0
    %9085 = vmatprep.mubr.bf16.mxu0 %v8755
    %9086 = vmatmul.mubr.bf16.gmra.mxu0 %v8754
    %v9087 = vpop.f32.mrf.mxu0
    %v9088 = vadd.f32 %v8927, %v9087
    %v9089 = vpop.f32.mrf.mxu0
    %v9090 = vpop.f32.mrf.mxu0
    %v9091 = vadd.f32 %v8930, %v9090
    %v9092 = vpop.f32.mrf.mxu0
    %9093 = vmatprep.mubr.bf16.mxu0 %v8759
    %9094 = vmatmul.mubr.bf16.gmra.mxu0 %v8758
    %v9095 = vpop.f32.mrf.mxu0
    %v9096 = vadd.f32 %v8935, %v9095
    %v9097 = vpop.f32.mrf.mxu0
    %v9098 = vpop.f32.mrf.mxu0
    %v9099 = vadd.f32 %v8938, %v9098
    %v9100 = vpop.f32.mrf.mxu0
    %9101 = vmatprep.mubr.bf16.mxu0 %v8763
    %9102 = vmatmul.mubr.bf16.gmra.mxu0 %v8762
    %v9103 = vpop.f32.mrf.mxu0
    %v9104 = vadd.f32 %v8943, %v9103
    %v9105 = vpop.f32.mrf.mxu0
    %v9106 = vpop.f32.mrf.mxu0
    %v9107 = vadd.f32 %v8946, %v9106
    %v9108 = vpop.f32.mrf.mxu0
    %9109 = vmatprep.mubr.bf16.mxu0 %v8767
    %9110 = vmatmul.mubr.bf16.gmra.mxu0 %v8766
    %v9111 = vpop.f32.mrf.mxu0
    %v9112 = vadd.f32 %v8951, %v9111
    %v9113 = vpop.f32.mrf.mxu0
    %v9114 = vpop.f32.mrf.mxu0
    %v9115 = vadd.f32 %v8954, %v9114
    %v9116 = vpop.f32.mrf.mxu0
    %9117 = vmatprep.mubr.bf16.mxu0 %v8771
    %9118 = vmatmul.mubr.bf16.gmra.mxu0 %v8770
    %v9119 = vpop.f32.mrf.mxu0
    %v9120 = vadd.f32 %v8959, %v9119
    %v9121 = vpop.f32.mrf.mxu0
    %v9122 = vpop.f32.mrf.mxu0
    %v9123 = vadd.f32 %v8962, %v9122
    %v9124 = vpop.f32.mrf.mxu0
    %9125 = vmatprep.mubr.bf16.mxu0 %v8775
    %9126 = vmatmul.mubr.bf16.gmra.mxu0 %v8774
    %v9127 = vpop.f32.mrf.mxu0
    %v9128 = vadd.f32 %v8967, %v9127
    %v9129 = vpop.f32.mrf.mxu0
    %v9130 = vpop.f32.mrf.mxu0
    %v9131 = vadd.f32 %v8970, %v9130
    %v9132 = vpop.f32.mrf.mxu0
    %9133 = vmatprep.mubr.bf16.mxu0 %v8779
    %9134 = vmatmul.mubr.bf16.gmra.mxu0 %v8778
    %v9135 = vpop.f32.mrf.mxu0
    %v9136 = vadd.f32 %v8975, %v9135
    %v9137 = vpop.f32.mrf.mxu0
    %v9138 = vpop.f32.mrf.mxu0
    %v9139 = vadd.f32 %v8978, %v9138
    %v9140 = vpop.f32.mrf.mxu0
    %9141 = vmatprep.mubr.bf16.mxu0 %v8783
    %9142 = vmatmul.mubr.bf16.gmra.mxu0 %v8782
    %v9143 = vpop.f32.mrf.mxu0
    %v9144 = vadd.f32 %v8983, %v9143
    %v9145 = vpop.f32.mrf.mxu0
    %v9146 = vpop.f32.mrf.mxu0
    %v9147 = vadd.f32 %v8986, %v9146
    %v9148 = vpop.f32.mrf.mxu0
    %9149 = vmatprep.mubr.bf16.mxu0 %v8787
    %9150 = vmatmul.mubr.bf16.gmra.mxu0 %v8786
    %v9151 = vpop.f32.mrf.mxu0
    %v9152 = vadd.f32 %v8991, %v9151
    %v9153 = vpop.f32.mrf.mxu0
    %v9154 = vpop.f32.mrf.mxu0
    %v9155 = vadd.f32 %v8994, %v9154
    %v9156 = vpop.f32.mrf.mxu0
    %9157 = vmatprep.mubr.bf16.mxu0 %v8791
    %9158 = vmatmul.mubr.bf16.gmra.mxu0 %v8790
    %v9159 = vpop.f32.mrf.mxu0
    %v9160 = vadd.f32 %v8999, %v9159
    %v9161 = vpop.f32.mrf.mxu0
    %v9162 = vpop.f32.mrf.mxu0
    %v9163 = vadd.f32 %v9002, %v9162
    %v9164 = vpop.f32.mrf.mxu0
    %9165 = vmatprep.mubr.bf16.mxu0 %v8795
    %9166 = vmatmul.mubr.bf16.gmra.mxu0 %v8794
    %v9167 = vpop.f32.mrf.mxu0
    %v9168 = vadd.f32 %v9007, %v9167
    %v9169 = vpop.f32.mrf.mxu0
    %v9170 = vpop.f32.mrf.mxu0
    %v9171 = vadd.f32 %v9010, %v9170
    %v9172 = vpop.f32.mrf.mxu0
    %9173 = vmatprep.mubr.bf16.mxu0 %v8799
    %9174 = vmatmul.mubr.bf16.gmra.mxu0 %v8798
    %v9175 = vpop.f32.mrf.mxu0
    %v9176 = vadd.f32 %v9015, %v9175
    %v9177 = vpop.f32.mrf.mxu0
    %v9178 = vpop.f32.mrf.mxu0
    %v9179 = vadd.f32 %v9018, %v9178
    %v9180 = vpop.f32.mrf.mxu0
    %9181 = vmatprep.mubr.bf16.mxu0 %v8803
    %9182 = vmatmul.mubr.bf16.gmra.mxu0 %v8802
    %v9183 = vpop.f32.mrf.mxu0
    %v9184 = vadd.f32 %v9023, %v9183
    %v9185 = vpop.f32.mrf.mxu0
    %v9186 = vpop.f32.mrf.mxu0
    %v9187 = vadd.f32 %v9026, %v9186
    %v9188 = vpop.f32.mrf.mxu0
    %9189 = vdwg.mxu0
    %vm9190 = vcmp.gt.f32.partialorder %v9064, 0.0
    %vm9191 = vcmp.gt.f32.partialorder %v9067, 0.0
    %vm9192 = vcmp.gt.f32.partialorder %v9072, 0.0
    %vm9193 = vcmp.gt.f32.partialorder %v9075, 0.0
    %vm9194 = vcmp.gt.f32.partialorder %v9080, 0.0
    %vm9195 = vcmp.gt.f32.partialorder %v9083, 0.0
    %vm9196 = vcmp.gt.f32.partialorder %v9088, 0.0
    %vm9197 = vcmp.gt.f32.partialorder %v9091, 0.0
    %vm9198 = vcmp.gt.f32.partialorder %v9096, 0.0
    %vm9199 = vcmp.gt.f32.partialorder %v9099, 0.0
    %vm9200 = vcmp.gt.f32.partialorder %v9104, 0.0
    %vm9201 = vcmp.gt.f32.partialorder %v9107, 0.0
    %vm9202 = vcmp.gt.f32.partialorder %v9112, 0.0
    %vm9203 = vcmp.gt.f32.partialorder %v9115, 0.0
    %vm9204 = vcmp.gt.f32.partialorder %v9120, 0.0
    %vm9205 = vcmp.gt.f32.partialorder %v9123, 0.0
    %vm9206 = vcmp.gt.f32.partialorder %v9128, 0.0
    %vm9207 = vcmp.gt.f32.partialorder %v9131, 0.0
    %vm9208 = vcmp.gt.f32.partialorder %v9136, 0.0
    %vm9209 = vcmp.gt.f32.partialorder %v9139, 0.0
    %vm9210 = vcmp.gt.f32.partialorder %v9144, 0.0
    %vm9211 = vcmp.gt.f32.partialorder %v9147, 0.0
    %vm9212 = vcmp.gt.f32.partialorder %v9152, 0.0
    %vm9213 = vcmp.gt.f32.partialorder %v9155, 0.0
    %vm9214 = vcmp.gt.f32.partialorder %v9160, 0.0
    %vm9215 = vcmp.gt.f32.partialorder %v9163, 0.0
    %vm9216 = vcmp.gt.f32.partialorder %v9168, 0.0
    %vm9217 = vcmp.gt.f32.partialorder %v9171, 0.0
    %vm9218 = vcmp.gt.f32.partialorder %v9176, 0.0
    %vm9219 = vcmp.gt.f32.partialorder %v9179, 0.0
    %vm9220 = vcmp.gt.f32.partialorder %v9184, 0.0
    %vm9221 = vcmp.gt.f32.partialorder %v9187, 0.0
    %v9222 = vmul.f32 %v9064, 0.2
    %v9223 = vmul.f32 %v9067, 0.2
    %v9224 = vmul.f32 %v9072, 0.2
    %v9225 = vmul.f32 %v9075, 0.2
    %v9226 = vmul.f32 %v9080, 0.2
    %v9227 = vmul.f32 %v9083, 0.2
    %v9228 = vmul.f32 %v9088, 0.2
    %v9229 = vmul.f32 %v9091, 0.2
    %v9230 = vmul.f32 %v9096, 0.2
    %v9231 = vmul.f32 %v9099, 0.2
    %v9232 = vmul.f32 %v9104, 0.2
    %v9233 = vmul.f32 %v9107, 0.2
    %v9234 = vmul.f32 %v9112, 0.2
    %v9235 = vmul.f32 %v9115, 0.2
    %v9236 = vmul.f32 %v9120, 0.2
    %v9237 = vmul.f32 %v9123, 0.2
    %v9238 = vmul.f32 %v9128, 0.2
    %v9239 = vmul.f32 %v9131, 0.2
    %v9240 = vmul.f32 %v9136, 0.2
    %v9241 = vmul.f32 %v9139, 0.2
    %v9242 = vmul.f32 %v9144, 0.2
    %v9243 = vmul.f32 %v9147, 0.2
    %v9244 = vmul.f32 %v9152, 0.2
    %v9245 = vmul.f32 %v9155, 0.2
    %v9246 = vmul.f32 %v9160, 0.2
    %v9247 = vmul.f32 %v9163, 0.2
    %v9248 = vmul.f32 %v9168, 0.2
    %v9249 = vmul.f32 %v9171, 0.2
    %v9250 = vmul.f32 %v9176, 0.2
    %v9251 = vmul.f32 %v9179, 0.2
    %v9252 = vmul.f32 %v9184, 0.2
    %v9253 = vmul.f32 %v9187, 0.2
    %v9254 = vsel %vm9190, %v9064, %v9222
    %v9255 = vsel %vm9191, %v9067, %v9223
    %v9256 = vsel %vm9192, %v9072, %v9224
    %v9257 = vsel %vm9193, %v9075, %v9225
    %v9258 = vsel %vm9194, %v9080, %v9226
    %v9259 = vsel %vm9195, %v9083, %v9227
    %v9260 = vsel %vm9196, %v9088, %v9228
    %v9261 = vsel %vm9197, %v9091, %v9229
    %v9262 = vsel %vm9198, %v9096, %v9230
    %v9263 = vsel %vm9199, %v9099, %v9231
    %v9264 = vsel %vm9200, %v9104, %v9232
    %v9265 = vsel %vm9201, %v9107, %v9233
    %v9266 = vsel %vm9202, %v9112, %v9234
    %v9267 = vsel %vm9203, %v9115, %v9235
    %v9268 = vsel %vm9204, %v9120, %v9236
    %v9269 = vsel %vm9205, %v9123, %v9237
    %v9270 = vsel %vm9206, %v9128, %v9238
    %v9271 = vsel %vm9207, %v9131, %v9239
    %v9272 = vsel %vm9208, %v9136, %v9240
    %v9273 = vsel %vm9209, %v9139, %v9241
    %v9274 = vsel %vm9210, %v9144, %v9242
    %v9275 = vsel %vm9211, %v9147, %v9243
    %v9276 = vsel %vm9212, %v9152, %v9244
    %v9277 = vsel %vm9213, %v9155, %v9245
    %v9278 = vsel %vm9214, %v9160, %v9246
    %v9279 = vsel %vm9215, %v9163, %v9247
    %v9280 = vsel %vm9216, %v9168, %v9248
    %v9281 = vsel %vm9217, %v9171, %v9249
    %v9282 = vsel %vm9218, %v9176, %v9250
    %v9283 = vsel %vm9219, %v9179, %v9251
    %v9284 = vsel %vm9220, %v9184, %v9252
    %v9285 = vsel %vm9221, %v9187, %v9253
    %v9286 = vld [vmem:[%s7] sm:$0xff]
    %v9287 = vld [vmem:[%s7 + $0x8] sm:$0xff]
    %v9288 = vld [vmem:[%s7 + $0x10] sm:$0xff]
    %v9289 = vld [vmem:[%s7 + $0x18] sm:$0xff]
    %v9290 = vld [vmem:[%s7 + $0x20] sm:$0xff]
    %v9291 = vld [vmem:[%s7 + $0x28] sm:$0xff]
    %v9292 = vld [vmem:[%s7 + $0x30] sm:$0xff]
    %v9293 = vld [vmem:[%s7 + $0x38] sm:$0xff]
    %v9294 = vld [vmem:[%s7 + $0x40] sm:$0xff]
    %v9295 = vld [vmem:[%s7 + $0x48] sm:$0xff]
    %v9296 = vld [vmem:[%s7 + $0x50] sm:$0xff]
    %v9297 = vld [vmem:[%s7 + $0x58] sm:$0xff]
    %v9298 = vld [vmem:[%s7 + $0x60] sm:$0xff]
    %v9299 = vld [vmem:[%s7 + $0x68] sm:$0xff]
    %v9300 = vld [vmem:[%s7 + $0x70] sm:$0xff]
    %v9301 = vld [vmem:[%s7 + $0x78] sm:$0xff]
    %v9302 = vld [vmem:[%s7 + $0x80] sm:$0xff]
    %v9303 = vld [vmem:[%s7 + $0x88] sm:$0xff]
    %v9304 = vld [vmem:[%s7 + $0x90] sm:$0xff]
    %v9305 = vld [vmem:[%s7 + $0x98] sm:$0xff]
    %v9306 = vld [vmem:[%s7 + $0xa0] sm:$0xff]
    %v9307 = vld [vmem:[%s7 + $0xa8] sm:$0xff]
    %v9308 = vld [vmem:[%s7 + $0xb0] sm:$0xff]
    %v9309 = vld [vmem:[%s7 + $0xb8] sm:$0xff]
    %v9310 = vld [vmem:[%s7 + $0xc0] sm:$0xff]
    %v9311 = vld [vmem:[%s7 + $0xc8] sm:$0xff]
    %v9312 = vld [vmem:[%s7 + $0xd0] sm:$0xff]
    %v9313 = vld [vmem:[%s7 + $0xd8] sm:$0xff]
    %v9314 = vld [vmem:[%s7 + $0xe0] sm:$0xff]
    %v9315 = vld [vmem:[%s7 + $0xe8] sm:$0xff]
    %v9316 = vld [vmem:[%s7 + $0xf0] sm:$0xff]
    %v9317 = vld [vmem:[%s7 + $0xf8] sm:$0xff]
    %9319 = vset.pattern.permute.xlu0 0
    %9320 = vperm.xlu0 %9319, %v9286
    %v9321 = vpop.permute.xlu0 %9320
    %9324 = vset.pattern.permute.xlu0 0
    %9325 = vperm.xlu0 %9324, %v9287
    %v9326 = vpop.permute.xlu0 %9325
    %9329 = vset.pattern.permute.xlu0 0
    %9330 = vperm.xlu0 %9329, %v9288
    %v9331 = vpop.permute.xlu0 %9330
    %9334 = vset.pattern.permute.xlu0 0
    %9335 = vperm.xlu0 %9334, %v9289
    %v9336 = vpop.permute.xlu0 %9335
    %9339 = vset.pattern.permute.xlu0 0
    %9340 = vperm.xlu0 %9339, %v9290
    %v9341 = vpop.permute.xlu0 %9340
    %9344 = vset.pattern.permute.xlu0 0
    %9345 = vperm.xlu0 %9344, %v9291
    %v9346 = vpop.permute.xlu0 %9345
    %9349 = vset.pattern.permute.xlu0 0
    %9350 = vperm.xlu0 %9349, %v9292
    %v9351 = vpop.permute.xlu0 %9350
    %9354 = vset.pattern.permute.xlu0 0
    %9355 = vperm.xlu0 %9354, %v9293
    %v9356 = vpop.permute.xlu0 %9355
    %9359 = vset.pattern.permute.xlu0 0
    %9360 = vperm.xlu0 %9359, %v9294
    %v9361 = vpop.permute.xlu0 %9360
    %9364 = vset.pattern.permute.xlu0 0
    %9365 = vperm.xlu0 %9364, %v9295
    %v9366 = vpop.permute.xlu0 %9365
    %9369 = vset.pattern.permute.xlu0 0
    %9370 = vperm.xlu0 %9369, %v9296
    %v9371 = vpop.permute.xlu0 %9370
    %9374 = vset.pattern.permute.xlu0 0
    %9375 = vperm.xlu0 %9374, %v9297
    %v9376 = vpop.permute.xlu0 %9375
    %9379 = vset.pattern.permute.xlu0 0
    %9380 = vperm.xlu0 %9379, %v9298
    %v9381 = vpop.permute.xlu0 %9380
    %9384 = vset.pattern.permute.xlu0 0
    %9385 = vperm.xlu0 %9384, %v9299
    %v9386 = vpop.permute.xlu0 %9385
    %9389 = vset.pattern.permute.xlu0 0
    %9390 = vperm.xlu0 %9389, %v9300
    %v9391 = vpop.permute.xlu0 %9390
    %9394 = vset.pattern.permute.xlu0 0
    %9395 = vperm.xlu0 %9394, %v9301
    %v9396 = vpop.permute.xlu0 %9395
    %9399 = vset.pattern.permute.xlu0 0
    %9400 = vperm.xlu0 %9399, %v9302
    %v9401 = vpop.permute.xlu0 %9400
    %9404 = vset.pattern.permute.xlu0 0
    %9405 = vperm.xlu0 %9404, %v9303
    %v9406 = vpop.permute.xlu0 %9405
    %9409 = vset.pattern.permute.xlu0 0
    %9410 = vperm.xlu0 %9409, %v9304
    %v9411 = vpop.permute.xlu0 %9410
    %9414 = vset.pattern.permute.xlu0 0
    %9415 = vperm.xlu0 %9414, %v9305
    %v9416 = vpop.permute.xlu0 %9415
    %9419 = vset.pattern.permute.xlu0 0
    %9420 = vperm.xlu0 %9419, %v9306
    %v9421 = vpop.permute.xlu0 %9420
    %9424 = vset.pattern.permute.xlu0 0
    %9425 = vperm.xlu0 %9424, %v9307
    %v9426 = vpop.permute.xlu0 %9425
    %9429 = vset.pattern.permute.xlu0 0
    %9430 = vperm.xlu0 %9429, %v9308
    %v9431 = vpop.permute.xlu0 %9430
    %9434 = vset.pattern.permute.xlu0 0
    %9435 = vperm.xlu0 %9434, %v9309
    %v9436 = vpop.permute.xlu0 %9435
    %9439 = vset.pattern.permute.xlu0 0
    %9440 = vperm.xlu0 %9439, %v9310
    %v9441 = vpop.permute.xlu0 %9440
    %9444 = vset.pattern.permute.xlu0 0
    %9445 = vperm.xlu0 %9444, %v9311
    %v9446 = vpop.permute.xlu0 %9445
    %9449 = vset.pattern.permute.xlu0 0
    %9450 = vperm.xlu0 %9449, %v9312
    %v9451 = vpop.permute.xlu0 %9450
    %9454 = vset.pattern.permute.xlu0 0
    %9455 = vperm.xlu0 %9454, %v9313
    %v9456 = vpop.permute.xlu0 %9455
    %9459 = vset.pattern.permute.xlu0 0
    %9460 = vperm.xlu0 %9459, %v9314
    %v9461 = vpop.permute.xlu0 %9460
    %9464 = vset.pattern.permute.xlu0 0
    %9465 = vperm.xlu0 %9464, %v9315
    %v9466 = vpop.permute.xlu0 %9465
    %9469 = vset.pattern.permute.xlu0 0
    %9470 = vperm.xlu0 %9469, %v9316
    %v9471 = vpop.permute.xlu0 %9470
    %9474 = vset.pattern.permute.xlu0 0
    %9475 = vperm.xlu0 %9474, %v9317
    %v9476 = vpop.permute.xlu0 %9475
    %v9478 = vmul.f32 %v9254, %v9321
    %v9479 = vmul.f32 %v9255, %v9326
    %v9480 = vmul.f32 %v9256, %v9331
    %v9481 = vmul.f32 %v9257, %v9336
    %v9482 = vmul.f32 %v9258, %v9341
    %v9483 = vmul.f32 %v9259, %v9346
    %v9484 = vmul.f32 %v9260, %v9351
    %v9485 = vmul.f32 %v9261, %v9356
    %v9486 = vmul.f32 %v9262, %v9361
    %v9487 = vmul.f32 %v9263, %v9366
    %v9488 = vmul.f32 %v9264, %v9371
    %v9489 = vmul.f32 %v9265, %v9376
    %v9490 = vmul.f32 %v9266, %v9381
    %v9491 = vmul.f32 %v9267, %v9386
    %v9492 = vmul.f32 %v9268, %v9391
    %v9493 = vmul.f32 %v9269, %v9396
    %v9494 = vmul.f32 %v9270, %v9401
    %v9495 = vmul.f32 %v9271, %v9406
    %v9496 = vmul.f32 %v9272, %v9411
    %v9497 = vmul.f32 %v9273, %v9416
    %v9498 = vmul.f32 %v9274, %v9421
    %v9499 = vmul.f32 %v9275, %v9426
    %v9500 = vmul.f32 %v9276, %v9431
    %v9501 = vmul.f32 %v9277, %v9436
    %v9502 = vmul.f32 %v9278, %v9441
    %v9503 = vmul.f32 %v9279, %v9446
    %v9504 = vmul.f32 %v9280, %v9451
    %v9505 = vmul.f32 %v9281, %v9456
    %v9506 = vmul.f32 %v9282, %v9461
    %v9507 = vmul.f32 %v9283, %v9466
    %v9508 = vmul.f32 %v9284, %v9471
    %v9509 = vmul.f32 %v9285, %v9476
    %vm9510 = vcmask 64512
    %v9511 = vsel %vm9510, %v9478, 0.0
    %v9512 = vsel %vm9510, %v9479, 0.0
    %v9513 = vadd.f32 %v9511, %v9512
    %v9514 = vsel %vm9510, %v9480, 0.0
    %v9515 = vadd.f32 %v9513, %v9514
    %v9516 = vsel %vm9510, %v9481, 0.0
    %v9517 = vadd.f32 %v9515, %v9516
    %v9518 = vsel %vm9510, %v9482, 0.0
    %v9519 = vadd.f32 %v9517, %v9518
    %v9520 = vsel %vm9510, %v9483, 0.0
    %v9521 = vadd.f32 %v9519, %v9520
    %v9522 = vsel %vm9510, %v9484, 0.0
    %v9523 = vadd.f32 %v9521, %v9522
    %v9524 = vsel %vm9510, %v9485, 0.0
    %v9525 = vadd.f32 %v9523, %v9524
    %v9526 = vsel %vm9510, %v9486, 0.0
    %v9527 = vadd.f32 %v9525, %v9526
    %v9528 = vsel %vm9510, %v9487, 0.0
    %v9529 = vadd.f32 %v9527, %v9528
    %v9530 = vsel %vm9510, %v9488, 0.0
    %v9531 = vadd.f32 %v9529, %v9530
    %v9532 = vsel %vm9510, %v9489, 0.0
    %v9533 = vadd.f32 %v9531, %v9532
    %v9534 = vsel %vm9510, %v9490, 0.0
    %v9535 = vadd.f32 %v9533, %v9534
    %v9536 = vsel %vm9510, %v9491, 0.0
    %v9537 = vadd.f32 %v9535, %v9536
    %v9538 = vsel %vm9510, %v9492, 0.0
    %v9539 = vadd.f32 %v9537, %v9538
    %v9540 = vsel %vm9510, %v9493, 0.0
    %v9541 = vadd.f32 %v9539, %v9540
    %v9542 = vsel %vm9510, %v9494, 0.0
    %v9543 = vadd.f32 %v9541, %v9542
    %v9544 = vsel %vm9510, %v9495, 0.0
    %v9545 = vadd.f32 %v9543, %v9544
    %v9546 = vsel %vm9510, %v9496, 0.0
    %v9547 = vadd.f32 %v9545, %v9546
    %v9548 = vsel %vm9510, %v9497, 0.0
    %v9549 = vadd.f32 %v9547, %v9548
    %v9550 = vsel %vm9510, %v9498, 0.0
    %v9551 = vadd.f32 %v9549, %v9550
    %v9552 = vsel %vm9510, %v9499, 0.0
    %v9553 = vadd.f32 %v9551, %v9552
    %v9554 = vsel %vm9510, %v9500, 0.0
    %v9555 = vadd.f32 %v9553, %v9554
    %v9556 = vsel %vm9510, %v9501, 0.0
    %v9557 = vadd.f32 %v9555, %v9556
    %v9558 = vsel %vm9510, %v9502, 0.0
    %v9559 = vadd.f32 %v9557, %v9558
    %v9560 = vsel %vm9510, %v9503, 0.0
    %v9561 = vadd.f32 %v9559, %v9560
    %v9562 = vsel %vm9510, %v9504, 0.0
    %v9563 = vadd.f32 %v9561, %v9562
    %v9564 = vsel %vm9510, %v9505, 0.0
    %v9565 = vadd.f32 %v9563, %v9564
    %v9566 = vsel %vm9510, %v9506, 0.0
    %v9567 = vadd.f32 %v9565, %v9566
    %v9568 = vsel %vm9510, %v9507, 0.0
    %v9569 = vadd.f32 %v9567, %v9568
    %v9570 = vsel %vm9510, %v9508, 0.0
    %v9571 = vadd.f32 %v9569, %v9570
    %v9572 = vsel %vm9510, %v9509, 0.0
    %v9573 = vadd.f32 %v9571, %v9572
    %v9574 = vrot.slane %v9573, 4
    %v9575 = vadd.f32 %v9573, %v9574
    %v9576 = vrot.slane %v9575, 2
    %v9577 = vadd.f32 %v9575, %v9576
    %v9578 = vrot.slane %v9577, 1
    %v9579 = vadd.f32 %v9577, %v9578
    %v9580 = vld [vmem:[#allocation2] sm:$0x1]
    %9582 = vset.pattern.permute.xlu0 0
    %9583 = vperm.xlu0 %9582, %v9580
    %v9584 = vpop.permute.xlu0 %9583
    %v9586 = vlaneseq
    %v9587 = vshrl.u32 %v9586, 7
    %v9588 = vsub.s32 0, %v9587
    %v9589 = vrot.slane %v9584, %v9588
    %v9590 = vadd.f32 %v9579, %v9589
    %v9591 = vxor.u32 %v9590, 2147483648
    %v9592 = vmul.f32 %v9591, 1.442695
    %v9593 = vpow.pop %v9592
    %v9594 = vadd.f32 %v9593, 1.0
    %v9595 = vrcp.pop %v9594
    %v9596 = vmul.f32 1.0, %v9595
    %vm9597 = vcmask 57344
    %9598 = vst.msk [vmem:[#allocation6] sm:$0x1] %vm9597, %v9596
    // Predicated region
    $region42: #{tpu_custom_call.1} parent=1 // pred_check
      _
    $region43: #{tpu_custom_call.1} parent=1 // pred_check_branch
      %9600 = sbr.rel (0) target = $region45
    $region44: #{tpu_custom_call.1} parent=1 // pred_region
      %s9602 = ssub.s32 16, 16
      %9603 = vsyncadd [#allocation5], %s9602
      %s9605 = sshll.u32 [#allocation6], 4
      %s9606 = int_to_ptr.vmem [resolvable:$true] %s9605
      %9608 = dma.vmem_to_hbm [thread:$0]  %s9606, 16, %s9, [#allocation5]
    $region45: #{tpu_custom_call.1} parent=1 // pred_fallthru
      _
    // Predicated region
    $region46: #{tpu_custom_call.1} parent=1 // pred_check
      _
    $region47: #{tpu_custom_call.1} parent=1 // pred_check_branch
      %9610 = sbr.rel (0) target = $region49
    $region48: #{tpu_custom_call.1} parent=1 // pred_region
      %9611 = dma.done [#allocation5], 16
    $region49: #{tpu_custom_call.1} parent=1 // pred_fallthru
      _
    %9612 = vsyncpa [#allocation4], 1
    %9613 = vsyncpa [#allocation5], 1

</llo_original>
